<compile_context>
chip_gen: v6e
topology: v6e:2x2x1
jax: 0.10.0
libtpu: 0.0.40
codegen_flags: <defaults>
</compile_context>

<pallas_src>
import functools
import math

import jax
import jax.numpy as jnp
from jax import lax
from jax.experimental import pallas as pl
from jax.experimental.pallas import tpu as pltpu


DIM_TEXT, DIM_VIDEO, DIM_AUDIO = 20, 12, 8
SIZE_SPACE = 32
S = SIZE_SPACE
NHEADS = 2
DIM_FF = 2048                       # PyTorch TransformerEncoderLayer default
E = 6 * S                           # 192 (d_model)
HEAD_DIM = E // NHEADS              # 96
XPACK = 128                         # packed input slab width: [text|video|audio|0]
QKV_W = 3 * 128 * NHEADS            # 768: q/k/v heads at 128-aligned columns
OUT_W = 4 * S                       # 128: fusion hidden == padded output width

# Row-block offsets inside the bf16 small-weight slab (all multiples of 8).
R_PROJ = 0                          # (XPACK, 3S)   fused block-diag projection
R_H = R_PROJ + XPACK                # (3S, E)       fused private + shared
R_WO = R_H + 3 * S                  # (128*NH, E)   attn out-proj, zero-row padded
R_FU1 = R_WO + 128 * NHEADS         # (E, 4S)       fusion layer 1
R_FU2 = R_FU1 + E                   # (4S, 4S)      fusion layer 3 (out padded to 4S)
WSM_ROWS = R_FU2 + 4 * S            # 800


def _layernorm(x, g, b, eps=1e-5):
    mu = jnp.mean(x, axis=-1, keepdims=True)
    var = jnp.mean((x - mu) ** 2, axis=-1, keepdims=True)
    return (x - mu) * lax.rsqrt(var + eps) * g + b


def _misa_fused_kernel(x_ref, vec_ref, wsm_ref, wqkv_ref, wf1_hbm, wf2_hbm,
                       o_ref, wf1_buf, wf2_buf, ff_sem, *, batch):
    f32, bf16 = jnp.float32, jnp.bfloat16

    # ---- prefetch big FF weights HBM -> VMEM; overlap with pre-FF compute ----
    cp1 = pltpu.make_async_copy(wf1_hbm, wf1_buf, ff_sem.at[0])
    cp2 = pltpu.make_async_copy(wf2_hbm, wf2_buf, ff_sem.at[1])
    cp1.start()
    cp2.start()

    # ---- project_{t,v,a}: fused block-diagonal Linear -> ReLU -> LayerNorm ----
    xb = x_ref[...].astype(bf16)                                       # (N, 128)
    y = jnp.dot(xb, wsm_ref[R_PROJ:R_PROJ + XPACK, 0:3 * S],
                preferred_element_type=f32) + vec_ref[0:1, 0:3 * S]
    y = jnp.maximum(y, 0.0)                                            # (N, 96)
    gam = vec_ref[1:2, 0:3 * S]
    bet = vec_ref[2:3, 0:3 * S]
    parts = []
    for m in range(3):                              # per-modality LayerNorm(32)
        c0, c1 = m * S, (m + 1) * S
        parts.append(_layernorm(y[:, c0:c1], gam[:, c0:c1], bet[:, c0:c1]))
    u = jnp.concatenate(parts, axis=-1)                                # (N, 96)

    # ---- private_{t,v,a} + shared(x3): single dense matmul, lane-dense h ----
    h = jax.nn.sigmoid(
        jnp.dot(u.astype(bf16), wsm_ref[R_H:R_H + 3 * S, 0:E],
                preferred_element_type=f32) + vec_ref[3:4, 0:E])       # (N, 192)
    n = h.shape[0]

    # ---- multi-head self-attention over all N = L*B rows, within-batch mask ----
    qkv = jnp.dot(h.astype(bf16), wqkv_ref[...],
                  preferred_element_type=f32) + vec_ref[4:5, 0:QKV_W]  # (N, 768)

    # seq-major rows: row i = l*B + b  =>  same batch iff (i % B) == (j % B)
    row = lax.broadcasted_iota(jnp.int32, (n, n), 0)
    col = lax.broadcasted_iota(jnp.int32, (n, n), 1)
    same_batch = (row % batch) == (col % batch)

    pad = jnp.zeros((n, 128 - HEAD_DIM), f32)
    pieces = []
    for hh in range(NHEADS):                        # static, NHEADS = 2
        q0 = 128 * hh                               # 128-aligned head slices
        k0 = 128 * NHEADS + 128 * hh
        v0 = 256 * NHEADS + 128 * hh
        qh = qkv[:, q0:q0 + HEAD_DIM]               # 1/sqrt(hd) folded into Wq/bq
        kh = qkv[:, k0:k0 + HEAD_DIM]
        vh = qkv[:, v0:v0 + HEAD_DIM]
        s = lax.dot_general(qh, kh, (((1,), (1,)), ((), ())),
                            preferred_element_type=f32)                # (N, N)
        s = jnp.where(same_batch, s, -1e30)
        s = s - jnp.max(s, axis=-1, keepdims=True)
        p = jnp.exp(s)
        p = p * pl.reciprocal(jnp.sum(p, axis=-1, keepdims=True), approx=True)
        pieces += [jnp.dot(p, vh, preferred_element_type=f32), pad]    # (N, 96|32)
    oh_all = jnp.concatenate(pieces, axis=-1)                          # (N, 256)
    attn = jnp.dot(oh_all.astype(bf16),
                   wsm_ref[R_WO:R_WO + 128 * NHEADS, 0:E],
                   preferred_element_type=f32) + vec_ref[5:6, 0:E]

    x1 = _layernorm(h + attn, vec_ref[6:7, 0:E], vec_ref[7:8, 0:E])    # post-norm

    # ---- feed-forward (prefetched bf16 weights, f32 accumulation) ----
    cp1.wait()
    cp2.wait()
    ff = jnp.dot(x1.astype(bf16), wf1_buf[...],
                 preferred_element_type=f32) + vec_ref[8:9, 0:DIM_FF]
    ff = jnp.maximum(ff, 0.0)
    ff = jnp.dot(ff.astype(bf16), wf2_buf[...],
                 preferred_element_type=f32) + vec_ref[9:10, 0:E]
    x2 = _layernorm(x1 + ff, vec_ref[10:11, 0:E], vec_ref[11:12, 0:E])

    # ---- fusion MLP: Linear(6S->4S) -> ReLU -> Linear(4S->3S, padded to 4S) ----
    f1 = jnp.maximum(
        jnp.dot(x2.astype(bf16), wsm_ref[R_FU1:R_FU1 + E, 0:OUT_W],
                preferred_element_type=f32) + vec_ref[12:13, 0:OUT_W], 0.0)
    o_ref[...] = jnp.dot(f1.astype(bf16), wsm_ref[R_FU2:R_FU2 + OUT_W, 0:OUT_W],
                         preferred_element_type=f32) + vec_ref[13:14, 0:OUT_W]


# ---------------------------------------------------------------------------
# Parameter init (deterministic, synthetic) — pre-packed into kernel layout
# ---------------------------------------------------------------------------

def init_params(key):
    keys = iter(jax.random.split(key, 32))

    def w(shape, scale=0.05):
        return jax.random.normal(next(keys), shape, jnp.float32) * scale

    # projection Linear weights/biases (per modality)
    wpt, bpt = w((DIM_TEXT, S)), w((S,), 0.02)
    wpv, bpv = w((DIM_VIDEO, S)), w((S,), 0.02)
    wpa, bpa = w((DIM_AUDIO, S)), w((S,), 0.02)

    # private_{t,v,a} + shared
    wprt, bprt = w((S, S)), w((S,), 0.02)
    wprv, bprv = w((S, S)), w((S,), 0.02)
    wpra, bpra = w((S, S)), w((S,), 0.02)
    wsh, bsh = w((S, S)), w((S,), 0.02)

    # transformer encoder layer
    wq, wk, wv, wo = w((E, E)), w((E, E)), w((E, E)), w((E, E))
    bq, bk, bv, bo = (w((E,), 0.02) for _ in range(4))
    g1, be1 = jnp.ones((E,), jnp.float32), jnp.zeros((E,), jnp.float32)
    wf1 = w((E, DIM_FF), 0.02).astype(jnp.bfloat16)
    bf1 = jnp.zeros((DIM_FF,), jnp.float32)
    wf2 = w((DIM_FF, E), 0.02).astype(jnp.bfloat16)
    bf2 = jnp.zeros((E,), jnp.float32)
    g2, be2 = jnp.ones((E,), jnp.float32), jnp.zeros((E,), jnp.float32)

    # fusion MLP
    wu1, bu1 = w((E, 4 * S)), w((4 * S,), 0.02)
    wu2, bu2 = w((4 * S, 3 * S)), w((3 * S,), 0.02)

    scale = 1.0 / math.sqrt(HEAD_DIM)

    # --- fused block-diagonal projection weight (K = packed input width) ---
    wproj = jnp.zeros((XPACK, 3 * S), jnp.float32)
    wproj = wproj.at[0:DIM_TEXT, 0:S].set(wpt)
    wproj = wproj.at[DIM_TEXT:DIM_TEXT + DIM_VIDEO, S:2 * S].set(wpv)
    wproj = wproj.at[DIM_TEXT + DIM_VIDEO:DIM_TEXT + DIM_VIDEO + DIM_AUDIO,
                     2 * S:3 * S].set(wpa)

    # --- fused private + shared weight producing concatenated h directly ---
    wh = jnp.zeros((3 * S, E), jnp.float32)
    wh = wh.at[0:S, 0:S].set(wprt)
    wh = wh.at[S:2 * S, S:2 * S].set(wprv)
    wh = wh.at[2 * S:3 * S, 2 * S:3 * S].set(wpra)
    wh = wh.at[0:S, 3 * S:4 * S].set(wsh)
    wh = wh.at[S:2 * S, 4 * S:5 * S].set(wsh)
    wh = wh.at[2 * S:3 * S, 5 * S:6 * S].set(wsh)

    # --- attention out-proj, heads at 128-aligned rows (zero-row padded) ---
    wopack = jnp.zeros((128 * NHEADS, E), jnp.float32)
    for hh in range(NHEADS):
        wopack = wopack.at[128 * hh:128 * hh + HEAD_DIM, :].set(
            wo[HEAD_DIM * hh:HEAD_DIM * (hh + 1), :])

    # --- bf16 small-weight slab (row-block layout matching the kernel) ---
    wsm = jnp.zeros((WSM_ROWS, E), jnp.float32)
    wsm = wsm.at[R_PROJ:R_PROJ + XPACK, 0:3 * S].set(wproj)
    wsm = wsm.at[R_H:R_H + 3 * S, 0:E].set(wh)
    wsm = wsm.at[R_WO:R_WO + 128 * NHEADS, 0:E].set(wopack)
    wsm = wsm.at[R_FU1:R_FU1 + E, 0:4 * S].set(wu1)
    wsm = wsm.at[R_FU2:R_FU2 + 4 * S, 0:3 * S].set(wu2)      # cols 96:128 stay 0
    wsm = wsm.astype(jnp.bfloat16)

    # --- fused QKV weight, heads at 128-aligned columns, q-scale folded in ---
    wqkv = jnp.zeros((E, QKV_W), jnp.float32)
    bqkv = jnp.zeros((QKV_W,), jnp.float32)
    for hh in range(NHEADS):
        hs = slice(HEAD_DIM * hh, HEAD_DIM * (hh + 1))
        cq = 0 * 128 * NHEADS + 128 * hh
        ck = 1 * 128 * NHEADS + 128 * hh
        cv = 2 * 128 * NHEADS + 128 * hh
        wqkv = wqkv.at[:, cq:cq + HEAD_DIM].set(wq[:, hs] * scale)
        wqkv = wqkv.at[:, ck:ck + HEAD_DIM].set(wk[:, hs])
        wqkv = wqkv.at[:, cv:cv + HEAD_DIM].set(wv[:, hs])
        bqkv = bqkv.at[cq:cq + HEAD_DIM].set(bq[hs] * scale)
        bqkv = bqkv.at[ck:ck + HEAD_DIM].set(bk[hs])
        bqkv = bqkv.at[cv:cv + HEAD_DIM].set(bv[hs])
    wqkv = wqkv.astype(jnp.bfloat16)

    # --- f32 bias / LayerNorm-parameter slab (one row per parameter vector) ---
    vec = jnp.zeros((16, DIM_FF), jnp.float32)
    vec = vec.at[0, 0:3 * S].set(jnp.concatenate([bpt, bpv, bpa]))
    vec = vec.at[1, 0:3 * S].set(jnp.ones((3 * S,), jnp.float32))   # proj LN gamma
    vec = vec.at[2, 0:3 * S].set(jnp.zeros((3 * S,), jnp.float32))  # proj LN beta
    vec = vec.at[3, 0:E].set(jnp.concatenate([bprt, bprv, bpra, bsh, bsh, bsh]))
    vec = vec.at[4, 0:QKV_W].set(bqkv)
    vec = vec.at[5, 0:E].set(bo)
    vec = vec.at[6, 0:E].set(g1)
    vec = vec.at[7, 0:E].set(be1)
    vec = vec.at[8, 0:DIM_FF].set(bf1)
    vec = vec.at[9, 0:E].set(bf2)
    vec = vec.at[10, 0:E].set(g2)
    vec = vec.at[11, 0:E].set(be2)
    vec = vec.at[12, 0:4 * S].set(bu1)
    vec = vec.at[13, 0:3 * S].set(bu2)                              # cols 96:128 = 0

    return dict(wsm=wsm, wqkv=wqkv, vec=vec, wf1=wf1, wf2=wf2)


# ---------------------------------------------------------------------------
# Forward
# ---------------------------------------------------------------------------

def misa_forward(params, sentences, video, acoustic):
    L, B, _ = sentences.shape
    N = L * B
    # row-major (L,B,D) -> (N,D) is a free view; pack modalities lane-dense.
    xt = sentences.reshape(N, DIM_TEXT)
    xv = video.reshape(N, DIM_VIDEO)
    xa = acoustic.reshape(N, DIM_AUDIO)
    x = jnp.concatenate([xt, xv, xa], axis=-1)
    x = jnp.pad(x, ((0, 0), (0, XPACK - x.shape[-1])))

    vmem = pltpu.MemorySpace.VMEM
    out = pl.pallas_call(
        functools.partial(_misa_fused_kernel, batch=B),
        out_shape=jax.ShapeDtypeStruct((N, OUT_W), jnp.float32),
        in_specs=[
            pl.BlockSpec(memory_space=vmem),     # packed inputs
            pl.BlockSpec(memory_space=vmem),     # bias / LN param slab
            pl.BlockSpec(memory_space=vmem),     # small-weight slab (bf16)
            pl.BlockSpec(memory_space=vmem),     # fused QKV weight (bf16)
            pl.BlockSpec(memory_space=pl.ANY),   # wf1 stays in HBM (manual DMA)
            pl.BlockSpec(memory_space=pl.ANY),   # wf2 stays in HBM (manual DMA)
        ],
        out_specs=pl.BlockSpec(memory_space=vmem),
        scratch_shapes=[
            pltpu.VMEM((E, DIM_FF), jnp.bfloat16),
            pltpu.VMEM((DIM_FF, E), jnp.bfloat16),
            pltpu.SemaphoreType.DMA((2,)),
        ],
        compiler_params=pltpu.CompilerParams(vmem_limit_bytes=32 * 1024 * 1024),
    )(x, params["vec"], params["wsm"], params["wqkv"], params["wf1"], params["wf2"])

    return out[:, :3 * SIZE_SPACE].reshape(L, B, 3 * SIZE_SPACE)


if __name__ == "__main__":
    key = jax.random.PRNGKey(0)
    kp, ks, kv, ka = jax.random.split(key, 4)
    params = init_params(kp)

    L, B = 8, 2
    sentences = jax.random.normal(ks, (L, B, DIM_TEXT), jnp.float32)
    video = jax.random.normal(kv, (L, B, DIM_VIDEO), jnp.float32)
    acoustic = jax.random.normal(ka, (L, B, DIM_AUDIO), jnp.float32)

    o = jax.jit(misa_forward)(params, sentences, video, acoustic)
    jax.block_until_ready(o)
    assert o.shape == (L, B, 3 * SIZE_SPACE), o.shape
    assert bool(jnp.all(jnp.isfinite(o)))
    print("KERNEL_OK")
</pallas_src>

<mosaic_0001>
module attributes {stable_mosaic.version = 11 : i64} {
  func.func @_misa_fused_kernel(%arg0: memref<16x128xf32, #tpu.memory_space<vmem>>, %arg1: memref<16x2048xf32, #tpu.memory_space<vmem>>, %arg2: memref<800x192xbf16, #tpu.memory_space<vmem>>, %arg3: memref<192x768xbf16, #tpu.memory_space<vmem>>, %arg4: memref<192x2048xbf16, #tpu.memory_space<any>>, %arg5: memref<2048x192xbf16, #tpu.memory_space<any>>, %arg6: memref<16x128xf32, #tpu.memory_space<vmem>>, %arg7: memref<192x2048xbf16, #tpu.memory_space<vmem>>, %arg8: memref<2048x192xbf16, #tpu.memory_space<vmem>>, %arg9: memref<2x!tpu.dma_semaphore, #tpu.memory_space<semaphore_mem>>) attributes {dimension_semantics = [], scalar_prefetch = 0 : i64, scratch_operands = 3 : i64, tpu.core_type = #tpu.core_type<tc>} {
    %c0_i32 = arith.constant 0 : i32
    %0 = tpu.memref_slice %arg9[%c0_i32] : memref<2x!tpu.dma_semaphore, #tpu.memory_space<semaphore_mem>> -> memref<1x!tpu.dma_semaphore, #tpu.memory_space<semaphore_mem>>
    %1 = tpu.memref_squeeze %0 : memref<1x!tpu.dma_semaphore, #tpu.memory_space<semaphore_mem>> -> memref<!tpu.dma_semaphore, #tpu.memory_space<semaphore_mem>>
    tpu.enqueue_dma source(%arg4 : memref<192x2048xbf16, #tpu.memory_space<any>>) target(%arg7 : memref<192x2048xbf16, #tpu.memory_space<vmem>>) target_semaphore(%1 : memref<!tpu.dma_semaphore, #tpu.memory_space<semaphore_mem>>)
    %c1_i32 = arith.constant 1 : i32
    %2 = tpu.memref_slice %arg9[%c1_i32] : memref<2x!tpu.dma_semaphore, #tpu.memory_space<semaphore_mem>> -> memref<1x!tpu.dma_semaphore, #tpu.memory_space<semaphore_mem>>
    %3 = tpu.memref_squeeze %2 : memref<1x!tpu.dma_semaphore, #tpu.memory_space<semaphore_mem>> -> memref<!tpu.dma_semaphore, #tpu.memory_space<semaphore_mem>>
    tpu.enqueue_dma source(%arg5 : memref<2048x192xbf16, #tpu.memory_space<any>>) target(%arg8 : memref<2048x192xbf16, #tpu.memory_space<vmem>>) target_semaphore(%3 : memref<!tpu.dma_semaphore, #tpu.memory_space<semaphore_mem>>)
    %c0 = arith.constant 0 : index
    %c0_0 = arith.constant 0 : index
    %4 = vector.load %arg0[%c0, %c0_0] : memref<16x128xf32, #tpu.memory_space<vmem>>, vector<16x128xf32>
    %5 = arith.truncf %4 : vector<16x128xf32> to vector<16x128xbf16>
    %c0_1 = arith.constant 0 : index
    %c0_2 = arith.constant 0 : index
    %6 = vector.load %arg2[%c0_1, %c0_2] : memref<800x192xbf16, #tpu.memory_space<vmem>>, vector<128x96xbf16>
    %cst = arith.constant dense<0.000000e+00> : vector<16x96xf32>
    %7 = tpu.matmul %5, %6, %cst {dimension_numbers = #tpu.dot_dimension_numbers<[1], [0], [0], [1], [0, 0, 1, 1], [], []>} : vector<16x128xbf16>, vector<128x96xbf16>, vector<16x96xf32> -> vector<16x96xf32>
    %c0_3 = arith.constant 0 : index
    %c0_4 = arith.constant 0 : index
    %8 = vector.load %arg1[%c0_3, %c0_4] : memref<16x2048xf32, #tpu.memory_space<vmem>>, vector<1x96xf32>
    %9 = vector.broadcast %8 : vector<1x96xf32> to vector<16x96xf32>
    %10 = arith.addf %7, %9 : vector<16x96xf32>
    %cst_5 = arith.constant 0.000000e+00 : f32
    %11 = vector.broadcast %cst_5 : f32 to vector<16x96xf32>
    %12 = arith.maximumf %10, %11 : vector<16x96xf32>
    %c1 = arith.constant 1 : index
    %c0_6 = arith.constant 0 : index
    %13 = vector.load %arg1[%c1, %c0_6] : memref<16x2048xf32, #tpu.memory_space<vmem>>, vector<1x96xf32>
    %c2 = arith.constant 2 : index
    %c0_7 = arith.constant 0 : index
    %14 = vector.load %arg1[%c2, %c0_7] : memref<16x2048xf32, #tpu.memory_space<vmem>>, vector<1x96xf32>
    %15 = vector.extract_strided_slice %12 {offsets = [0, 0], sizes = [16, 32], strides = [1, 1]} : vector<16x96xf32> to vector<16x32xf32>
    %16 = vector.extract_strided_slice %13 {offsets = [0, 0], sizes = [1, 32], strides = [1, 1]} : vector<1x96xf32> to vector<1x32xf32>
    %17 = vector.extract_strided_slice %14 {offsets = [0, 0], sizes = [1, 32], strides = [1, 1]} : vector<1x96xf32> to vector<1x32xf32>
    %cst_8 = arith.constant dense<0.000000e+00> : vector<16xf32>
    %18 = vector.multi_reduction <add>, %15, %cst_8 [1] : vector<16x32xf32> to vector<16xf32>
    %19 = vector.shape_cast %18 : vector<16xf32> to vector<16x1xf32>
    %cst_9 = arith.constant 3.200000e+01 : f32
    %20 = vector.broadcast %cst_9 : f32 to vector<16x1xf32>
    %21 = arith.divf %19, %20 : vector<16x1xf32>
    %22 = vector.broadcast %21 : vector<16x1xf32> to vector<16x32xf32>
    %23 = arith.subf %15, %22 : vector<16x32xf32>
    %24 = arith.mulf %23, %23 : vector<16x32xf32>
    %cst_10 = arith.constant dense<0.000000e+00> : vector<16xf32>
    %25 = vector.multi_reduction <add>, %24, %cst_10 [1] : vector<16x32xf32> to vector<16xf32>
    %26 = vector.shape_cast %25 : vector<16xf32> to vector<16x1xf32>
    %cst_11 = arith.constant 3.200000e+01 : f32
    %27 = vector.broadcast %cst_11 : f32 to vector<16x1xf32>
    %28 = arith.divf %26, %27 : vector<16x1xf32>
    %29 = vector.broadcast %21 : vector<16x1xf32> to vector<16x32xf32>
    %30 = arith.subf %15, %29 : vector<16x32xf32>
    %cst_12 = arith.constant 9.99999974E-6 : f32
    %31 = vector.broadcast %cst_12 : f32 to vector<16x1xf32>
    %32 = arith.addf %28, %31 : vector<16x1xf32>
    %33 = math.rsqrt %32 : vector<16x1xf32>
    %34 = vector.broadcast %33 : vector<16x1xf32> to vector<16x32xf32>
    %35 = arith.mulf %30, %34 : vector<16x32xf32>
    %36 = vector.broadcast %16 : vector<1x32xf32> to vector<16x32xf32>
    %37 = arith.mulf %35, %36 : vector<16x32xf32>
    %38 = vector.broadcast %17 : vector<1x32xf32> to vector<16x32xf32>
    %39 = arith.addf %37, %38 : vector<16x32xf32>
    %40 = vector.extract_strided_slice %12 {offsets = [0, 32], sizes = [16, 32], strides = [1, 1]} : vector<16x96xf32> to vector<16x32xf32>
    %41 = vector.extract_strided_slice %13 {offsets = [0, 32], sizes = [1, 32], strides = [1, 1]} : vector<1x96xf32> to vector<1x32xf32>
    %42 = vector.extract_strided_slice %14 {offsets = [0, 32], sizes = [1, 32], strides = [1, 1]} : vector<1x96xf32> to vector<1x32xf32>
    %cst_13 = arith.constant dense<0.000000e+00> : vector<16xf32>
    %43 = vector.multi_reduction <add>, %40, %cst_13 [1] : vector<16x32xf32> to vector<16xf32>
    %44 = vector.shape_cast %43 : vector<16xf32> to vector<16x1xf32>
    %cst_14 = arith.constant 3.200000e+01 : f32
    %45 = vector.broadcast %cst_14 : f32 to vector<16x1xf32>
    %46 = arith.divf %44, %45 : vector<16x1xf32>
    %47 = vector.broadcast %46 : vector<16x1xf32> to vector<16x32xf32>
    %48 = arith.subf %40, %47 : vector<16x32xf32>
    %49 = arith.mulf %48, %48 : vector<16x32xf32>
    %cst_15 = arith.constant dense<0.000000e+00> : vector<16xf32>
    %50 = vector.multi_reduction <add>, %49, %cst_15 [1] : vector<16x32xf32> to vector<16xf32>
    %51 = vector.shape_cast %50 : vector<16xf32> to vector<16x1xf32>
    %cst_16 = arith.constant 3.200000e+01 : f32
    %52 = vector.broadcast %cst_16 : f32 to vector<16x1xf32>
    %53 = arith.divf %51, %52 : vector<16x1xf32>
    %54 = vector.broadcast %46 : vector<16x1xf32> to vector<16x32xf32>
    %55 = arith.subf %40, %54 : vector<16x32xf32>
    %cst_17 = arith.constant 9.99999974E-6 : f32
    %56 = vector.broadcast %cst_17 : f32 to vector<16x1xf32>
    %57 = arith.addf %53, %56 : vector<16x1xf32>
    %58 = math.rsqrt %57 : vector<16x1xf32>
    %59 = vector.broadcast %58 : vector<16x1xf32> to vector<16x32xf32>
    %60 = arith.mulf %55, %59 : vector<16x32xf32>
    %61 = vector.broadcast %41 : vector<1x32xf32> to vector<16x32xf32>
    %62 = arith.mulf %60, %61 : vector<16x32xf32>
    %63 = vector.broadcast %42 : vector<1x32xf32> to vector<16x32xf32>
    %64 = arith.addf %62, %63 : vector<16x32xf32>
    %65 = vector.extract_strided_slice %12 {offsets = [0, 64], sizes = [16, 32], strides = [1, 1]} : vector<16x96xf32> to vector<16x32xf32>
    %66 = vector.extract_strided_slice %13 {offsets = [0, 64], sizes = [1, 32], strides = [1, 1]} : vector<1x96xf32> to vector<1x32xf32>
    %67 = vector.extract_strided_slice %14 {offsets = [0, 64], sizes = [1, 32], strides = [1, 1]} : vector<1x96xf32> to vector<1x32xf32>
    %cst_18 = arith.constant dense<0.000000e+00> : vector<16xf32>
    %68 = vector.multi_reduction <add>, %65, %cst_18 [1] : vector<16x32xf32> to vector<16xf32>
    %69 = vector.shape_cast %68 : vector<16xf32> to vector<16x1xf32>
    %cst_19 = arith.constant 3.200000e+01 : f32
    %70 = vector.broadcast %cst_19 : f32 to vector<16x1xf32>
    %71 = arith.divf %69, %70 : vector<16x1xf32>
    %72 = vector.broadcast %71 : vector<16x1xf32> to vector<16x32xf32>
    %73 = arith.subf %65, %72 : vector<16x32xf32>
    %74 = arith.mulf %73, %73 : vector<16x32xf32>
    %cst_20 = arith.constant dense<0.000000e+00> : vector<16xf32>
    %75 = vector.multi_reduction <add>, %74, %cst_20 [1] : vector<16x32xf32> to vector<16xf32>
    %76 = vector.shape_cast %75 : vector<16xf32> to vector<16x1xf32>
    %cst_21 = arith.constant 3.200000e+01 : f32
    %77 = vector.broadcast %cst_21 : f32 to vector<16x1xf32>
    %78 = arith.divf %76, %77 : vector<16x1xf32>
    %79 = vector.broadcast %71 : vector<16x1xf32> to vector<16x32xf32>
    %80 = arith.subf %65, %79 : vector<16x32xf32>
    %cst_22 = arith.constant 9.99999974E-6 : f32
    %81 = vector.broadcast %cst_22 : f32 to vector<16x1xf32>
    %82 = arith.addf %78, %81 : vector<16x1xf32>
    %83 = math.rsqrt %82 : vector<16x1xf32>
    %84 = vector.broadcast %83 : vector<16x1xf32> to vector<16x32xf32>
    %85 = arith.mulf %80, %84 : vector<16x32xf32>
    %86 = vector.broadcast %66 : vector<1x32xf32> to vector<16x32xf32>
    %87 = arith.mulf %85, %86 : vector<16x32xf32>
    %88 = vector.broadcast %67 : vector<1x32xf32> to vector<16x32xf32>
    %89 = arith.addf %87, %88 : vector<16x32xf32>
    %90 = tpu.concatenate %39, %64, %89 in 1 : vector<16x32xf32>, vector<16x32xf32>, vector<16x32xf32> -> vector<16x96xf32>
    %91 = arith.truncf %90 : vector<16x96xf32> to vector<16x96xbf16>
    %c128 = arith.constant 128 : index
    %c0_23 = arith.constant 0 : index
    %92 = vector.load %arg2[%c128, %c0_23] : memref<800x192xbf16, #tpu.memory_space<vmem>>, vector<96x192xbf16>
    %cst_24 = arith.constant dense<0.000000e+00> : vector<16x192xf32>
    %93 = tpu.matmul %91, %92, %cst_24 {dimension_numbers = #tpu.dot_dimension_numbers<[1], [0], [0], [1], [0, 0, 1, 1], [], []>} : vector<16x96xbf16>, vector<96x192xbf16>, vector<16x192xf32> -> vector<16x192xf32>
    %c3 = arith.constant 3 : index
    %c0_25 = arith.constant 0 : index
    %94 = vector.load %arg1[%c3, %c0_25] : memref<16x2048xf32, #tpu.memory_space<vmem>>, vector<1x192xf32>
    %95 = vector.broadcast %94 : vector<1x192xf32> to vector<16x192xf32>
    %96 = arith.addf %93, %95 : vector<16x192xf32>
    %97 = arith.negf %96 : vector<16x192xf32>
    %98 = math.exp %97 : vector<16x192xf32>
    %cst_26 = arith.constant 1.000000e+00 : f32
    %99 = vector.broadcast %cst_26 : f32 to vector<16x192xf32>
    %100 = arith.addf %99, %98 : vector<16x192xf32>
    %101 = arith.divf %99, %100 : vector<16x192xf32>
    %102 = arith.truncf %101 : vector<16x192xf32> to vector<16x192xbf16>
    %c0_27 = arith.constant 0 : index
    %c0_28 = arith.constant 0 : index
    %103 = vector.load %arg3[%c0_27, %c0_28] : memref<192x768xbf16, #tpu.memory_space<vmem>>, vector<192x768xbf16>
    %cst_29 = arith.constant dense<0.000000e+00> : vector<16x768xf32>
    %104 = tpu.matmul %102, %103, %cst_29 {dimension_numbers = #tpu.dot_dimension_numbers<[1], [0], [0], [1], [0, 0, 1, 1], [], []>} : vector<16x192xbf16>, vector<192x768xbf16>, vector<16x768xf32> -> vector<16x768xf32>
    %c4 = arith.constant 4 : index
    %c0_30 = arith.constant 0 : index
    %105 = vector.load %arg1[%c4, %c0_30] : memref<16x2048xf32, #tpu.memory_space<vmem>>, vector<1x768xf32>
    %106 = vector.broadcast %105 : vector<1x768xf32> to vector<16x768xf32>
    %107 = arith.addf %104, %106 : vector<16x768xf32>
    %108 = tpu.iota {dimensions = array<i32: 0>} : vector<16x16xi32>
    %109 = tpu.iota {dimensions = array<i32: 1>} : vector<16x16xi32>
    %c2_i32 = arith.constant 2 : i32
    %c0_i32_31 = arith.constant 0 : i32
    %110 = arith.cmpi eq, %c2_i32, %c0_i32_31 : i32
    %c1_i32_32 = arith.constant 1 : i32
    %111 = arith.select %110, %c1_i32_32, %c2_i32 : i32
    %112 = vector.broadcast %111 : i32 to vector<16x16xi32>
    %113 = arith.remsi %108, %112 : vector<16x16xi32>
    %c0_i32_33 = arith.constant 0 : i32
    %114 = vector.broadcast %c0_i32_33 : i32 to vector<16x16xi32>
    %115 = arith.cmpi ne, %113, %114 : vector<16x16xi32>
    %c0_i32_34 = arith.constant 0 : i32
    %116 = vector.broadcast %c0_i32_34 : i32 to vector<16x16xi32>
    %117 = arith.cmpi slt, %113, %116 : vector<16x16xi32>
    %c0_i32_35 = arith.constant 0 : i32
    %118 = arith.cmpi slt, %111, %c0_i32_35 : i32
    %119 = vector.broadcast %118 : i1 to vector<16x16xi1>
    %120 = vector.broadcast %119 : vector<16x16xi1> to vector<16x16xi1>
    %121 = arith.xori %117, %120 : vector<16x16xi1>
    %122 = arith.andi %121, %115 : vector<16x16xi1>
    %123 = vector.broadcast %111 : i32 to vector<16x16xi32>
    %124 = arith.addi %113, %123 : vector<16x16xi32>
    %125 = arith.select %122, %124, %113 : vector<16x16xi1>, vector<16x16xi32>
    %c2_i32_36 = arith.constant 2 : i32
    %c0_i32_37 = arith.constant 0 : i32
    %126 = arith.cmpi eq, %c2_i32_36, %c0_i32_37 : i32
    %c1_i32_38 = arith.constant 1 : i32
    %127 = arith.select %126, %c1_i32_38, %c2_i32_36 : i32
    %128 = vector.broadcast %127 : i32 to vector<16x16xi32>
    %129 = arith.remsi %109, %128 : vector<16x16xi32>
    %c0_i32_39 = arith.constant 0 : i32
    %130 = vector.broadcast %c0_i32_39 : i32 to vector<16x16xi32>
    %131 = arith.cmpi ne, %129, %130 : vector<16x16xi32>
    %c0_i32_40 = arith.constant 0 : i32
    %132 = vector.broadcast %c0_i32_40 : i32 to vector<16x16xi32>
    %133 = arith.cmpi slt, %129, %132 : vector<16x16xi32>
    %c0_i32_41 = arith.constant 0 : i32
    %134 = arith.cmpi slt, %127, %c0_i32_41 : i32
    %135 = vector.broadcast %134 : i1 to vector<16x16xi1>
    %136 = vector.broadcast %135 : vector<16x16xi1> to vector<16x16xi1>
    %137 = arith.xori %133, %136 : vector<16x16xi1>
    %138 = arith.andi %137, %131 : vector<16x16xi1>
    %139 = vector.broadcast %127 : i32 to vector<16x16xi32>
    %140 = arith.addi %129, %139 : vector<16x16xi32>
    %141 = arith.select %138, %140, %129 : vector<16x16xi1>, vector<16x16xi32>
    %142 = arith.cmpi eq, %125, %141 : vector<16x16xi32>
    %cst_42 = arith.constant 0.000000e+00 : f32
    %143 = vector.broadcast %cst_42 : f32 to vector<16x32xf32>
    %144 = vector.extract_strided_slice %107 {offsets = [0, 0], sizes = [16, 96], strides = [1, 1]} : vector<16x768xf32> to vector<16x96xf32>
    %145 = vector.extract_strided_slice %107 {offsets = [0, 256], sizes = [16, 96], strides = [1, 1]} : vector<16x768xf32> to vector<16x96xf32>
    %146 = vector.extract_strided_slice %107 {offsets = [0, 512], sizes = [16, 96], strides = [1, 1]} : vector<16x768xf32> to vector<16x96xf32>
    %cst_43 = arith.constant dense<0.000000e+00> : vector<16x16xf32>
    %147 = tpu.matmul %144, %145, %cst_43 {dimension_numbers = #tpu.dot_dimension_numbers<[1], [1], [0], [0], [0, 0, 1, 0], [], []>} : vector<16x96xf32>, vector<16x96xf32>, vector<16x16xf32> -> vector<16x16xf32>
    %cst_44 = arith.constant -1.000000e+30 : f32
    %148 = vector.broadcast %cst_44 : f32 to vector<16x16xf32>
    %149 = arith.select %142, %147, %148 : vector<16x16xi1>, vector<16x16xf32>
    %cst_45 = arith.constant dense<0xFF800000> : vector<16xf32>
    %150 = vector.multi_reduction <maximumf>, %149, %cst_45 [1] : vector<16x16xf32> to vector<16xf32>
    %151 = vector.shape_cast %150 : vector<16xf32> to vector<16x1xf32>
    %152 = vector.broadcast %151 : vector<16x1xf32> to vector<16x16xf32>
    %153 = arith.subf %149, %152 : vector<16x16xf32>
    %154 = math.exp %153 : vector<16x16xf32>
    %cst_46 = arith.constant dense<0.000000e+00> : vector<16xf32>
    %155 = vector.multi_reduction <add>, %154, %cst_46 [1] : vector<16x16xf32> to vector<16xf32>
    %156 = vector.shape_cast %155 : vector<16xf32> to vector<16x1xf32>
    %157 = tpu.reciprocal %156 {approx = true} : vector<16x1xf32> -> vector<16x1xf32>
    %158 = vector.broadcast %157 : vector<16x1xf32> to vector<16x16xf32>
    %159 = arith.mulf %154, %158 : vector<16x16xf32>
    %cst_47 = arith.constant dense<0.000000e+00> : vector<16x96xf32>
    %160 = tpu.matmul %159, %146, %cst_47 {dimension_numbers = #tpu.dot_dimension_numbers<[1], [0], [0], [1], [0, 0, 1, 1], [], []>} : vector<16x16xf32>, vector<16x96xf32>, vector<16x96xf32> -> vector<16x96xf32>
    %161 = vector.extract_strided_slice %107 {offsets = [0, 128], sizes = [16, 96], strides = [1, 1]} : vector<16x768xf32> to vector<16x96xf32>
    %162 = vector.extract_strided_slice %107 {offsets = [0, 384], sizes = [16, 96], strides = [1, 1]} : vector<16x768xf32> to vector<16x96xf32>
    %163 = vector.extract_strided_slice %107 {offsets = [0, 640], sizes = [16, 96], strides = [1, 1]} : vector<16x768xf32> to vector<16x96xf32>
    %cst_48 = arith.constant dense<0.000000e+00> : vector<16x16xf32>
    %164 = tpu.matmul %161, %162, %cst_48 {dimension_numbers = #tpu.dot_dimension_numbers<[1], [1], [0], [0], [0, 0, 1, 0], [], []>} : vector<16x96xf32>, vector<16x96xf32>, vector<16x16xf32> -> vector<16x16xf32>
    %cst_49 = arith.constant -1.000000e+30 : f32
    %165 = vector.broadcast %cst_49 : f32 to vector<16x16xf32>
    %166 = arith.select %142, %164, %165 : vector<16x16xi1>, vector<16x16xf32>
    %cst_50 = arith.constant dense<0xFF800000> : vector<16xf32>
    %167 = vector.multi_reduction <maximumf>, %166, %cst_50 [1] : vector<16x16xf32> to vector<16xf32>
    %168 = vector.shape_cast %167 : vector<16xf32> to vector<16x1xf32>
    %169 = vector.broadcast %168 : vector<16x1xf32> to vector<16x16xf32>
    %170 = arith.subf %166, %169 : vector<16x16xf32>
    %171 = math.exp %170 : vector<16x16xf32>
    %cst_51 = arith.constant dense<0.000000e+00> : vector<16xf32>
    %172 = vector.multi_reduction <add>, %171, %cst_51 [1] : vector<16x16xf32> to vector<16xf32>
    %173 = vector.shape_cast %172 : vector<16xf32> to vector<16x1xf32>
    %174 = tpu.reciprocal %173 {approx = true} : vector<16x1xf32> -> vector<16x1xf32>
    %175 = vector.broadcast %174 : vector<16x1xf32> to vector<16x16xf32>
    %176 = arith.mulf %171, %175 : vector<16x16xf32>
    %cst_52 = arith.constant dense<0.000000e+00> : vector<16x96xf32>
    %177 = tpu.matmul %176, %163, %cst_52 {dimension_numbers = #tpu.dot_dimension_numbers<[1], [0], [0], [1], [0, 0, 1, 1], [], []>} : vector<16x16xf32>, vector<16x96xf32>, vector<16x96xf32> -> vector<16x96xf32>
    %178 = tpu.concatenate %160, %143, %177, %143 in 1 : vector<16x96xf32>, vector<16x32xf32>, vector<16x96xf32>, vector<16x32xf32> -> vector<16x256xf32>
    %179 = arith.truncf %178 : vector<16x256xf32> to vector<16x256xbf16>
    %c224 = arith.constant 224 : index
    %c0_53 = arith.constant 0 : index
    %180 = vector.load %arg2[%c224, %c0_53] : memref<800x192xbf16, #tpu.memory_space<vmem>>, vector<256x192xbf16>
    %cst_54 = arith.constant dense<0.000000e+00> : vector<16x192xf32>
    %181 = tpu.matmul %179, %180, %cst_54 {dimension_numbers = #tpu.dot_dimension_numbers<[1], [0], [0], [1], [0, 0, 1, 1], [], []>} : vector<16x256xbf16>, vector<256x192xbf16>, vector<16x192xf32> -> vector<16x192xf32>
    %c5 = arith.constant 5 : index
    %c0_55 = arith.constant 0 : index
    %182 = vector.load %arg1[%c5, %c0_55] : memref<16x2048xf32, #tpu.memory_space<vmem>>, vector<1x192xf32>
    %183 = vector.broadcast %182 : vector<1x192xf32> to vector<16x192xf32>
    %184 = arith.addf %181, %183 : vector<16x192xf32>
    %185 = arith.addf %101, %184 : vector<16x192xf32>
    %c6 = arith.constant 6 : index
    %c0_56 = arith.constant 0 : index
    %186 = vector.load %arg1[%c6, %c0_56] : memref<16x2048xf32, #tpu.memory_space<vmem>>, vector<1x192xf32>
    %c7 = arith.constant 7 : index
    %c0_57 = arith.constant 0 : index
    %187 = vector.load %arg1[%c7, %c0_57] : memref<16x2048xf32, #tpu.memory_space<vmem>>, vector<1x192xf32>
    %cst_58 = arith.constant dense<0.000000e+00> : vector<16xf32>
    %188 = vector.multi_reduction <add>, %185, %cst_58 [1] : vector<16x192xf32> to vector<16xf32>
    %189 = vector.shape_cast %188 : vector<16xf32> to vector<16x1xf32>
    %cst_59 = arith.constant 1.920000e+02 : f32
    %190 = vector.broadcast %cst_59 : f32 to vector<16x1xf32>
    %191 = arith.divf %189, %190 : vector<16x1xf32>
    %192 = vector.broadcast %191 : vector<16x1xf32> to vector<16x192xf32>
    %193 = arith.subf %185, %192 : vector<16x192xf32>
    %194 = arith.mulf %193, %193 : vector<16x192xf32>
    %cst_60 = arith.constant dense<0.000000e+00> : vector<16xf32>
    %195 = vector.multi_reduction <add>, %194, %cst_60 [1] : vector<16x192xf32> to vector<16xf32>
    %196 = vector.shape_cast %195 : vector<16xf32> to vector<16x1xf32>
    %cst_61 = arith.constant 1.920000e+02 : f32
    %197 = vector.broadcast %cst_61 : f32 to vector<16x1xf32>
    %198 = arith.divf %196, %197 : vector<16x1xf32>
    %199 = vector.broadcast %191 : vector<16x1xf32> to vector<16x192xf32>
    %200 = arith.subf %185, %199 : vector<16x192xf32>
    %cst_62 = arith.constant 9.99999974E-6 : f32
    %201 = vector.broadcast %cst_62 : f32 to vector<16x1xf32>
    %202 = arith.addf %198, %201 : vector<16x1xf32>
    %203 = math.rsqrt %202 : vector<16x1xf32>
    %204 = vector.broadcast %203 : vector<16x1xf32> to vector<16x192xf32>
    %205 = arith.mulf %200, %204 : vector<16x192xf32>
    %206 = vector.broadcast %186 : vector<1x192xf32> to vector<16x192xf32>
    %207 = arith.mulf %205, %206 : vector<16x192xf32>
    %208 = vector.broadcast %187 : vector<1x192xf32> to vector<16x192xf32>
    %209 = arith.addf %207, %208 : vector<16x192xf32>
    %c0_i32_63 = arith.constant 0 : i32
    %210 = tpu.memref_slice %arg9[%c0_i32_63] : memref<2x!tpu.dma_semaphore, #tpu.memory_space<semaphore_mem>> -> memref<1x!tpu.dma_semaphore, #tpu.memory_space<semaphore_mem>>
    %211 = tpu.memref_squeeze %210 : memref<1x!tpu.dma_semaphore, #tpu.memory_space<semaphore_mem>> -> memref<!tpu.dma_semaphore, #tpu.memory_space<semaphore_mem>>
    tpu.wait_dma2 semaphore(%211 : memref<!tpu.dma_semaphore, #tpu.memory_space<semaphore_mem>>) src(%arg4 : memref<192x2048xbf16, #tpu.memory_space<any>>) dst(%arg7 : memref<192x2048xbf16, #tpu.memory_space<vmem>>)
    %c1_i32_64 = arith.constant 1 : i32
    %212 = tpu.memref_slice %arg9[%c1_i32_64] : memref<2x!tpu.dma_semaphore, #tpu.memory_space<semaphore_mem>> -> memref<1x!tpu.dma_semaphore, #tpu.memory_space<semaphore_mem>>
    %213 = tpu.memref_squeeze %212 : memref<1x!tpu.dma_semaphore, #tpu.memory_space<semaphore_mem>> -> memref<!tpu.dma_semaphore, #tpu.memory_space<semaphore_mem>>
    tpu.wait_dma2 semaphore(%213 : memref<!tpu.dma_semaphore, #tpu.memory_space<semaphore_mem>>) src(%arg5 : memref<2048x192xbf16, #tpu.memory_space<any>>) dst(%arg8 : memref<2048x192xbf16, #tpu.memory_space<vmem>>)
    %214 = arith.truncf %209 : vector<16x192xf32> to vector<16x192xbf16>
    %c0_65 = arith.constant 0 : index
    %c0_66 = arith.constant 0 : index
    %215 = vector.load %arg7[%c0_65, %c0_66] : memref<192x2048xbf16, #tpu.memory_space<vmem>>, vector<192x2048xbf16>
    %cst_67 = arith.constant dense<0.000000e+00> : vector<16x2048xf32>
    %216 = tpu.matmul %214, %215, %cst_67 {dimension_numbers = #tpu.dot_dimension_numbers<[1], [0], [0], [1], [0, 0, 1, 1], [], []>} : vector<16x192xbf16>, vector<192x2048xbf16>, vector<16x2048xf32> -> vector<16x2048xf32>
    %c8 = arith.constant 8 : index
    %c0_68 = arith.constant 0 : index
    %217 = vector.load %arg1[%c8, %c0_68] : memref<16x2048xf32, #tpu.memory_space<vmem>>, vector<1x2048xf32>
    %218 = vector.broadcast %217 : vector<1x2048xf32> to vector<16x2048xf32>
    %219 = arith.addf %216, %218 : vector<16x2048xf32>
    %cst_69 = arith.constant 0.000000e+00 : f32
    %220 = vector.broadcast %cst_69 : f32 to vector<16x2048xf32>
    %221 = arith.maximumf %219, %220 : vector<16x2048xf32>
    %222 = arith.truncf %221 : vector<16x2048xf32> to vector<16x2048xbf16>
    %c0_70 = arith.constant 0 : index
    %c0_71 = arith.constant 0 : index
    %223 = vector.load %arg8[%c0_70, %c0_71] : memref<2048x192xbf16, #tpu.memory_space<vmem>>, vector<2048x192xbf16>
    %cst_72 = arith.constant dense<0.000000e+00> : vector<16x192xf32>
    %224 = tpu.matmul %222, %223, %cst_72 {dimension_numbers = #tpu.dot_dimension_numbers<[1], [0], [0], [1], [0, 0, 1, 1], [], []>} : vector<16x2048xbf16>, vector<2048x192xbf16>, vector<16x192xf32> -> vector<16x192xf32>
    %c9 = arith.constant 9 : index
    %c0_73 = arith.constant 0 : index
    %225 = vector.load %arg1[%c9, %c0_73] : memref<16x2048xf32, #tpu.memory_space<vmem>>, vector<1x192xf32>
    %226 = vector.broadcast %225 : vector<1x192xf32> to vector<16x192xf32>
    %227 = arith.addf %224, %226 : vector<16x192xf32>
    %228 = arith.addf %209, %227 : vector<16x192xf32>
    %c10 = arith.constant 10 : index
    %c0_74 = arith.constant 0 : index
    %229 = vector.load %arg1[%c10, %c0_74] : memref<16x2048xf32, #tpu.memory_space<vmem>>, vector<1x192xf32>
    %c11 = arith.constant 11 : index
    %c0_75 = arith.constant 0 : index
    %230 = vector.load %arg1[%c11, %c0_75] : memref<16x2048xf32, #tpu.memory_space<vmem>>, vector<1x192xf32>
    %cst_76 = arith.constant dense<0.000000e+00> : vector<16xf32>
    %231 = vector.multi_reduction <add>, %228, %cst_76 [1] : vector<16x192xf32> to vector<16xf32>
    %232 = vector.shape_cast %231 : vector<16xf32> to vector<16x1xf32>
    %cst_77 = arith.constant 1.920000e+02 : f32
    %233 = vector.broadcast %cst_77 : f32 to vector<16x1xf32>
    %234 = arith.divf %232, %233 : vector<16x1xf32>
    %235 = vector.broadcast %234 : vector<16x1xf32> to vector<16x192xf32>
    %236 = arith.subf %228, %235 : vector<16x192xf32>
    %237 = arith.mulf %236, %236 : vector<16x192xf32>
    %cst_78 = arith.constant dense<0.000000e+00> : vector<16xf32>
    %238 = vector.multi_reduction <add>, %237, %cst_78 [1] : vector<16x192xf32> to vector<16xf32>
    %239 = vector.shape_cast %238 : vector<16xf32> to vector<16x1xf32>
    %cst_79 = arith.constant 1.920000e+02 : f32
    %240 = vector.broadcast %cst_79 : f32 to vector<16x1xf32>
    %241 = arith.divf %239, %240 : vector<16x1xf32>
    %242 = vector.broadcast %234 : vector<16x1xf32> to vector<16x192xf32>
    %243 = arith.subf %228, %242 : vector<16x192xf32>
    %cst_80 = arith.constant 9.99999974E-6 : f32
    %244 = vector.broadcast %cst_80 : f32 to vector<16x1xf32>
    %245 = arith.addf %241, %244 : vector<16x1xf32>
    %246 = math.rsqrt %245 : vector<16x1xf32>
    %247 = vector.broadcast %246 : vector<16x1xf32> to vector<16x192xf32>
    %248 = arith.mulf %243, %247 : vector<16x192xf32>
    %249 = vector.broadcast %229 : vector<1x192xf32> to vector<16x192xf32>
    %250 = arith.mulf %248, %249 : vector<16x192xf32>
    %251 = vector.broadcast %230 : vector<1x192xf32> to vector<16x192xf32>
    %252 = arith.addf %250, %251 : vector<16x192xf32>
    %253 = arith.truncf %252 : vector<16x192xf32> to vector<16x192xbf16>
    %c480 = arith.constant 480 : index
    %c0_81 = arith.constant 0 : index
    %254 = vector.load %arg2[%c480, %c0_81] : memref<800x192xbf16, #tpu.memory_space<vmem>>, vector<192x128xbf16>
    %cst_82 = arith.constant dense<0.000000e+00> : vector<16x128xf32>
    %255 = tpu.matmul %253, %254, %cst_82 {dimension_numbers = #tpu.dot_dimension_numbers<[1], [0], [0], [1], [0, 0, 1, 1], [], []>} : vector<16x192xbf16>, vector<192x128xbf16>, vector<16x128xf32> -> vector<16x128xf32>
    %c12 = arith.constant 12 : index
    %c0_83 = arith.constant 0 : index
    %256 = vector.load %arg1[%c12, %c0_83] : memref<16x2048xf32, #tpu.memory_space<vmem>>, vector<1x128xf32>
    %257 = vector.broadcast %256 : vector<1x128xf32> to vector<16x128xf32>
    %258 = arith.addf %255, %257 : vector<16x128xf32>
    %cst_84 = arith.constant 0.000000e+00 : f32
    %259 = vector.broadcast %cst_84 : f32 to vector<16x128xf32>
    %260 = arith.maximumf %258, %259 : vector<16x128xf32>
    %261 = arith.truncf %260 : vector<16x128xf32> to vector<16x128xbf16>
    %c672 = arith.constant 672 : index
    %c0_85 = arith.constant 0 : index
    %262 = vector.load %arg2[%c672, %c0_85] : memref<800x192xbf16, #tpu.memory_space<vmem>>, vector<128x128xbf16>
    %cst_86 = arith.constant dense<0.000000e+00> : vector<16x128xf32>
    %263 = tpu.matmul %261, %262, %cst_86 {dimension_numbers = #tpu.dot_dimension_numbers<[1], [0], [0], [1], [0, 0, 1, 1], [], []>} : vector<16x128xbf16>, vector<128x128xbf16>, vector<16x128xf32> -> vector<16x128xf32>
    %c13 = arith.constant 13 : index
    %c0_87 = arith.constant 0 : index
    %264 = vector.load %arg1[%c13, %c0_87] : memref<16x2048xf32, #tpu.memory_space<vmem>>, vector<1x128xf32>
    %265 = vector.broadcast %264 : vector<1x128xf32> to vector<16x128xf32>
    %266 = arith.addf %263, %265 : vector<16x128xf32>
    %c0_88 = arith.constant 0 : index
    %c0_89 = arith.constant 0 : index
    %267 = vector.load %arg6[%c0_88, %c0_89] : memref<16x128xf32, #tpu.memory_space<vmem>>, vector<16x128xf32>
    tpu.vector_store %arg6[%c0_88, %c0_89], %266 {strides = array<i32>} : memref<16x128xf32, #tpu.memory_space<vmem>>, vector<16x128xf32>,
    return
  }
}

</mosaic_0001>

<llo_original>
// kernel: misa_forward.1
$region0: #{misa_forward.1}
  #allocation0 [shape = 'u32[]', space=smem, size = 0x4, offset = 0x4, fixed_abs, tag = 'smem constant byte address 0x4 - core index']
  #allocation1 [shape = 'u32[144,128]{1,0:T(1,128)}', space=vmem, size = 0x12000, scoped, tag = 'internal scratch']
  #allocation2 [shape = 'bf16[192,2048]{1,0:T(8,128)(2,1)}', space=vmem, size = 0xc0000, scoped, tag = 'scratch operand']
  #allocation3 [shape = 'bf16[2048,192]{1,0:T(8,128)(2,1)}', space=vmem, size = 0x100000, scoped, tag = 'scratch operand']
  #allocation4 [shape = 's32[2]{0}', space=sflag, size = 0x8, scoped, tag = 'scratch operand']
  #allocation7 [shape = 's32[]', space=sflag, size = 0x4, offset = 0, fixed_abs, tag = 'sflag constant byte address 0x0 - dummy sync flag']
  #allocation8 [shape = 's32[]', space=sflag, size = 0x4, offset = 0, fixed_abs, tag = 'sflag constant byte address 0x0 - dummy sync flag']
  %s0 = inlined_call_operand.vmem [shape: f32[16,128], index: 0, kind: input, shape index: {}]
  %s1 = inlined_call_operand.vmem [shape: f32[16,2048], index: 1, kind: input, shape index: {}]
  %s2 = inlined_call_operand.vmem [shape: bf16[800,192], index: 2, kind: input, shape index: {}]
  %s3 = inlined_call_operand.vmem [shape: bf16[192,768], index: 3, kind: input, shape index: {}]
  %s4 = inlined_call_operand.vmem [shape: bf16[192,2048], index: 4, kind: input, shape index: {}]
  %s5 = inlined_call_operand.vmem [shape: bf16[2048,192], index: 5, kind: input, shape index: {}]
  %s6 = inlined_call_operand.hbm [shape: f32[16,128], index: 6, kind: output, shape index: {}]
  %s7 = sld [smem:[#allocation0]]
  $region94: #{misa_forward.1} parent=0
    _
  %s9 = ssub.s32 1, %s7
  %s10 = scalar_select 0, %s9, %s7
  $region1: #{misa_forward.1} parent=0
    #allocation5 [shape = 'u8[8192]{0}', space=vmem, size = 0x2000, scoped, tag = 'output window, operand 0, single buffered']
    #allocation6 [shape = 's32[1]{0}', space=sflag, size = 0x4, scoped, tag = 'scoped memory for misa_forward.1']
    %11 = vsyncpa [#allocation6], 0
    // Predicated region
    $region2: #{misa_forward.1} parent=1 // pred_check
      _
    $region3: #{misa_forward.1} parent=1 // pred_check_branch
      %13 = sbr.rel (0) target = $region5
    $region4: #{misa_forward.1} parent=1 // pred_region
      _
    $region5: #{misa_forward.1} parent=1 // pred_fallthru
      _
    // Predicated region
    $region6: #{misa_forward.1} parent=1 // pred_check
      _
    $region7: #{misa_forward.1} parent=1 // pred_check_branch
      %15 = sbr.rel (0) target = $region9
    $region8: #{misa_forward.1} parent=1 // pred_region
      _
    $region9: #{misa_forward.1} parent=1 // pred_fallthru
      _
    // Predicated region
    $region10: #{misa_forward.1} parent=1 // pred_check
      _
    $region11: #{misa_forward.1} parent=1 // pred_check_branch
      %17 = sbr.rel (0) target = $region13
    $region12: #{misa_forward.1} parent=1 // pred_region
      _
    $region13: #{misa_forward.1} parent=1 // pred_fallthru
      _
    // Predicated region
    $region14: #{misa_forward.1} parent=1 // pred_check
      _
    $region15: #{misa_forward.1} parent=1 // pred_check_branch
      %19 = sbr.rel (0) target = $region17
    $region16: #{misa_forward.1} parent=1 // pred_region
      _
    $region17: #{misa_forward.1} parent=1 // pred_fallthru
      _
    %p22 = scmp.lt.u32.totalorder 1536, 8
    %p23 = pneg %p22
    // Predicated region
    $region18: #{misa_forward.1} parent=1 // pred_check
      _
    $region19: #{misa_forward.1} parent=1 // pred_check_branch
      %25 = sbr.rel (%p22) target = $region21
    $region20: #{misa_forward.1} parent=1 // pred_region
      %s41 = sand.u32 1536, 7
      %p42 = scmp.eq.s32.totalorder %s41, 0
      // Predicated region
      $region33: #{misa_forward.1} parent=20 // pred_check
        %p43 = pneg %p42
      $region34: #{misa_forward.1} parent=20 // pred_check_branch
        %45 = sbr.rel (%p43) target = $region36
      $region35: #{misa_forward.1} parent=20 // pred_region
        loop: start=0, step=1, limit=1
        $region37: #{misa_forward.1} parent=35 // loop_pre_header
          _
        $region38: #{misa_forward.1} parent=35 // loop_header
          %s47 = sphi 0, %s51
          %p48 = scmp.ge.s32.totalorder %s47, 1
          %s52 = sphi %s4, %s4
          %s53 = sphi [#allocation2], [#allocation2]
        $region39: #{misa_forward.1} parent=35 // loop_header_branch
          %50 = sbr.rel (%p48) target = $region43
        $region40: #{misa_forward.1} parent=35 // loop_body
          %v54 = vld [vmem:[%s52] sm:$0xff]
          %55 = vst [vmem:[%s53] sm:$0xff] %v54
          %v56 = vld [vmem:[%s52 + $0x8] sm:$0xff]
          %57 = vst [vmem:[%s53 + $0x8] sm:$0xff] %v56
          %v58 = vld [vmem:[%s52 + $0x10] sm:$0xff]
          %59 = vst [vmem:[%s53 + $0x10] sm:$0xff] %v58
          %v60 = vld [vmem:[%s52 + $0x18] sm:$0xff]
          %61 = vst [vmem:[%s53 + $0x18] sm:$0xff] %v60
          %v62 = vld [vmem:[%s52 + $0x20] sm:$0xff]
          %63 = vst [vmem:[%s53 + $0x20] sm:$0xff] %v62
          %v64 = vld [vmem:[%s52 + $0x28] sm:$0xff]
          %65 = vst [vmem:[%s53 + $0x28] sm:$0xff] %v64
          %v66 = vld [vmem:[%s52 + $0x30] sm:$0xff]
          %67 = vst [vmem:[%s53 + $0x30] sm:$0xff] %v66
          %v68 = vld [vmem:[%s52 + $0x38] sm:$0xff]
          %69 = vst [vmem:[%s53 + $0x38] sm:$0xff] %v68
          %v70 = vld [vmem:[%s52 + $0x40] sm:$0xff]
          %71 = vst [vmem:[%s53 + $0x40] sm:$0xff] %v70
          %v72 = vld [vmem:[%s52 + $0x48] sm:$0xff]
          %73 = vst [vmem:[%s53 + $0x48] sm:$0xff] %v72
          %v74 = vld [vmem:[%s52 + $0x50] sm:$0xff]
          %75 = vst [vmem:[%s53 + $0x50] sm:$0xff] %v74
          %v76 = vld [vmem:[%s52 + $0x58] sm:$0xff]
          %77 = vst [vmem:[%s53 + $0x58] sm:$0xff] %v76
          %v78 = vld [vmem:[%s52 + $0x60] sm:$0xff]
          %79 = vst [vmem:[%s53 + $0x60] sm:$0xff] %v78
          %v80 = vld [vmem:[%s52 + $0x68] sm:$0xff]
          %81 = vst [vmem:[%s53 + $0x68] sm:$0xff] %v80
          %v82 = vld [vmem:[%s52 + $0x70] sm:$0xff]
          %83 = vst [vmem:[%s53 + $0x70] sm:$0xff] %v82
          %v84 = vld [vmem:[%s52 + $0x78] sm:$0xff]
          %85 = vst [vmem:[%s53 + $0x78] sm:$0xff] %v84
          %v86 = vld [vmem:[%s52 + $0x80] sm:$0xff]
          %87 = vst [vmem:[%s53 + $0x80] sm:$0xff] %v86
          %v88 = vld [vmem:[%s52 + $0x88] sm:$0xff]
          %89 = vst [vmem:[%s53 + $0x88] sm:$0xff] %v88
          %v90 = vld [vmem:[%s52 + $0x90] sm:$0xff]
          %91 = vst [vmem:[%s53 + $0x90] sm:$0xff] %v90
          %v92 = vld [vmem:[%s52 + $0x98] sm:$0xff]
          %93 = vst [vmem:[%s53 + $0x98] sm:$0xff] %v92
          %v94 = vld [vmem:[%s52 + $0xa0] sm:$0xff]
          %95 = vst [vmem:[%s53 + $0xa0] sm:$0xff] %v94
          %v96 = vld [vmem:[%s52 + $0xa8] sm:$0xff]
          %97 = vst [vmem:[%s53 + $0xa8] sm:$0xff] %v96
          %v98 = vld [vmem:[%s52 + $0xb0] sm:$0xff]
          %99 = vst [vmem:[%s53 + $0xb0] sm:$0xff] %v98
          %v100 = vld [vmem:[%s52 + $0xb8] sm:$0xff]
          %101 = vst [vmem:[%s53 + $0xb8] sm:$0xff] %v100
          %v102 = vld [vmem:[%s52 + $0xc0] sm:$0xff]
          %103 = vst [vmem:[%s53 + $0xc0] sm:$0xff] %v102
          %v104 = vld [vmem:[%s52 + $0xc8] sm:$0xff]
          %105 = vst [vmem:[%s53 + $0xc8] sm:$0xff] %v104
          %v106 = vld [vmem:[%s52 + $0xd0] sm:$0xff]
          %107 = vst [vmem:[%s53 + $0xd0] sm:$0xff] %v106
          %v108 = vld [vmem:[%s52 + $0xd8] sm:$0xff]
          %109 = vst [vmem:[%s53 + $0xd8] sm:$0xff] %v108
          %v110 = vld [vmem:[%s52 + $0xe0] sm:$0xff]
          %111 = vst [vmem:[%s53 + $0xe0] sm:$0xff] %v110
          %v112 = vld [vmem:[%s52 + $0xe8] sm:$0xff]
          %113 = vst [vmem:[%s53 + $0xe8] sm:$0xff] %v112
          %v114 = vld [vmem:[%s52 + $0xf0] sm:$0xff]
          %115 = vst [vmem:[%s53 + $0xf0] sm:$0xff] %v114
          %v116 = vld [vmem:[%s52 + $0xf8] sm:$0xff]
          %117 = vst [vmem:[%s53 + $0xf8] sm:$0xff] %v116
          %v118 = vld [vmem:[%s52 + $0x100] sm:$0xff]
          %119 = vst [vmem:[%s53 + $0x100] sm:$0xff] %v118
          %v120 = vld [vmem:[%s52 + $0x108] sm:$0xff]
          %121 = vst [vmem:[%s53 + $0x108] sm:$0xff] %v120
          %v122 = vld [vmem:[%s52 + $0x110] sm:$0xff]
          %123 = vst [vmem:[%s53 + $0x110] sm:$0xff] %v122
          %v124 = vld [vmem:[%s52 + $0x118] sm:$0xff]
          %125 = vst [vmem:[%s53 + $0x118] sm:$0xff] %v124
          %v126 = vld [vmem:[%s52 + $0x120] sm:$0xff]
          %127 = vst [vmem:[%s53 + $0x120] sm:$0xff] %v126
          %v128 = vld [vmem:[%s52 + $0x128] sm:$0xff]
          %129 = vst [vmem:[%s53 + $0x128] sm:$0xff] %v128
          %v130 = vld [vmem:[%s52 + $0x130] sm:$0xff]
          %131 = vst [vmem:[%s53 + $0x130] sm:$0xff] %v130
          %v132 = vld [vmem:[%s52 + $0x138] sm:$0xff]
          %133 = vst [vmem:[%s53 + $0x138] sm:$0xff] %v132
          %v134 = vld [vmem:[%s52 + $0x140] sm:$0xff]
          %135 = vst [vmem:[%s53 + $0x140] sm:$0xff] %v134
          %v136 = vld [vmem:[%s52 + $0x148] sm:$0xff]
          %137 = vst [vmem:[%s53 + $0x148] sm:$0xff] %v136
          %v138 = vld [vmem:[%s52 + $0x150] sm:$0xff]
          %139 = vst [vmem:[%s53 + $0x150] sm:$0xff] %v138
          %v140 = vld [vmem:[%s52 + $0x158] sm:$0xff]
          %141 = vst [vmem:[%s53 + $0x158] sm:$0xff] %v140
          %v142 = vld [vmem:[%s52 + $0x160] sm:$0xff]
          %143 = vst [vmem:[%s53 + $0x160] sm:$0xff] %v142
          %v144 = vld [vmem:[%s52 + $0x168] sm:$0xff]
          %145 = vst [vmem:[%s53 + $0x168] sm:$0xff] %v144
          %v146 = vld [vmem:[%s52 + $0x170] sm:$0xff]
          %147 = vst [vmem:[%s53 + $0x170] sm:$0xff] %v146
          %v148 = vld [vmem:[%s52 + $0x178] sm:$0xff]
          %149 = vst [vmem:[%s53 + $0x178] sm:$0xff] %v148
          %v150 = vld [vmem:[%s52 + $0x180] sm:$0xff]
          %151 = vst [vmem:[%s53 + $0x180] sm:$0xff] %v150
          %v152 = vld [vmem:[%s52 + $0x188] sm:$0xff]
          %153 = vst [vmem:[%s53 + $0x188] sm:$0xff] %v152
          %v154 = vld [vmem:[%s52 + $0x190] sm:$0xff]
          %155 = vst [vmem:[%s53 + $0x190] sm:$0xff] %v154
          %v156 = vld [vmem:[%s52 + $0x198] sm:$0xff]
          %157 = vst [vmem:[%s53 + $0x198] sm:$0xff] %v156
          %v158 = vld [vmem:[%s52 + $0x1a0] sm:$0xff]
          %159 = vst [vmem:[%s53 + $0x1a0] sm:$0xff] %v158
          %v160 = vld [vmem:[%s52 + $0x1a8] sm:$0xff]
          %161 = vst [vmem:[%s53 + $0x1a8] sm:$0xff] %v160
          %v162 = vld [vmem:[%s52 + $0x1b0] sm:$0xff]
          %163 = vst [vmem:[%s53 + $0x1b0] sm:$0xff] %v162
          %v164 = vld [vmem:[%s52 + $0x1b8] sm:$0xff]
          %165 = vst [vmem:[%s53 + $0x1b8] sm:$0xff] %v164
          %v166 = vld [vmem:[%s52 + $0x1c0] sm:$0xff]
          %167 = vst [vmem:[%s53 + $0x1c0] sm:$0xff] %v166
          %v168 = vld [vmem:[%s52 + $0x1c8] sm:$0xff]
          %169 = vst [vmem:[%s53 + $0x1c8] sm:$0xff] %v168
          %v170 = vld [vmem:[%s52 + $0x1d0] sm:$0xff]
          %171 = vst [vmem:[%s53 + $0x1d0] sm:$0xff] %v170
          %v172 = vld [vmem:[%s52 + $0x1d8] sm:$0xff]
          %173 = vst [vmem:[%s53 + $0x1d8] sm:$0xff] %v172
          %v174 = vld [vmem:[%s52 + $0x1e0] sm:$0xff]
          %175 = vst [vmem:[%s53 + $0x1e0] sm:$0xff] %v174
          %v176 = vld [vmem:[%s52 + $0x1e8] sm:$0xff]
          %177 = vst [vmem:[%s53 + $0x1e8] sm:$0xff] %v176
          %v178 = vld [vmem:[%s52 + $0x1f0] sm:$0xff]
          %179 = vst [vmem:[%s53 + $0x1f0] sm:$0xff] %v178
          %v180 = vld [vmem:[%s52 + $0x1f8] sm:$0xff]
          %181 = vst [vmem:[%s53 + $0x1f8] sm:$0xff] %v180
          %v182 = vld [vmem:[%s52 + $0x200] sm:$0xff]
          %183 = vst [vmem:[%s53 + $0x200] sm:$0xff] %v182
          %v184 = vld [vmem:[%s52 + $0x208] sm:$0xff]
          %185 = vst [vmem:[%s53 + $0x208] sm:$0xff] %v184
          %v186 = vld [vmem:[%s52 + $0x210] sm:$0xff]
          %187 = vst [vmem:[%s53 + $0x210] sm:$0xff] %v186
          %v188 = vld [vmem:[%s52 + $0x218] sm:$0xff]
          %189 = vst [vmem:[%s53 + $0x218] sm:$0xff] %v188
          %v190 = vld [vmem:[%s52 + $0x220] sm:$0xff]
          %191 = vst [vmem:[%s53 + $0x220] sm:$0xff] %v190
          %v192 = vld [vmem:[%s52 + $0x228] sm:$0xff]
          %193 = vst [vmem:[%s53 + $0x228] sm:$0xff] %v192
          %v194 = vld [vmem:[%s52 + $0x230] sm:$0xff]
          %195 = vst [vmem:[%s53 + $0x230] sm:$0xff] %v194
          %v196 = vld [vmem:[%s52 + $0x238] sm:$0xff]
          %197 = vst [vmem:[%s53 + $0x238] sm:$0xff] %v196
          %v198 = vld [vmem:[%s52 + $0x240] sm:$0xff]
          %199 = vst [vmem:[%s53 + $0x240] sm:$0xff] %v198
          %v200 = vld [vmem:[%s52 + $0x248] sm:$0xff]
          %201 = vst [vmem:[%s53 + $0x248] sm:$0xff] %v200
          %v202 = vld [vmem:[%s52 + $0x250] sm:$0xff]
          %203 = vst [vmem:[%s53 + $0x250] sm:$0xff] %v202
          %v204 = vld [vmem:[%s52 + $0x258] sm:$0xff]
          %205 = vst [vmem:[%s53 + $0x258] sm:$0xff] %v204
          %v206 = vld [vmem:[%s52 + $0x260] sm:$0xff]
          %207 = vst [vmem:[%s53 + $0x260] sm:$0xff] %v206
          %v208 = vld [vmem:[%s52 + $0x268] sm:$0xff]
          %209 = vst [vmem:[%s53 + $0x268] sm:$0xff] %v208
          %v210 = vld [vmem:[%s52 + $0x270] sm:$0xff]
          %211 = vst [vmem:[%s53 + $0x270] sm:$0xff] %v210
          %v212 = vld [vmem:[%s52 + $0x278] sm:$0xff]
          %213 = vst [vmem:[%s53 + $0x278] sm:$0xff] %v212
          %v214 = vld [vmem:[%s52 + $0x280] sm:$0xff]
          %215 = vst [vmem:[%s53 + $0x280] sm:$0xff] %v214
          %v216 = vld [vmem:[%s52 + $0x288] sm:$0xff]
          %217 = vst [vmem:[%s53 + $0x288] sm:$0xff] %v216
          %v218 = vld [vmem:[%s52 + $0x290] sm:$0xff]
          %219 = vst [vmem:[%s53 + $0x290] sm:$0xff] %v218
          %v220 = vld [vmem:[%s52 + $0x298] sm:$0xff]
          %221 = vst [vmem:[%s53 + $0x298] sm:$0xff] %v220
          %v222 = vld [vmem:[%s52 + $0x2a0] sm:$0xff]
          %223 = vst [vmem:[%s53 + $0x2a0] sm:$0xff] %v222
          %v224 = vld [vmem:[%s52 + $0x2a8] sm:$0xff]
          %225 = vst [vmem:[%s53 + $0x2a8] sm:$0xff] %v224
          %v226 = vld [vmem:[%s52 + $0x2b0] sm:$0xff]
          %227 = vst [vmem:[%s53 + $0x2b0] sm:$0xff] %v226
          %v228 = vld [vmem:[%s52 + $0x2b8] sm:$0xff]
          %229 = vst [vmem:[%s53 + $0x2b8] sm:$0xff] %v228
          %v230 = vld [vmem:[%s52 + $0x2c0] sm:$0xff]
          %231 = vst [vmem:[%s53 + $0x2c0] sm:$0xff] %v230
          %v232 = vld [vmem:[%s52 + $0x2c8] sm:$0xff]
          %233 = vst [vmem:[%s53 + $0x2c8] sm:$0xff] %v232
          %v234 = vld [vmem:[%s52 + $0x2d0] sm:$0xff]
          %235 = vst [vmem:[%s53 + $0x2d0] sm:$0xff] %v234
          %v236 = vld [vmem:[%s52 + $0x2d8] sm:$0xff]
          %237 = vst [vmem:[%s53 + $0x2d8] sm:$0xff] %v236
          %v238 = vld [vmem:[%s52 + $0x2e0] sm:$0xff]
          %239 = vst [vmem:[%s53 + $0x2e0] sm:$0xff] %v238
          %v240 = vld [vmem:[%s52 + $0x2e8] sm:$0xff]
          %241 = vst [vmem:[%s53 + $0x2e8] sm:$0xff] %v240
          %v242 = vld [vmem:[%s52 + $0x2f0] sm:$0xff]
          %243 = vst [vmem:[%s53 + $0x2f0] sm:$0xff] %v242
          %v244 = vld [vmem:[%s52 + $0x2f8] sm:$0xff]
          %245 = vst [vmem:[%s53 + $0x2f8] sm:$0xff] %v244
          %v246 = vld [vmem:[%s52 + $0x300] sm:$0xff]
          %247 = vst [vmem:[%s53 + $0x300] sm:$0xff] %v246
          %v248 = vld [vmem:[%s52 + $0x308] sm:$0xff]
          %249 = vst [vmem:[%s53 + $0x308] sm:$0xff] %v248
          %v250 = vld [vmem:[%s52 + $0x310] sm:$0xff]
          %251 = vst [vmem:[%s53 + $0x310] sm:$0xff] %v250
          %v252 = vld [vmem:[%s52 + $0x318] sm:$0xff]
          %253 = vst [vmem:[%s53 + $0x318] sm:$0xff] %v252
          %v254 = vld [vmem:[%s52 + $0x320] sm:$0xff]
          %255 = vst [vmem:[%s53 + $0x320] sm:$0xff] %v254
          %v256 = vld [vmem:[%s52 + $0x328] sm:$0xff]
          %257 = vst [vmem:[%s53 + $0x328] sm:$0xff] %v256
          %v258 = vld [vmem:[%s52 + $0x330] sm:$0xff]
          %259 = vst [vmem:[%s53 + $0x330] sm:$0xff] %v258
          %v260 = vld [vmem:[%s52 + $0x338] sm:$0xff]
          %261 = vst [vmem:[%s53 + $0x338] sm:$0xff] %v260
          %v262 = vld [vmem:[%s52 + $0x340] sm:$0xff]
          %263 = vst [vmem:[%s53 + $0x340] sm:$0xff] %v262
          %v264 = vld [vmem:[%s52 + $0x348] sm:$0xff]
          %265 = vst [vmem:[%s53 + $0x348] sm:$0xff] %v264
          %v266 = vld [vmem:[%s52 + $0x350] sm:$0xff]
          %267 = vst [vmem:[%s53 + $0x350] sm:$0xff] %v266
          %v268 = vld [vmem:[%s52 + $0x358] sm:$0xff]
          %269 = vst [vmem:[%s53 + $0x358] sm:$0xff] %v268
          %v270 = vld [vmem:[%s52 + $0x360] sm:$0xff]
          %271 = vst [vmem:[%s53 + $0x360] sm:$0xff] %v270
          %v272 = vld [vmem:[%s52 + $0x368] sm:$0xff]
          %273 = vst [vmem:[%s53 + $0x368] sm:$0xff] %v272
          %v274 = vld [vmem:[%s52 + $0x370] sm:$0xff]
          %275 = vst [vmem:[%s53 + $0x370] sm:$0xff] %v274
          %v276 = vld [vmem:[%s52 + $0x378] sm:$0xff]
          %277 = vst [vmem:[%s53 + $0x378] sm:$0xff] %v276
          %v278 = vld [vmem:[%s52 + $0x380] sm:$0xff]
          %279 = vst [vmem:[%s53 + $0x380] sm:$0xff] %v278
          %v280 = vld [vmem:[%s52 + $0x388] sm:$0xff]
          %281 = vst [vmem:[%s53 + $0x388] sm:$0xff] %v280
          %v282 = vld [vmem:[%s52 + $0x390] sm:$0xff]
          %283 = vst [vmem:[%s53 + $0x390] sm:$0xff] %v282
          %v284 = vld [vmem:[%s52 + $0x398] sm:$0xff]
          %285 = vst [vmem:[%s53 + $0x398] sm:$0xff] %v284
          %v286 = vld [vmem:[%s52 + $0x3a0] sm:$0xff]
          %287 = vst [vmem:[%s53 + $0x3a0] sm:$0xff] %v286
          %v288 = vld [vmem:[%s52 + $0x3a8] sm:$0xff]
          %289 = vst [vmem:[%s53 + $0x3a8] sm:$0xff] %v288
          %v290 = vld [vmem:[%s52 + $0x3b0] sm:$0xff]
          %291 = vst [vmem:[%s53 + $0x3b0] sm:$0xff] %v290
          %v292 = vld [vmem:[%s52 + $0x3b8] sm:$0xff]
          %293 = vst [vmem:[%s53 + $0x3b8] sm:$0xff] %v292
          %v294 = vld [vmem:[%s52 + $0x3c0] sm:$0xff]
          %295 = vst [vmem:[%s53 + $0x3c0] sm:$0xff] %v294
          %v296 = vld [vmem:[%s52 + $0x3c8] sm:$0xff]
          %297 = vst [vmem:[%s53 + $0x3c8] sm:$0xff] %v296
          %v298 = vld [vmem:[%s52 + $0x3d0] sm:$0xff]
          %299 = vst [vmem:[%s53 + $0x3d0] sm:$0xff] %v298
          %v300 = vld [vmem:[%s52 + $0x3d8] sm:$0xff]
          %301 = vst [vmem:[%s53 + $0x3d8] sm:$0xff] %v300
          %v302 = vld [vmem:[%s52 + $0x3e0] sm:$0xff]
          %303 = vst [vmem:[%s53 + $0x3e0] sm:$0xff] %v302
          %v304 = vld [vmem:[%s52 + $0x3e8] sm:$0xff]
          %305 = vst [vmem:[%s53 + $0x3e8] sm:$0xff] %v304
          %v306 = vld [vmem:[%s52 + $0x3f0] sm:$0xff]
          %307 = vst [vmem:[%s53 + $0x3f0] sm:$0xff] %v306
          %v308 = vld [vmem:[%s52 + $0x3f8] sm:$0xff]
          %309 = vst [vmem:[%s53 + $0x3f8] sm:$0xff] %v308
          %v310 = vld [vmem:[%s52 + $0x400] sm:$0xff]
          %311 = vst [vmem:[%s53 + $0x400] sm:$0xff] %v310
          %v312 = vld [vmem:[%s52 + $0x408] sm:$0xff]
          %313 = vst [vmem:[%s53 + $0x408] sm:$0xff] %v312
          %v314 = vld [vmem:[%s52 + $0x410] sm:$0xff]
          %315 = vst [vmem:[%s53 + $0x410] sm:$0xff] %v314
          %v316 = vld [vmem:[%s52 + $0x418] sm:$0xff]
          %317 = vst [vmem:[%s53 + $0x418] sm:$0xff] %v316
          %v318 = vld [vmem:[%s52 + $0x420] sm:$0xff]
          %319 = vst [vmem:[%s53 + $0x420] sm:$0xff] %v318
          %v320 = vld [vmem:[%s52 + $0x428] sm:$0xff]
          %321 = vst [vmem:[%s53 + $0x428] sm:$0xff] %v320
          %v322 = vld [vmem:[%s52 + $0x430] sm:$0xff]
          %323 = vst [vmem:[%s53 + $0x430] sm:$0xff] %v322
          %v324 = vld [vmem:[%s52 + $0x438] sm:$0xff]
          %325 = vst [vmem:[%s53 + $0x438] sm:$0xff] %v324
          %v326 = vld [vmem:[%s52 + $0x440] sm:$0xff]
          %327 = vst [vmem:[%s53 + $0x440] sm:$0xff] %v326
          %v328 = vld [vmem:[%s52 + $0x448] sm:$0xff]
          %329 = vst [vmem:[%s53 + $0x448] sm:$0xff] %v328
          %v330 = vld [vmem:[%s52 + $0x450] sm:$0xff]
          %331 = vst [vmem:[%s53 + $0x450] sm:$0xff] %v330
          %v332 = vld [vmem:[%s52 + $0x458] sm:$0xff]
          %333 = vst [vmem:[%s53 + $0x458] sm:$0xff] %v332
          %v334 = vld [vmem:[%s52 + $0x460] sm:$0xff]
          %335 = vst [vmem:[%s53 + $0x460] sm:$0xff] %v334
          %v336 = vld [vmem:[%s52 + $0x468] sm:$0xff]
          %337 = vst [vmem:[%s53 + $0x468] sm:$0xff] %v336
          %v338 = vld [vmem:[%s52 + $0x470] sm:$0xff]
          %339 = vst [vmem:[%s53 + $0x470] sm:$0xff] %v338
          %v340 = vld [vmem:[%s52 + $0x478] sm:$0xff]
          %341 = vst [vmem:[%s53 + $0x478] sm:$0xff] %v340
          %v342 = vld [vmem:[%s52 + $0x480] sm:$0xff]
          %343 = vst [vmem:[%s53 + $0x480] sm:$0xff] %v342
          %v344 = vld [vmem:[%s52 + $0x488] sm:$0xff]
          %345 = vst [vmem:[%s53 + $0x488] sm:$0xff] %v344
          %v346 = vld [vmem:[%s52 + $0x490] sm:$0xff]
          %347 = vst [vmem:[%s53 + $0x490] sm:$0xff] %v346
          %v348 = vld [vmem:[%s52 + $0x498] sm:$0xff]
          %349 = vst [vmem:[%s53 + $0x498] sm:$0xff] %v348
          %v350 = vld [vmem:[%s52 + $0x4a0] sm:$0xff]
          %351 = vst [vmem:[%s53 + $0x4a0] sm:$0xff] %v350
          %v352 = vld [vmem:[%s52 + $0x4a8] sm:$0xff]
          %353 = vst [vmem:[%s53 + $0x4a8] sm:$0xff] %v352
          %v354 = vld [vmem:[%s52 + $0x4b0] sm:$0xff]
          %355 = vst [vmem:[%s53 + $0x4b0] sm:$0xff] %v354
          %v356 = vld [vmem:[%s52 + $0x4b8] sm:$0xff]
          %357 = vst [vmem:[%s53 + $0x4b8] sm:$0xff] %v356
          %v358 = vld [vmem:[%s52 + $0x4c0] sm:$0xff]
          %359 = vst [vmem:[%s53 + $0x4c0] sm:$0xff] %v358
          %v360 = vld [vmem:[%s52 + $0x4c8] sm:$0xff]
          %361 = vst [vmem:[%s53 + $0x4c8] sm:$0xff] %v360
          %v362 = vld [vmem:[%s52 + $0x4d0] sm:$0xff]
          %363 = vst [vmem:[%s53 + $0x4d0] sm:$0xff] %v362
          %v364 = vld [vmem:[%s52 + $0x4d8] sm:$0xff]
          %365 = vst [vmem:[%s53 + $0x4d8] sm:$0xff] %v364
          %v366 = vld [vmem:[%s52 + $0x4e0] sm:$0xff]
          %367 = vst [vmem:[%s53 + $0x4e0] sm:$0xff] %v366
          %v368 = vld [vmem:[%s52 + $0x4e8] sm:$0xff]
          %369 = vst [vmem:[%s53 + $0x4e8] sm:$0xff] %v368
          %v370 = vld [vmem:[%s52 + $0x4f0] sm:$0xff]
          %371 = vst [vmem:[%s53 + $0x4f0] sm:$0xff] %v370
          %v372 = vld [vmem:[%s52 + $0x4f8] sm:$0xff]
          %373 = vst [vmem:[%s53 + $0x4f8] sm:$0xff] %v372
          %v374 = vld [vmem:[%s52 + $0x500] sm:$0xff]
          %375 = vst [vmem:[%s53 + $0x500] sm:$0xff] %v374
          %v376 = vld [vmem:[%s52 + $0x508] sm:$0xff]
          %377 = vst [vmem:[%s53 + $0x508] sm:$0xff] %v376
          %v378 = vld [vmem:[%s52 + $0x510] sm:$0xff]
          %379 = vst [vmem:[%s53 + $0x510] sm:$0xff] %v378
          %v380 = vld [vmem:[%s52 + $0x518] sm:$0xff]
          %381 = vst [vmem:[%s53 + $0x518] sm:$0xff] %v380
          %v382 = vld [vmem:[%s52 + $0x520] sm:$0xff]
          %383 = vst [vmem:[%s53 + $0x520] sm:$0xff] %v382
          %v384 = vld [vmem:[%s52 + $0x528] sm:$0xff]
          %385 = vst [vmem:[%s53 + $0x528] sm:$0xff] %v384
          %v386 = vld [vmem:[%s52 + $0x530] sm:$0xff]
          %387 = vst [vmem:[%s53 + $0x530] sm:$0xff] %v386
          %v388 = vld [vmem:[%s52 + $0x538] sm:$0xff]
          %389 = vst [vmem:[%s53 + $0x538] sm:$0xff] %v388
          %v390 = vld [vmem:[%s52 + $0x540] sm:$0xff]
          %391 = vst [vmem:[%s53 + $0x540] sm:$0xff] %v390
          %v392 = vld [vmem:[%s52 + $0x548] sm:$0xff]
          %393 = vst [vmem:[%s53 + $0x548] sm:$0xff] %v392
          %v394 = vld [vmem:[%s52 + $0x550] sm:$0xff]
          %395 = vst [vmem:[%s53 + $0x550] sm:$0xff] %v394
          %v396 = vld [vmem:[%s52 + $0x558] sm:$0xff]
          %397 = vst [vmem:[%s53 + $0x558] sm:$0xff] %v396
          %v398 = vld [vmem:[%s52 + $0x560] sm:$0xff]
          %399 = vst [vmem:[%s53 + $0x560] sm:$0xff] %v398
          %v400 = vld [vmem:[%s52 + $0x568] sm:$0xff]
          %401 = vst [vmem:[%s53 + $0x568] sm:$0xff] %v400
          %v402 = vld [vmem:[%s52 + $0x570] sm:$0xff]
          %403 = vst [vmem:[%s53 + $0x570] sm:$0xff] %v402
          %v404 = vld [vmem:[%s52 + $0x578] sm:$0xff]
          %405 = vst [vmem:[%s53 + $0x578] sm:$0xff] %v404
          %v406 = vld [vmem:[%s52 + $0x580] sm:$0xff]
          %407 = vst [vmem:[%s53 + $0x580] sm:$0xff] %v406
          %v408 = vld [vmem:[%s52 + $0x588] sm:$0xff]
          %409 = vst [vmem:[%s53 + $0x588] sm:$0xff] %v408
          %v410 = vld [vmem:[%s52 + $0x590] sm:$0xff]
          %411 = vst [vmem:[%s53 + $0x590] sm:$0xff] %v410
          %v412 = vld [vmem:[%s52 + $0x598] sm:$0xff]
          %413 = vst [vmem:[%s53 + $0x598] sm:$0xff] %v412
          %v414 = vld [vmem:[%s52 + $0x5a0] sm:$0xff]
          %415 = vst [vmem:[%s53 + $0x5a0] sm:$0xff] %v414
          %v416 = vld [vmem:[%s52 + $0x5a8] sm:$0xff]
          %417 = vst [vmem:[%s53 + $0x5a8] sm:$0xff] %v416
          %v418 = vld [vmem:[%s52 + $0x5b0] sm:$0xff]
          %419 = vst [vmem:[%s53 + $0x5b0] sm:$0xff] %v418
          %v420 = vld [vmem:[%s52 + $0x5b8] sm:$0xff]
          %421 = vst [vmem:[%s53 + $0x5b8] sm:$0xff] %v420
          %v422 = vld [vmem:[%s52 + $0x5c0] sm:$0xff]
          %423 = vst [vmem:[%s53 + $0x5c0] sm:$0xff] %v422
          %v424 = vld [vmem:[%s52 + $0x5c8] sm:$0xff]
          %425 = vst [vmem:[%s53 + $0x5c8] sm:$0xff] %v424
          %v426 = vld [vmem:[%s52 + $0x5d0] sm:$0xff]
          %427 = vst [vmem:[%s53 + $0x5d0] sm:$0xff] %v426
          %v428 = vld [vmem:[%s52 + $0x5d8] sm:$0xff]
          %429 = vst [vmem:[%s53 + $0x5d8] sm:$0xff] %v428
          %v430 = vld [vmem:[%s52 + $0x5e0] sm:$0xff]
          %431 = vst [vmem:[%s53 + $0x5e0] sm:$0xff] %v430
          %v432 = vld [vmem:[%s52 + $0x5e8] sm:$0xff]
          %433 = vst [vmem:[%s53 + $0x5e8] sm:$0xff] %v432
          %v434 = vld [vmem:[%s52 + $0x5f0] sm:$0xff]
          %435 = vst [vmem:[%s53 + $0x5f0] sm:$0xff] %v434
          %v436 = vld [vmem:[%s52 + $0x5f8] sm:$0xff]
          %437 = vst [vmem:[%s53 + $0x5f8] sm:$0xff] %v436
        $region41: #{misa_forward.1} parent=35 // loop_footer
          %s51 = sadd.s32 1, %s47
        $region42: #{misa_forward.1} parent=35 // loop_footer_branch
          %46 = sbr.rel target = $region38
        $region43: #{misa_forward.1} parent=35 // loop_exit
          _
      $region36: #{misa_forward.1} parent=20 // pred_fallthru
        _
      %p438 = pneg %p42
      // Predicated region
      $region44: #{misa_forward.1} parent=20 // pred_check
        _
      $region45: #{misa_forward.1} parent=20 // pred_check_branch
        %440 = sbr.rel (%p42) target = $region47
      $region46: #{misa_forward.1} parent=20 // pred_region
        %s441 = sand.u32 1536, 7
      $region47: #{misa_forward.1} parent=20 // pred_fallthru
        _
    $region21: #{misa_forward.1} parent=1 // pred_fallthru
      _
    // Predicated region
    $region22: #{misa_forward.1} parent=1 // pred_check
      %p26 = pneg %p22
    $region23: #{misa_forward.1} parent=1 // pred_check_branch
      %28 = sbr.rel (%p26) target = $region25
    $region24: #{misa_forward.1} parent=1 // pred_region
      %s29 = sshll.u32 1, 1536
      %s30 = ssub.s32 %s29, 1
      loop: start=0, step=1, limit=1
      $region26: #{misa_forward.1} parent=24 // loop_pre_header
        _
      $region27: #{misa_forward.1} parent=24 // loop_header
        %s32 = sphi 0, %s36
        %p33 = scmp.ge.s32.totalorder %s32, 1
        %s37 = sphi %s4, %s4
        %s38 = sphi [#allocation2], [#allocation2]
      $region28: #{misa_forward.1} parent=24 // loop_header_branch
        %35 = sbr.rel (%p33) target = $region32
      $region29: #{misa_forward.1} parent=24 // loop_body
        %v39 = vld [vmem:[%s37] sm:%s30]
        %40 = vst [vmem:[%s38] sm:%s30] %v39
      $region30: #{misa_forward.1} parent=24 // loop_footer
        %s36 = sadd.s32 1, %s32
      $region31: #{misa_forward.1} parent=24 // loop_footer_branch
        %31 = sbr.rel target = $region27
      $region32: #{misa_forward.1} parent=24 // loop_exit
        _
    $region25: #{misa_forward.1} parent=1 // pred_fallthru
      _
    // Predicated region
    $region48: #{misa_forward.1} parent=1 // pred_check
      _
    $region49: #{misa_forward.1} parent=1 // pred_check_branch
      %444 = sbr.rel (0) target = $region51
    $region50: #{misa_forward.1} parent=1 // pred_region
      %445 = vsyncadd [#allocation4], 24576
    $region51: #{misa_forward.1} parent=1 // pred_fallthru
      _
    %s446 = scalar_lea.sflag [#allocation4], 1
    %p448 = scmp.lt.u32.totalorder 2048, 8
    %p449 = pneg %p448
    // Predicated region
    $region52: #{misa_forward.1} parent=1 // pred_check
      _
    $region53: #{misa_forward.1} parent=1 // pred_check_branch
      %451 = sbr.rel (%p448) target = $region55
    $region54: #{misa_forward.1} parent=1 // pred_region
      %s467 = sand.u32 2048, 7
      %p468 = scmp.eq.s32.totalorder %s467, 0
      // Predicated region
      $region67: #{misa_forward.1} parent=54 // pred_check
        %p469 = pneg %p468
      $region68: #{misa_forward.1} parent=54 // pred_check_branch
        %471 = sbr.rel (%p469) target = $region70
      $region69: #{misa_forward.1} parent=54 // pred_region
        loop: start=0, step=1, limit=1
        $region71: #{misa_forward.1} parent=69 // loop_pre_header
          _
        $region72: #{misa_forward.1} parent=69 // loop_header
          %s473 = sphi 0, %s477
          %p474 = scmp.ge.s32.totalorder %s473, 1
          %s478 = sphi %s5, %s5
          %s479 = sphi [#allocation3], [#allocation3]
        $region73: #{misa_forward.1} parent=69 // loop_header_branch
          %476 = sbr.rel (%p474) target = $region77
        $region74: #{misa_forward.1} parent=69 // loop_body
          %v480 = vld [vmem:[%s478] sm:$0xff]
          %481 = vst [vmem:[%s479] sm:$0xff] %v480
          %v482 = vld [vmem:[%s478 + $0x8] sm:$0xff]
          %483 = vst [vmem:[%s479 + $0x8] sm:$0xff] %v482
          %v484 = vld [vmem:[%s478 + $0x10] sm:$0xff]
          %485 = vst [vmem:[%s479 + $0x10] sm:$0xff] %v484
          %v486 = vld [vmem:[%s478 + $0x18] sm:$0xff]
          %487 = vst [vmem:[%s479 + $0x18] sm:$0xff] %v486
          %v488 = vld [vmem:[%s478 + $0x20] sm:$0xff]
          %489 = vst [vmem:[%s479 + $0x20] sm:$0xff] %v488
          %v490 = vld [vmem:[%s478 + $0x28] sm:$0xff]
          %491 = vst [vmem:[%s479 + $0x28] sm:$0xff] %v490
          %v492 = vld [vmem:[%s478 + $0x30] sm:$0xff]
          %493 = vst [vmem:[%s479 + $0x30] sm:$0xff] %v492
          %v494 = vld [vmem:[%s478 + $0x38] sm:$0xff]
          %495 = vst [vmem:[%s479 + $0x38] sm:$0xff] %v494
          %v496 = vld [vmem:[%s478 + $0x40] sm:$0xff]
          %497 = vst [vmem:[%s479 + $0x40] sm:$0xff] %v496
          %v498 = vld [vmem:[%s478 + $0x48] sm:$0xff]
          %499 = vst [vmem:[%s479 + $0x48] sm:$0xff] %v498
          %v500 = vld [vmem:[%s478 + $0x50] sm:$0xff]
          %501 = vst [vmem:[%s479 + $0x50] sm:$0xff] %v500
          %v502 = vld [vmem:[%s478 + $0x58] sm:$0xff]
          %503 = vst [vmem:[%s479 + $0x58] sm:$0xff] %v502
          %v504 = vld [vmem:[%s478 + $0x60] sm:$0xff]
          %505 = vst [vmem:[%s479 + $0x60] sm:$0xff] %v504
          %v506 = vld [vmem:[%s478 + $0x68] sm:$0xff]
          %507 = vst [vmem:[%s479 + $0x68] sm:$0xff] %v506
          %v508 = vld [vmem:[%s478 + $0x70] sm:$0xff]
          %509 = vst [vmem:[%s479 + $0x70] sm:$0xff] %v508
          %v510 = vld [vmem:[%s478 + $0x78] sm:$0xff]
          %511 = vst [vmem:[%s479 + $0x78] sm:$0xff] %v510
          %v512 = vld [vmem:[%s478 + $0x80] sm:$0xff]
          %513 = vst [vmem:[%s479 + $0x80] sm:$0xff] %v512
          %v514 = vld [vmem:[%s478 + $0x88] sm:$0xff]
          %515 = vst [vmem:[%s479 + $0x88] sm:$0xff] %v514
          %v516 = vld [vmem:[%s478 + $0x90] sm:$0xff]
          %517 = vst [vmem:[%s479 + $0x90] sm:$0xff] %v516
          %v518 = vld [vmem:[%s478 + $0x98] sm:$0xff]
          %519 = vst [vmem:[%s479 + $0x98] sm:$0xff] %v518
          %v520 = vld [vmem:[%s478 + $0xa0] sm:$0xff]
          %521 = vst [vmem:[%s479 + $0xa0] sm:$0xff] %v520
          %v522 = vld [vmem:[%s478 + $0xa8] sm:$0xff]
          %523 = vst [vmem:[%s479 + $0xa8] sm:$0xff] %v522
          %v524 = vld [vmem:[%s478 + $0xb0] sm:$0xff]
          %525 = vst [vmem:[%s479 + $0xb0] sm:$0xff] %v524
          %v526 = vld [vmem:[%s478 + $0xb8] sm:$0xff]
          %527 = vst [vmem:[%s479 + $0xb8] sm:$0xff] %v526
          %v528 = vld [vmem:[%s478 + $0xc0] sm:$0xff]
          %529 = vst [vmem:[%s479 + $0xc0] sm:$0xff] %v528
          %v530 = vld [vmem:[%s478 + $0xc8] sm:$0xff]
          %531 = vst [vmem:[%s479 + $0xc8] sm:$0xff] %v530
          %v532 = vld [vmem:[%s478 + $0xd0] sm:$0xff]
          %533 = vst [vmem:[%s479 + $0xd0] sm:$0xff] %v532
          %v534 = vld [vmem:[%s478 + $0xd8] sm:$0xff]
          %535 = vst [vmem:[%s479 + $0xd8] sm:$0xff] %v534
          %v536 = vld [vmem:[%s478 + $0xe0] sm:$0xff]
          %537 = vst [vmem:[%s479 + $0xe0] sm:$0xff] %v536
          %v538 = vld [vmem:[%s478 + $0xe8] sm:$0xff]
          %539 = vst [vmem:[%s479 + $0xe8] sm:$0xff] %v538
          %v540 = vld [vmem:[%s478 + $0xf0] sm:$0xff]
          %541 = vst [vmem:[%s479 + $0xf0] sm:$0xff] %v540
          %v542 = vld [vmem:[%s478 + $0xf8] sm:$0xff]
          %543 = vst [vmem:[%s479 + $0xf8] sm:$0xff] %v542
          %v544 = vld [vmem:[%s478 + $0x100] sm:$0xff]
          %545 = vst [vmem:[%s479 + $0x100] sm:$0xff] %v544
          %v546 = vld [vmem:[%s478 + $0x108] sm:$0xff]
          %547 = vst [vmem:[%s479 + $0x108] sm:$0xff] %v546
          %v548 = vld [vmem:[%s478 + $0x110] sm:$0xff]
          %549 = vst [vmem:[%s479 + $0x110] sm:$0xff] %v548
          %v550 = vld [vmem:[%s478 + $0x118] sm:$0xff]
          %551 = vst [vmem:[%s479 + $0x118] sm:$0xff] %v550
          %v552 = vld [vmem:[%s478 + $0x120] sm:$0xff]
          %553 = vst [vmem:[%s479 + $0x120] sm:$0xff] %v552
          %v554 = vld [vmem:[%s478 + $0x128] sm:$0xff]
          %555 = vst [vmem:[%s479 + $0x128] sm:$0xff] %v554
          %v556 = vld [vmem:[%s478 + $0x130] sm:$0xff]
          %557 = vst [vmem:[%s479 + $0x130] sm:$0xff] %v556
          %v558 = vld [vmem:[%s478 + $0x138] sm:$0xff]
          %559 = vst [vmem:[%s479 + $0x138] sm:$0xff] %v558
          %v560 = vld [vmem:[%s478 + $0x140] sm:$0xff]
          %561 = vst [vmem:[%s479 + $0x140] sm:$0xff] %v560
          %v562 = vld [vmem:[%s478 + $0x148] sm:$0xff]
          %563 = vst [vmem:[%s479 + $0x148] sm:$0xff] %v562
          %v564 = vld [vmem:[%s478 + $0x150] sm:$0xff]
          %565 = vst [vmem:[%s479 + $0x150] sm:$0xff] %v564
          %v566 = vld [vmem:[%s478 + $0x158] sm:$0xff]
          %567 = vst [vmem:[%s479 + $0x158] sm:$0xff] %v566
          %v568 = vld [vmem:[%s478 + $0x160] sm:$0xff]
          %569 = vst [vmem:[%s479 + $0x160] sm:$0xff] %v568
          %v570 = vld [vmem:[%s478 + $0x168] sm:$0xff]
          %571 = vst [vmem:[%s479 + $0x168] sm:$0xff] %v570
          %v572 = vld [vmem:[%s478 + $0x170] sm:$0xff]
          %573 = vst [vmem:[%s479 + $0x170] sm:$0xff] %v572
          %v574 = vld [vmem:[%s478 + $0x178] sm:$0xff]
          %575 = vst [vmem:[%s479 + $0x178] sm:$0xff] %v574
          %v576 = vld [vmem:[%s478 + $0x180] sm:$0xff]
          %577 = vst [vmem:[%s479 + $0x180] sm:$0xff] %v576
          %v578 = vld [vmem:[%s478 + $0x188] sm:$0xff]
          %579 = vst [vmem:[%s479 + $0x188] sm:$0xff] %v578
          %v580 = vld [vmem:[%s478 + $0x190] sm:$0xff]
          %581 = vst [vmem:[%s479 + $0x190] sm:$0xff] %v580
          %v582 = vld [vmem:[%s478 + $0x198] sm:$0xff]
          %583 = vst [vmem:[%s479 + $0x198] sm:$0xff] %v582
          %v584 = vld [vmem:[%s478 + $0x1a0] sm:$0xff]
          %585 = vst [vmem:[%s479 + $0x1a0] sm:$0xff] %v584
          %v586 = vld [vmem:[%s478 + $0x1a8] sm:$0xff]
          %587 = vst [vmem:[%s479 + $0x1a8] sm:$0xff] %v586
          %v588 = vld [vmem:[%s478 + $0x1b0] sm:$0xff]
          %589 = vst [vmem:[%s479 + $0x1b0] sm:$0xff] %v588
          %v590 = vld [vmem:[%s478 + $0x1b8] sm:$0xff]
          %591 = vst [vmem:[%s479 + $0x1b8] sm:$0xff] %v590
          %v592 = vld [vmem:[%s478 + $0x1c0] sm:$0xff]
          %593 = vst [vmem:[%s479 + $0x1c0] sm:$0xff] %v592
          %v594 = vld [vmem:[%s478 + $0x1c8] sm:$0xff]
          %595 = vst [vmem:[%s479 + $0x1c8] sm:$0xff] %v594
          %v596 = vld [vmem:[%s478 + $0x1d0] sm:$0xff]
          %597 = vst [vmem:[%s479 + $0x1d0] sm:$0xff] %v596
          %v598 = vld [vmem:[%s478 + $0x1d8] sm:$0xff]
          %599 = vst [vmem:[%s479 + $0x1d8] sm:$0xff] %v598
          %v600 = vld [vmem:[%s478 + $0x1e0] sm:$0xff]
          %601 = vst [vmem:[%s479 + $0x1e0] sm:$0xff] %v600
          %v602 = vld [vmem:[%s478 + $0x1e8] sm:$0xff]
          %603 = vst [vmem:[%s479 + $0x1e8] sm:$0xff] %v602
          %v604 = vld [vmem:[%s478 + $0x1f0] sm:$0xff]
          %605 = vst [vmem:[%s479 + $0x1f0] sm:$0xff] %v604
          %v606 = vld [vmem:[%s478 + $0x1f8] sm:$0xff]
          %607 = vst [vmem:[%s479 + $0x1f8] sm:$0xff] %v606
          %v608 = vld [vmem:[%s478 + $0x200] sm:$0xff]
          %609 = vst [vmem:[%s479 + $0x200] sm:$0xff] %v608
          %v610 = vld [vmem:[%s478 + $0x208] sm:$0xff]
          %611 = vst [vmem:[%s479 + $0x208] sm:$0xff] %v610
          %v612 = vld [vmem:[%s478 + $0x210] sm:$0xff]
          %613 = vst [vmem:[%s479 + $0x210] sm:$0xff] %v612
          %v614 = vld [vmem:[%s478 + $0x218] sm:$0xff]
          %615 = vst [vmem:[%s479 + $0x218] sm:$0xff] %v614
          %v616 = vld [vmem:[%s478 + $0x220] sm:$0xff]
          %617 = vst [vmem:[%s479 + $0x220] sm:$0xff] %v616
          %v618 = vld [vmem:[%s478 + $0x228] sm:$0xff]
          %619 = vst [vmem:[%s479 + $0x228] sm:$0xff] %v618
          %v620 = vld [vmem:[%s478 + $0x230] sm:$0xff]
          %621 = vst [vmem:[%s479 + $0x230] sm:$0xff] %v620
          %v622 = vld [vmem:[%s478 + $0x238] sm:$0xff]
          %623 = vst [vmem:[%s479 + $0x238] sm:$0xff] %v622
          %v624 = vld [vmem:[%s478 + $0x240] sm:$0xff]
          %625 = vst [vmem:[%s479 + $0x240] sm:$0xff] %v624
          %v626 = vld [vmem:[%s478 + $0x248] sm:$0xff]
          %627 = vst [vmem:[%s479 + $0x248] sm:$0xff] %v626
          %v628 = vld [vmem:[%s478 + $0x250] sm:$0xff]
          %629 = vst [vmem:[%s479 + $0x250] sm:$0xff] %v628
          %v630 = vld [vmem:[%s478 + $0x258] sm:$0xff]
          %631 = vst [vmem:[%s479 + $0x258] sm:$0xff] %v630
          %v632 = vld [vmem:[%s478 + $0x260] sm:$0xff]
          %633 = vst [vmem:[%s479 + $0x260] sm:$0xff] %v632
          %v634 = vld [vmem:[%s478 + $0x268] sm:$0xff]
          %635 = vst [vmem:[%s479 + $0x268] sm:$0xff] %v634
          %v636 = vld [vmem:[%s478 + $0x270] sm:$0xff]
          %637 = vst [vmem:[%s479 + $0x270] sm:$0xff] %v636
          %v638 = vld [vmem:[%s478 + $0x278] sm:$0xff]
          %639 = vst [vmem:[%s479 + $0x278] sm:$0xff] %v638
          %v640 = vld [vmem:[%s478 + $0x280] sm:$0xff]
          %641 = vst [vmem:[%s479 + $0x280] sm:$0xff] %v640
          %v642 = vld [vmem:[%s478 + $0x288] sm:$0xff]
          %643 = vst [vmem:[%s479 + $0x288] sm:$0xff] %v642
          %v644 = vld [vmem:[%s478 + $0x290] sm:$0xff]
          %645 = vst [vmem:[%s479 + $0x290] sm:$0xff] %v644
          %v646 = vld [vmem:[%s478 + $0x298] sm:$0xff]
          %647 = vst [vmem:[%s479 + $0x298] sm:$0xff] %v646
          %v648 = vld [vmem:[%s478 + $0x2a0] sm:$0xff]
          %649 = vst [vmem:[%s479 + $0x2a0] sm:$0xff] %v648
          %v650 = vld [vmem:[%s478 + $0x2a8] sm:$0xff]
          %651 = vst [vmem:[%s479 + $0x2a8] sm:$0xff] %v650
          %v652 = vld [vmem:[%s478 + $0x2b0] sm:$0xff]
          %653 = vst [vmem:[%s479 + $0x2b0] sm:$0xff] %v652
          %v654 = vld [vmem:[%s478 + $0x2b8] sm:$0xff]
          %655 = vst [vmem:[%s479 + $0x2b8] sm:$0xff] %v654
          %v656 = vld [vmem:[%s478 + $0x2c0] sm:$0xff]
          %657 = vst [vmem:[%s479 + $0x2c0] sm:$0xff] %v656
          %v658 = vld [vmem:[%s478 + $0x2c8] sm:$0xff]
          %659 = vst [vmem:[%s479 + $0x2c8] sm:$0xff] %v658
          %v660 = vld [vmem:[%s478 + $0x2d0] sm:$0xff]
          %661 = vst [vmem:[%s479 + $0x2d0] sm:$0xff] %v660
          %v662 = vld [vmem:[%s478 + $0x2d8] sm:$0xff]
          %663 = vst [vmem:[%s479 + $0x2d8] sm:$0xff] %v662
          %v664 = vld [vmem:[%s478 + $0x2e0] sm:$0xff]
          %665 = vst [vmem:[%s479 + $0x2e0] sm:$0xff] %v664
          %v666 = vld [vmem:[%s478 + $0x2e8] sm:$0xff]
          %667 = vst [vmem:[%s479 + $0x2e8] sm:$0xff] %v666
          %v668 = vld [vmem:[%s478 + $0x2f0] sm:$0xff]
          %669 = vst [vmem:[%s479 + $0x2f0] sm:$0xff] %v668
          %v670 = vld [vmem:[%s478 + $0x2f8] sm:$0xff]
          %671 = vst [vmem:[%s479 + $0x2f8] sm:$0xff] %v670
          %v672 = vld [vmem:[%s478 + $0x300] sm:$0xff]
          %673 = vst [vmem:[%s479 + $0x300] sm:$0xff] %v672
          %v674 = vld [vmem:[%s478 + $0x308] sm:$0xff]
          %675 = vst [vmem:[%s479 + $0x308] sm:$0xff] %v674
          %v676 = vld [vmem:[%s478 + $0x310] sm:$0xff]
          %677 = vst [vmem:[%s479 + $0x310] sm:$0xff] %v676
          %v678 = vld [vmem:[%s478 + $0x318] sm:$0xff]
          %679 = vst [vmem:[%s479 + $0x318] sm:$0xff] %v678
          %v680 = vld [vmem:[%s478 + $0x320] sm:$0xff]
          %681 = vst [vmem:[%s479 + $0x320] sm:$0xff] %v680
          %v682 = vld [vmem:[%s478 + $0x328] sm:$0xff]
          %683 = vst [vmem:[%s479 + $0x328] sm:$0xff] %v682
          %v684 = vld [vmem:[%s478 + $0x330] sm:$0xff]
          %685 = vst [vmem:[%s479 + $0x330] sm:$0xff] %v684
          %v686 = vld [vmem:[%s478 + $0x338] sm:$0xff]
          %687 = vst [vmem:[%s479 + $0x338] sm:$0xff] %v686
          %v688 = vld [vmem:[%s478 + $0x340] sm:$0xff]
          %689 = vst [vmem:[%s479 + $0x340] sm:$0xff] %v688
          %v690 = vld [vmem:[%s478 + $0x348] sm:$0xff]
          %691 = vst [vmem:[%s479 + $0x348] sm:$0xff] %v690
          %v692 = vld [vmem:[%s478 + $0x350] sm:$0xff]
          %693 = vst [vmem:[%s479 + $0x350] sm:$0xff] %v692
          %v694 = vld [vmem:[%s478 + $0x358] sm:$0xff]
          %695 = vst [vmem:[%s479 + $0x358] sm:$0xff] %v694
          %v696 = vld [vmem:[%s478 + $0x360] sm:$0xff]
          %697 = vst [vmem:[%s479 + $0x360] sm:$0xff] %v696
          %v698 = vld [vmem:[%s478 + $0x368] sm:$0xff]
          %699 = vst [vmem:[%s479 + $0x368] sm:$0xff] %v698
          %v700 = vld [vmem:[%s478 + $0x370] sm:$0xff]
          %701 = vst [vmem:[%s479 + $0x370] sm:$0xff] %v700
          %v702 = vld [vmem:[%s478 + $0x378] sm:$0xff]
          %703 = vst [vmem:[%s479 + $0x378] sm:$0xff] %v702
          %v704 = vld [vmem:[%s478 + $0x380] sm:$0xff]
          %705 = vst [vmem:[%s479 + $0x380] sm:$0xff] %v704
          %v706 = vld [vmem:[%s478 + $0x388] sm:$0xff]
          %707 = vst [vmem:[%s479 + $0x388] sm:$0xff] %v706
          %v708 = vld [vmem:[%s478 + $0x390] sm:$0xff]
          %709 = vst [vmem:[%s479 + $0x390] sm:$0xff] %v708
          %v710 = vld [vmem:[%s478 + $0x398] sm:$0xff]
          %711 = vst [vmem:[%s479 + $0x398] sm:$0xff] %v710
          %v712 = vld [vmem:[%s478 + $0x3a0] sm:$0xff]
          %713 = vst [vmem:[%s479 + $0x3a0] sm:$0xff] %v712
          %v714 = vld [vmem:[%s478 + $0x3a8] sm:$0xff]
          %715 = vst [vmem:[%s479 + $0x3a8] sm:$0xff] %v714
          %v716 = vld [vmem:[%s478 + $0x3b0] sm:$0xff]
          %717 = vst [vmem:[%s479 + $0x3b0] sm:$0xff] %v716
          %v718 = vld [vmem:[%s478 + $0x3b8] sm:$0xff]
          %719 = vst [vmem:[%s479 + $0x3b8] sm:$0xff] %v718
          %v720 = vld [vmem:[%s478 + $0x3c0] sm:$0xff]
          %721 = vst [vmem:[%s479 + $0x3c0] sm:$0xff] %v720
          %v722 = vld [vmem:[%s478 + $0x3c8] sm:$0xff]
          %723 = vst [vmem:[%s479 + $0x3c8] sm:$0xff] %v722
          %v724 = vld [vmem:[%s478 + $0x3d0] sm:$0xff]
          %725 = vst [vmem:[%s479 + $0x3d0] sm:$0xff] %v724
          %v726 = vld [vmem:[%s478 + $0x3d8] sm:$0xff]
          %727 = vst [vmem:[%s479 + $0x3d8] sm:$0xff] %v726
          %v728 = vld [vmem:[%s478 + $0x3e0] sm:$0xff]
          %729 = vst [vmem:[%s479 + $0x3e0] sm:$0xff] %v728
          %v730 = vld [vmem:[%s478 + $0x3e8] sm:$0xff]
          %731 = vst [vmem:[%s479 + $0x3e8] sm:$0xff] %v730
          %v732 = vld [vmem:[%s478 + $0x3f0] sm:$0xff]
          %733 = vst [vmem:[%s479 + $0x3f0] sm:$0xff] %v732
          %v734 = vld [vmem:[%s478 + $0x3f8] sm:$0xff]
          %735 = vst [vmem:[%s479 + $0x3f8] sm:$0xff] %v734
          %v736 = vld [vmem:[%s478 + $0x400] sm:$0xff]
          %737 = vst [vmem:[%s479 + $0x400] sm:$0xff] %v736
          %v738 = vld [vmem:[%s478 + $0x408] sm:$0xff]
          %739 = vst [vmem:[%s479 + $0x408] sm:$0xff] %v738
          %v740 = vld [vmem:[%s478 + $0x410] sm:$0xff]
          %741 = vst [vmem:[%s479 + $0x410] sm:$0xff] %v740
          %v742 = vld [vmem:[%s478 + $0x418] sm:$0xff]
          %743 = vst [vmem:[%s479 + $0x418] sm:$0xff] %v742
          %v744 = vld [vmem:[%s478 + $0x420] sm:$0xff]
          %745 = vst [vmem:[%s479 + $0x420] sm:$0xff] %v744
          %v746 = vld [vmem:[%s478 + $0x428] sm:$0xff]
          %747 = vst [vmem:[%s479 + $0x428] sm:$0xff] %v746
          %v748 = vld [vmem:[%s478 + $0x430] sm:$0xff]
          %749 = vst [vmem:[%s479 + $0x430] sm:$0xff] %v748
          %v750 = vld [vmem:[%s478 + $0x438] sm:$0xff]
          %751 = vst [vmem:[%s479 + $0x438] sm:$0xff] %v750
          %v752 = vld [vmem:[%s478 + $0x440] sm:$0xff]
          %753 = vst [vmem:[%s479 + $0x440] sm:$0xff] %v752
          %v754 = vld [vmem:[%s478 + $0x448] sm:$0xff]
          %755 = vst [vmem:[%s479 + $0x448] sm:$0xff] %v754
          %v756 = vld [vmem:[%s478 + $0x450] sm:$0xff]
          %757 = vst [vmem:[%s479 + $0x450] sm:$0xff] %v756
          %v758 = vld [vmem:[%s478 + $0x458] sm:$0xff]
          %759 = vst [vmem:[%s479 + $0x458] sm:$0xff] %v758
          %v760 = vld [vmem:[%s478 + $0x460] sm:$0xff]
          %761 = vst [vmem:[%s479 + $0x460] sm:$0xff] %v760
          %v762 = vld [vmem:[%s478 + $0x468] sm:$0xff]
          %763 = vst [vmem:[%s479 + $0x468] sm:$0xff] %v762
          %v764 = vld [vmem:[%s478 + $0x470] sm:$0xff]
          %765 = vst [vmem:[%s479 + $0x470] sm:$0xff] %v764
          %v766 = vld [vmem:[%s478 + $0x478] sm:$0xff]
          %767 = vst [vmem:[%s479 + $0x478] sm:$0xff] %v766
          %v768 = vld [vmem:[%s478 + $0x480] sm:$0xff]
          %769 = vst [vmem:[%s479 + $0x480] sm:$0xff] %v768
          %v770 = vld [vmem:[%s478 + $0x488] sm:$0xff]
          %771 = vst [vmem:[%s479 + $0x488] sm:$0xff] %v770
          %v772 = vld [vmem:[%s478 + $0x490] sm:$0xff]
          %773 = vst [vmem:[%s479 + $0x490] sm:$0xff] %v772
          %v774 = vld [vmem:[%s478 + $0x498] sm:$0xff]
          %775 = vst [vmem:[%s479 + $0x498] sm:$0xff] %v774
          %v776 = vld [vmem:[%s478 + $0x4a0] sm:$0xff]
          %777 = vst [vmem:[%s479 + $0x4a0] sm:$0xff] %v776
          %v778 = vld [vmem:[%s478 + $0x4a8] sm:$0xff]
          %779 = vst [vmem:[%s479 + $0x4a8] sm:$0xff] %v778
          %v780 = vld [vmem:[%s478 + $0x4b0] sm:$0xff]
          %781 = vst [vmem:[%s479 + $0x4b0] sm:$0xff] %v780
          %v782 = vld [vmem:[%s478 + $0x4b8] sm:$0xff]
          %783 = vst [vmem:[%s479 + $0x4b8] sm:$0xff] %v782
          %v784 = vld [vmem:[%s478 + $0x4c0] sm:$0xff]
          %785 = vst [vmem:[%s479 + $0x4c0] sm:$0xff] %v784
          %v786 = vld [vmem:[%s478 + $0x4c8] sm:$0xff]
          %787 = vst [vmem:[%s479 + $0x4c8] sm:$0xff] %v786
          %v788 = vld [vmem:[%s478 + $0x4d0] sm:$0xff]
          %789 = vst [vmem:[%s479 + $0x4d0] sm:$0xff] %v788
          %v790 = vld [vmem:[%s478 + $0x4d8] sm:$0xff]
          %791 = vst [vmem:[%s479 + $0x4d8] sm:$0xff] %v790
          %v792 = vld [vmem:[%s478 + $0x4e0] sm:$0xff]
          %793 = vst [vmem:[%s479 + $0x4e0] sm:$0xff] %v792
          %v794 = vld [vmem:[%s478 + $0x4e8] sm:$0xff]
          %795 = vst [vmem:[%s479 + $0x4e8] sm:$0xff] %v794
          %v796 = vld [vmem:[%s478 + $0x4f0] sm:$0xff]
          %797 = vst [vmem:[%s479 + $0x4f0] sm:$0xff] %v796
          %v798 = vld [vmem:[%s478 + $0x4f8] sm:$0xff]
          %799 = vst [vmem:[%s479 + $0x4f8] sm:$0xff] %v798
          %v800 = vld [vmem:[%s478 + $0x500] sm:$0xff]
          %801 = vst [vmem:[%s479 + $0x500] sm:$0xff] %v800
          %v802 = vld [vmem:[%s478 + $0x508] sm:$0xff]
          %803 = vst [vmem:[%s479 + $0x508] sm:$0xff] %v802
          %v804 = vld [vmem:[%s478 + $0x510] sm:$0xff]
          %805 = vst [vmem:[%s479 + $0x510] sm:$0xff] %v804
          %v806 = vld [vmem:[%s478 + $0x518] sm:$0xff]
          %807 = vst [vmem:[%s479 + $0x518] sm:$0xff] %v806
          %v808 = vld [vmem:[%s478 + $0x520] sm:$0xff]
          %809 = vst [vmem:[%s479 + $0x520] sm:$0xff] %v808
          %v810 = vld [vmem:[%s478 + $0x528] sm:$0xff]
          %811 = vst [vmem:[%s479 + $0x528] sm:$0xff] %v810
          %v812 = vld [vmem:[%s478 + $0x530] sm:$0xff]
          %813 = vst [vmem:[%s479 + $0x530] sm:$0xff] %v812
          %v814 = vld [vmem:[%s478 + $0x538] sm:$0xff]
          %815 = vst [vmem:[%s479 + $0x538] sm:$0xff] %v814
          %v816 = vld [vmem:[%s478 + $0x540] sm:$0xff]
          %817 = vst [vmem:[%s479 + $0x540] sm:$0xff] %v816
          %v818 = vld [vmem:[%s478 + $0x548] sm:$0xff]
          %819 = vst [vmem:[%s479 + $0x548] sm:$0xff] %v818
          %v820 = vld [vmem:[%s478 + $0x550] sm:$0xff]
          %821 = vst [vmem:[%s479 + $0x550] sm:$0xff] %v820
          %v822 = vld [vmem:[%s478 + $0x558] sm:$0xff]
          %823 = vst [vmem:[%s479 + $0x558] sm:$0xff] %v822
          %v824 = vld [vmem:[%s478 + $0x560] sm:$0xff]
          %825 = vst [vmem:[%s479 + $0x560] sm:$0xff] %v824
          %v826 = vld [vmem:[%s478 + $0x568] sm:$0xff]
          %827 = vst [vmem:[%s479 + $0x568] sm:$0xff] %v826
          %v828 = vld [vmem:[%s478 + $0x570] sm:$0xff]
          %829 = vst [vmem:[%s479 + $0x570] sm:$0xff] %v828
          %v830 = vld [vmem:[%s478 + $0x578] sm:$0xff]
          %831 = vst [vmem:[%s479 + $0x578] sm:$0xff] %v830
          %v832 = vld [vmem:[%s478 + $0x580] sm:$0xff]
          %833 = vst [vmem:[%s479 + $0x580] sm:$0xff] %v832
          %v834 = vld [vmem:[%s478 + $0x588] sm:$0xff]
          %835 = vst [vmem:[%s479 + $0x588] sm:$0xff] %v834
          %v836 = vld [vmem:[%s478 + $0x590] sm:$0xff]
          %837 = vst [vmem:[%s479 + $0x590] sm:$0xff] %v836
          %v838 = vld [vmem:[%s478 + $0x598] sm:$0xff]
          %839 = vst [vmem:[%s479 + $0x598] sm:$0xff] %v838
          %v840 = vld [vmem:[%s478 + $0x5a0] sm:$0xff]
          %841 = vst [vmem:[%s479 + $0x5a0] sm:$0xff] %v840
          %v842 = vld [vmem:[%s478 + $0x5a8] sm:$0xff]
          %843 = vst [vmem:[%s479 + $0x5a8] sm:$0xff] %v842
          %v844 = vld [vmem:[%s478 + $0x5b0] sm:$0xff]
          %845 = vst [vmem:[%s479 + $0x5b0] sm:$0xff] %v844
          %v846 = vld [vmem:[%s478 + $0x5b8] sm:$0xff]
          %847 = vst [vmem:[%s479 + $0x5b8] sm:$0xff] %v846
          %v848 = vld [vmem:[%s478 + $0x5c0] sm:$0xff]
          %849 = vst [vmem:[%s479 + $0x5c0] sm:$0xff] %v848
          %v850 = vld [vmem:[%s478 + $0x5c8] sm:$0xff]
          %851 = vst [vmem:[%s479 + $0x5c8] sm:$0xff] %v850
          %v852 = vld [vmem:[%s478 + $0x5d0] sm:$0xff]
          %853 = vst [vmem:[%s479 + $0x5d0] sm:$0xff] %v852
          %v854 = vld [vmem:[%s478 + $0x5d8] sm:$0xff]
          %855 = vst [vmem:[%s479 + $0x5d8] sm:$0xff] %v854
          %v856 = vld [vmem:[%s478 + $0x5e0] sm:$0xff]
          %857 = vst [vmem:[%s479 + $0x5e0] sm:$0xff] %v856
          %v858 = vld [vmem:[%s478 + $0x5e8] sm:$0xff]
          %859 = vst [vmem:[%s479 + $0x5e8] sm:$0xff] %v858
          %v860 = vld [vmem:[%s478 + $0x5f0] sm:$0xff]
          %861 = vst [vmem:[%s479 + $0x5f0] sm:$0xff] %v860
          %v862 = vld [vmem:[%s478 + $0x5f8] sm:$0xff]
          %863 = vst [vmem:[%s479 + $0x5f8] sm:$0xff] %v862
          %v864 = vld [vmem:[%s478 + $0x600] sm:$0xff]
          %865 = vst [vmem:[%s479 + $0x600] sm:$0xff] %v864
          %v866 = vld [vmem:[%s478 + $0x608] sm:$0xff]
          %867 = vst [vmem:[%s479 + $0x608] sm:$0xff] %v866
          %v868 = vld [vmem:[%s478 + $0x610] sm:$0xff]
          %869 = vst [vmem:[%s479 + $0x610] sm:$0xff] %v868
          %v870 = vld [vmem:[%s478 + $0x618] sm:$0xff]
          %871 = vst [vmem:[%s479 + $0x618] sm:$0xff] %v870
          %v872 = vld [vmem:[%s478 + $0x620] sm:$0xff]
          %873 = vst [vmem:[%s479 + $0x620] sm:$0xff] %v872
          %v874 = vld [vmem:[%s478 + $0x628] sm:$0xff]
          %875 = vst [vmem:[%s479 + $0x628] sm:$0xff] %v874
          %v876 = vld [vmem:[%s478 + $0x630] sm:$0xff]
          %877 = vst [vmem:[%s479 + $0x630] sm:$0xff] %v876
          %v878 = vld [vmem:[%s478 + $0x638] sm:$0xff]
          %879 = vst [vmem:[%s479 + $0x638] sm:$0xff] %v878
          %v880 = vld [vmem:[%s478 + $0x640] sm:$0xff]
          %881 = vst [vmem:[%s479 + $0x640] sm:$0xff] %v880
          %v882 = vld [vmem:[%s478 + $0x648] sm:$0xff]
          %883 = vst [vmem:[%s479 + $0x648] sm:$0xff] %v882
          %v884 = vld [vmem:[%s478 + $0x650] sm:$0xff]
          %885 = vst [vmem:[%s479 + $0x650] sm:$0xff] %v884
          %v886 = vld [vmem:[%s478 + $0x658] sm:$0xff]
          %887 = vst [vmem:[%s479 + $0x658] sm:$0xff] %v886
          %v888 = vld [vmem:[%s478 + $0x660] sm:$0xff]
          %889 = vst [vmem:[%s479 + $0x660] sm:$0xff] %v888
          %v890 = vld [vmem:[%s478 + $0x668] sm:$0xff]
          %891 = vst [vmem:[%s479 + $0x668] sm:$0xff] %v890
          %v892 = vld [vmem:[%s478 + $0x670] sm:$0xff]
          %893 = vst [vmem:[%s479 + $0x670] sm:$0xff] %v892
          %v894 = vld [vmem:[%s478 + $0x678] sm:$0xff]
          %895 = vst [vmem:[%s479 + $0x678] sm:$0xff] %v894
          %v896 = vld [vmem:[%s478 + $0x680] sm:$0xff]
          %897 = vst [vmem:[%s479 + $0x680] sm:$0xff] %v896
          %v898 = vld [vmem:[%s478 + $0x688] sm:$0xff]
          %899 = vst [vmem:[%s479 + $0x688] sm:$0xff] %v898
          %v900 = vld [vmem:[%s478 + $0x690] sm:$0xff]
          %901 = vst [vmem:[%s479 + $0x690] sm:$0xff] %v900
          %v902 = vld [vmem:[%s478 + $0x698] sm:$0xff]
          %903 = vst [vmem:[%s479 + $0x698] sm:$0xff] %v902
          %v904 = vld [vmem:[%s478 + $0x6a0] sm:$0xff]
          %905 = vst [vmem:[%s479 + $0x6a0] sm:$0xff] %v904
          %v906 = vld [vmem:[%s478 + $0x6a8] sm:$0xff]
          %907 = vst [vmem:[%s479 + $0x6a8] sm:$0xff] %v906
          %v908 = vld [vmem:[%s478 + $0x6b0] sm:$0xff]
          %909 = vst [vmem:[%s479 + $0x6b0] sm:$0xff] %v908
          %v910 = vld [vmem:[%s478 + $0x6b8] sm:$0xff]
          %911 = vst [vmem:[%s479 + $0x6b8] sm:$0xff] %v910
          %v912 = vld [vmem:[%s478 + $0x6c0] sm:$0xff]
          %913 = vst [vmem:[%s479 + $0x6c0] sm:$0xff] %v912
          %v914 = vld [vmem:[%s478 + $0x6c8] sm:$0xff]
          %915 = vst [vmem:[%s479 + $0x6c8] sm:$0xff] %v914
          %v916 = vld [vmem:[%s478 + $0x6d0] sm:$0xff]
          %917 = vst [vmem:[%s479 + $0x6d0] sm:$0xff] %v916
          %v918 = vld [vmem:[%s478 + $0x6d8] sm:$0xff]
          %919 = vst [vmem:[%s479 + $0x6d8] sm:$0xff] %v918
          %v920 = vld [vmem:[%s478 + $0x6e0] sm:$0xff]
          %921 = vst [vmem:[%s479 + $0x6e0] sm:$0xff] %v920
          %v922 = vld [vmem:[%s478 + $0x6e8] sm:$0xff]
          %923 = vst [vmem:[%s479 + $0x6e8] sm:$0xff] %v922
          %v924 = vld [vmem:[%s478 + $0x6f0] sm:$0xff]
          %925 = vst [vmem:[%s479 + $0x6f0] sm:$0xff] %v924
          %v926 = vld [vmem:[%s478 + $0x6f8] sm:$0xff]
          %927 = vst [vmem:[%s479 + $0x6f8] sm:$0xff] %v926
          %v928 = vld [vmem:[%s478 + $0x700] sm:$0xff]
          %929 = vst [vmem:[%s479 + $0x700] sm:$0xff] %v928
          %v930 = vld [vmem:[%s478 + $0x708] sm:$0xff]
          %931 = vst [vmem:[%s479 + $0x708] sm:$0xff] %v930
          %v932 = vld [vmem:[%s478 + $0x710] sm:$0xff]
          %933 = vst [vmem:[%s479 + $0x710] sm:$0xff] %v932
          %v934 = vld [vmem:[%s478 + $0x718] sm:$0xff]
          %935 = vst [vmem:[%s479 + $0x718] sm:$0xff] %v934
          %v936 = vld [vmem:[%s478 + $0x720] sm:$0xff]
          %937 = vst [vmem:[%s479 + $0x720] sm:$0xff] %v936
          %v938 = vld [vmem:[%s478 + $0x728] sm:$0xff]
          %939 = vst [vmem:[%s479 + $0x728] sm:$0xff] %v938
          %v940 = vld [vmem:[%s478 + $0x730] sm:$0xff]
          %941 = vst [vmem:[%s479 + $0x730] sm:$0xff] %v940
          %v942 = vld [vmem:[%s478 + $0x738] sm:$0xff]
          %943 = vst [vmem:[%s479 + $0x738] sm:$0xff] %v942
          %v944 = vld [vmem:[%s478 + $0x740] sm:$0xff]
          %945 = vst [vmem:[%s479 + $0x740] sm:$0xff] %v944
          %v946 = vld [vmem:[%s478 + $0x748] sm:$0xff]
          %947 = vst [vmem:[%s479 + $0x748] sm:$0xff] %v946
          %v948 = vld [vmem:[%s478 + $0x750] sm:$0xff]
          %949 = vst [vmem:[%s479 + $0x750] sm:$0xff] %v948
          %v950 = vld [vmem:[%s478 + $0x758] sm:$0xff]
          %951 = vst [vmem:[%s479 + $0x758] sm:$0xff] %v950
          %v952 = vld [vmem:[%s478 + $0x760] sm:$0xff]
          %953 = vst [vmem:[%s479 + $0x760] sm:$0xff] %v952
          %v954 = vld [vmem:[%s478 + $0x768] sm:$0xff]
          %955 = vst [vmem:[%s479 + $0x768] sm:$0xff] %v954
          %v956 = vld [vmem:[%s478 + $0x770] sm:$0xff]
          %957 = vst [vmem:[%s479 + $0x770] sm:$0xff] %v956
          %v958 = vld [vmem:[%s478 + $0x778] sm:$0xff]
          %959 = vst [vmem:[%s479 + $0x778] sm:$0xff] %v958
          %v960 = vld [vmem:[%s478 + $0x780] sm:$0xff]
          %961 = vst [vmem:[%s479 + $0x780] sm:$0xff] %v960
          %v962 = vld [vmem:[%s478 + $0x788] sm:$0xff]
          %963 = vst [vmem:[%s479 + $0x788] sm:$0xff] %v962
          %v964 = vld [vmem:[%s478 + $0x790] sm:$0xff]
          %965 = vst [vmem:[%s479 + $0x790] sm:$0xff] %v964
          %v966 = vld [vmem:[%s478 + $0x798] sm:$0xff]
          %967 = vst [vmem:[%s479 + $0x798] sm:$0xff] %v966
          %v968 = vld [vmem:[%s478 + $0x7a0] sm:$0xff]
          %969 = vst [vmem:[%s479 + $0x7a0] sm:$0xff] %v968
          %v970 = vld [vmem:[%s478 + $0x7a8] sm:$0xff]
          %971 = vst [vmem:[%s479 + $0x7a8] sm:$0xff] %v970
          %v972 = vld [vmem:[%s478 + $0x7b0] sm:$0xff]
          %973 = vst [vmem:[%s479 + $0x7b0] sm:$0xff] %v972
          %v974 = vld [vmem:[%s478 + $0x7b8] sm:$0xff]
          %975 = vst [vmem:[%s479 + $0x7b8] sm:$0xff] %v974
          %v976 = vld [vmem:[%s478 + $0x7c0] sm:$0xff]
          %977 = vst [vmem:[%s479 + $0x7c0] sm:$0xff] %v976
          %v978 = vld [vmem:[%s478 + $0x7c8] sm:$0xff]
          %979 = vst [vmem:[%s479 + $0x7c8] sm:$0xff] %v978
          %v980 = vld [vmem:[%s478 + $0x7d0] sm:$0xff]
          %981 = vst [vmem:[%s479 + $0x7d0] sm:$0xff] %v980
          %v982 = vld [vmem:[%s478 + $0x7d8] sm:$0xff]
          %983 = vst [vmem:[%s479 + $0x7d8] sm:$0xff] %v982
          %v984 = vld [vmem:[%s478 + $0x7e0] sm:$0xff]
          %985 = vst [vmem:[%s479 + $0x7e0] sm:$0xff] %v984
          %v986 = vld [vmem:[%s478 + $0x7e8] sm:$0xff]
          %987 = vst [vmem:[%s479 + $0x7e8] sm:$0xff] %v986
          %v988 = vld [vmem:[%s478 + $0x7f0] sm:$0xff]
          %989 = vst [vmem:[%s479 + $0x7f0] sm:$0xff] %v988
          %v990 = vld [vmem:[%s478 + $0x7f8] sm:$0xff]
          %991 = vst [vmem:[%s479 + $0x7f8] sm:$0xff] %v990
        $region75: #{misa_forward.1} parent=69 // loop_footer
          %s477 = sadd.s32 1, %s473
        $region76: #{misa_forward.1} parent=69 // loop_footer_branch
          %472 = sbr.rel target = $region72
        $region77: #{misa_forward.1} parent=69 // loop_exit
          _
      $region70: #{misa_forward.1} parent=54 // pred_fallthru
        _
      %p992 = pneg %p468
      // Predicated region
      $region78: #{misa_forward.1} parent=54 // pred_check
        _
      $region79: #{misa_forward.1} parent=54 // pred_check_branch
        %994 = sbr.rel (%p468) target = $region81
      $region80: #{misa_forward.1} parent=54 // pred_region
        %s995 = sand.u32 2048, 7
      $region81: #{misa_forward.1} parent=54 // pred_fallthru
        _
    $region55: #{misa_forward.1} parent=1 // pred_fallthru
      _
    // Predicated region
    $region56: #{misa_forward.1} parent=1 // pred_check
      %p452 = pneg %p448
    $region57: #{misa_forward.1} parent=1 // pred_check_branch
      %454 = sbr.rel (%p452) target = $region59
    $region58: #{misa_forward.1} parent=1 // pred_region
      %s455 = sshll.u32 1, 2048
      %s456 = ssub.s32 %s455, 1
      loop: start=0, step=1, limit=1
      $region60: #{misa_forward.1} parent=58 // loop_pre_header
        _
      $region61: #{misa_forward.1} parent=58 // loop_header
        %s458 = sphi 0, %s462
        %p459 = scmp.ge.s32.totalorder %s458, 1
        %s463 = sphi %s5, %s5
        %s464 = sphi [#allocation3], [#allocation3]
      $region62: #{misa_forward.1} parent=58 // loop_header_branch
        %461 = sbr.rel (%p459) target = $region66
      $region63: #{misa_forward.1} parent=58 // loop_body
        %v465 = vld [vmem:[%s463] sm:%s456]
        %466 = vst [vmem:[%s464] sm:%s456] %v465
      $region64: #{misa_forward.1} parent=58 // loop_footer
        %s462 = sadd.s32 1, %s458
      $region65: #{misa_forward.1} parent=58 // loop_footer_branch
        %457 = sbr.rel target = $region61
      $region66: #{misa_forward.1} parent=58 // loop_exit
        _
    $region59: #{misa_forward.1} parent=1 // pred_fallthru
      _
    // Predicated region
    $region82: #{misa_forward.1} parent=1 // pred_check
      _
    $region83: #{misa_forward.1} parent=1 // pred_check_branch
      %998 = sbr.rel (0) target = $region85
    $region84: #{misa_forward.1} parent=1 // pred_region
      %999 = vsyncadd %s446, 32768
    $region85: #{misa_forward.1} parent=1 // pred_fallthru
      _
    %v1000 = vld [vmem:[%s0] sm:$0xff]
    %v1001 = vld [vmem:[%s0 + $0x8] sm:$0xff]
    %v1002 = vpack.c.bf16 %v1001, %v1000
    %v1003 = vld [vmem:[%s2] sm:$0xf]
    %v1004 = vld [vmem:[%s2 + $0x8] sm:$0xf]
    %v1005 = vld [vmem:[%s2 + $0x10] sm:$0xf]
    %v1006 = vld [vmem:[%s2 + $0x18] sm:$0xf]
    %v1007 = vld [vmem:[%s2 + $0x20] sm:$0xf]
    %v1008 = vld [vmem:[%s2 + $0x28] sm:$0xf]
    %v1009 = vld [vmem:[%s2 + $0x30] sm:$0xf]
    %v1010 = vld [vmem:[%s2 + $0x38] sm:$0xf]
    %v1011 = vld [vmem:[%s2 + $0x40] sm:$0xf]
    %v1012 = vld [vmem:[%s2 + $0x48] sm:$0xf]
    %v1013 = vld [vmem:[%s2 + $0x50] sm:$0xf]
    %v1014 = vld [vmem:[%s2 + $0x58] sm:$0xf]
    %v1015 = vld [vmem:[%s2 + $0x60] sm:$0xf]
    %v1016 = vld [vmem:[%s2 + $0x68] sm:$0xf]
    %v1017 = vld [vmem:[%s2 + $0x70] sm:$0xf]
    %v1018 = vld [vmem:[%s2 + $0x78] sm:$0xf]
    %v1019 = vld [vmem:[%s1] ss:$0 sm:$0xff]
    %v1036 = vunpack.c.l.b16 %v1003
    %v1037 = vunpack.c.l.b16 %v1004
    %v1038 = vunpack.c.l.b16 %v1005
    %v1039 = vunpack.c.l.b16 %v1006
    %v1040 = vunpack.c.l.b16 %v1007
    %v1041 = vunpack.c.l.b16 %v1008
    %v1042 = vunpack.c.l.b16 %v1009
    %v1043 = vunpack.c.l.b16 %v1010
    %v1044 = vunpack.c.l.b16 %v1011
    %v1045 = vunpack.c.l.b16 %v1012
    %v1046 = vunpack.c.l.b16 %v1013
    %v1047 = vunpack.c.l.b16 %v1014
    %v1048 = vunpack.c.l.b16 %v1015
    %v1049 = vunpack.c.l.b16 %v1016
    %v1050 = vunpack.c.l.b16 %v1017
    %v1051 = vunpack.c.l.b16 %v1018
    %v1052 = vpack.c.b16 %v1037, %v1036
    %v1053 = vpack.c.b16 %v1039, %v1038
    %v1054 = vpack.c.b16 %v1041, %v1040
    %v1055 = vpack.c.b16 %v1043, %v1042
    %v1056 = vpack.c.b16 %v1045, %v1044
    %v1057 = vpack.c.b16 %v1047, %v1046
    %v1058 = vpack.c.b16 %v1049, %v1048
    %v1059 = vpack.c.b16 %v1051, %v1050
    %1068 = vmatprep.subr.bf16.mxu0 0
    %1069 = vmatpush1.bf16.msra.mxu0 %v1059
    %1070 = vmatprep.subr.bf16.mxu0 0
    %1071 = vmatpush1.bf16.msra.mxu0 %v1058
    %1072 = vmatprep.subr.bf16.mxu0 0
    %1073 = vmatpush1.bf16.msra.mxu0 %v1057
    %1074 = vmatprep.subr.bf16.mxu0 0
    %1075 = vmatpush1.bf16.msra.mxu0 %v1056
    %1076 = vmatprep.subr.bf16.mxu0 0
    %1077 = vmatpush1.bf16.msra.mxu0 %v1055
    %1078 = vmatprep.subr.bf16.mxu0 0
    %1079 = vmatpush1.bf16.msra.mxu0 %v1054
    %1080 = vmatprep.subr.bf16.mxu0 0
    %1081 = vmatpush1.bf16.msra.mxu0 %v1053
    %1082 = vmatprep.subr.bf16.mxu0 0
    %1083 = vmatpush1.bf16.msra.mxu0 %v1052
    %1084 = vmatprep.subr.bf16.mxu0 0
    %1085 = vmatpush2.bf16.msra.mxu0 0
    %1086 = vmatprep.subr.bf16.mxu0 0
    %1087 = vmatpush2.bf16.msra.mxu0 0
    %1088 = vmatprep.subr.bf16.mxu0 0
    %1089 = vmatpush2.bf16.msra.mxu0 0
    %1090 = vmatprep.subr.bf16.mxu0 0
    %1091 = vmatpush2.bf16.msra.mxu0 0
    %1092 = vmatprep.subr.bf16.mxu0 0
    %1093 = vmatpush2.bf16.msra.mxu0 0
    %1094 = vmatprep.subr.bf16.mxu0 0
    %1095 = vmatpush2.bf16.msra.mxu0 0
    %1096 = vmatprep.subr.bf16.mxu0 0
    %1097 = vmatpush2.bf16.msra.mxu0 0
    %1098 = vmatprep.subr.bf16.mxu0 0
    %1099 = vmatpush2.bf16.msra.mxu0 0
    %1100 = vmatprep.mubr.bf16.mxu0 0
    %1101 = vmatmul.mubr.bf16.gmra.mxu0 %v1002
    %v1102 = vpop.f32.mrf.mxu0
    %v1103 = vadd.f32 %v1019, %v1102
    %v1104 = vpop.f32.mrf.mxu0
    %v1105 = vpop.f32.mrf.mxu0
    %v1106 = vadd.f32 %v1019, %v1105
    %v1107 = vpop.f32.mrf.mxu0
    %1108 = vdwg.mxu0
    %v1109 = vmax.f32 %v1103, 0.0
    %v1110 = vmax.f32 %v1106, 0.0
    %v1111 = vld [vmem:[%s1 + $0x1] ss:$0 sm:$0xff]
    %v1112 = vld [vmem:[%s1 + $0x2] ss:$0 sm:$0xff]
    %vm1113 = vcmask 261120
    %v1114 = vsel %vm1113, %v1109, 0.0
    %1115 = vadd.xlane.f32.xlu0 %v1114
    %v1116 = vpop.xlane.xlu0 %1115
    %v1117 = vsel %vm1113, %v1110, 0.0
    %1118 = vadd.xlane.f32.xlu0 %v1117
    %v1119 = vpop.xlane.xlu0 %1118
    %v1120 = vrcp.pop 32.0
    %v1121 = vmul.f32 %v1116, %v1120
    %v1122 = vmul.f32 %v1119, %v1120
    %v1123 = vsub.f32 %v1109, %v1121
    %v1124 = vsub.f32 %v1110, %v1122
    %v1125 = vmul.f32 %v1123, %v1123
    %v1126 = vmul.f32 %v1124, %v1124
    %v1127 = vsel %vm1113, %v1125, 0.0
    %1128 = vadd.xlane.f32.xlu0 %v1127
    %v1129 = vpop.xlane.xlu0 %1128
    %v1130 = vsel %vm1113, %v1126, 0.0
    %1131 = vadd.xlane.f32.xlu0 %v1130
    %v1132 = vpop.xlane.xlu0 %1131
    %v1133 = vmul.f32 %v1129, %v1120
    %v1134 = vmul.f32 %v1132, %v1120
    %v1135 = vadd.f32 %v1133, 1e-05
    %v1136 = vadd.f32 %v1134, 1e-05
    %v1137 = vrsqrt.pop %v1135
    %v1138 = vrsqrt.pop %v1136
    %v1139 = vmul.f32 %v1123, %v1137
    %v1140 = vmul.f32 %v1124, %v1138
    %v1141 = vmul.f32 %v1139, %v1111
    %v1142 = vmul.f32 %v1140, %v1111
    %v1143 = vadd.f32 %v1141, %v1112
    %v1144 = vadd.f32 %v1142, %v1112
    %1147 = vrot.lane.b32.xlu0 %v1109, 96
    %v1148 = vpop.permute.xlu0 %1147
    %1149 = vrot.lane.b32.xlu0 %v1110, 96
    %v1150 = vpop.permute.xlu0 %1149
    %v1153 = vsel %vm1113, %v1148, 0.0
    %1154 = vadd.xlane.f32.xlu0 %v1153
    %v1155 = vpop.xlane.xlu0 %1154
    %v1156 = vsel %vm1113, %v1150, 0.0
    %1157 = vadd.xlane.f32.xlu0 %v1156
    %v1158 = vpop.xlane.xlu0 %1157
    %v1159 = vmul.f32 %v1155, %v1120
    %v1160 = vmul.f32 %v1158, %v1120
    %v1161 = vsub.f32 %v1109, %v1159
    %v1162 = vsub.f32 %v1110, %v1160
    %v1163 = vmul.f32 %v1161, %v1161
    %v1164 = vmul.f32 %v1162, %v1162
    %1167 = vrot.lane.b32.xlu0 %v1163, 96
    %v1168 = vpop.permute.xlu0 %1167
    %1169 = vrot.lane.b32.xlu0 %v1164, 96
    %v1170 = vpop.permute.xlu0 %1169
    %v1173 = vsel %vm1113, %v1168, 0.0
    %1174 = vadd.xlane.f32.xlu0 %v1173
    %v1175 = vpop.xlane.xlu0 %1174
    %v1176 = vsel %vm1113, %v1170, 0.0
    %1177 = vadd.xlane.f32.xlu0 %v1176
    %v1178 = vpop.xlane.xlu0 %1177
    %v1179 = vmul.f32 %v1175, %v1120
    %v1180 = vmul.f32 %v1178, %v1120
    %v1181 = vadd.f32 %v1179, 1e-05
    %v1182 = vadd.f32 %v1180, 1e-05
    %v1183 = vrsqrt.pop %v1181
    %v1184 = vrsqrt.pop %v1182
    %v1185 = vmul.f32 %v1161, %v1183
    %v1186 = vmul.f32 %v1162, %v1184
    %v1187 = vmul.f32 %v1185, %v1111
    %v1188 = vmul.f32 %v1186, %v1111
    %v1189 = vadd.f32 %v1187, %v1112
    %v1190 = vadd.f32 %v1188, %v1112
    %1191 = vrot.lane.b32.xlu0 %v1109, 64
    %v1192 = vpop.permute.xlu0 %1191
    %1193 = vrot.lane.b32.xlu0 %v1110, 64
    %v1194 = vpop.permute.xlu0 %1193
    %v1197 = vsel %vm1113, %v1192, 0.0
    %1198 = vadd.xlane.f32.xlu0 %v1197
    %v1199 = vpop.xlane.xlu0 %1198
    %v1200 = vsel %vm1113, %v1194, 0.0
    %1201 = vadd.xlane.f32.xlu0 %v1200
    %v1202 = vpop.xlane.xlu0 %1201
    %v1203 = vmul.f32 %v1199, %v1120
    %v1204 = vmul.f32 %v1202, %v1120
    %v1205 = vsub.f32 %v1109, %v1203
    %v1206 = vsub.f32 %v1110, %v1204
    %v1207 = vmul.f32 %v1205, %v1205
    %v1208 = vmul.f32 %v1206, %v1206
    %1211 = vrot.lane.b32.xlu0 %v1207, 64
    %v1212 = vpop.permute.xlu0 %1211
    %1213 = vrot.lane.b32.xlu0 %v1208, 64
    %v1214 = vpop.permute.xlu0 %1213
    %v1217 = vsel %vm1113, %v1212, 0.0
    %1218 = vadd.xlane.f32.xlu0 %v1217
    %v1219 = vpop.xlane.xlu0 %1218
    %v1220 = vsel %vm1113, %v1214, 0.0
    %1221 = vadd.xlane.f32.xlu0 %v1220
    %v1222 = vpop.xlane.xlu0 %1221
    %v1223 = vmul.f32 %v1219, %v1120
    %v1224 = vmul.f32 %v1222, %v1120
    %v1225 = vadd.f32 %v1223, 1e-05
    %v1226 = vadd.f32 %v1224, 1e-05
    %v1227 = vrsqrt.pop %v1225
    %v1228 = vrsqrt.pop %v1226
    %v1229 = vmul.f32 %v1205, %v1227
    %v1230 = vmul.f32 %v1206, %v1228
    %v1231 = vmul.f32 %v1229, %v1111
    %v1232 = vmul.f32 %v1230, %v1111
    %v1233 = vadd.f32 %v1231, %v1112
    %v1234 = vadd.f32 %v1232, %v1112
    %v1235 = vsel %vm1113, %v1143, %v1189
    %v1236 = vsel %vm1113, %v1144, %v1190
    %vm1237 = vcmask 523264
    %v1238 = vsel %vm1237, %v1235, %v1233
    %v1239 = vsel %vm1237, %v1236, %v1234
    %v1240 = vpack.c.bf16 %v1239, %v1238
    %v1241 = vld [vmem:[%s2 + $0x80] sm:$0xff]
    %v1242 = vld [vmem:[%s2 + $0x88] sm:$0xff]
    %v1243 = vld [vmem:[%s2 + $0x90] sm:$0xff]
    %v1244 = vld [vmem:[%s2 + $0x98] sm:$0xff]
    %v1245 = vld [vmem:[%s2 + $0xa0] sm:$0xff]
    %v1246 = vld [vmem:[%s2 + $0xa8] sm:$0xff]
    %v1247 = vld [vmem:[%s2 + $0xb0] sm:$0xff]
    %v1248 = vld [vmem:[%s2 + $0xb8] sm:$0xff]
    %v1249 = vld [vmem:[%s2 + $0xc0] sm:$0xff]
    %v1250 = vld [vmem:[%s2 + $0xc8] sm:$0xff]
    %v1251 = vld [vmem:[%s2 + $0xd0] sm:$0xff]
    %v1252 = vld [vmem:[%s2 + $0xd8] sm:$0xff]
    %s1253 = scalar_lea.vmem %s1, 3
    %v1254 = vld [vmem:[%s1253] ss:$8 sm:$0x3]
    %v1256 = vlaneseq
    %v1257 = vshrl.u32 %v1256, 7
    %v1258 = vsub.s32 0, %v1257
    %v1259 = vrot.slane %v1254, %v1258
    %v1260 = vlaneseq
    %v1261 = vshrl.u32 %v1260, 7
    %v1262 = vsub.s32 1, %v1261
    %v1263 = vrot.slane %v1254, %v1262
    %v1278 = vunpack.c.l.b16 %v1241
    %v1279 = vunpack.c.h.b16 %v1241
    %v1280 = vunpack.c.l.b16 %v1242
    %v1281 = vunpack.c.h.b16 %v1242
    %v1282 = vunpack.c.l.b16 %v1243
    %v1283 = vunpack.c.h.b16 %v1243
    %v1284 = vunpack.c.l.b16 %v1244
    %v1285 = vunpack.c.h.b16 %v1244
    %v1286 = vunpack.c.l.b16 %v1245
    %v1287 = vunpack.c.h.b16 %v1245
    %v1288 = vunpack.c.l.b16 %v1246
    %v1289 = vunpack.c.h.b16 %v1246
    %v1290 = vunpack.c.l.b16 %v1247
    %v1291 = vunpack.c.h.b16 %v1247
    %v1292 = vunpack.c.l.b16 %v1248
    %v1293 = vunpack.c.h.b16 %v1248
    %v1294 = vunpack.c.l.b16 %v1249
    %v1295 = vunpack.c.h.b16 %v1249
    %v1296 = vunpack.c.l.b16 %v1250
    %v1297 = vunpack.c.h.b16 %v1250
    %v1298 = vunpack.c.l.b16 %v1251
    %v1299 = vunpack.c.h.b16 %v1251
    %v1300 = vunpack.c.l.b16 %v1252
    %v1301 = vunpack.c.h.b16 %v1252
    %v1302 = vpack.c.b16 %v1280, %v1278
    %v1303 = vpack.c.b16 %v1281, %v1279
    %v1304 = vpack.c.b16 %v1284, %v1282
    %v1305 = vpack.c.b16 %v1285, %v1283
    %v1306 = vpack.c.b16 %v1288, %v1286
    %v1307 = vpack.c.b16 %v1289, %v1287
    %v1308 = vpack.c.b16 %v1292, %v1290
    %v1309 = vpack.c.b16 %v1293, %v1291
    %v1310 = vpack.c.b16 %v1296, %v1294
    %v1311 = vpack.c.b16 %v1297, %v1295
    %v1312 = vpack.c.b16 %v1300, %v1298
    %v1313 = vpack.c.b16 %v1301, %v1299
    %vm1326 = vcmask 785408
    %v1328 = vsel %vm1326, %v1240, 0
    %1330 = vmatprep.subr.bf16.mxu0 0
    %1331 = vmatpush1.bf16.msra.mxu0 0
    %1332 = vmatprep.subr.bf16.mxu0 0
    %1333 = vmatpush1.bf16.msra.mxu0 0
    %1334 = vmatprep.subr.bf16.mxu0 %v1313
    %1335 = vmatpush1.bf16.msra.mxu0 %v1312
    %1336 = vmatprep.subr.bf16.mxu0 %v1311
    %1337 = vmatpush1.bf16.msra.mxu0 %v1310
    %1338 = vmatprep.subr.bf16.mxu0 %v1309
    %1339 = vmatpush1.bf16.msra.mxu0 %v1308
    %1340 = vmatprep.subr.bf16.mxu0 %v1307
    %1341 = vmatpush1.bf16.msra.mxu0 %v1306
    %1342 = vmatprep.subr.bf16.mxu0 %v1305
    %1343 = vmatpush1.bf16.msra.mxu0 %v1304
    %1344 = vmatprep.subr.bf16.mxu0 %v1303
    %1345 = vmatpush1.bf16.msra.mxu0 %v1302
    %1346 = vmatprep.subr.bf16.mxu0 0
    %1347 = vmatpush2.bf16.msra.mxu0 0
    %1348 = vmatprep.subr.bf16.mxu0 0
    %1349 = vmatpush2.bf16.msra.mxu0 0
    %1350 = vmatprep.subr.bf16.mxu0 0
    %1351 = vmatpush2.bf16.msra.mxu0 0
    %1352 = vmatprep.subr.bf16.mxu0 0
    %1353 = vmatpush2.bf16.msra.mxu0 0
    %1354 = vmatprep.subr.bf16.mxu0 0
    %1355 = vmatpush2.bf16.msra.mxu0 0
    %1356 = vmatprep.subr.bf16.mxu0 0
    %1357 = vmatpush2.bf16.msra.mxu0 0
    %1358 = vmatprep.subr.bf16.mxu0 0
    %1359 = vmatpush2.bf16.msra.mxu0 0
    %1360 = vmatprep.subr.bf16.mxu0 0
    %1361 = vmatpush2.bf16.msra.mxu0 0
    %1362 = vmatprep.mubr.bf16.mxu0 0
    %1363 = vmatmul.mubr.bf16.gmra.mxu0 %v1328
    %v1364 = vpop.f32.mrf.mxu0
    %v1365 = vadd.f32 %v1259, %v1364
    %v1366 = vpop.f32.mrf.mxu0
    %v1367 = vadd.f32 %v1263, %v1366
    %v1368 = vpop.f32.mrf.mxu0
    %v1369 = vadd.f32 %v1259, %v1368
    %v1370 = vpop.f32.mrf.mxu0
    %v1371 = vadd.f32 %v1263, %v1370
    %1372 = vdwg.mxu0
    %v1373 = vxor.u32 %v1365, 2147483648
    %v1374 = vxor.u32 %v1367, 2147483648
    %v1375 = vxor.u32 %v1369, 2147483648
    %v1376 = vxor.u32 %v1371, 2147483648
    %v1377 = vmul.f32 %v1373, 1.442695
    %v1378 = vpow.pop %v1377
    %v1379 = vmul.f32 %v1374, 1.442695
    %v1380 = vpow.pop %v1379
    %v1381 = vmul.f32 %v1375, 1.442695
    %v1382 = vpow.pop %v1381
    %v1383 = vmul.f32 %v1376, 1.442695
    %v1384 = vpow.pop %v1383
    %v1385 = vadd.f32 %v1378, 1.0
    %v1386 = vadd.f32 %v1380, 1.0
    %v1387 = vadd.f32 %v1382, 1.0
    %v1388 = vadd.f32 %v1384, 1.0
    %v1389 = vrcp.pop %v1385
    %v1390 = vmul.f32 1.0, %v1389
    %v1391 = vrcp.pop %v1386
    %v1392 = vmul.f32 1.0, %v1391
    %v1393 = vrcp.pop %v1387
    %v1394 = vmul.f32 1.0, %v1393
    %v1395 = vrcp.pop %v1388
    %v1396 = vmul.f32 1.0, %v1395
    %v1397 = vpack.c.bf16 %v1394, %v1390
    %v1398 = vpack.c.bf16 %v1396, %v1392
    %v1399 = vld [vmem:[%s3] sm:$0xff]
    %v1400 = vld [vmem:[%s3 + $0x8] sm:$0xff]
    %v1401 = vld [vmem:[%s3 + $0x10] sm:$0xff]
    %v1402 = vld [vmem:[%s3 + $0x18] sm:$0xff]
    %v1403 = vld [vmem:[%s3 + $0x20] sm:$0xff]
    %v1404 = vld [vmem:[%s3 + $0x28] sm:$0xff]
    %v1405 = vld [vmem:[%s3 + $0x30] sm:$0xff]
    %v1406 = vld [vmem:[%s3 + $0x38] sm:$0xff]
    %v1407 = vld [vmem:[%s3 + $0x40] sm:$0xff]
    %v1408 = vld [vmem:[%s3 + $0x48] sm:$0xff]
    %v1409 = vld [vmem:[%s3 + $0x50] sm:$0xff]
    %v1410 = vld [vmem:[%s3 + $0x58] sm:$0xff]
    %v1411 = vld [vmem:[%s3 + $0x60] sm:$0xff]
    %v1412 = vld [vmem:[%s3 + $0x68] sm:$0xff]
    %v1413 = vld [vmem:[%s3 + $0x70] sm:$0xff]
    %v1414 = vld [vmem:[%s3 + $0x78] sm:$0xff]
    %v1415 = vld [vmem:[%s3 + $0x80] sm:$0xff]
    %v1416 = vld [vmem:[%s3 + $0x88] sm:$0xff]
    %v1417 = vld [vmem:[%s3 + $0x90] sm:$0xff]
    %v1418 = vld [vmem:[%s3 + $0x98] sm:$0xff]
    %v1419 = vld [vmem:[%s3 + $0xa0] sm:$0xff]
    %v1420 = vld [vmem:[%s3 + $0xa8] sm:$0xff]
    %v1421 = vld [vmem:[%s3 + $0xb0] sm:$0xff]
    %v1422 = vld [vmem:[%s3 + $0xb8] sm:$0xff]
    %v1423 = vld [vmem:[%s3 + $0xc0] sm:$0xff]
    %v1424 = vld [vmem:[%s3 + $0xc8] sm:$0xff]
    %v1425 = vld [vmem:[%s3 + $0xd0] sm:$0xff]
    %v1426 = vld [vmem:[%s3 + $0xd8] sm:$0xff]
    %v1427 = vld [vmem:[%s3 + $0xe0] sm:$0xff]
    %v1428 = vld [vmem:[%s3 + $0xe8] sm:$0xff]
    %v1429 = vld [vmem:[%s3 + $0xf0] sm:$0xff]
    %v1430 = vld [vmem:[%s3 + $0xf8] sm:$0xff]
    %v1431 = vld [vmem:[%s3 + $0x100] sm:$0xff]
    %v1432 = vld [vmem:[%s3 + $0x108] sm:$0xff]
    %v1433 = vld [vmem:[%s3 + $0x110] sm:$0xff]
    %v1434 = vld [vmem:[%s3 + $0x118] sm:$0xff]
    %v1435 = vld [vmem:[%s3 + $0x120] sm:$0xff]
    %v1436 = vld [vmem:[%s3 + $0x128] sm:$0xff]
    %v1437 = vld [vmem:[%s3 + $0x130] sm:$0xff]
    %v1438 = vld [vmem:[%s3 + $0x138] sm:$0xff]
    %v1439 = vld [vmem:[%s3 + $0x140] sm:$0xff]
    %v1440 = vld [vmem:[%s3 + $0x148] sm:$0xff]
    %v1441 = vld [vmem:[%s3 + $0x150] sm:$0xff]
    %v1442 = vld [vmem:[%s3 + $0x158] sm:$0xff]
    %v1443 = vld [vmem:[%s3 + $0x160] sm:$0xff]
    %v1444 = vld [vmem:[%s3 + $0x168] sm:$0xff]
    %v1445 = vld [vmem:[%s3 + $0x170] sm:$0xff]
    %v1446 = vld [vmem:[%s3 + $0x178] sm:$0xff]
    %v1447 = vld [vmem:[%s3 + $0x180] sm:$0xff]
    %v1448 = vld [vmem:[%s3 + $0x188] sm:$0xff]
    %v1449 = vld [vmem:[%s3 + $0x190] sm:$0xff]
    %v1450 = vld [vmem:[%s3 + $0x198] sm:$0xff]
    %v1451 = vld [vmem:[%s3 + $0x1a0] sm:$0xff]
    %v1452 = vld [vmem:[%s3 + $0x1a8] sm:$0xff]
    %v1453 = vld [vmem:[%s3 + $0x1b0] sm:$0xff]
    %v1454 = vld [vmem:[%s3 + $0x1b8] sm:$0xff]
    %v1455 = vld [vmem:[%s3 + $0x1c0] sm:$0xff]
    %v1456 = vld [vmem:[%s3 + $0x1c8] sm:$0xff]
    %v1457 = vld [vmem:[%s3 + $0x1d0] sm:$0xff]
    %v1458 = vld [vmem:[%s3 + $0x1d8] sm:$0xff]
    %v1459 = vld [vmem:[%s3 + $0x1e0] sm:$0xff]
    %v1460 = vld [vmem:[%s3 + $0x1e8] sm:$0xff]
    %v1461 = vld [vmem:[%s3 + $0x1f0] sm:$0xff]
    %v1462 = vld [vmem:[%s3 + $0x1f8] sm:$0xff]
    %v1463 = vld [vmem:[%s3 + $0x200] sm:$0xff]
    %v1464 = vld [vmem:[%s3 + $0x208] sm:$0xff]
    %v1465 = vld [vmem:[%s3 + $0x210] sm:$0xff]
    %v1466 = vld [vmem:[%s3 + $0x218] sm:$0xff]
    %v1467 = vld [vmem:[%s3 + $0x220] sm:$0xff]
    %v1468 = vld [vmem:[%s3 + $0x228] sm:$0xff]
    %v1469 = vld [vmem:[%s3 + $0x230] sm:$0xff]
    %v1470 = vld [vmem:[%s3 + $0x238] sm:$0xff]
    %s1471 = scalar_lea.vmem %s1, 4
    %v1472 = vld [vmem:[%s1471] ss:$8 sm:$0xf]
    %v1473 = vld [vmem:[%s1471] ss:$8 sm:$0x30]
    %v1474 = vor.u32 %v1472, %v1473
    %v1476 = vlaneseq
    %v1477 = vshrl.u32 %v1476, 7
    %v1478 = vsub.s32 0, %v1477
    %v1479 = vrot.slane %v1474, %v1478
    %v1480 = vlaneseq
    %v1481 = vshrl.u32 %v1480, 7
    %v1482 = vsub.s32 1, %v1481
    %v1483 = vrot.slane %v1474, %v1482
    %v1484 = vlaneseq
    %v1485 = vshrl.u32 %v1484, 7
    %v1486 = vsub.s32 2, %v1485
    %v1487 = vrot.slane %v1474, %v1486
    %v1488 = vlaneseq
    %v1489 = vshrl.u32 %v1488, 7
    %v1490 = vsub.s32 3, %v1489
    %v1491 = vrot.slane %v1474, %v1490
    %v1492 = vlaneseq
    %v1493 = vshrl.u32 %v1492, 7
    %v1494 = vsub.s32 4, %v1493
    %v1495 = vrot.slane %v1474, %v1494
    %v1496 = vlaneseq
    %v1497 = vshrl.u32 %v1496, 7
    %v1498 = vsub.s32 5, %v1497
    %v1499 = vrot.slane %v1474, %v1498
    %v1578 = vunpack.c.l.b16 %v1399
    %v1579 = vunpack.c.h.b16 %v1399
    %v1580 = vunpack.c.l.b16 %v1400
    %v1581 = vunpack.c.h.b16 %v1400
    %v1582 = vunpack.c.l.b16 %v1401
    %v1583 = vunpack.c.h.b16 %v1401
    %v1584 = vunpack.c.l.b16 %v1402
    %v1585 = vunpack.c.h.b16 %v1402
    %v1586 = vunpack.c.l.b16 %v1403
    %v1587 = vunpack.c.h.b16 %v1403
    %v1588 = vunpack.c.l.b16 %v1404
    %v1589 = vunpack.c.h.b16 %v1404
    %v1590 = vunpack.c.l.b16 %v1405
    %v1591 = vunpack.c.h.b16 %v1405
    %v1592 = vunpack.c.l.b16 %v1406
    %v1593 = vunpack.c.h.b16 %v1406
    %v1594 = vunpack.c.l.b16 %v1407
    %v1595 = vunpack.c.h.b16 %v1407
    %v1596 = vunpack.c.l.b16 %v1408
    %v1597 = vunpack.c.h.b16 %v1408
    %v1598 = vunpack.c.l.b16 %v1409
    %v1599 = vunpack.c.h.b16 %v1409
    %v1600 = vunpack.c.l.b16 %v1410
    %v1601 = vunpack.c.h.b16 %v1410
    %v1602 = vunpack.c.l.b16 %v1411
    %v1603 = vunpack.c.h.b16 %v1411
    %v1604 = vunpack.c.l.b16 %v1412
    %v1605 = vunpack.c.h.b16 %v1412
    %v1606 = vunpack.c.l.b16 %v1413
    %v1607 = vunpack.c.h.b16 %v1413
    %v1608 = vunpack.c.l.b16 %v1414
    %v1609 = vunpack.c.h.b16 %v1414
    %v1610 = vunpack.c.l.b16 %v1415
    %v1611 = vunpack.c.h.b16 %v1415
    %v1612 = vunpack.c.l.b16 %v1416
    %v1613 = vunpack.c.h.b16 %v1416
    %v1614 = vunpack.c.l.b16 %v1417
    %v1615 = vunpack.c.h.b16 %v1417
    %v1616 = vunpack.c.l.b16 %v1418
    %v1617 = vunpack.c.h.b16 %v1418
    %v1618 = vunpack.c.l.b16 %v1419
    %v1619 = vunpack.c.h.b16 %v1419
    %v1620 = vunpack.c.l.b16 %v1420
    %v1621 = vunpack.c.h.b16 %v1420
    %v1622 = vunpack.c.l.b16 %v1421
    %v1623 = vunpack.c.h.b16 %v1421
    %v1624 = vunpack.c.l.b16 %v1422
    %v1625 = vunpack.c.h.b16 %v1422
    %v1626 = vunpack.c.l.b16 %v1423
    %v1627 = vunpack.c.h.b16 %v1423
    %v1628 = vunpack.c.l.b16 %v1424
    %v1629 = vunpack.c.h.b16 %v1424
    %v1630 = vunpack.c.l.b16 %v1425
    %v1631 = vunpack.c.h.b16 %v1425
    %v1632 = vunpack.c.l.b16 %v1426
    %v1633 = vunpack.c.h.b16 %v1426
    %v1634 = vunpack.c.l.b16 %v1427
    %v1635 = vunpack.c.h.b16 %v1427
    %v1636 = vunpack.c.l.b16 %v1428
    %v1637 = vunpack.c.h.b16 %v1428
    %v1638 = vunpack.c.l.b16 %v1429
    %v1639 = vunpack.c.h.b16 %v1429
    %v1640 = vunpack.c.l.b16 %v1430
    %v1641 = vunpack.c.h.b16 %v1430
    %v1642 = vunpack.c.l.b16 %v1431
    %v1643 = vunpack.c.h.b16 %v1431
    %v1644 = vunpack.c.l.b16 %v1432
    %v1645 = vunpack.c.h.b16 %v1432
    %v1646 = vunpack.c.l.b16 %v1433
    %v1647 = vunpack.c.h.b16 %v1433
    %v1648 = vunpack.c.l.b16 %v1434
    %v1649 = vunpack.c.h.b16 %v1434
    %v1650 = vunpack.c.l.b16 %v1435
    %v1651 = vunpack.c.h.b16 %v1435
    %v1652 = vunpack.c.l.b16 %v1436
    %v1653 = vunpack.c.h.b16 %v1436
    %v1654 = vunpack.c.l.b16 %v1437
    %v1655 = vunpack.c.h.b16 %v1437
    %v1656 = vunpack.c.l.b16 %v1438
    %v1657 = vunpack.c.h.b16 %v1438
    %v1658 = vunpack.c.l.b16 %v1439
    %v1659 = vunpack.c.h.b16 %v1439
    %v1660 = vunpack.c.l.b16 %v1440
    %v1661 = vunpack.c.h.b16 %v1440
    %v1662 = vunpack.c.l.b16 %v1441
    %v1663 = vunpack.c.h.b16 %v1441
    %v1664 = vunpack.c.l.b16 %v1442
    %v1665 = vunpack.c.h.b16 %v1442
    %v1666 = vunpack.c.l.b16 %v1443
    %v1667 = vunpack.c.h.b16 %v1443
    %v1668 = vunpack.c.l.b16 %v1444
    %v1669 = vunpack.c.h.b16 %v1444
    %v1670 = vunpack.c.l.b16 %v1445
    %v1671 = vunpack.c.h.b16 %v1445
    %v1672 = vunpack.c.l.b16 %v1446
    %v1673 = vunpack.c.h.b16 %v1446
    %v1674 = vunpack.c.l.b16 %v1447
    %v1675 = vunpack.c.h.b16 %v1447
    %v1676 = vunpack.c.l.b16 %v1448
    %v1677 = vunpack.c.h.b16 %v1448
    %v1678 = vunpack.c.l.b16 %v1449
    %v1679 = vunpack.c.h.b16 %v1449
    %v1680 = vunpack.c.l.b16 %v1450
    %v1681 = vunpack.c.h.b16 %v1450
    %v1682 = vunpack.c.l.b16 %v1451
    %v1683 = vunpack.c.h.b16 %v1451
    %v1684 = vunpack.c.l.b16 %v1452
    %v1685 = vunpack.c.h.b16 %v1452
    %v1686 = vunpack.c.l.b16 %v1453
    %v1687 = vunpack.c.h.b16 %v1453
    %v1688 = vunpack.c.l.b16 %v1454
    %v1689 = vunpack.c.h.b16 %v1454
    %v1690 = vunpack.c.l.b16 %v1455
    %v1691 = vunpack.c.h.b16 %v1455
    %v1692 = vunpack.c.l.b16 %v1456
    %v1693 = vunpack.c.h.b16 %v1456
    %v1694 = vunpack.c.l.b16 %v1457
    %v1695 = vunpack.c.h.b16 %v1457
    %v1696 = vunpack.c.l.b16 %v1458
    %v1697 = vunpack.c.h.b16 %v1458
    %v1698 = vunpack.c.l.b16 %v1459
    %v1699 = vunpack.c.h.b16 %v1459
    %v1700 = vunpack.c.l.b16 %v1460
    %v1701 = vunpack.c.h.b16 %v1460
    %v1702 = vunpack.c.l.b16 %v1461
    %v1703 = vunpack.c.h.b16 %v1461
    %v1704 = vunpack.c.l.b16 %v1462
    %v1705 = vunpack.c.h.b16 %v1462
    %v1706 = vunpack.c.l.b16 %v1463
    %v1707 = vunpack.c.h.b16 %v1463
    %v1708 = vunpack.c.l.b16 %v1464
    %v1709 = vunpack.c.h.b16 %v1464
    %v1710 = vunpack.c.l.b16 %v1465
    %v1711 = vunpack.c.h.b16 %v1465
    %v1712 = vunpack.c.l.b16 %v1466
    %v1713 = vunpack.c.h.b16 %v1466
    %v1714 = vunpack.c.l.b16 %v1467
    %v1715 = vunpack.c.h.b16 %v1467
    %v1716 = vunpack.c.l.b16 %v1468
    %v1717 = vunpack.c.h.b16 %v1468
    %v1718 = vunpack.c.l.b16 %v1469
    %v1719 = vunpack.c.h.b16 %v1469
    %v1720 = vunpack.c.l.b16 %v1470
    %v1721 = vunpack.c.h.b16 %v1470
    %v1722 = vpack.c.b16 %v1584, %v1578
    %v1723 = vpack.c.b16 %v1585, %v1579
    %v1724 = vpack.c.b16 %v1586, %v1580
    %v1725 = vpack.c.b16 %v1587, %v1581
    %v1726 = vpack.c.b16 %v1588, %v1582
    %v1727 = vpack.c.b16 %v1589, %v1583
    %v1728 = vpack.c.b16 %v1596, %v1590
    %v1729 = vpack.c.b16 %v1597, %v1591
    %v1730 = vpack.c.b16 %v1598, %v1592
    %v1731 = vpack.c.b16 %v1599, %v1593
    %v1732 = vpack.c.b16 %v1600, %v1594
    %v1733 = vpack.c.b16 %v1601, %v1595
    %v1734 = vpack.c.b16 %v1608, %v1602
    %v1735 = vpack.c.b16 %v1609, %v1603
    %v1736 = vpack.c.b16 %v1610, %v1604
    %v1737 = vpack.c.b16 %v1611, %v1605
    %v1738 = vpack.c.b16 %v1612, %v1606
    %v1739 = vpack.c.b16 %v1613, %v1607
    %v1740 = vpack.c.b16 %v1620, %v1614
    %v1741 = vpack.c.b16 %v1621, %v1615
    %v1742 = vpack.c.b16 %v1622, %v1616
    %v1743 = vpack.c.b16 %v1623, %v1617
    %v1744 = vpack.c.b16 %v1624, %v1618
    %v1745 = vpack.c.b16 %v1625, %v1619
    %v1746 = vpack.c.b16 %v1632, %v1626
    %v1747 = vpack.c.b16 %v1633, %v1627
    %v1748 = vpack.c.b16 %v1634, %v1628
    %v1749 = vpack.c.b16 %v1635, %v1629
    %v1750 = vpack.c.b16 %v1636, %v1630
    %v1751 = vpack.c.b16 %v1637, %v1631
    %v1752 = vpack.c.b16 %v1644, %v1638
    %v1753 = vpack.c.b16 %v1645, %v1639
    %v1754 = vpack.c.b16 %v1646, %v1640
    %v1755 = vpack.c.b16 %v1647, %v1641
    %v1756 = vpack.c.b16 %v1648, %v1642
    %v1757 = vpack.c.b16 %v1649, %v1643
    %v1758 = vpack.c.b16 %v1656, %v1650
    %v1759 = vpack.c.b16 %v1657, %v1651
    %v1760 = vpack.c.b16 %v1658, %v1652
    %v1761 = vpack.c.b16 %v1659, %v1653
    %v1762 = vpack.c.b16 %v1660, %v1654
    %v1763 = vpack.c.b16 %v1661, %v1655
    %v1764 = vpack.c.b16 %v1668, %v1662
    %v1765 = vpack.c.b16 %v1669, %v1663
    %v1766 = vpack.c.b16 %v1670, %v1664
    %v1767 = vpack.c.b16 %v1671, %v1665
    %v1768 = vpack.c.b16 %v1672, %v1666
    %v1769 = vpack.c.b16 %v1673, %v1667
    %v1770 = vpack.c.b16 %v1680, %v1674
    %v1771 = vpack.c.b16 %v1681, %v1675
    %v1772 = vpack.c.b16 %v1682, %v1676
    %v1773 = vpack.c.b16 %v1683, %v1677
    %v1774 = vpack.c.b16 %v1684, %v1678
    %v1775 = vpack.c.b16 %v1685, %v1679
    %v1776 = vpack.c.b16 %v1692, %v1686
    %v1777 = vpack.c.b16 %v1693, %v1687
    %v1778 = vpack.c.b16 %v1694, %v1688
    %v1779 = vpack.c.b16 %v1695, %v1689
    %v1780 = vpack.c.b16 %v1696, %v1690
    %v1781 = vpack.c.b16 %v1697, %v1691
    %v1782 = vpack.c.b16 %v1704, %v1698
    %v1783 = vpack.c.b16 %v1705, %v1699
    %v1784 = vpack.c.b16 %v1706, %v1700
    %v1785 = vpack.c.b16 %v1707, %v1701
    %v1786 = vpack.c.b16 %v1708, %v1702
    %v1787 = vpack.c.b16 %v1709, %v1703
    %v1788 = vpack.c.b16 %v1716, %v1710
    %v1789 = vpack.c.b16 %v1717, %v1711
    %v1790 = vpack.c.b16 %v1718, %v1712
    %v1791 = vpack.c.b16 %v1719, %v1713
    %v1792 = vpack.c.b16 %v1720, %v1714
    %v1793 = vpack.c.b16 %v1721, %v1715
    %v1867 = vsel %vm1237, %v1398, 0
    %1869 = vmatprep.subr.bf16.mxu0 %v1765
    %1870 = vmatpush1.bf16.msra.mxu0 %v1764
    %1871 = vmatprep.subr.bf16.mxu0 %v1759
    %1872 = vmatpush1.bf16.msra.mxu0 %v1758
    %1873 = vmatprep.subr.bf16.mxu0 %v1753
    %1874 = vmatpush1.bf16.msra.mxu0 %v1752
    %1875 = vmatprep.subr.bf16.mxu0 %v1747
    %1876 = vmatpush1.bf16.msra.mxu0 %v1746
    %1877 = vmatprep.subr.bf16.mxu0 %v1741
    %1878 = vmatpush1.bf16.msra.mxu0 %v1740
    %1879 = vmatprep.subr.bf16.mxu0 %v1735
    %1880 = vmatpush1.bf16.msra.mxu0 %v1734
    %1881 = vmatprep.subr.bf16.mxu0 %v1729
    %1882 = vmatpush1.bf16.msra.mxu0 %v1728
    %1883 = vmatprep.subr.bf16.mxu0 %v1723
    %1884 = vmatpush1.bf16.msra.mxu0 %v1722
    %1885 = vmatprep.subr.bf16.mxu0 0
    %1886 = vmatpush2.bf16.msra.mxu0 0
    %1887 = vmatprep.subr.bf16.mxu0 0
    %1888 = vmatpush2.bf16.msra.mxu0 0
    %1889 = vmatprep.subr.bf16.mxu0 0
    %1890 = vmatpush2.bf16.msra.mxu0 0
    %1891 = vmatprep.subr.bf16.mxu0 0
    %1892 = vmatpush2.bf16.msra.mxu0 0
    %1893 = vmatprep.subr.bf16.mxu0 %v1789
    %1894 = vmatpush2.bf16.msra.mxu0 %v1788
    %1895 = vmatprep.subr.bf16.mxu0 %v1783
    %1896 = vmatpush2.bf16.msra.mxu0 %v1782
    %1897 = vmatprep.subr.bf16.mxu0 %v1777
    %1898 = vmatpush2.bf16.msra.mxu0 %v1776
    %1899 = vmatprep.subr.bf16.mxu0 %v1771
    %1900 = vmatpush2.bf16.msra.mxu0 %v1770
    %1901 = vmatprep.mubr.bf16.mxu0 %v1867
    %1902 = vmatmul.mubr.bf16.gmra.mxu0 %v1397
    %v1903 = vpop.f32.mrf.mxu0
    %v1904 = vadd.f32 %v1479, %v1903
    %v1905 = vpop.f32.mrf.mxu0
    %v1906 = vadd.f32 %v1483, %v1905
    %v1907 = vpop.f32.mrf.mxu0
    %v1908 = vadd.f32 %v1479, %v1907
    %v1909 = vpop.f32.mrf.mxu0
    %v1910 = vadd.f32 %v1483, %v1909
    %1911 = vdwg.mxu0
    %1912 = vmatprep.subr.bf16.mxu0 %v1767
    %1913 = vmatpush1.bf16.msra.mxu0 %v1766
    %1914 = vmatprep.subr.bf16.mxu0 %v1761
    %1915 = vmatpush1.bf16.msra.mxu0 %v1760
    %1916 = vmatprep.subr.bf16.mxu0 %v1755
    %1917 = vmatpush1.bf16.msra.mxu0 %v1754
    %1918 = vmatprep.subr.bf16.mxu0 %v1749
    %1919 = vmatpush1.bf16.msra.mxu0 %v1748
    %1920 = vmatprep.subr.bf16.mxu0 %v1743
    %1921 = vmatpush1.bf16.msra.mxu0 %v1742
    %1922 = vmatprep.subr.bf16.mxu0 %v1737
    %1923 = vmatpush1.bf16.msra.mxu0 %v1736
    %1924 = vmatprep.subr.bf16.mxu0 %v1731
    %1925 = vmatpush1.bf16.msra.mxu0 %v1730
    %1926 = vmatprep.subr.bf16.mxu0 %v1725
    %1927 = vmatpush1.bf16.msra.mxu0 %v1724
    %1928 = vmatprep.subr.bf16.mxu0 0
    %1929 = vmatpush2.bf16.msra.mxu0 0
    %1930 = vmatprep.subr.bf16.mxu0 0
    %1931 = vmatpush2.bf16.msra.mxu0 0
    %1932 = vmatprep.subr.bf16.mxu0 0
    %1933 = vmatpush2.bf16.msra.mxu0 0
    %1934 = vmatprep.subr.bf16.mxu0 0
    %1935 = vmatpush2.bf16.msra.mxu0 0
    %1936 = vmatprep.subr.bf16.mxu0 %v1791
    %1937 = vmatpush2.bf16.msra.mxu0 %v1790
    %1938 = vmatprep.subr.bf16.mxu0 %v1785
    %1939 = vmatpush2.bf16.msra.mxu0 %v1784
    %1940 = vmatprep.subr.bf16.mxu0 %v1779
    %1941 = vmatpush2.bf16.msra.mxu0 %v1778
    %1942 = vmatprep.subr.bf16.mxu0 %v1773
    %1943 = vmatpush2.bf16.msra.mxu0 %v1772
    %1944 = vmatprep.mubr.bf16.mxu0 %v1867
    %1945 = vmatmul.mubr.bf16.gmra.mxu0 %v1397
    %v1946 = vpop.f32.mrf.mxu0
    %v1947 = vadd.f32 %v1487, %v1946
    %v1948 = vpop.f32.mrf.mxu0
    %v1949 = vadd.f32 %v1491, %v1948
    %v1950 = vpop.f32.mrf.mxu0
    %v1951 = vadd.f32 %v1487, %v1950
    %v1952 = vpop.f32.mrf.mxu0
    %v1953 = vadd.f32 %v1491, %v1952
    %1954 = vdwg.mxu0
    %1955 = vmatprep.subr.bf16.mxu0 %v1769
    %1956 = vmatpush1.bf16.msra.mxu0 %v1768
    %1957 = vmatprep.subr.bf16.mxu0 %v1763
    %1958 = vmatpush1.bf16.msra.mxu0 %v1762
    %1959 = vmatprep.subr.bf16.mxu0 %v1757
    %1960 = vmatpush1.bf16.msra.mxu0 %v1756
    %1961 = vmatprep.subr.bf16.mxu0 %v1751
    %1962 = vmatpush1.bf16.msra.mxu0 %v1750
    %1963 = vmatprep.subr.bf16.mxu0 %v1745
    %1964 = vmatpush1.bf16.msra.mxu0 %v1744
    %1965 = vmatprep.subr.bf16.mxu0 %v1739
    %1966 = vmatpush1.bf16.msra.mxu0 %v1738
    %1967 = vmatprep.subr.bf16.mxu0 %v1733
    %1968 = vmatpush1.bf16.msra.mxu0 %v1732
    %1969 = vmatprep.subr.bf16.mxu0 %v1727
    %1970 = vmatpush1.bf16.msra.mxu0 %v1726
    %1971 = vmatprep.subr.bf16.mxu0 0
    %1972 = vmatpush2.bf16.msra.mxu0 0
    %1973 = vmatprep.subr.bf16.mxu0 0
    %1974 = vmatpush2.bf16.msra.mxu0 0
    %1975 = vmatprep.subr.bf16.mxu0 0
    %1976 = vmatpush2.bf16.msra.mxu0 0
    %1977 = vmatprep.subr.bf16.mxu0 0
    %1978 = vmatpush2.bf16.msra.mxu0 0
    %1979 = vmatprep.subr.bf16.mxu0 %v1793
    %1980 = vmatpush2.bf16.msra.mxu0 %v1792
    %1981 = vmatprep.subr.bf16.mxu0 %v1787
    %1982 = vmatpush2.bf16.msra.mxu0 %v1786
    %1983 = vmatprep.subr.bf16.mxu0 %v1781
    %1984 = vmatpush2.bf16.msra.mxu0 %v1780
    %1985 = vmatprep.subr.bf16.mxu0 %v1775
    %1986 = vmatpush2.bf16.msra.mxu0 %v1774
    %1987 = vmatprep.mubr.bf16.mxu0 %v1867
    %1988 = vmatmul.mubr.bf16.gmra.mxu0 %v1397
    %v1989 = vpop.f32.mrf.mxu0
    %v1990 = vadd.f32 %v1495, %v1989
    %v1991 = vpop.f32.mrf.mxu0
    %v1992 = vadd.f32 %v1499, %v1991
    %v1993 = vpop.f32.mrf.mxu0
    %v1994 = vadd.f32 %v1495, %v1993
    %v1995 = vpop.f32.mrf.mxu0
    %v1996 = vadd.f32 %v1499, %v1995
    %1997 = vdwg.mxu0
    %v1998 = vlaneseq
    %v1999 = vshrl.u32 %v1998, 7
    %v2000 = vadd.s32 %v1999, 8
    %v2001 = vlaneseq
    %v2002 = vand.u32 %v2001, 127
    %vm2003 = vcmp.lt.s32.totalorder %v1999, 0
    %v2004 = vsub.s32 0, %v1999
    %v2005 = vsel %vm2003, %v2004, %v1999
    %v2006 = vshrl.u32 %v2005, 1
    %v2007 = vand.u32 %v2005, 1
    %v2008 = vsub.s32 0, %v2007
    %v2009 = vsel %vm2003, %v2008, %v2007
    %vm2010 = vcmp.lt.s32.totalorder %v2000, 0
    %v2011 = vsub.s32 0, %v2000
    %v2012 = vsel %vm2010, %v2011, %v2000
    %v2013 = vshrl.u32 %v2012, 1
    %v2014 = vand.u32 %v2012, 1
    %v2015 = vsub.s32 0, %v2014
    %v2016 = vsel %vm2010, %v2015, %v2014
    %vm2017 = vcmp.ne.s32.totalorder %v2009, 0
    %vm2018 = vcmp.ne.s32.totalorder %v2016, 0
    %vm2019 = vcmp.lt.s32.totalorder %v2009, 0
    %vm2020 = vcmp.lt.s32.totalorder %v2016, 0
    %vm2021 = vmand %vm2019, %vm2017
    %vm2022 = vmand %vm2020, %vm2018
    %v2023 = vadd.s32 %v2009, 2
    %v2024 = vadd.s32 %v2016, 2
    %v2025 = vsel %vm2021, %v2023, %v2009
    %v2026 = vsel %vm2022, %v2024, %v2016
    %vm2027 = vcmp.lt.s32.totalorder %v2002, 0
    %v2028 = vsub.s32 0, %v2002
    %v2029 = vsel %vm2027, %v2028, %v2002
    %v2030 = vshrl.u32 %v2029, 1
    %v2031 = vand.u32 %v2029, 1
    %v2032 = vsub.s32 0, %v2031
    %v2033 = vsel %vm2027, %v2032, %v2031
    %vm2034 = vcmp.ne.s32.totalorder %v2033, 0
    %vm2035 = vcmp.lt.s32.totalorder %v2033, 0
    %vm2036 = vmand %vm2035, %vm2034
    %v2037 = vadd.s32 %v2033, 2
    %v2038 = vsel %vm2036, %v2037, %v2033
    %vm2039 = vcmp.eq.s32.totalorder %v2025, %v2038
    %vm2040 = vcmp.eq.s32.totalorder %v2026, %v2038
    %v2042 = vsel %vm1326, %v1904, 0
    %v2045 = vsel %vm1326, %v1908, 0
    %v2048 = vsel %vm1326, %v1947, 0
    %v2051 = vsel %vm1326, %v1951, 0
    %2053 = vmatprep.subr.mxu0 0.0
    %2054 = vmatpush1.xpose.msra.mxu0 0.0
    %2055 = vmatprep.subr.mxu0 0.0
    %2056 = vmatpush1.xpose.msra.mxu0 0.0
    %2057 = vmatprep.subr.mxu0 0.0
    %2058 = vmatpush1.xpose.msra.mxu0 0.0
    %2059 = vmatprep.subr.mxu0 0.0
    %2060 = vmatpush1.xpose.msra.mxu0 0.0
    %2061 = vmatprep.subr.mxu0 0.0
    %2062 = vmatpush1.xpose.msra.mxu0 0.0
    %2063 = vmatprep.subr.mxu0 0.0
    %2064 = vmatpush1.xpose.msra.mxu0 0.0
    %2065 = vmatprep.subr.mxu0 0.0
    %2066 = vmatpush1.xpose.msra.mxu0 0.0
    %2067 = vmatprep.subr.mxu0 0.0
    %2068 = vmatpush1.xpose.msra.mxu0 0.0
    %2069 = vmatprep.subr.mxu0 0.0
    %2070 = vmatpush1.xpose.msra.mxu0 0.0
    %2071 = vmatprep.subr.mxu0 0.0
    %2072 = vmatpush1.xpose.msra.mxu0 0.0
    %2073 = vmatprep.subr.mxu0 0.0
    %2074 = vmatpush1.xpose.msra.mxu0 0.0
    %2075 = vmatprep.subr.mxu0 0.0
    %2076 = vmatpush1.xpose.msra.mxu0 0.0
    %2077 = vmatprep.subr.mxu0 0.0
    %2078 = vmatpush1.xpose.msra.mxu0 0.0
    %2079 = vmatprep.subr.mxu0 0.0
    %2080 = vmatpush1.xpose.msra.mxu0 0.0
    %2081 = vmatprep.subr.mxu0 0.0
    %2082 = vmatpush1.xpose.msra.mxu0 %v2051
    %2083 = vmatprep.subr.mxu0 0.0
    %2084 = vmatpush1.xpose.msra.mxu0 %v2048
    %2085 = vmatprep.subr.mxu0 0.0
    %2086 = vmatpush2.xpose.msra.mxu0 0.0
    %2087 = vmatprep.subr.mxu0 0.0
    %2088 = vmatpush2.xpose.msra.mxu0 0.0
    %2089 = vmatprep.subr.mxu0 0.0
    %2090 = vmatpush2.xpose.msra.mxu0 0.0
    %2091 = vmatprep.subr.mxu0 0.0
    %2092 = vmatpush2.xpose.msra.mxu0 0.0
    %2093 = vmatprep.subr.mxu0 0.0
    %2094 = vmatpush2.xpose.msra.mxu0 0.0
    %2095 = vmatprep.subr.mxu0 0.0
    %2096 = vmatpush2.xpose.msra.mxu0 0.0
    %2097 = vmatprep.subr.mxu0 0.0
    %2098 = vmatpush2.xpose.msra.mxu0 0.0
    %2099 = vmatprep.subr.mxu0 0.0
    %2100 = vmatpush2.xpose.msra.mxu0 0.0
    %2101 = vmatprep.subr.mxu0 0.0
    %2102 = vmatpush2.xpose.msra.mxu0 0.0
    %2103 = vmatprep.subr.mxu0 0.0
    %2104 = vmatpush2.xpose.msra.mxu0 0.0
    %2105 = vmatprep.subr.mxu0 0.0
    %2106 = vmatpush2.xpose.msra.mxu0 0.0
    %2107 = vmatprep.subr.mxu0 0.0
    %2108 = vmatpush2.xpose.msra.mxu0 0.0
    %2109 = vmatprep.subr.mxu0 0.0
    %2110 = vmatpush2.xpose.msra.mxu0 0.0
    %2111 = vmatprep.subr.mxu0 0.0
    %2112 = vmatpush2.xpose.msra.mxu0 0.0
    %2113 = vmatprep.subr.mxu0 0.0
    %2114 = vmatpush2.xpose.msra.mxu0 0.0
    %2115 = vmatprep.subr.mxu0 0.0
    %2116 = vmatpush2.xpose.msra.mxu0 0.0
    %2117 = vmatprep.mubr.f32.mxu0 0.0
    %2118 = vmatmul.mubr.f32.gmra.mxu0 %v2042
    %v2119 = vpop.f32.mrf.mxu0
    %v2120 = vadd.f32 0.0, %v2119
    %v2121 = vpop.f32.mrf.mxu0
    %2122 = vmatprep.mubr.f32.mxu0 0.0
    %2123 = vmatmul.mubr.f32.gmra.mxu0 %v2045
    %v2124 = vpop.f32.mrf.mxu0
    %v2125 = vadd.f32 0.0, %v2124
    %v2126 = vpop.f32.mrf.mxu0
    %2127 = vdwg.mxu0
    %v2128 = vsel %vm2039, %v2120, -1e+30
    %v2129 = vsel %vm2040, %v2125, -1e+30
    %vm2130 = vcmask 130048
    %v2131 = vsel %vm2130, %v2128, -inf
    %2132 = vmax.xlane.f32.xlu0 %v2131
    %v2133 = vpop.xlane.xlu0 %2132
    %v2134 = vsel %vm2130, %v2129, -inf
    %2135 = vmax.xlane.f32.xlu0 %v2134
    %v2136 = vpop.xlane.xlu0 %2135
    %v2137 = vsub.f32 %v2128, %v2133
    %v2138 = vsub.f32 %v2129, %v2136
    %v2139 = vmul.f32 %v2137, 1.442695
    %v2140 = vpow.pop %v2139
    %v2141 = vmul.f32 %v2138, 1.442695
    %v2142 = vpow.pop %v2141
    %v2143 = vsel %vm2130, %v2140, 0.0
    %2144 = vadd.xlane.f32.xlu0 %v2143
    %v2145 = vpop.xlane.xlu0 %2144
    %v2146 = vsel %vm2130, %v2142, 0.0
    %2147 = vadd.xlane.f32.xlu0 %v2146
    %v2148 = vpop.xlane.xlu0 %2147
    %v2149 = vrcp.pop %v2145
    %v2150 = vrcp.pop %v2148
    %v2151 = vmul.f32 %v2140, %v2149
    %v2152 = vmul.f32 %v2142, %v2150
    %v2154 = vsel %vm2130, %v2151, 0
    %v2157 = vsel %vm2130, %v2152, 0
    %2159 = vmatprep.subr.mxu0 0.0
    %2160 = vmatpush1.msra.mxu0 0.0
    %2161 = vmatprep.subr.mxu0 0.0
    %2162 = vmatpush1.msra.mxu0 0.0
    %2163 = vmatprep.subr.mxu0 0.0
    %2164 = vmatpush1.msra.mxu0 0.0
    %2165 = vmatprep.subr.mxu0 0.0
    %2166 = vmatpush1.msra.mxu0 0.0
    %2167 = vmatprep.subr.mxu0 0.0
    %2168 = vmatpush1.msra.mxu0 0.0
    %2169 = vmatprep.subr.mxu0 0.0
    %2170 = vmatpush1.msra.mxu0 0.0
    %2171 = vmatprep.subr.mxu0 0.0
    %2172 = vmatpush1.msra.mxu0 0.0
    %2173 = vmatprep.subr.mxu0 0.0
    %2174 = vmatpush1.msra.mxu0 0.0
    %2175 = vmatprep.subr.mxu0 0.0
    %2176 = vmatpush1.msra.mxu0 0.0
    %2177 = vmatprep.subr.mxu0 0.0
    %2178 = vmatpush1.msra.mxu0 0.0
    %2179 = vmatprep.subr.mxu0 0.0
    %2180 = vmatpush1.msra.mxu0 0.0
    %2181 = vmatprep.subr.mxu0 0.0
    %2182 = vmatpush1.msra.mxu0 0.0
    %2183 = vmatprep.subr.mxu0 0.0
    %2184 = vmatpush1.msra.mxu0 0.0
    %2185 = vmatprep.subr.mxu0 0.0
    %2186 = vmatpush1.msra.mxu0 0.0
    %2187 = vmatprep.subr.mxu0 0.0
    %2188 = vmatpush1.msra.mxu0 %v1994
    %2189 = vmatprep.subr.mxu0 0.0
    %2190 = vmatpush1.msra.mxu0 %v1990
    %2191 = vmatprep.subr.mxu0 0.0
    %2192 = vmatpush2.msra.mxu0 0.0
    %2193 = vmatprep.subr.mxu0 0.0
    %2194 = vmatpush2.msra.mxu0 0.0
    %2195 = vmatprep.subr.mxu0 0.0
    %2196 = vmatpush2.msra.mxu0 0.0
    %2197 = vmatprep.subr.mxu0 0.0
    %2198 = vmatpush2.msra.mxu0 0.0
    %2199 = vmatprep.subr.mxu0 0.0
    %2200 = vmatpush2.msra.mxu0 0.0
    %2201 = vmatprep.subr.mxu0 0.0
    %2202 = vmatpush2.msra.mxu0 0.0
    %2203 = vmatprep.subr.mxu0 0.0
    %2204 = vmatpush2.msra.mxu0 0.0
    %2205 = vmatprep.subr.mxu0 0.0
    %2206 = vmatpush2.msra.mxu0 0.0
    %2207 = vmatprep.subr.mxu0 0.0
    %2208 = vmatpush2.msra.mxu0 0.0
    %2209 = vmatprep.subr.mxu0 0.0
    %2210 = vmatpush2.msra.mxu0 0.0
    %2211 = vmatprep.subr.mxu0 0.0
    %2212 = vmatpush2.msra.mxu0 0.0
    %2213 = vmatprep.subr.mxu0 0.0
    %2214 = vmatpush2.msra.mxu0 0.0
    %2215 = vmatprep.subr.mxu0 0.0
    %2216 = vmatpush2.msra.mxu0 0.0
    %2217 = vmatprep.subr.mxu0 0.0
    %2218 = vmatpush2.msra.mxu0 0.0
    %2219 = vmatprep.subr.mxu0 0.0
    %2220 = vmatpush2.msra.mxu0 0.0
    %2221 = vmatprep.subr.mxu0 0.0
    %2222 = vmatpush2.msra.mxu0 0.0
    %2223 = vmatprep.mubr.f32.mxu0 0.0
    %2224 = vmatmul.mubr.f32.gmra.mxu0 %v2154
    %v2225 = vpop.f32.mrf.mxu0
    %v2226 = vadd.f32 0.0, %v2225
    %v2227 = vpop.f32.mrf.mxu0
    %2228 = vmatprep.mubr.f32.mxu0 0.0
    %2229 = vmatmul.mubr.f32.gmra.mxu0 %v2157
    %v2230 = vpop.f32.mrf.mxu0
    %v2231 = vadd.f32 0.0, %v2230
    %v2232 = vpop.f32.mrf.mxu0
    %2233 = vdwg.mxu0
    %v2235 = vsel %vm1326, %v1906, 0
    %v2238 = vsel %vm1326, %v1910, 0
    %v2241 = vsel %vm1326, %v1949, 0
    %v2244 = vsel %vm1326, %v1953, 0
    %2246 = vmatprep.subr.mxu0 0.0
    %2247 = vmatpush1.xpose.msra.mxu0 0.0
    %2248 = vmatprep.subr.mxu0 0.0
    %2249 = vmatpush1.xpose.msra.mxu0 0.0
    %2250 = vmatprep.subr.mxu0 0.0
    %2251 = vmatpush1.xpose.msra.mxu0 0.0
    %2252 = vmatprep.subr.mxu0 0.0
    %2253 = vmatpush1.xpose.msra.mxu0 0.0
    %2254 = vmatprep.subr.mxu0 0.0
    %2255 = vmatpush1.xpose.msra.mxu0 0.0
    %2256 = vmatprep.subr.mxu0 0.0
    %2257 = vmatpush1.xpose.msra.mxu0 0.0
    %2258 = vmatprep.subr.mxu0 0.0
    %2259 = vmatpush1.xpose.msra.mxu0 0.0
    %2260 = vmatprep.subr.mxu0 0.0
    %2261 = vmatpush1.xpose.msra.mxu0 0.0
    %2262 = vmatprep.subr.mxu0 0.0
    %2263 = vmatpush1.xpose.msra.mxu0 0.0
    %2264 = vmatprep.subr.mxu0 0.0
    %2265 = vmatpush1.xpose.msra.mxu0 0.0
    %2266 = vmatprep.subr.mxu0 0.0
    %2267 = vmatpush1.xpose.msra.mxu0 0.0
    %2268 = vmatprep.subr.mxu0 0.0
    %2269 = vmatpush1.xpose.msra.mxu0 0.0
    %2270 = vmatprep.subr.mxu0 0.0
    %2271 = vmatpush1.xpose.msra.mxu0 0.0
    %2272 = vmatprep.subr.mxu0 0.0
    %2273 = vmatpush1.xpose.msra.mxu0 0.0
    %2274 = vmatprep.subr.mxu0 0.0
    %2275 = vmatpush1.xpose.msra.mxu0 %v2244
    %2276 = vmatprep.subr.mxu0 0.0
    %2277 = vmatpush1.xpose.msra.mxu0 %v2241
    %2278 = vmatprep.subr.mxu0 0.0
    %2279 = vmatpush2.xpose.msra.mxu0 0.0
    %2280 = vmatprep.subr.mxu0 0.0
    %2281 = vmatpush2.xpose.msra.mxu0 0.0
    %2282 = vmatprep.subr.mxu0 0.0
    %2283 = vmatpush2.xpose.msra.mxu0 0.0
    %2284 = vmatprep.subr.mxu0 0.0
    %2285 = vmatpush2.xpose.msra.mxu0 0.0
    %2286 = vmatprep.subr.mxu0 0.0
    %2287 = vmatpush2.xpose.msra.mxu0 0.0
    %2288 = vmatprep.subr.mxu0 0.0
    %2289 = vmatpush2.xpose.msra.mxu0 0.0
    %2290 = vmatprep.subr.mxu0 0.0
    %2291 = vmatpush2.xpose.msra.mxu0 0.0
    %2292 = vmatprep.subr.mxu0 0.0
    %2293 = vmatpush2.xpose.msra.mxu0 0.0
    %2294 = vmatprep.subr.mxu0 0.0
    %2295 = vmatpush2.xpose.msra.mxu0 0.0
    %2296 = vmatprep.subr.mxu0 0.0
    %2297 = vmatpush2.xpose.msra.mxu0 0.0
    %2298 = vmatprep.subr.mxu0 0.0
    %2299 = vmatpush2.xpose.msra.mxu0 0.0
    %2300 = vmatprep.subr.mxu0 0.0
    %2301 = vmatpush2.xpose.msra.mxu0 0.0
    %2302 = vmatprep.subr.mxu0 0.0
    %2303 = vmatpush2.xpose.msra.mxu0 0.0
    %2304 = vmatprep.subr.mxu0 0.0
    %2305 = vmatpush2.xpose.msra.mxu0 0.0
    %2306 = vmatprep.subr.mxu0 0.0
    %2307 = vmatpush2.xpose.msra.mxu0 0.0
    %2308 = vmatprep.subr.mxu0 0.0
    %2309 = vmatpush2.xpose.msra.mxu0 0.0
    %2310 = vmatprep.mubr.f32.mxu0 0.0
    %2311 = vmatmul.mubr.f32.gmra.mxu0 %v2235
    %v2312 = vpop.f32.mrf.mxu0
    %v2313 = vadd.f32 0.0, %v2312
    %v2314 = vpop.f32.mrf.mxu0
    %2315 = vmatprep.mubr.f32.mxu0 0.0
    %2316 = vmatmul.mubr.f32.gmra.mxu0 %v2238
    %v2317 = vpop.f32.mrf.mxu0
    %v2318 = vadd.f32 0.0, %v2317
    %v2319 = vpop.f32.mrf.mxu0
    %2320 = vdwg.mxu0
    %v2321 = vsel %vm2039, %v2313, -1e+30
    %v2322 = vsel %vm2040, %v2318, -1e+30
    %v2323 = vsel %vm2130, %v2321, -inf
    %2324 = vmax.xlane.f32.xlu0 %v2323
    %v2325 = vpop.xlane.xlu0 %2324
    %v2326 = vsel %vm2130, %v2322, -inf
    %2327 = vmax.xlane.f32.xlu0 %v2326
    %v2328 = vpop.xlane.xlu0 %2327
    %v2329 = vsub.f32 %v2321, %v2325
    %v2330 = vsub.f32 %v2322, %v2328
    %v2331 = vmul.f32 %v2329, 1.442695
    %v2332 = vpow.pop %v2331
    %v2333 = vmul.f32 %v2330, 1.442695
    %v2334 = vpow.pop %v2333
    %v2335 = vsel %vm2130, %v2332, 0.0
    %2336 = vadd.xlane.f32.xlu0 %v2335
    %v2337 = vpop.xlane.xlu0 %2336
    %v2338 = vsel %vm2130, %v2334, 0.0
    %2339 = vadd.xlane.f32.xlu0 %v2338
    %v2340 = vpop.xlane.xlu0 %2339
    %v2341 = vrcp.pop %v2337
    %v2342 = vrcp.pop %v2340
    %v2343 = vmul.f32 %v2332, %v2341
    %v2344 = vmul.f32 %v2334, %v2342
    %v2346 = vsel %vm2130, %v2343, 0
    %v2349 = vsel %vm2130, %v2344, 0
    %2351 = vmatprep.subr.mxu0 0.0
    %2352 = vmatpush1.msra.mxu0 0.0
    %2353 = vmatprep.subr.mxu0 0.0
    %2354 = vmatpush1.msra.mxu0 0.0
    %2355 = vmatprep.subr.mxu0 0.0
    %2356 = vmatpush1.msra.mxu0 0.0
    %2357 = vmatprep.subr.mxu0 0.0
    %2358 = vmatpush1.msra.mxu0 0.0
    %2359 = vmatprep.subr.mxu0 0.0
    %2360 = vmatpush1.msra.mxu0 0.0
    %2361 = vmatprep.subr.mxu0 0.0
    %2362 = vmatpush1.msra.mxu0 0.0
    %2363 = vmatprep.subr.mxu0 0.0
    %2364 = vmatpush1.msra.mxu0 0.0
    %2365 = vmatprep.subr.mxu0 0.0
    %2366 = vmatpush1.msra.mxu0 0.0
    %2367 = vmatprep.subr.mxu0 0.0
    %2368 = vmatpush1.msra.mxu0 0.0
    %2369 = vmatprep.subr.mxu0 0.0
    %2370 = vmatpush1.msra.mxu0 0.0
    %2371 = vmatprep.subr.mxu0 0.0
    %2372 = vmatpush1.msra.mxu0 0.0
    %2373 = vmatprep.subr.mxu0 0.0
    %2374 = vmatpush1.msra.mxu0 0.0
    %2375 = vmatprep.subr.mxu0 0.0
    %2376 = vmatpush1.msra.mxu0 0.0
    %2377 = vmatprep.subr.mxu0 0.0
    %2378 = vmatpush1.msra.mxu0 0.0
    %2379 = vmatprep.subr.mxu0 0.0
    %2380 = vmatpush1.msra.mxu0 %v1996
    %2381 = vmatprep.subr.mxu0 0.0
    %2382 = vmatpush1.msra.mxu0 %v1992
    %2383 = vmatprep.subr.mxu0 0.0
    %2384 = vmatpush2.msra.mxu0 0.0
    %2385 = vmatprep.subr.mxu0 0.0
    %2386 = vmatpush2.msra.mxu0 0.0
    %2387 = vmatprep.subr.mxu0 0.0
    %2388 = vmatpush2.msra.mxu0 0.0
    %2389 = vmatprep.subr.mxu0 0.0
    %2390 = vmatpush2.msra.mxu0 0.0
    %2391 = vmatprep.subr.mxu0 0.0
    %2392 = vmatpush2.msra.mxu0 0.0
    %2393 = vmatprep.subr.mxu0 0.0
    %2394 = vmatpush2.msra.mxu0 0.0
    %2395 = vmatprep.subr.mxu0 0.0
    %2396 = vmatpush2.msra.mxu0 0.0
    %2397 = vmatprep.subr.mxu0 0.0
    %2398 = vmatpush2.msra.mxu0 0.0
    %2399 = vmatprep.subr.mxu0 0.0
    %2400 = vmatpush2.msra.mxu0 0.0
    %2401 = vmatprep.subr.mxu0 0.0
    %2402 = vmatpush2.msra.mxu0 0.0
    %2403 = vmatprep.subr.mxu0 0.0
    %2404 = vmatpush2.msra.mxu0 0.0
    %2405 = vmatprep.subr.mxu0 0.0
    %2406 = vmatpush2.msra.mxu0 0.0
    %2407 = vmatprep.subr.mxu0 0.0
    %2408 = vmatpush2.msra.mxu0 0.0
    %2409 = vmatprep.subr.mxu0 0.0
    %2410 = vmatpush2.msra.mxu0 0.0
    %2411 = vmatprep.subr.mxu0 0.0
    %2412 = vmatpush2.msra.mxu0 0.0
    %2413 = vmatprep.subr.mxu0 0.0
    %2414 = vmatpush2.msra.mxu0 0.0
    %2415 = vmatprep.mubr.f32.mxu0 0.0
    %2416 = vmatmul.mubr.f32.gmra.mxu0 %v2346
    %v2417 = vpop.f32.mrf.mxu0
    %v2418 = vadd.f32 0.0, %v2417
    %v2419 = vpop.f32.mrf.mxu0
    %2420 = vmatprep.mubr.f32.mxu0 0.0
    %2421 = vmatmul.mubr.f32.gmra.mxu0 %v2349
    %v2422 = vpop.f32.mrf.mxu0
    %v2423 = vadd.f32 0.0, %v2422
    %v2424 = vpop.f32.mrf.mxu0
    %2425 = vdwg.mxu0
    %v2426 = vsel %vm1326, %v2226, 0.0
    %v2427 = vsel %vm1326, %v2231, 0.0
    %v2428 = vsel %vm1326, %v2418, 0.0
    %v2429 = vsel %vm1326, %v2423, 0.0
    %v2430 = vpack.c.bf16 %v2427, %v2426
    %v2431 = vpack.c.bf16 %v2429, %v2428
    %v2432 = vld [vmem:[%s2 + $0xe0] sm:$0xff]
    %v2433 = vld [vmem:[%s2 + $0xe8] sm:$0xff]
    %v2434 = vld [vmem:[%s2 + $0xf0] sm:$0xff]
    %v2435 = vld [vmem:[%s2 + $0xf8] sm:$0xff]
    %v2436 = vld [vmem:[%s2 + $0x100] sm:$0xff]
    %v2437 = vld [vmem:[%s2 + $0x108] sm:$0xff]
    %v2438 = vld [vmem:[%s2 + $0x110] sm:$0xff]
    %v2439 = vld [vmem:[%s2 + $0x118] sm:$0xff]
    %v2440 = vld [vmem:[%s2 + $0x120] sm:$0xff]
    %v2441 = vld [vmem:[%s2 + $0x128] sm:$0xff]
    %v2442 = vld [vmem:[%s2 + $0x130] sm:$0xff]
    %v2443 = vld [vmem:[%s2 + $0x138] sm:$0xff]
    %v2444 = vld [vmem:[%s2 + $0x140] sm:$0xff]
    %v2445 = vld [vmem:[%s2 + $0x148] sm:$0xff]
    %v2446 = vld [vmem:[%s2 + $0x150] sm:$0xff]
    %v2447 = vld [vmem:[%s2 + $0x158] sm:$0xff]
    %v2448 = vld [vmem:[%s2 + $0x160] sm:$0xff]
    %v2449 = vld [vmem:[%s2 + $0x168] sm:$0xff]
    %v2450 = vld [vmem:[%s2 + $0x170] sm:$0xff]
    %v2451 = vld [vmem:[%s2 + $0x178] sm:$0xff]
    %v2452 = vld [vmem:[%s2 + $0x180] sm:$0xff]
    %v2453 = vld [vmem:[%s2 + $0x188] sm:$0xff]
    %v2454 = vld [vmem:[%s2 + $0x190] sm:$0xff]
    %v2455 = vld [vmem:[%s2 + $0x198] sm:$0xff]
    %v2456 = vld [vmem:[%s2 + $0x1a0] sm:$0xff]
    %v2457 = vld [vmem:[%s2 + $0x1a8] sm:$0xff]
    %v2458 = vld [vmem:[%s2 + $0x1b0] sm:$0xff]
    %v2459 = vld [vmem:[%s2 + $0x1b8] sm:$0xff]
    %v2460 = vld [vmem:[%s2 + $0x1c0] sm:$0xff]
    %v2461 = vld [vmem:[%s2 + $0x1c8] sm:$0xff]
    %v2462 = vld [vmem:[%s2 + $0x1d0] sm:$0xff]
    %v2463 = vld [vmem:[%s2 + $0x1d8] sm:$0xff]
    %s2464 = scalar_lea.vmem %s1, 5
    %v2465 = vld [vmem:[%s2464] ss:$8 sm:$0x3]
    %v2467 = vlaneseq
    %v2468 = vshrl.u32 %v2467, 7
    %v2469 = vsub.s32 0, %v2468
    %v2470 = vrot.slane %v2465, %v2469
    %v2471 = vlaneseq
    %v2472 = vshrl.u32 %v2471, 7
    %v2473 = vsub.s32 1, %v2472
    %v2474 = vrot.slane %v2465, %v2473
    %v2509 = vunpack.c.l.b16 %v2432
    %v2510 = vunpack.c.h.b16 %v2432
    %v2511 = vunpack.c.l.b16 %v2433
    %v2512 = vunpack.c.h.b16 %v2433
    %v2513 = vunpack.c.l.b16 %v2434
    %v2514 = vunpack.c.h.b16 %v2434
    %v2515 = vunpack.c.l.b16 %v2435
    %v2516 = vunpack.c.h.b16 %v2435
    %v2517 = vunpack.c.l.b16 %v2436
    %v2518 = vunpack.c.h.b16 %v2436
    %v2519 = vunpack.c.l.b16 %v2437
    %v2520 = vunpack.c.h.b16 %v2437
    %v2521 = vunpack.c.l.b16 %v2438
    %v2522 = vunpack.c.h.b16 %v2438
    %v2523 = vunpack.c.l.b16 %v2439
    %v2524 = vunpack.c.h.b16 %v2439
    %v2525 = vunpack.c.l.b16 %v2440
    %v2526 = vunpack.c.h.b16 %v2440
    %v2527 = vunpack.c.l.b16 %v2441
    %v2528 = vunpack.c.h.b16 %v2441
    %v2529 = vunpack.c.l.b16 %v2442
    %v2530 = vunpack.c.h.b16 %v2442
    %v2531 = vunpack.c.l.b16 %v2443
    %v2532 = vunpack.c.h.b16 %v2443
    %v2533 = vunpack.c.l.b16 %v2444
    %v2534 = vunpack.c.h.b16 %v2444
    %v2535 = vunpack.c.l.b16 %v2445
    %v2536 = vunpack.c.h.b16 %v2445
    %v2537 = vunpack.c.l.b16 %v2446
    %v2538 = vunpack.c.h.b16 %v2446
    %v2539 = vunpack.c.l.b16 %v2447
    %v2540 = vunpack.c.h.b16 %v2447
    %v2541 = vunpack.c.l.b16 %v2448
    %v2542 = vunpack.c.h.b16 %v2448
    %v2543 = vunpack.c.l.b16 %v2449
    %v2544 = vunpack.c.h.b16 %v2449
    %v2545 = vunpack.c.l.b16 %v2450
    %v2546 = vunpack.c.h.b16 %v2450
    %v2547 = vunpack.c.l.b16 %v2451
    %v2548 = vunpack.c.h.b16 %v2451
    %v2549 = vunpack.c.l.b16 %v2452
    %v2550 = vunpack.c.h.b16 %v2452
    %v2551 = vunpack.c.l.b16 %v2453
    %v2552 = vunpack.c.h.b16 %v2453
    %v2553 = vunpack.c.l.b16 %v2454
    %v2554 = vunpack.c.h.b16 %v2454
    %v2555 = vunpack.c.l.b16 %v2455
    %v2556 = vunpack.c.h.b16 %v2455
    %v2557 = vunpack.c.l.b16 %v2456
    %v2558 = vunpack.c.h.b16 %v2456
    %v2559 = vunpack.c.l.b16 %v2457
    %v2560 = vunpack.c.h.b16 %v2457
    %v2561 = vunpack.c.l.b16 %v2458
    %v2562 = vunpack.c.h.b16 %v2458
    %v2563 = vunpack.c.l.b16 %v2459
    %v2564 = vunpack.c.h.b16 %v2459
    %v2565 = vunpack.c.l.b16 %v2460
    %v2566 = vunpack.c.h.b16 %v2460
    %v2567 = vunpack.c.l.b16 %v2461
    %v2568 = vunpack.c.h.b16 %v2461
    %v2569 = vunpack.c.l.b16 %v2462
    %v2570 = vunpack.c.h.b16 %v2462
    %v2571 = vunpack.c.l.b16 %v2463
    %v2572 = vunpack.c.h.b16 %v2463
    %v2573 = vpack.c.b16 %v2511, %v2509
    %v2574 = vpack.c.b16 %v2512, %v2510
    %v2575 = vpack.c.b16 %v2515, %v2513
    %v2576 = vpack.c.b16 %v2516, %v2514
    %v2577 = vpack.c.b16 %v2519, %v2517
    %v2578 = vpack.c.b16 %v2520, %v2518
    %v2579 = vpack.c.b16 %v2523, %v2521
    %v2580 = vpack.c.b16 %v2524, %v2522
    %v2581 = vpack.c.b16 %v2527, %v2525
    %v2582 = vpack.c.b16 %v2528, %v2526
    %v2583 = vpack.c.b16 %v2531, %v2529
    %v2584 = vpack.c.b16 %v2532, %v2530
    %v2585 = vpack.c.b16 %v2535, %v2533
    %v2586 = vpack.c.b16 %v2536, %v2534
    %v2587 = vpack.c.b16 %v2539, %v2537
    %v2588 = vpack.c.b16 %v2540, %v2538
    %v2589 = vpack.c.b16 %v2543, %v2541
    %v2590 = vpack.c.b16 %v2544, %v2542
    %v2591 = vpack.c.b16 %v2547, %v2545
    %v2592 = vpack.c.b16 %v2548, %v2546
    %v2593 = vpack.c.b16 %v2551, %v2549
    %v2594 = vpack.c.b16 %v2552, %v2550
    %v2595 = vpack.c.b16 %v2555, %v2553
    %v2596 = vpack.c.b16 %v2556, %v2554
    %v2597 = vpack.c.b16 %v2559, %v2557
    %v2598 = vpack.c.b16 %v2560, %v2558
    %v2599 = vpack.c.b16 %v2563, %v2561
    %v2600 = vpack.c.b16 %v2564, %v2562
    %v2601 = vpack.c.b16 %v2567, %v2565
    %v2602 = vpack.c.b16 %v2568, %v2566
    %v2603 = vpack.c.b16 %v2571, %v2569
    %v2604 = vpack.c.b16 %v2572, %v2570
    %2637 = vmatprep.subr.bf16.mxu0 %v2588
    %2638 = vmatpush1.bf16.msra.mxu0 %v2587
    %2639 = vmatprep.subr.bf16.mxu0 %v2586
    %2640 = vmatpush1.bf16.msra.mxu0 %v2585
    %2641 = vmatprep.subr.bf16.mxu0 %v2584
    %2642 = vmatpush1.bf16.msra.mxu0 %v2583
    %2643 = vmatprep.subr.bf16.mxu0 %v2582
    %2644 = vmatpush1.bf16.msra.mxu0 %v2581
    %2645 = vmatprep.subr.bf16.mxu0 %v2580
    %2646 = vmatpush1.bf16.msra.mxu0 %v2579
    %2647 = vmatprep.subr.bf16.mxu0 %v2578
    %2648 = vmatpush1.bf16.msra.mxu0 %v2577
    %2649 = vmatprep.subr.bf16.mxu0 %v2576
    %2650 = vmatpush1.bf16.msra.mxu0 %v2575
    %2651 = vmatprep.subr.bf16.mxu0 %v2574
    %2652 = vmatpush1.bf16.msra.mxu0 %v2573
    %2653 = vmatprep.subr.bf16.mxu0 %v2604
    %2654 = vmatpush2.bf16.msra.mxu0 %v2603
    %2655 = vmatprep.subr.bf16.mxu0 %v2602
    %2656 = vmatpush2.bf16.msra.mxu0 %v2601
    %2657 = vmatprep.subr.bf16.mxu0 %v2600
    %2658 = vmatpush2.bf16.msra.mxu0 %v2599
    %2659 = vmatprep.subr.bf16.mxu0 %v2598
    %2660 = vmatpush2.bf16.msra.mxu0 %v2597
    %2661 = vmatprep.subr.bf16.mxu0 %v2596
    %2662 = vmatpush2.bf16.msra.mxu0 %v2595
    %2663 = vmatprep.subr.bf16.mxu0 %v2594
    %2664 = vmatpush2.bf16.msra.mxu0 %v2593
    %2665 = vmatprep.subr.bf16.mxu0 %v2592
    %2666 = vmatpush2.bf16.msra.mxu0 %v2591
    %2667 = vmatprep.subr.bf16.mxu0 %v2590
    %2668 = vmatpush2.bf16.msra.mxu0 %v2589
    %2669 = vmatprep.mubr.bf16.mxu0 %v2431
    %2670 = vmatmul.mubr.bf16.gmra.mxu0 %v2430
    %v2671 = vpop.f32.mrf.mxu0
    %v2672 = vadd.f32 %v2470, %v2671
    %v2673 = vpop.f32.mrf.mxu0
    %v2674 = vadd.f32 %v2474, %v2673
    %v2675 = vpop.f32.mrf.mxu0
    %v2676 = vadd.f32 %v2470, %v2675
    %v2677 = vpop.f32.mrf.mxu0
    %v2678 = vadd.f32 %v2474, %v2677
    %2679 = vdwg.mxu0
    %v2680 = vadd.f32 %v1390, %v2672
    %v2681 = vadd.f32 %v1392, %v2674
    %v2682 = vadd.f32 %v1394, %v2676
    %v2683 = vadd.f32 %v1396, %v2678
    %s2684 = scalar_lea.vmem %s1, 6
    %v2685 = vld [vmem:[%s2684] ss:$8 sm:$0x3]
    %s2686 = scalar_lea.vmem %s1, 7
    %v2687 = vld [vmem:[%s2686] ss:$8 sm:$0x3]
    %v2688 = vsel %vm1237, %v2681, 0.0
    %v2689 = vadd.f32 %v2680, %v2688
    %2690 = vadd.xlane.f32.xlu0 %v2689
    %v2691 = vpop.xlane.xlu0 %2690
    %v2692 = vsel %vm1237, %v2683, 0.0
    %v2693 = vadd.f32 %v2682, %v2692
    %2694 = vadd.xlane.f32.xlu0 %v2693
    %v2695 = vpop.xlane.xlu0 %2694
    %v2696 = vrcp.pop 192.0
    %v2697 = vmul.f32 %v2691, %v2696
    %v2698 = vmul.f32 %v2695, %v2696
    %v2699 = vsub.f32 %v2680, %v2697
    %v2700 = vsub.f32 %v2681, %v2697
    %v2701 = vsub.f32 %v2682, %v2698
    %v2702 = vsub.f32 %v2683, %v2698
    %v2703 = vmul.f32 %v2699, %v2699
    %v2704 = vmul.f32 %v2700, %v2700
    %v2705 = vmul.f32 %v2701, %v2701
    %v2706 = vmul.f32 %v2702, %v2702
    %v2707 = vsel %vm1237, %v2704, 0.0
    %v2708 = vadd.f32 %v2703, %v2707
    %2709 = vadd.xlane.f32.xlu0 %v2708
    %v2710 = vpop.xlane.xlu0 %2709
    %v2711 = vsel %vm1237, %v2706, 0.0
    %v2712 = vadd.f32 %v2705, %v2711
    %2713 = vadd.xlane.f32.xlu0 %v2712
    %v2714 = vpop.xlane.xlu0 %2713
    %v2715 = vmul.f32 %v2710, %v2696
    %v2716 = vmul.f32 %v2714, %v2696
    %v2717 = vadd.f32 %v2715, 1e-05
    %v2718 = vadd.f32 %v2716, 1e-05
    %v2719 = vrsqrt.pop %v2717
    %v2720 = vrsqrt.pop %v2718
    %v2721 = vmul.f32 %v2699, %v2719
    %v2722 = vmul.f32 %v2700, %v2719
    %v2723 = vmul.f32 %v2701, %v2720
    %v2724 = vmul.f32 %v2702, %v2720
    %v2726 = vlaneseq
    %v2727 = vshrl.u32 %v2726, 7
    %v2728 = vsub.s32 0, %v2727
    %v2729 = vrot.slane %v2685, %v2728
    %v2730 = vlaneseq
    %v2731 = vshrl.u32 %v2730, 7
    %v2732 = vsub.s32 1, %v2731
    %v2733 = vrot.slane %v2685, %v2732
    %v2736 = vmul.f32 %v2721, %v2729
    %v2737 = vmul.f32 %v2722, %v2733
    %v2738 = vmul.f32 %v2723, %v2729
    %v2739 = vmul.f32 %v2724, %v2733
    %v2741 = vlaneseq
    %v2742 = vshrl.u32 %v2741, 7
    %v2743 = vsub.s32 0, %v2742
    %v2744 = vrot.slane %v2687, %v2743
    %v2745 = vlaneseq
    %v2746 = vshrl.u32 %v2745, 7
    %v2747 = vsub.s32 1, %v2746
    %v2748 = vrot.slane %v2687, %v2747
    %v2751 = vadd.f32 %v2736, %v2744
    %v2752 = vadd.f32 %v2737, %v2748
    %v2753 = vadd.f32 %v2738, %v2744
    %v2754 = vadd.f32 %v2739, %v2748
    %s2755 = smul.u32 4, 24
    %s2756 = smul.u32 %s2755, 16
    %s2757 = sshll.u32 %s2756, 4
    %2758 = dma.done [#allocation4], %s2757
    %s2759 = smul.u32 4, 256
    %s2760 = smul.u32 %s2759, 2
    %s2761 = sshll.u32 %s2760, 4
    %2762 = dma.done %s446, %s2761
    %v2763 = vpack.c.bf16 %v2753, %v2751
    %v2764 = vpack.c.bf16 %v2754, %v2752
    %v2765 = vld [vmem:[#allocation2] sm:$0xff]
    %v2766 = vld [vmem:[#allocation2 + $0x8] sm:$0xff]
    %v2767 = vld [vmem:[#allocation2 + $0x10] sm:$0xff]
    %v2768 = vld [vmem:[#allocation2 + $0x18] sm:$0xff]
    %v2769 = vld [vmem:[#allocation2 + $0x20] sm:$0xff]
    %v2770 = vld [vmem:[#allocation2 + $0x28] sm:$0xff]
    %v2771 = vld [vmem:[#allocation2 + $0x30] sm:$0xff]
    %v2772 = vld [vmem:[#allocation2 + $0x38] sm:$0xff]
    %v2773 = vld [vmem:[#allocation2 + $0x40] sm:$0xff]
    %v2774 = vld [vmem:[#allocation2 + $0x48] sm:$0xff]
    %v2775 = vld [vmem:[#allocation2 + $0x50] sm:$0xff]
    %v2776 = vld [vmem:[#allocation2 + $0x58] sm:$0xff]
    %v2777 = vld [vmem:[#allocation2 + $0x60] sm:$0xff]
    %v2778 = vld [vmem:[#allocation2 + $0x68] sm:$0xff]
    %v2779 = vld [vmem:[#allocation2 + $0x70] sm:$0xff]
    %v2780 = vld [vmem:[#allocation2 + $0x78] sm:$0xff]
    %v2781 = vld [vmem:[#allocation2 + $0x80] sm:$0xff]
    %v2782 = vld [vmem:[#allocation2 + $0x88] sm:$0xff]
    %v2783 = vld [vmem:[#allocation2 + $0x90] sm:$0xff]
    %v2784 = vld [vmem:[#allocation2 + $0x98] sm:$0xff]
    %v2785 = vld [vmem:[#allocation2 + $0xa0] sm:$0xff]
    %v2786 = vld [vmem:[#allocation2 + $0xa8] sm:$0xff]
    %v2787 = vld [vmem:[#allocation2 + $0xb0] sm:$0xff]
    %v2788 = vld [vmem:[#allocation2 + $0xb8] sm:$0xff]
    %v2789 = vld [vmem:[#allocation2 + $0xc0] sm:$0xff]
    %v2790 = vld [vmem:[#allocation2 + $0xc8] sm:$0xff]
    %v2791 = vld [vmem:[#allocation2 + $0xd0] sm:$0xff]
    %v2792 = vld [vmem:[#allocation2 + $0xd8] sm:$0xff]
    %v2793 = vld [vmem:[#allocation2 + $0xe0] sm:$0xff]
    %v2794 = vld [vmem:[#allocation2 + $0xe8] sm:$0xff]
    %v2795 = vld [vmem:[#allocation2 + $0xf0] sm:$0xff]
    %v2796 = vld [vmem:[#allocation2 + $0xf8] sm:$0xff]
    %v2797 = vld [vmem:[#allocation2 + $0x100] sm:$0xff]
    %v2798 = vld [vmem:[#allocation2 + $0x108] sm:$0xff]
    %v2799 = vld [vmem:[#allocation2 + $0x110] sm:$0xff]
    %v2800 = vld [vmem:[#allocation2 + $0x118] sm:$0xff]
    %v2801 = vld [vmem:[#allocation2 + $0x120] sm:$0xff]
    %v2802 = vld [vmem:[#allocation2 + $0x128] sm:$0xff]
    %v2803 = vld [vmem:[#allocation2 + $0x130] sm:$0xff]
    %v2804 = vld [vmem:[#allocation2 + $0x138] sm:$0xff]
    %v2805 = vld [vmem:[#allocation2 + $0x140] sm:$0xff]
    %v2806 = vld [vmem:[#allocation2 + $0x148] sm:$0xff]
    %v2807 = vld [vmem:[#allocation2 + $0x150] sm:$0xff]
    %v2808 = vld [vmem:[#allocation2 + $0x158] sm:$0xff]
    %v2809 = vld [vmem:[#allocation2 + $0x160] sm:$0xff]
    %v2810 = vld [vmem:[#allocation2 + $0x168] sm:$0xff]
    %v2811 = vld [vmem:[#allocation2 + $0x170] sm:$0xff]
    %v2812 = vld [vmem:[#allocation2 + $0x178] sm:$0xff]
    %v2813 = vld [vmem:[#allocation2 + $0x180] sm:$0xff]
    %v2814 = vld [vmem:[#allocation2 + $0x188] sm:$0xff]
    %v2815 = vld [vmem:[#allocation2 + $0x190] sm:$0xff]
    %v2816 = vld [vmem:[#allocation2 + $0x198] sm:$0xff]
    %v2817 = vld [vmem:[#allocation2 + $0x1a0] sm:$0xff]
    %v2818 = vld [vmem:[#allocation2 + $0x1a8] sm:$0xff]
    %v2819 = vld [vmem:[#allocation2 + $0x1b0] sm:$0xff]
    %v2820 = vld [vmem:[#allocation2 + $0x1b8] sm:$0xff]
    %v2821 = vld [vmem:[#allocation2 + $0x1c0] sm:$0xff]
    %v2822 = vld [vmem:[#allocation2 + $0x1c8] sm:$0xff]
    %v2823 = vld [vmem:[#allocation2 + $0x1d0] sm:$0xff]
    %v2824 = vld [vmem:[#allocation2 + $0x1d8] sm:$0xff]
    %v2825 = vld [vmem:[#allocation2 + $0x1e0] sm:$0xff]
    %v2826 = vld [vmem:[#allocation2 + $0x1e8] sm:$0xff]
    %v2827 = vld [vmem:[#allocation2 + $0x1f0] sm:$0xff]
    %v2828 = vld [vmem:[#allocation2 + $0x1f8] sm:$0xff]
    %v2829 = vld [vmem:[#allocation2 + $0x200] sm:$0xff]
    %v2830 = vld [vmem:[#allocation2 + $0x208] sm:$0xff]
    %v2831 = vld [vmem:[#allocation2 + $0x210] sm:$0xff]
    %v2832 = vld [vmem:[#allocation2 + $0x218] sm:$0xff]
    %v2833 = vld [vmem:[#allocation2 + $0x220] sm:$0xff]
    %v2834 = vld [vmem:[#allocation2 + $0x228] sm:$0xff]
    %v2835 = vld [vmem:[#allocation2 + $0x230] sm:$0xff]
    %v2836 = vld [vmem:[#allocation2 + $0x238] sm:$0xff]
    %v2837 = vld [vmem:[#allocation2 + $0x240] sm:$0xff]
    %v2838 = vld [vmem:[#allocation2 + $0x248] sm:$0xff]
    %v2839 = vld [vmem:[#allocation2 + $0x250] sm:$0xff]
    %v2840 = vld [vmem:[#allocation2 + $0x258] sm:$0xff]
    %v2841 = vld [vmem:[#allocation2 + $0x260] sm:$0xff]
    %v2842 = vld [vmem:[#allocation2 + $0x268] sm:$0xff]
    %v2843 = vld [vmem:[#allocation2 + $0x270] sm:$0xff]
    %v2844 = vld [vmem:[#allocation2 + $0x278] sm:$0xff]
    %v2845 = vld [vmem:[#allocation2 + $0x280] sm:$0xff]
    %v2846 = vld [vmem:[#allocation2 + $0x288] sm:$0xff]
    %v2847 = vld [vmem:[#allocation2 + $0x290] sm:$0xff]
    %v2848 = vld [vmem:[#allocation2 + $0x298] sm:$0xff]
    %v2849 = vld [vmem:[#allocation2 + $0x2a0] sm:$0xff]
    %v2850 = vld [vmem:[#allocation2 + $0x2a8] sm:$0xff]
    %v2851 = vld [vmem:[#allocation2 + $0x2b0] sm:$0xff]
    %v2852 = vld [vmem:[#allocation2 + $0x2b8] sm:$0xff]
    %v2853 = vld [vmem:[#allocation2 + $0x2c0] sm:$0xff]
    %v2854 = vld [vmem:[#allocation2 + $0x2c8] sm:$0xff]
    %v2855 = vld [vmem:[#allocation2 + $0x2d0] sm:$0xff]
    %v2856 = vld [vmem:[#allocation2 + $0x2d8] sm:$0xff]
    %v2857 = vld [vmem:[#allocation2 + $0x2e0] sm:$0xff]
    %v2858 = vld [vmem:[#allocation2 + $0x2e8] sm:$0xff]
    %v2859 = vld [vmem:[#allocation2 + $0x2f0] sm:$0xff]
    %v2860 = vld [vmem:[#allocation2 + $0x2f8] sm:$0xff]
    %v2861 = vld [vmem:[#allocation2 + $0x300] sm:$0xff]
    %v2862 = vld [vmem:[#allocation2 + $0x308] sm:$0xff]
    %v2863 = vld [vmem:[#allocation2 + $0x310] sm:$0xff]
    %v2864 = vld [vmem:[#allocation2 + $0x318] sm:$0xff]
    %v2865 = vld [vmem:[#allocation2 + $0x320] sm:$0xff]
    %v2866 = vld [vmem:[#allocation2 + $0x328] sm:$0xff]
    %v2867 = vld [vmem:[#allocation2 + $0x330] sm:$0xff]
    %v2868 = vld [vmem:[#allocation2 + $0x338] sm:$0xff]
    %v2869 = vld [vmem:[#allocation2 + $0x340] sm:$0xff]
    %v2870 = vld [vmem:[#allocation2 + $0x348] sm:$0xff]
    %v2871 = vld [vmem:[#allocation2 + $0x350] sm:$0xff]
    %v2872 = vld [vmem:[#allocation2 + $0x358] sm:$0xff]
    %v2873 = vld [vmem:[#allocation2 + $0x360] sm:$0xff]
    %v2874 = vld [vmem:[#allocation2 + $0x368] sm:$0xff]
    %v2875 = vld [vmem:[#allocation2 + $0x370] sm:$0xff]
    %v2876 = vld [vmem:[#allocation2 + $0x378] sm:$0xff]
    %v2877 = vld [vmem:[#allocation2 + $0x380] sm:$0xff]
    %v2878 = vld [vmem:[#allocation2 + $0x388] sm:$0xff]
    %v2879 = vld [vmem:[#allocation2 + $0x390] sm:$0xff]
    %v2880 = vld [vmem:[#allocation2 + $0x398] sm:$0xff]
    %v2881 = vld [vmem:[#allocation2 + $0x3a0] sm:$0xff]
    %v2882 = vld [vmem:[#allocation2 + $0x3a8] sm:$0xff]
    %v2883 = vld [vmem:[#allocation2 + $0x3b0] sm:$0xff]
    %v2884 = vld [vmem:[#allocation2 + $0x3b8] sm:$0xff]
    %v2885 = vld [vmem:[#allocation2 + $0x3c0] sm:$0xff]
    %v2886 = vld [vmem:[#allocation2 + $0x3c8] sm:$0xff]
    %v2887 = vld [vmem:[#allocation2 + $0x3d0] sm:$0xff]
    %v2888 = vld [vmem:[#allocation2 + $0x3d8] sm:$0xff]
    %v2889 = vld [vmem:[#allocation2 + $0x3e0] sm:$0xff]
    %v2890 = vld [vmem:[#allocation2 + $0x3e8] sm:$0xff]
    %v2891 = vld [vmem:[#allocation2 + $0x3f0] sm:$0xff]
    %v2892 = vld [vmem:[#allocation2 + $0x3f8] sm:$0xff]
    %v2893 = vld [vmem:[#allocation2 + $0x400] sm:$0xff]
    %v2894 = vld [vmem:[#allocation2 + $0x408] sm:$0xff]
    %v2895 = vld [vmem:[#allocation2 + $0x410] sm:$0xff]
    %v2896 = vld [vmem:[#allocation2 + $0x418] sm:$0xff]
    %v2897 = vld [vmem:[#allocation2 + $0x420] sm:$0xff]
    %v2898 = vld [vmem:[#allocation2 + $0x428] sm:$0xff]
    %v2899 = vld [vmem:[#allocation2 + $0x430] sm:$0xff]
    %v2900 = vld [vmem:[#allocation2 + $0x438] sm:$0xff]
    %v2901 = vld [vmem:[#allocation2 + $0x440] sm:$0xff]
    %v2902 = vld [vmem:[#allocation2 + $0x448] sm:$0xff]
    %v2903 = vld [vmem:[#allocation2 + $0x450] sm:$0xff]
    %v2904 = vld [vmem:[#allocation2 + $0x458] sm:$0xff]
    %v2905 = vld [vmem:[#allocation2 + $0x460] sm:$0xff]
    %v2906 = vld [vmem:[#allocation2 + $0x468] sm:$0xff]
    %v2907 = vld [vmem:[#allocation2 + $0x470] sm:$0xff]
    %v2908 = vld [vmem:[#allocation2 + $0x478] sm:$0xff]
    %v2909 = vld [vmem:[#allocation2 + $0x480] sm:$0xff]
    %v2910 = vld [vmem:[#allocation2 + $0x488] sm:$0xff]
    %v2911 = vld [vmem:[#allocation2 + $0x490] sm:$0xff]
    %v2912 = vld [vmem:[#allocation2 + $0x498] sm:$0xff]
    %v2913 = vld [vmem:[#allocation2 + $0x4a0] sm:$0xff]
    %v2914 = vld [vmem:[#allocation2 + $0x4a8] sm:$0xff]
    %v2915 = vld [vmem:[#allocation2 + $0x4b0] sm:$0xff]
    %v2916 = vld [vmem:[#allocation2 + $0x4b8] sm:$0xff]
    %v2917 = vld [vmem:[#allocation2 + $0x4c0] sm:$0xff]
    %v2918 = vld [vmem:[#allocation2 + $0x4c8] sm:$0xff]
    %v2919 = vld [vmem:[#allocation2 + $0x4d0] sm:$0xff]
    %v2920 = vld [vmem:[#allocation2 + $0x4d8] sm:$0xff]
    %v2921 = vld [vmem:[#allocation2 + $0x4e0] sm:$0xff]
    %v2922 = vld [vmem:[#allocation2 + $0x4e8] sm:$0xff]
    %v2923 = vld [vmem:[#allocation2 + $0x4f0] sm:$0xff]
    %v2924 = vld [vmem:[#allocation2 + $0x4f8] sm:$0xff]
    %v2925 = vld [vmem:[#allocation2 + $0x500] sm:$0xff]
    %v2926 = vld [vmem:[#allocation2 + $0x508] sm:$0xff]
    %v2927 = vld [vmem:[#allocation2 + $0x510] sm:$0xff]
    %v2928 = vld [vmem:[#allocation2 + $0x518] sm:$0xff]
    %v2929 = vld [vmem:[#allocation2 + $0x520] sm:$0xff]
    %v2930 = vld [vmem:[#allocation2 + $0x528] sm:$0xff]
    %v2931 = vld [vmem:[#allocation2 + $0x530] sm:$0xff]
    %v2932 = vld [vmem:[#allocation2 + $0x538] sm:$0xff]
    %v2933 = vld [vmem:[#allocation2 + $0x540] sm:$0xff]
    %v2934 = vld [vmem:[#allocation2 + $0x548] sm:$0xff]
    %v2935 = vld [vmem:[#allocation2 + $0x550] sm:$0xff]
    %v2936 = vld [vmem:[#allocation2 + $0x558] sm:$0xff]
    %v2937 = vld [vmem:[#allocation2 + $0x560] sm:$0xff]
    %v2938 = vld [vmem:[#allocation2 + $0x568] sm:$0xff]
    %v2939 = vld [vmem:[#allocation2 + $0x570] sm:$0xff]
    %v2940 = vld [vmem:[#allocation2 + $0x578] sm:$0xff]
    %v2941 = vld [vmem:[#allocation2 + $0x580] sm:$0xff]
    %v2942 = vld [vmem:[#allocation2 + $0x588] sm:$0xff]
    %v2943 = vld [vmem:[#allocation2 + $0x590] sm:$0xff]
    %v2944 = vld [vmem:[#allocation2 + $0x598] sm:$0xff]
    %v2945 = vld [vmem:[#allocation2 + $0x5a0] sm:$0xff]
    %v2946 = vld [vmem:[#allocation2 + $0x5a8] sm:$0xff]
    %v2947 = vld [vmem:[#allocation2 + $0x5b0] sm:$0xff]
    %v2948 = vld [vmem:[#allocation2 + $0x5b8] sm:$0xff]
    %v2949 = vld [vmem:[#allocation2 + $0x5c0] sm:$0xff]
    %v2950 = vld [vmem:[#allocation2 + $0x5c8] sm:$0xff]
    %v2951 = vld [vmem:[#allocation2 + $0x5d0] sm:$0xff]
    %v2952 = vld [vmem:[#allocation2 + $0x5d8] sm:$0xff]
    %v2953 = vld [vmem:[#allocation2 + $0x5e0] sm:$0xff]
    %v2954 = vld [vmem:[#allocation2 + $0x5e8] sm:$0xff]
    %v2955 = vld [vmem:[#allocation2 + $0x5f0] sm:$0xff]
    %v2956 = vld [vmem:[#allocation2 + $0x5f8] sm:$0xff]
    %s2957 = scalar_lea.vmem %s1, 128
    %v2958 = vld [vmem:[%s2957] ss:$8 sm:$0xf]
    %v2959 = vld [vmem:[%s2957] ss:$8 sm:$0xf0]
    %v2960 = vor.u32 %v2958, %v2959
    %s2961 = scalar_lea.vmem %s1, 192
    %v2962 = vld [vmem:[%s2961] ss:$8 sm:$0xf]
    %v2963 = vld [vmem:[%s2961] ss:$8 sm:$0xf0]
    %v2964 = vor.u32 %v2962, %v2963
    %v2967 = vlaneseq
    %v2968 = vshrl.u32 %v2967, 7
    %v2969 = vsub.s32 0, %v2968
    %v2970 = vrot.slane %v2960, %v2969
    %v2971 = vlaneseq
    %v2972 = vshrl.u32 %v2971, 7
    %v2973 = vsub.s32 1, %v2972
    %v2974 = vrot.slane %v2960, %v2973
    %v2975 = vlaneseq
    %v2976 = vshrl.u32 %v2975, 7
    %v2977 = vsub.s32 2, %v2976
    %v2978 = vrot.slane %v2960, %v2977
    %v2979 = vlaneseq
    %v2980 = vshrl.u32 %v2979, 7
    %v2981 = vsub.s32 3, %v2980
    %v2982 = vrot.slane %v2960, %v2981
    %v2983 = vlaneseq
    %v2984 = vshrl.u32 %v2983, 7
    %v2985 = vsub.s32 4, %v2984
    %v2986 = vrot.slane %v2960, %v2985
    %v2987 = vlaneseq
    %v2988 = vshrl.u32 %v2987, 7
    %v2989 = vsub.s32 5, %v2988
    %v2990 = vrot.slane %v2960, %v2989
    %v2991 = vlaneseq
    %v2992 = vshrl.u32 %v2991, 7
    %v2993 = vsub.s32 6, %v2992
    %v2994 = vrot.slane %v2960, %v2993
    %v2995 = vlaneseq
    %v2996 = vshrl.u32 %v2995, 7
    %v2997 = vsub.s32 7, %v2996
    %v2998 = vrot.slane %v2960, %v2997
    %v2999 = vlaneseq
    %v3000 = vshrl.u32 %v2999, 7
    %v3001 = vsub.s32 0, %v3000
    %v3002 = vrot.slane %v2964, %v3001
    %v3003 = vlaneseq
    %v3004 = vshrl.u32 %v3003, 7
    %v3005 = vsub.s32 1, %v3004
    %v3006 = vrot.slane %v2964, %v3005
    %v3007 = vlaneseq
    %v3008 = vshrl.u32 %v3007, 7
    %v3009 = vsub.s32 2, %v3008
    %v3010 = vrot.slane %v2964, %v3009
    %v3011 = vlaneseq
    %v3012 = vshrl.u32 %v3011, 7
    %v3013 = vsub.s32 3, %v3012
    %v3014 = vrot.slane %v2964, %v3013
    %v3015 = vlaneseq
    %v3016 = vshrl.u32 %v3015, 7
    %v3017 = vsub.s32 4, %v3016
    %v3018 = vrot.slane %v2964, %v3017
    %v3019 = vlaneseq
    %v3020 = vshrl.u32 %v3019, 7
    %v3021 = vsub.s32 5, %v3020
    %v3022 = vrot.slane %v2964, %v3021
    %v3023 = vlaneseq
    %v3024 = vshrl.u32 %v3023, 7
    %v3025 = vsub.s32 6, %v3024
    %v3026 = vrot.slane %v2964, %v3025
    %v3027 = vlaneseq
    %v3028 = vshrl.u32 %v3027, 7
    %v3029 = vsub.s32 7, %v3028
    %v3030 = vrot.slane %v2964, %v3029
    %v3239 = vunpack.c.l.b16 %v2765
    %v3240 = vunpack.c.h.b16 %v2765
    %v3241 = vunpack.c.l.b16 %v2766
    %v3242 = vunpack.c.h.b16 %v2766
    %v3243 = vunpack.c.l.b16 %v2767
    %v3244 = vunpack.c.h.b16 %v2767
    %v3245 = vunpack.c.l.b16 %v2768
    %v3246 = vunpack.c.h.b16 %v2768
    %v3247 = vunpack.c.l.b16 %v2769
    %v3248 = vunpack.c.h.b16 %v2769
    %v3249 = vunpack.c.l.b16 %v2770
    %v3250 = vunpack.c.h.b16 %v2770
    %v3251 = vunpack.c.l.b16 %v2771
    %v3252 = vunpack.c.h.b16 %v2771
    %v3253 = vunpack.c.l.b16 %v2772
    %v3254 = vunpack.c.h.b16 %v2772
    %v3255 = vunpack.c.l.b16 %v2773
    %v3256 = vunpack.c.h.b16 %v2773
    %v3257 = vunpack.c.l.b16 %v2774
    %v3258 = vunpack.c.h.b16 %v2774
    %v3259 = vunpack.c.l.b16 %v2775
    %v3260 = vunpack.c.h.b16 %v2775
    %v3261 = vunpack.c.l.b16 %v2776
    %v3262 = vunpack.c.h.b16 %v2776
    %v3263 = vunpack.c.l.b16 %v2777
    %v3264 = vunpack.c.h.b16 %v2777
    %v3265 = vunpack.c.l.b16 %v2778
    %v3266 = vunpack.c.h.b16 %v2778
    %v3267 = vunpack.c.l.b16 %v2779
    %v3268 = vunpack.c.h.b16 %v2779
    %v3269 = vunpack.c.l.b16 %v2780
    %v3270 = vunpack.c.h.b16 %v2780
    %v3271 = vunpack.c.l.b16 %v2781
    %v3272 = vunpack.c.h.b16 %v2781
    %v3273 = vunpack.c.l.b16 %v2782
    %v3274 = vunpack.c.h.b16 %v2782
    %v3275 = vunpack.c.l.b16 %v2783
    %v3276 = vunpack.c.h.b16 %v2783
    %v3277 = vunpack.c.l.b16 %v2784
    %v3278 = vunpack.c.h.b16 %v2784
    %v3279 = vunpack.c.l.b16 %v2785
    %v3280 = vunpack.c.h.b16 %v2785
    %v3281 = vunpack.c.l.b16 %v2786
    %v3282 = vunpack.c.h.b16 %v2786
    %v3283 = vunpack.c.l.b16 %v2787
    %v3284 = vunpack.c.h.b16 %v2787
    %v3285 = vunpack.c.l.b16 %v2788
    %v3286 = vunpack.c.h.b16 %v2788
    %v3287 = vunpack.c.l.b16 %v2789
    %v3288 = vunpack.c.h.b16 %v2789
    %v3289 = vunpack.c.l.b16 %v2790
    %v3290 = vunpack.c.h.b16 %v2790
    %v3291 = vunpack.c.l.b16 %v2791
    %v3292 = vunpack.c.h.b16 %v2791
    %v3293 = vunpack.c.l.b16 %v2792
    %v3294 = vunpack.c.h.b16 %v2792
    %v3295 = vunpack.c.l.b16 %v2793
    %v3296 = vunpack.c.h.b16 %v2793
    %v3297 = vunpack.c.l.b16 %v2794
    %v3298 = vunpack.c.h.b16 %v2794
    %v3299 = vunpack.c.l.b16 %v2795
    %v3300 = vunpack.c.h.b16 %v2795
    %v3301 = vunpack.c.l.b16 %v2796
    %v3302 = vunpack.c.h.b16 %v2796
    %v3303 = vunpack.c.l.b16 %v2797
    %v3304 = vunpack.c.h.b16 %v2797
    %v3305 = vunpack.c.l.b16 %v2798
    %v3306 = vunpack.c.h.b16 %v2798
    %v3307 = vunpack.c.l.b16 %v2799
    %v3308 = vunpack.c.h.b16 %v2799
    %v3309 = vunpack.c.l.b16 %v2800
    %v3310 = vunpack.c.h.b16 %v2800
    %v3311 = vunpack.c.l.b16 %v2801
    %v3312 = vunpack.c.h.b16 %v2801
    %v3313 = vunpack.c.l.b16 %v2802
    %v3314 = vunpack.c.h.b16 %v2802
    %v3315 = vunpack.c.l.b16 %v2803
    %v3316 = vunpack.c.h.b16 %v2803
    %v3317 = vunpack.c.l.b16 %v2804
    %v3318 = vunpack.c.h.b16 %v2804
    %v3319 = vunpack.c.l.b16 %v2805
    %v3320 = vunpack.c.h.b16 %v2805
    %v3321 = vunpack.c.l.b16 %v2806
    %v3322 = vunpack.c.h.b16 %v2806
    %v3323 = vunpack.c.l.b16 %v2807
    %v3324 = vunpack.c.h.b16 %v2807
    %v3325 = vunpack.c.l.b16 %v2808
    %v3326 = vunpack.c.h.b16 %v2808
    %v3327 = vunpack.c.l.b16 %v2809
    %v3328 = vunpack.c.h.b16 %v2809
    %v3329 = vunpack.c.l.b16 %v2810
    %v3330 = vunpack.c.h.b16 %v2810
    %v3331 = vunpack.c.l.b16 %v2811
    %v3332 = vunpack.c.h.b16 %v2811
    %v3333 = vunpack.c.l.b16 %v2812
    %v3334 = vunpack.c.h.b16 %v2812
    %v3335 = vunpack.c.l.b16 %v2813
    %v3336 = vunpack.c.h.b16 %v2813
    %v3337 = vunpack.c.l.b16 %v2814
    %v3338 = vunpack.c.h.b16 %v2814
    %v3339 = vunpack.c.l.b16 %v2815
    %v3340 = vunpack.c.h.b16 %v2815
    %v3341 = vunpack.c.l.b16 %v2816
    %v3342 = vunpack.c.h.b16 %v2816
    %v3343 = vunpack.c.l.b16 %v2817
    %v3344 = vunpack.c.h.b16 %v2817
    %v3345 = vunpack.c.l.b16 %v2818
    %v3346 = vunpack.c.h.b16 %v2818
    %v3347 = vunpack.c.l.b16 %v2819
    %v3348 = vunpack.c.h.b16 %v2819
    %v3349 = vunpack.c.l.b16 %v2820
    %v3350 = vunpack.c.h.b16 %v2820
    %v3351 = vunpack.c.l.b16 %v2821
    %v3352 = vunpack.c.h.b16 %v2821
    %v3353 = vunpack.c.l.b16 %v2822
    %v3354 = vunpack.c.h.b16 %v2822
    %v3355 = vunpack.c.l.b16 %v2823
    %v3356 = vunpack.c.h.b16 %v2823
    %v3357 = vunpack.c.l.b16 %v2824
    %v3358 = vunpack.c.h.b16 %v2824
    %v3359 = vunpack.c.l.b16 %v2825
    %v3360 = vunpack.c.h.b16 %v2825
    %v3361 = vunpack.c.l.b16 %v2826
    %v3362 = vunpack.c.h.b16 %v2826
    %v3363 = vunpack.c.l.b16 %v2827
    %v3364 = vunpack.c.h.b16 %v2827
    %v3365 = vunpack.c.l.b16 %v2828
    %v3366 = vunpack.c.h.b16 %v2828
    %v3367 = vunpack.c.l.b16 %v2829
    %v3368 = vunpack.c.h.b16 %v2829
    %v3369 = vunpack.c.l.b16 %v2830
    %v3370 = vunpack.c.h.b16 %v2830
    %v3371 = vunpack.c.l.b16 %v2831
    %v3372 = vunpack.c.h.b16 %v2831
    %v3373 = vunpack.c.l.b16 %v2832
    %v3374 = vunpack.c.h.b16 %v2832
    %v3375 = vunpack.c.l.b16 %v2833
    %v3376 = vunpack.c.h.b16 %v2833
    %v3377 = vunpack.c.l.b16 %v2834
    %v3378 = vunpack.c.h.b16 %v2834
    %v3379 = vunpack.c.l.b16 %v2835
    %v3380 = vunpack.c.h.b16 %v2835
    %v3381 = vunpack.c.l.b16 %v2836
    %v3382 = vunpack.c.h.b16 %v2836
    %v3383 = vunpack.c.l.b16 %v2837
    %v3384 = vunpack.c.h.b16 %v2837
    %v3385 = vunpack.c.l.b16 %v2838
    %v3386 = vunpack.c.h.b16 %v2838
    %v3387 = vunpack.c.l.b16 %v2839
    %v3388 = vunpack.c.h.b16 %v2839
    %v3389 = vunpack.c.l.b16 %v2840
    %v3390 = vunpack.c.h.b16 %v2840
    %v3391 = vunpack.c.l.b16 %v2841
    %v3392 = vunpack.c.h.b16 %v2841
    %v3393 = vunpack.c.l.b16 %v2842
    %v3394 = vunpack.c.h.b16 %v2842
    %v3395 = vunpack.c.l.b16 %v2843
    %v3396 = vunpack.c.h.b16 %v2843
    %v3397 = vunpack.c.l.b16 %v2844
    %v3398 = vunpack.c.h.b16 %v2844
    %v3399 = vunpack.c.l.b16 %v2845
    %v3400 = vunpack.c.h.b16 %v2845
    %v3401 = vunpack.c.l.b16 %v2846
    %v3402 = vunpack.c.h.b16 %v2846
    %v3403 = vunpack.c.l.b16 %v2847
    %v3404 = vunpack.c.h.b16 %v2847
    %v3405 = vunpack.c.l.b16 %v2848
    %v3406 = vunpack.c.h.b16 %v2848
    %v3407 = vunpack.c.l.b16 %v2849
    %v3408 = vunpack.c.h.b16 %v2849
    %v3409 = vunpack.c.l.b16 %v2850
    %v3410 = vunpack.c.h.b16 %v2850
    %v3411 = vunpack.c.l.b16 %v2851
    %v3412 = vunpack.c.h.b16 %v2851
    %v3413 = vunpack.c.l.b16 %v2852
    %v3414 = vunpack.c.h.b16 %v2852
    %v3415 = vunpack.c.l.b16 %v2853
    %v3416 = vunpack.c.h.b16 %v2853
    %v3417 = vunpack.c.l.b16 %v2854
    %v3418 = vunpack.c.h.b16 %v2854
    %v3419 = vunpack.c.l.b16 %v2855
    %v3420 = vunpack.c.h.b16 %v2855
    %v3421 = vunpack.c.l.b16 %v2856
    %v3422 = vunpack.c.h.b16 %v2856
    %v3423 = vunpack.c.l.b16 %v2857
    %v3424 = vunpack.c.h.b16 %v2857
    %v3425 = vunpack.c.l.b16 %v2858
    %v3426 = vunpack.c.h.b16 %v2858
    %v3427 = vunpack.c.l.b16 %v2859
    %v3428 = vunpack.c.h.b16 %v2859
    %v3429 = vunpack.c.l.b16 %v2860
    %v3430 = vunpack.c.h.b16 %v2860
    %v3431 = vunpack.c.l.b16 %v2861
    %v3432 = vunpack.c.h.b16 %v2861
    %v3433 = vunpack.c.l.b16 %v2862
    %v3434 = vunpack.c.h.b16 %v2862
    %v3435 = vunpack.c.l.b16 %v2863
    %v3436 = vunpack.c.h.b16 %v2863
    %v3437 = vunpack.c.l.b16 %v2864
    %v3438 = vunpack.c.h.b16 %v2864
    %v3439 = vunpack.c.l.b16 %v2865
    %v3440 = vunpack.c.h.b16 %v2865
    %v3441 = vunpack.c.l.b16 %v2866
    %v3442 = vunpack.c.h.b16 %v2866
    %v3443 = vunpack.c.l.b16 %v2867
    %v3444 = vunpack.c.h.b16 %v2867
    %v3445 = vunpack.c.l.b16 %v2868
    %v3446 = vunpack.c.h.b16 %v2868
    %v3447 = vunpack.c.l.b16 %v2869
    %v3448 = vunpack.c.h.b16 %v2869
    %v3449 = vunpack.c.l.b16 %v2870
    %v3450 = vunpack.c.h.b16 %v2870
    %v3451 = vunpack.c.l.b16 %v2871
    %v3452 = vunpack.c.h.b16 %v2871
    %v3453 = vunpack.c.l.b16 %v2872
    %v3454 = vunpack.c.h.b16 %v2872
    %v3455 = vunpack.c.l.b16 %v2873
    %v3456 = vunpack.c.h.b16 %v2873
    %v3457 = vunpack.c.l.b16 %v2874
    %v3458 = vunpack.c.h.b16 %v2874
    %v3459 = vunpack.c.l.b16 %v2875
    %v3460 = vunpack.c.h.b16 %v2875
    %v3461 = vunpack.c.l.b16 %v2876
    %v3462 = vunpack.c.h.b16 %v2876
    %v3463 = vunpack.c.l.b16 %v2877
    %v3464 = vunpack.c.h.b16 %v2877
    %v3465 = vunpack.c.l.b16 %v2878
    %v3466 = vunpack.c.h.b16 %v2878
    %v3467 = vunpack.c.l.b16 %v2879
    %v3468 = vunpack.c.h.b16 %v2879
    %v3469 = vunpack.c.l.b16 %v2880
    %v3470 = vunpack.c.h.b16 %v2880
    %v3471 = vunpack.c.l.b16 %v2881
    %v3472 = vunpack.c.h.b16 %v2881
    %v3473 = vunpack.c.l.b16 %v2882
    %v3474 = vunpack.c.h.b16 %v2882
    %v3475 = vunpack.c.l.b16 %v2883
    %v3476 = vunpack.c.h.b16 %v2883
    %v3477 = vunpack.c.l.b16 %v2884
    %v3478 = vunpack.c.h.b16 %v2884
    %v3479 = vunpack.c.l.b16 %v2885
    %v3480 = vunpack.c.h.b16 %v2885
    %v3481 = vunpack.c.l.b16 %v2886
    %v3482 = vunpack.c.h.b16 %v2886
    %v3483 = vunpack.c.l.b16 %v2887
    %v3484 = vunpack.c.h.b16 %v2887
    %v3485 = vunpack.c.l.b16 %v2888
    %v3486 = vunpack.c.h.b16 %v2888
    %v3487 = vunpack.c.l.b16 %v2889
    %v3488 = vunpack.c.h.b16 %v2889
    %v3489 = vunpack.c.l.b16 %v2890
    %v3490 = vunpack.c.h.b16 %v2890
    %v3491 = vunpack.c.l.b16 %v2891
    %v3492 = vunpack.c.h.b16 %v2891
    %v3493 = vunpack.c.l.b16 %v2892
    %v3494 = vunpack.c.h.b16 %v2892
    %v3495 = vunpack.c.l.b16 %v2893
    %v3496 = vunpack.c.h.b16 %v2893
    %v3497 = vunpack.c.l.b16 %v2894
    %v3498 = vunpack.c.h.b16 %v2894
    %v3499 = vunpack.c.l.b16 %v2895
    %v3500 = vunpack.c.h.b16 %v2895
    %v3501 = vunpack.c.l.b16 %v2896
    %v3502 = vunpack.c.h.b16 %v2896
    %v3503 = vunpack.c.l.b16 %v2897
    %v3504 = vunpack.c.h.b16 %v2897
    %v3505 = vunpack.c.l.b16 %v2898
    %v3506 = vunpack.c.h.b16 %v2898
    %v3507 = vunpack.c.l.b16 %v2899
    %v3508 = vunpack.c.h.b16 %v2899
    %v3509 = vunpack.c.l.b16 %v2900
    %v3510 = vunpack.c.h.b16 %v2900
    %v3511 = vunpack.c.l.b16 %v2901
    %v3512 = vunpack.c.h.b16 %v2901
    %v3513 = vunpack.c.l.b16 %v2902
    %v3514 = vunpack.c.h.b16 %v2902
    %v3515 = vunpack.c.l.b16 %v2903
    %v3516 = vunpack.c.h.b16 %v2903
    %v3517 = vunpack.c.l.b16 %v2904
    %v3518 = vunpack.c.h.b16 %v2904
    %v3519 = vunpack.c.l.b16 %v2905
    %v3520 = vunpack.c.h.b16 %v2905
    %v3521 = vunpack.c.l.b16 %v2906
    %v3522 = vunpack.c.h.b16 %v2906
    %v3523 = vunpack.c.l.b16 %v2907
    %v3524 = vunpack.c.h.b16 %v2907
    %v3525 = vunpack.c.l.b16 %v2908
    %v3526 = vunpack.c.h.b16 %v2908
    %v3527 = vunpack.c.l.b16 %v2909
    %v3528 = vunpack.c.h.b16 %v2909
    %v3529 = vunpack.c.l.b16 %v2910
    %v3530 = vunpack.c.h.b16 %v2910
    %v3531 = vunpack.c.l.b16 %v2911
    %v3532 = vunpack.c.h.b16 %v2911
    %v3533 = vunpack.c.l.b16 %v2912
    %v3534 = vunpack.c.h.b16 %v2912
    %v3535 = vunpack.c.l.b16 %v2913
    %v3536 = vunpack.c.h.b16 %v2913
    %v3537 = vunpack.c.l.b16 %v2914
    %v3538 = vunpack.c.h.b16 %v2914
    %v3539 = vunpack.c.l.b16 %v2915
    %v3540 = vunpack.c.h.b16 %v2915
    %v3541 = vunpack.c.l.b16 %v2916
    %v3542 = vunpack.c.h.b16 %v2916
    %v3543 = vunpack.c.l.b16 %v2917
    %v3544 = vunpack.c.h.b16 %v2917
    %v3545 = vunpack.c.l.b16 %v2918
    %v3546 = vunpack.c.h.b16 %v2918
    %v3547 = vunpack.c.l.b16 %v2919
    %v3548 = vunpack.c.h.b16 %v2919
    %v3549 = vunpack.c.l.b16 %v2920
    %v3550 = vunpack.c.h.b16 %v2920
    %v3551 = vunpack.c.l.b16 %v2921
    %v3552 = vunpack.c.h.b16 %v2921
    %v3553 = vunpack.c.l.b16 %v2922
    %v3554 = vunpack.c.h.b16 %v2922
    %v3555 = vunpack.c.l.b16 %v2923
    %v3556 = vunpack.c.h.b16 %v2923
    %v3557 = vunpack.c.l.b16 %v2924
    %v3558 = vunpack.c.h.b16 %v2924
    %v3559 = vunpack.c.l.b16 %v2925
    %v3560 = vunpack.c.h.b16 %v2925
    %v3561 = vunpack.c.l.b16 %v2926
    %v3562 = vunpack.c.h.b16 %v2926
    %v3563 = vunpack.c.l.b16 %v2927
    %v3564 = vunpack.c.h.b16 %v2927
    %v3565 = vunpack.c.l.b16 %v2928
    %v3566 = vunpack.c.h.b16 %v2928
    %v3567 = vunpack.c.l.b16 %v2929
    %v3568 = vunpack.c.h.b16 %v2929
    %v3569 = vunpack.c.l.b16 %v2930
    %v3570 = vunpack.c.h.b16 %v2930
    %v3571 = vunpack.c.l.b16 %v2931
    %v3572 = vunpack.c.h.b16 %v2931
    %v3573 = vunpack.c.l.b16 %v2932
    %v3574 = vunpack.c.h.b16 %v2932
    %v3575 = vunpack.c.l.b16 %v2933
    %v3576 = vunpack.c.h.b16 %v2933
    %v3577 = vunpack.c.l.b16 %v2934
    %v3578 = vunpack.c.h.b16 %v2934
    %v3579 = vunpack.c.l.b16 %v2935
    %v3580 = vunpack.c.h.b16 %v2935
    %v3581 = vunpack.c.l.b16 %v2936
    %v3582 = vunpack.c.h.b16 %v2936
    %v3583 = vunpack.c.l.b16 %v2937
    %v3584 = vunpack.c.h.b16 %v2937
    %v3585 = vunpack.c.l.b16 %v2938
    %v3586 = vunpack.c.h.b16 %v2938
    %v3587 = vunpack.c.l.b16 %v2939
    %v3588 = vunpack.c.h.b16 %v2939
    %v3589 = vunpack.c.l.b16 %v2940
    %v3590 = vunpack.c.h.b16 %v2940
    %v3591 = vunpack.c.l.b16 %v2941
    %v3592 = vunpack.c.h.b16 %v2941
    %v3593 = vunpack.c.l.b16 %v2942
    %v3594 = vunpack.c.h.b16 %v2942
    %v3595 = vunpack.c.l.b16 %v2943
    %v3596 = vunpack.c.h.b16 %v2943
    %v3597 = vunpack.c.l.b16 %v2944
    %v3598 = vunpack.c.h.b16 %v2944
    %v3599 = vunpack.c.l.b16 %v2945
    %v3600 = vunpack.c.h.b16 %v2945
    %v3601 = vunpack.c.l.b16 %v2946
    %v3602 = vunpack.c.h.b16 %v2946
    %v3603 = vunpack.c.l.b16 %v2947
    %v3604 = vunpack.c.h.b16 %v2947
    %v3605 = vunpack.c.l.b16 %v2948
    %v3606 = vunpack.c.h.b16 %v2948
    %v3607 = vunpack.c.l.b16 %v2949
    %v3608 = vunpack.c.h.b16 %v2949
    %v3609 = vunpack.c.l.b16 %v2950
    %v3610 = vunpack.c.h.b16 %v2950
    %v3611 = vunpack.c.l.b16 %v2951
    %v3612 = vunpack.c.h.b16 %v2951
    %v3613 = vunpack.c.l.b16 %v2952
    %v3614 = vunpack.c.h.b16 %v2952
    %v3615 = vunpack.c.l.b16 %v2953
    %v3616 = vunpack.c.h.b16 %v2953
    %v3617 = vunpack.c.l.b16 %v2954
    %v3618 = vunpack.c.h.b16 %v2954
    %v3619 = vunpack.c.l.b16 %v2955
    %v3620 = vunpack.c.h.b16 %v2955
    %v3621 = vunpack.c.l.b16 %v2956
    %v3622 = vunpack.c.h.b16 %v2956
    %v3623 = vpack.c.b16 %v3255, %v3239
    %v3624 = vpack.c.b16 %v3256, %v3240
    %v3625 = vpack.c.b16 %v3257, %v3241
    %v3626 = vpack.c.b16 %v3258, %v3242
    %v3627 = vpack.c.b16 %v3259, %v3243
    %v3628 = vpack.c.b16 %v3260, %v3244
    %v3629 = vpack.c.b16 %v3261, %v3245
    %v3630 = vpack.c.b16 %v3262, %v3246
    %v3631 = vpack.c.b16 %v3263, %v3247
    %v3632 = vpack.c.b16 %v3264, %v3248
    %v3633 = vpack.c.b16 %v3265, %v3249
    %v3634 = vpack.c.b16 %v3266, %v3250
    %v3635 = vpack.c.b16 %v3267, %v3251
    %v3636 = vpack.c.b16 %v3268, %v3252
    %v3637 = vpack.c.b16 %v3269, %v3253
    %v3638 = vpack.c.b16 %v3270, %v3254
    %v3639 = vpack.c.b16 %v3287, %v3271
    %v3640 = vpack.c.b16 %v3288, %v3272
    %v3641 = vpack.c.b16 %v3289, %v3273
    %v3642 = vpack.c.b16 %v3290, %v3274
    %v3643 = vpack.c.b16 %v3291, %v3275
    %v3644 = vpack.c.b16 %v3292, %v3276
    %v3645 = vpack.c.b16 %v3293, %v3277
    %v3646 = vpack.c.b16 %v3294, %v3278
    %v3647 = vpack.c.b16 %v3295, %v3279
    %v3648 = vpack.c.b16 %v3296, %v3280
    %v3649 = vpack.c.b16 %v3297, %v3281
    %v3650 = vpack.c.b16 %v3298, %v3282
    %v3651 = vpack.c.b16 %v3299, %v3283
    %v3652 = vpack.c.b16 %v3300, %v3284
    %v3653 = vpack.c.b16 %v3301, %v3285
    %v3654 = vpack.c.b16 %v3302, %v3286
    %v3655 = vpack.c.b16 %v3319, %v3303
    %v3656 = vpack.c.b16 %v3320, %v3304
    %v3657 = vpack.c.b16 %v3321, %v3305
    %v3658 = vpack.c.b16 %v3322, %v3306
    %v3659 = vpack.c.b16 %v3323, %v3307
    %v3660 = vpack.c.b16 %v3324, %v3308
    %v3661 = vpack.c.b16 %v3325, %v3309
    %v3662 = vpack.c.b16 %v3326, %v3310
    %v3663 = vpack.c.b16 %v3327, %v3311
    %v3664 = vpack.c.b16 %v3328, %v3312
    %v3665 = vpack.c.b16 %v3329, %v3313
    %v3666 = vpack.c.b16 %v3330, %v3314
    %v3667 = vpack.c.b16 %v3331, %v3315
    %v3668 = vpack.c.b16 %v3332, %v3316
    %v3669 = vpack.c.b16 %v3333, %v3317
    %v3670 = vpack.c.b16 %v3334, %v3318
    %v3671 = vpack.c.b16 %v3351, %v3335
    %v3672 = vpack.c.b16 %v3352, %v3336
    %v3673 = vpack.c.b16 %v3353, %v3337
    %v3674 = vpack.c.b16 %v3354, %v3338
    %v3675 = vpack.c.b16 %v3355, %v3339
    %v3676 = vpack.c.b16 %v3356, %v3340
    %v3677 = vpack.c.b16 %v3357, %v3341
    %v3678 = vpack.c.b16 %v3358, %v3342
    %v3679 = vpack.c.b16 %v3359, %v3343
    %v3680 = vpack.c.b16 %v3360, %v3344
    %v3681 = vpack.c.b16 %v3361, %v3345
    %v3682 = vpack.c.b16 %v3362, %v3346
    %v3683 = vpack.c.b16 %v3363, %v3347
    %v3684 = vpack.c.b16 %v3364, %v3348
    %v3685 = vpack.c.b16 %v3365, %v3349
    %v3686 = vpack.c.b16 %v3366, %v3350
    %v3687 = vpack.c.b16 %v3383, %v3367
    %v3688 = vpack.c.b16 %v3384, %v3368
    %v3689 = vpack.c.b16 %v3385, %v3369
    %v3690 = vpack.c.b16 %v3386, %v3370
    %v3691 = vpack.c.b16 %v3387, %v3371
    %v3692 = vpack.c.b16 %v3388, %v3372
    %v3693 = vpack.c.b16 %v3389, %v3373
    %v3694 = vpack.c.b16 %v3390, %v3374
    %v3695 = vpack.c.b16 %v3391, %v3375
    %v3696 = vpack.c.b16 %v3392, %v3376
    %v3697 = vpack.c.b16 %v3393, %v3377
    %v3698 = vpack.c.b16 %v3394, %v3378
    %v3699 = vpack.c.b16 %v3395, %v3379
    %v3700 = vpack.c.b16 %v3396, %v3380
    %v3701 = vpack.c.b16 %v3397, %v3381
    %v3702 = vpack.c.b16 %v3398, %v3382
    %v3703 = vpack.c.b16 %v3415, %v3399
    %v3704 = vpack.c.b16 %v3416, %v3400
    %v3705 = vpack.c.b16 %v3417, %v3401
    %v3706 = vpack.c.b16 %v3418, %v3402
    %v3707 = vpack.c.b16 %v3419, %v3403
    %v3708 = vpack.c.b16 %v3420, %v3404
    %v3709 = vpack.c.b16 %v3421, %v3405
    %v3710 = vpack.c.b16 %v3422, %v3406
    %v3711 = vpack.c.b16 %v3423, %v3407
    %v3712 = vpack.c.b16 %v3424, %v3408
    %v3713 = vpack.c.b16 %v3425, %v3409
    %v3714 = vpack.c.b16 %v3426, %v3410
    %v3715 = vpack.c.b16 %v3427, %v3411
    %v3716 = vpack.c.b16 %v3428, %v3412
    %v3717 = vpack.c.b16 %v3429, %v3413
    %v3718 = vpack.c.b16 %v3430, %v3414
    %v3719 = vpack.c.b16 %v3447, %v3431
    %v3720 = vpack.c.b16 %v3448, %v3432
    %v3721 = vpack.c.b16 %v3449, %v3433
    %v3722 = vpack.c.b16 %v3450, %v3434
    %v3723 = vpack.c.b16 %v3451, %v3435
    %v3724 = vpack.c.b16 %v3452, %v3436
    %v3725 = vpack.c.b16 %v3453, %v3437
    %v3726 = vpack.c.b16 %v3454, %v3438
    %v3727 = vpack.c.b16 %v3455, %v3439
    %v3728 = vpack.c.b16 %v3456, %v3440
    %v3729 = vpack.c.b16 %v3457, %v3441
    %v3730 = vpack.c.b16 %v3458, %v3442
    %v3731 = vpack.c.b16 %v3459, %v3443
    %v3732 = vpack.c.b16 %v3460, %v3444
    %v3733 = vpack.c.b16 %v3461, %v3445
    %v3734 = vpack.c.b16 %v3462, %v3446
    %v3735 = vpack.c.b16 %v3479, %v3463
    %v3736 = vpack.c.b16 %v3480, %v3464
    %v3737 = vpack.c.b16 %v3481, %v3465
    %v3738 = vpack.c.b16 %v3482, %v3466
    %v3739 = vpack.c.b16 %v3483, %v3467
    %v3740 = vpack.c.b16 %v3484, %v3468
    %v3741 = vpack.c.b16 %v3485, %v3469
    %v3742 = vpack.c.b16 %v3486, %v3470
    %v3743 = vpack.c.b16 %v3487, %v3471
    %v3744 = vpack.c.b16 %v3488, %v3472
    %v3745 = vpack.c.b16 %v3489, %v3473
    %v3746 = vpack.c.b16 %v3490, %v3474
    %v3747 = vpack.c.b16 %v3491, %v3475
    %v3748 = vpack.c.b16 %v3492, %v3476
    %v3749 = vpack.c.b16 %v3493, %v3477
    %v3750 = vpack.c.b16 %v3494, %v3478
    %v3751 = vpack.c.b16 %v3511, %v3495
    %v3752 = vpack.c.b16 %v3512, %v3496
    %v3753 = vpack.c.b16 %v3513, %v3497
    %v3754 = vpack.c.b16 %v3514, %v3498
    %v3755 = vpack.c.b16 %v3515, %v3499
    %v3756 = vpack.c.b16 %v3516, %v3500
    %v3757 = vpack.c.b16 %v3517, %v3501
    %v3758 = vpack.c.b16 %v3518, %v3502
    %v3759 = vpack.c.b16 %v3519, %v3503
    %v3760 = vpack.c.b16 %v3520, %v3504
    %v3761 = vpack.c.b16 %v3521, %v3505
    %v3762 = vpack.c.b16 %v3522, %v3506
    %v3763 = vpack.c.b16 %v3523, %v3507
    %v3764 = vpack.c.b16 %v3524, %v3508
    %v3765 = vpack.c.b16 %v3525, %v3509
    %v3766 = vpack.c.b16 %v3526, %v3510
    %v3767 = vpack.c.b16 %v3543, %v3527
    %v3768 = vpack.c.b16 %v3544, %v3528
    %v3769 = vpack.c.b16 %v3545, %v3529
    %v3770 = vpack.c.b16 %v3546, %v3530
    %v3771 = vpack.c.b16 %v3547, %v3531
    %v3772 = vpack.c.b16 %v3548, %v3532
    %v3773 = vpack.c.b16 %v3549, %v3533
    %v3774 = vpack.c.b16 %v3550, %v3534
    %v3775 = vpack.c.b16 %v3551, %v3535
    %v3776 = vpack.c.b16 %v3552, %v3536
    %v3777 = vpack.c.b16 %v3553, %v3537
    %v3778 = vpack.c.b16 %v3554, %v3538
    %v3779 = vpack.c.b16 %v3555, %v3539
    %v3780 = vpack.c.b16 %v3556, %v3540
    %v3781 = vpack.c.b16 %v3557, %v3541
    %v3782 = vpack.c.b16 %v3558, %v3542
    %v3783 = vpack.c.b16 %v3575, %v3559
    %v3784 = vpack.c.b16 %v3576, %v3560
    %v3785 = vpack.c.b16 %v3577, %v3561
    %v3786 = vpack.c.b16 %v3578, %v3562
    %v3787 = vpack.c.b16 %v3579, %v3563
    %v3788 = vpack.c.b16 %v3580, %v3564
    %v3789 = vpack.c.b16 %v3581, %v3565
    %v3790 = vpack.c.b16 %v3582, %v3566
    %v3791 = vpack.c.b16 %v3583, %v3567
    %v3792 = vpack.c.b16 %v3584, %v3568
    %v3793 = vpack.c.b16 %v3585, %v3569
    %v3794 = vpack.c.b16 %v3586, %v3570
    %v3795 = vpack.c.b16 %v3587, %v3571
    %v3796 = vpack.c.b16 %v3588, %v3572
    %v3797 = vpack.c.b16 %v3589, %v3573
    %v3798 = vpack.c.b16 %v3590, %v3574
    %v3799 = vpack.c.b16 %v3607, %v3591
    %v3800 = vpack.c.b16 %v3608, %v3592
    %v3801 = vpack.c.b16 %v3609, %v3593
    %v3802 = vpack.c.b16 %v3610, %v3594
    %v3803 = vpack.c.b16 %v3611, %v3595
    %v3804 = vpack.c.b16 %v3612, %v3596
    %v3805 = vpack.c.b16 %v3613, %v3597
    %v3806 = vpack.c.b16 %v3614, %v3598
    %v3807 = vpack.c.b16 %v3615, %v3599
    %v3808 = vpack.c.b16 %v3616, %v3600
    %v3809 = vpack.c.b16 %v3617, %v3601
    %v3810 = vpack.c.b16 %v3618, %v3602
    %v3811 = vpack.c.b16 %v3619, %v3603
    %v3812 = vpack.c.b16 %v3620, %v3604
    %v3813 = vpack.c.b16 %v3621, %v3605
    %v3814 = vpack.c.b16 %v3622, %v3606
    %v4008 = vsel %vm1237, %v2764, 0
    %4010 = vmatprep.subr.bf16.mxu0 %v3736
    %4011 = vmatpush1.bf16.msra.mxu0 %v3735
    %4012 = vmatprep.subr.bf16.mxu0 %v3720
    %4013 = vmatpush1.bf16.msra.mxu0 %v3719
    %4014 = vmatprep.subr.bf16.mxu0 %v3704
    %4015 = vmatpush1.bf16.msra.mxu0 %v3703
    %4016 = vmatprep.subr.bf16.mxu0 %v3688
    %4017 = vmatpush1.bf16.msra.mxu0 %v3687
    %4018 = vmatprep.subr.bf16.mxu0 %v3672
    %4019 = vmatpush1.bf16.msra.mxu0 %v3671
    %4020 = vmatprep.subr.bf16.mxu0 %v3656
    %4021 = vmatpush1.bf16.msra.mxu0 %v3655
    %4022 = vmatprep.subr.bf16.mxu0 %v3640
    %4023 = vmatpush1.bf16.msra.mxu0 %v3639
    %4024 = vmatprep.subr.bf16.mxu0 %v3624
    %4025 = vmatpush1.bf16.msra.mxu0 %v3623
    %4026 = vmatprep.subr.bf16.mxu0 0
    %4027 = vmatpush2.bf16.msra.mxu0 0
    %4028 = vmatprep.subr.bf16.mxu0 0
    %4029 = vmatpush2.bf16.msra.mxu0 0
    %4030 = vmatprep.subr.bf16.mxu0 0
    %4031 = vmatpush2.bf16.msra.mxu0 0
    %4032 = vmatprep.subr.bf16.mxu0 0
    %4033 = vmatpush2.bf16.msra.mxu0 0
    %4034 = vmatprep.subr.bf16.mxu0 %v3800
    %4035 = vmatpush2.bf16.msra.mxu0 %v3799
    %4036 = vmatprep.subr.bf16.mxu0 %v3784
    %4037 = vmatpush2.bf16.msra.mxu0 %v3783
    %4038 = vmatprep.subr.bf16.mxu0 %v3768
    %4039 = vmatpush2.bf16.msra.mxu0 %v3767
    %4040 = vmatprep.subr.bf16.mxu0 %v3752
    %4041 = vmatpush2.bf16.msra.mxu0 %v3751
    %4042 = vmatprep.mubr.bf16.mxu0 %v4008
    %4043 = vmatmul.mubr.bf16.gmra.mxu0 %v2763
    %v4044 = vpop.f32.mrf.mxu0
    %v4045 = vadd.f32 %v2970, %v4044
    %v4046 = vpop.f32.mrf.mxu0
    %v4047 = vadd.f32 %v2974, %v4046
    %v4048 = vpop.f32.mrf.mxu0
    %v4049 = vadd.f32 %v2970, %v4048
    %v4050 = vpop.f32.mrf.mxu0
    %v4051 = vadd.f32 %v2974, %v4050
    %4052 = vdwg.mxu0
    %4053 = vmatprep.subr.bf16.mxu0 %v3738
    %4054 = vmatpush1.bf16.msra.mxu0 %v3737
    %4055 = vmatprep.subr.bf16.mxu0 %v3722
    %4056 = vmatpush1.bf16.msra.mxu0 %v3721
    %4057 = vmatprep.subr.bf16.mxu0 %v3706
    %4058 = vmatpush1.bf16.msra.mxu0 %v3705
    %4059 = vmatprep.subr.bf16.mxu0 %v3690
    %4060 = vmatpush1.bf16.msra.mxu0 %v3689
    %4061 = vmatprep.subr.bf16.mxu0 %v3674
    %4062 = vmatpush1.bf16.msra.mxu0 %v3673
    %4063 = vmatprep.subr.bf16.mxu0 %v3658
    %4064 = vmatpush1.bf16.msra.mxu0 %v3657
    %4065 = vmatprep.subr.bf16.mxu0 %v3642
    %4066 = vmatpush1.bf16.msra.mxu0 %v3641
    %4067 = vmatprep.subr.bf16.mxu0 %v3626
    %4068 = vmatpush1.bf16.msra.mxu0 %v3625
    %4069 = vmatprep.subr.bf16.mxu0 0
    %4070 = vmatpush2.bf16.msra.mxu0 0
    %4071 = vmatprep.subr.bf16.mxu0 0
    %4072 = vmatpush2.bf16.msra.mxu0 0
    %4073 = vmatprep.subr.bf16.mxu0 0
    %4074 = vmatpush2.bf16.msra.mxu0 0
    %4075 = vmatprep.subr.bf16.mxu0 0
    %4076 = vmatpush2.bf16.msra.mxu0 0
    %4077 = vmatprep.subr.bf16.mxu0 %v3802
    %4078 = vmatpush2.bf16.msra.mxu0 %v3801
    %4079 = vmatprep.subr.bf16.mxu0 %v3786
    %4080 = vmatpush2.bf16.msra.mxu0 %v3785
    %4081 = vmatprep.subr.bf16.mxu0 %v3770
    %4082 = vmatpush2.bf16.msra.mxu0 %v3769
    %4083 = vmatprep.subr.bf16.mxu0 %v3754
    %4084 = vmatpush2.bf16.msra.mxu0 %v3753
    %4085 = vmatprep.mubr.bf16.mxu0 %v4008
    %4086 = vmatmul.mubr.bf16.gmra.mxu0 %v2763
    %v4087 = vpop.f32.mrf.mxu0
    %v4088 = vadd.f32 %v2978, %v4087
    %v4089 = vpop.f32.mrf.mxu0
    %v4090 = vadd.f32 %v2982, %v4089
    %v4091 = vpop.f32.mrf.mxu0
    %v4092 = vadd.f32 %v2978, %v4091
    %v4093 = vpop.f32.mrf.mxu0
    %v4094 = vadd.f32 %v2982, %v4093
    %4095 = vdwg.mxu0
    %4096 = vmatprep.subr.bf16.mxu0 %v3740
    %4097 = vmatpush1.bf16.msra.mxu0 %v3739
    %4098 = vmatprep.subr.bf16.mxu0 %v3724
    %4099 = vmatpush1.bf16.msra.mxu0 %v3723
    %4100 = vmatprep.subr.bf16.mxu0 %v3708
    %4101 = vmatpush1.bf16.msra.mxu0 %v3707
    %4102 = vmatprep.subr.bf16.mxu0 %v3692
    %4103 = vmatpush1.bf16.msra.mxu0 %v3691
    %4104 = vmatprep.subr.bf16.mxu0 %v3676
    %4105 = vmatpush1.bf16.msra.mxu0 %v3675
    %4106 = vmatprep.subr.bf16.mxu0 %v3660
    %4107 = vmatpush1.bf16.msra.mxu0 %v3659
    %4108 = vmatprep.subr.bf16.mxu0 %v3644
    %4109 = vmatpush1.bf16.msra.mxu0 %v3643
    %4110 = vmatprep.subr.bf16.mxu0 %v3628
    %4111 = vmatpush1.bf16.msra.mxu0 %v3627
    %4112 = vmatprep.subr.bf16.mxu0 0
    %4113 = vmatpush2.bf16.msra.mxu0 0
    %4114 = vmatprep.subr.bf16.mxu0 0
    %4115 = vmatpush2.bf16.msra.mxu0 0
    %4116 = vmatprep.subr.bf16.mxu0 0
    %4117 = vmatpush2.bf16.msra.mxu0 0
    %4118 = vmatprep.subr.bf16.mxu0 0
    %4119 = vmatpush2.bf16.msra.mxu0 0
    %4120 = vmatprep.subr.bf16.mxu0 %v3804
    %4121 = vmatpush2.bf16.msra.mxu0 %v3803
    %4122 = vmatprep.subr.bf16.mxu0 %v3788
    %4123 = vmatpush2.bf16.msra.mxu0 %v3787
    %4124 = vmatprep.subr.bf16.mxu0 %v3772
    %4125 = vmatpush2.bf16.msra.mxu0 %v3771
    %4126 = vmatprep.subr.bf16.mxu0 %v3756
    %4127 = vmatpush2.bf16.msra.mxu0 %v3755
    %4128 = vmatprep.mubr.bf16.mxu0 %v4008
    %4129 = vmatmul.mubr.bf16.gmra.mxu0 %v2763
    %v4130 = vpop.f32.mrf.mxu0
    %v4131 = vadd.f32 %v2986, %v4130
    %v4132 = vpop.f32.mrf.mxu0
    %v4133 = vadd.f32 %v2990, %v4132
    %v4134 = vpop.f32.mrf.mxu0
    %v4135 = vadd.f32 %v2986, %v4134
    %v4136 = vpop.f32.mrf.mxu0
    %v4137 = vadd.f32 %v2990, %v4136
    %4138 = vdwg.mxu0
    %4139 = vmatprep.subr.bf16.mxu0 %v3742
    %4140 = vmatpush1.bf16.msra.mxu0 %v3741
    %4141 = vmatprep.subr.bf16.mxu0 %v3726
    %4142 = vmatpush1.bf16.msra.mxu0 %v3725
    %4143 = vmatprep.subr.bf16.mxu0 %v3710
    %4144 = vmatpush1.bf16.msra.mxu0 %v3709
    %4145 = vmatprep.subr.bf16.mxu0 %v3694
    %4146 = vmatpush1.bf16.msra.mxu0 %v3693
    %4147 = vmatprep.subr.bf16.mxu0 %v3678
    %4148 = vmatpush1.bf16.msra.mxu0 %v3677
    %4149 = vmatprep.subr.bf16.mxu0 %v3662
    %4150 = vmatpush1.bf16.msra.mxu0 %v3661
    %4151 = vmatprep.subr.bf16.mxu0 %v3646
    %4152 = vmatpush1.bf16.msra.mxu0 %v3645
    %4153 = vmatprep.subr.bf16.mxu0 %v3630
    %4154 = vmatpush1.bf16.msra.mxu0 %v3629
    %4155 = vmatprep.subr.bf16.mxu0 0
    %4156 = vmatpush2.bf16.msra.mxu0 0
    %4157 = vmatprep.subr.bf16.mxu0 0
    %4158 = vmatpush2.bf16.msra.mxu0 0
    %4159 = vmatprep.subr.bf16.mxu0 0
    %4160 = vmatpush2.bf16.msra.mxu0 0
    %4161 = vmatprep.subr.bf16.mxu0 0
    %4162 = vmatpush2.bf16.msra.mxu0 0
    %4163 = vmatprep.subr.bf16.mxu0 %v3806
    %4164 = vmatpush2.bf16.msra.mxu0 %v3805
    %4165 = vmatprep.subr.bf16.mxu0 %v3790
    %4166 = vmatpush2.bf16.msra.mxu0 %v3789
    %4167 = vmatprep.subr.bf16.mxu0 %v3774
    %4168 = vmatpush2.bf16.msra.mxu0 %v3773
    %4169 = vmatprep.subr.bf16.mxu0 %v3758
    %4170 = vmatpush2.bf16.msra.mxu0 %v3757
    %4171 = vmatprep.mubr.bf16.mxu0 %v4008
    %4172 = vmatmul.mubr.bf16.gmra.mxu0 %v2763
    %v4173 = vpop.f32.mrf.mxu0
    %v4174 = vadd.f32 %v2994, %v4173
    %v4175 = vpop.f32.mrf.mxu0
    %v4176 = vadd.f32 %v2998, %v4175
    %v4177 = vpop.f32.mrf.mxu0
    %v4178 = vadd.f32 %v2994, %v4177
    %v4179 = vpop.f32.mrf.mxu0
    %v4180 = vadd.f32 %v2998, %v4179
    %4181 = vdwg.mxu0
    %4182 = vmatprep.subr.bf16.mxu0 %v3744
    %4183 = vmatpush1.bf16.msra.mxu0 %v3743
    %4184 = vmatprep.subr.bf16.mxu0 %v3728
    %4185 = vmatpush1.bf16.msra.mxu0 %v3727
    %4186 = vmatprep.subr.bf16.mxu0 %v3712
    %4187 = vmatpush1.bf16.msra.mxu0 %v3711
    %4188 = vmatprep.subr.bf16.mxu0 %v3696
    %4189 = vmatpush1.bf16.msra.mxu0 %v3695
    %4190 = vmatprep.subr.bf16.mxu0 %v3680
    %4191 = vmatpush1.bf16.msra.mxu0 %v3679
    %4192 = vmatprep.subr.bf16.mxu0 %v3664
    %4193 = vmatpush1.bf16.msra.mxu0 %v3663
    %4194 = vmatprep.subr.bf16.mxu0 %v3648
    %4195 = vmatpush1.bf16.msra.mxu0 %v3647
    %4196 = vmatprep.subr.bf16.mxu0 %v3632
    %4197 = vmatpush1.bf16.msra.mxu0 %v3631
    %4198 = vmatprep.subr.bf16.mxu0 0
    %4199 = vmatpush2.bf16.msra.mxu0 0
    %4200 = vmatprep.subr.bf16.mxu0 0
    %4201 = vmatpush2.bf16.msra.mxu0 0
    %4202 = vmatprep.subr.bf16.mxu0 0
    %4203 = vmatpush2.bf16.msra.mxu0 0
    %4204 = vmatprep.subr.bf16.mxu0 0
    %4205 = vmatpush2.bf16.msra.mxu0 0
    %4206 = vmatprep.subr.bf16.mxu0 %v3808
    %4207 = vmatpush2.bf16.msra.mxu0 %v3807
    %4208 = vmatprep.subr.bf16.mxu0 %v3792
    %4209 = vmatpush2.bf16.msra.mxu0 %v3791
    %4210 = vmatprep.subr.bf16.mxu0 %v3776
    %4211 = vmatpush2.bf16.msra.mxu0 %v3775
    %4212 = vmatprep.subr.bf16.mxu0 %v3760
    %4213 = vmatpush2.bf16.msra.mxu0 %v3759
    %4214 = vmatprep.mubr.bf16.mxu0 %v4008
    %4215 = vmatmul.mubr.bf16.gmra.mxu0 %v2763
    %v4216 = vpop.f32.mrf.mxu0
    %v4217 = vadd.f32 %v3002, %v4216
    %v4218 = vpop.f32.mrf.mxu0
    %v4219 = vadd.f32 %v3006, %v4218
    %v4220 = vpop.f32.mrf.mxu0
    %v4221 = vadd.f32 %v3002, %v4220
    %v4222 = vpop.f32.mrf.mxu0
    %v4223 = vadd.f32 %v3006, %v4222
    %4224 = vdwg.mxu0
    %4225 = vmatprep.subr.bf16.mxu0 %v3746
    %4226 = vmatpush1.bf16.msra.mxu0 %v3745
    %4227 = vmatprep.subr.bf16.mxu0 %v3730
    %4228 = vmatpush1.bf16.msra.mxu0 %v3729
    %4229 = vmatprep.subr.bf16.mxu0 %v3714
    %4230 = vmatpush1.bf16.msra.mxu0 %v3713
    %4231 = vmatprep.subr.bf16.mxu0 %v3698
    %4232 = vmatpush1.bf16.msra.mxu0 %v3697
    %4233 = vmatprep.subr.bf16.mxu0 %v3682
    %4234 = vmatpush1.bf16.msra.mxu0 %v3681
    %4235 = vmatprep.subr.bf16.mxu0 %v3666
    %4236 = vmatpush1.bf16.msra.mxu0 %v3665
    %4237 = vmatprep.subr.bf16.mxu0 %v3650
    %4238 = vmatpush1.bf16.msra.mxu0 %v3649
    %4239 = vmatprep.subr.bf16.mxu0 %v3634
    %4240 = vmatpush1.bf16.msra.mxu0 %v3633
    %4241 = vmatprep.subr.bf16.mxu0 0
    %4242 = vmatpush2.bf16.msra.mxu0 0
    %4243 = vmatprep.subr.bf16.mxu0 0
    %4244 = vmatpush2.bf16.msra.mxu0 0
    %4245 = vmatprep.subr.bf16.mxu0 0
    %4246 = vmatpush2.bf16.msra.mxu0 0
    %4247 = vmatprep.subr.bf16.mxu0 0
    %4248 = vmatpush2.bf16.msra.mxu0 0
    %4249 = vmatprep.subr.bf16.mxu0 %v3810
    %4250 = vmatpush2.bf16.msra.mxu0 %v3809
    %4251 = vmatprep.subr.bf16.mxu0 %v3794
    %4252 = vmatpush2.bf16.msra.mxu0 %v3793
    %4253 = vmatprep.subr.bf16.mxu0 %v3778
    %4254 = vmatpush2.bf16.msra.mxu0 %v3777
    %4255 = vmatprep.subr.bf16.mxu0 %v3762
    %4256 = vmatpush2.bf16.msra.mxu0 %v3761
    %4257 = vmatprep.mubr.bf16.mxu0 %v4008
    %4258 = vmatmul.mubr.bf16.gmra.mxu0 %v2763
    %v4259 = vpop.f32.mrf.mxu0
    %v4260 = vadd.f32 %v3010, %v4259
    %v4261 = vpop.f32.mrf.mxu0
    %v4262 = vadd.f32 %v3014, %v4261
    %v4263 = vpop.f32.mrf.mxu0
    %v4264 = vadd.f32 %v3010, %v4263
    %v4265 = vpop.f32.mrf.mxu0
    %v4266 = vadd.f32 %v3014, %v4265
    %4267 = vdwg.mxu0
    %4268 = vmatprep.subr.bf16.mxu0 %v3748
    %4269 = vmatpush1.bf16.msra.mxu0 %v3747
    %4270 = vmatprep.subr.bf16.mxu0 %v3732
    %4271 = vmatpush1.bf16.msra.mxu0 %v3731
    %4272 = vmatprep.subr.bf16.mxu0 %v3716
    %4273 = vmatpush1.bf16.msra.mxu0 %v3715
    %4274 = vmatprep.subr.bf16.mxu0 %v3700
    %4275 = vmatpush1.bf16.msra.mxu0 %v3699
    %4276 = vmatprep.subr.bf16.mxu0 %v3684
    %4277 = vmatpush1.bf16.msra.mxu0 %v3683
    %4278 = vmatprep.subr.bf16.mxu0 %v3668
    %4279 = vmatpush1.bf16.msra.mxu0 %v3667
    %4280 = vmatprep.subr.bf16.mxu0 %v3652
    %4281 = vmatpush1.bf16.msra.mxu0 %v3651
    %4282 = vmatprep.subr.bf16.mxu0 %v3636
    %4283 = vmatpush1.bf16.msra.mxu0 %v3635
    %4284 = vmatprep.subr.bf16.mxu0 0
    %4285 = vmatpush2.bf16.msra.mxu0 0
    %4286 = vmatprep.subr.bf16.mxu0 0
    %4287 = vmatpush2.bf16.msra.mxu0 0
    %4288 = vmatprep.subr.bf16.mxu0 0
    %4289 = vmatpush2.bf16.msra.mxu0 0
    %4290 = vmatprep.subr.bf16.mxu0 0
    %4291 = vmatpush2.bf16.msra.mxu0 0
    %4292 = vmatprep.subr.bf16.mxu0 %v3812
    %4293 = vmatpush2.bf16.msra.mxu0 %v3811
    %4294 = vmatprep.subr.bf16.mxu0 %v3796
    %4295 = vmatpush2.bf16.msra.mxu0 %v3795
    %4296 = vmatprep.subr.bf16.mxu0 %v3780
    %4297 = vmatpush2.bf16.msra.mxu0 %v3779
    %4298 = vmatprep.subr.bf16.mxu0 %v3764
    %4299 = vmatpush2.bf16.msra.mxu0 %v3763
    %4300 = vmatprep.mubr.bf16.mxu0 %v4008
    %4301 = vmatmul.mubr.bf16.gmra.mxu0 %v2763
    %v4302 = vpop.f32.mrf.mxu0
    %v4303 = vadd.f32 %v3018, %v4302
    %v4304 = vpop.f32.mrf.mxu0
    %v4305 = vadd.f32 %v3022, %v4304
    %v4306 = vpop.f32.mrf.mxu0
    %v4307 = vadd.f32 %v3018, %v4306
    %v4308 = vpop.f32.mrf.mxu0
    %v4309 = vadd.f32 %v3022, %v4308
    %4310 = vdwg.mxu0
    %4311 = vmatprep.subr.bf16.mxu0 %v3750
    %4312 = vmatpush1.bf16.msra.mxu0 %v3749
    %4313 = vmatprep.subr.bf16.mxu0 %v3734
    %4314 = vmatpush1.bf16.msra.mxu0 %v3733
    %4315 = vmatprep.subr.bf16.mxu0 %v3718
    %4316 = vmatpush1.bf16.msra.mxu0 %v3717
    %4317 = vmatprep.subr.bf16.mxu0 %v3702
    %4318 = vmatpush1.bf16.msra.mxu0 %v3701
    %4319 = vmatprep.subr.bf16.mxu0 %v3686
    %4320 = vmatpush1.bf16.msra.mxu0 %v3685
    %4321 = vmatprep.subr.bf16.mxu0 %v3670
    %4322 = vmatpush1.bf16.msra.mxu0 %v3669
    %4323 = vmatprep.subr.bf16.mxu0 %v3654
    %4324 = vmatpush1.bf16.msra.mxu0 %v3653
    %4325 = vmatprep.subr.bf16.mxu0 %v3638
    %4326 = vmatpush1.bf16.msra.mxu0 %v3637
    %4327 = vmatprep.subr.bf16.mxu0 0
    %4328 = vmatpush2.bf16.msra.mxu0 0
    %4329 = vmatprep.subr.bf16.mxu0 0
    %4330 = vmatpush2.bf16.msra.mxu0 0
    %4331 = vmatprep.subr.bf16.mxu0 0
    %4332 = vmatpush2.bf16.msra.mxu0 0
    %4333 = vmatprep.subr.bf16.mxu0 0
    %4334 = vmatpush2.bf16.msra.mxu0 0
    %4335 = vmatprep.subr.bf16.mxu0 %v3814
    %4336 = vmatpush2.bf16.msra.mxu0 %v3813
    %4337 = vmatprep.subr.bf16.mxu0 %v3798
    %4338 = vmatpush2.bf16.msra.mxu0 %v3797
    %4339 = vmatprep.subr.bf16.mxu0 %v3782
    %4340 = vmatpush2.bf16.msra.mxu0 %v3781
    %4341 = vmatprep.subr.bf16.mxu0 %v3766
    %4342 = vmatpush2.bf16.msra.mxu0 %v3765
    %4343 = vmatprep.mubr.bf16.mxu0 %v4008
    %4344 = vmatmul.mubr.bf16.gmra.mxu0 %v2763
    %v4345 = vpop.f32.mrf.mxu0
    %v4346 = vadd.f32 %v3026, %v4345
    %v4347 = vpop.f32.mrf.mxu0
    %v4348 = vadd.f32 %v3030, %v4347
    %v4349 = vpop.f32.mrf.mxu0
    %v4350 = vadd.f32 %v3026, %v4349
    %v4351 = vpop.f32.mrf.mxu0
    %v4352 = vadd.f32 %v3030, %v4351
    %4353 = vdwg.mxu0
    %v4354 = vmax.f32 %v4045, 0.0
    %v4355 = vmax.f32 %v4047, 0.0
    %v4356 = vmax.f32 %v4088, 0.0
    %v4357 = vmax.f32 %v4090, 0.0
    %v4358 = vmax.f32 %v4131, 0.0
    %v4359 = vmax.f32 %v4133, 0.0
    %v4360 = vmax.f32 %v4174, 0.0
    %v4361 = vmax.f32 %v4176, 0.0
    %v4362 = vmax.f32 %v4217, 0.0
    %v4363 = vmax.f32 %v4219, 0.0
    %v4364 = vmax.f32 %v4260, 0.0
    %v4365 = vmax.f32 %v4262, 0.0
    %v4366 = vmax.f32 %v4303, 0.0
    %v4367 = vmax.f32 %v4305, 0.0
    %v4368 = vmax.f32 %v4346, 0.0
    %v4369 = vmax.f32 %v4348, 0.0
    %v4370 = vmax.f32 %v4049, 0.0
    %v4371 = vmax.f32 %v4051, 0.0
    %v4372 = vmax.f32 %v4092, 0.0
    %v4373 = vmax.f32 %v4094, 0.0
    %v4374 = vmax.f32 %v4135, 0.0
    %v4375 = vmax.f32 %v4137, 0.0
    %v4376 = vmax.f32 %v4178, 0.0
    %v4377 = vmax.f32 %v4180, 0.0
    %v4378 = vmax.f32 %v4221, 0.0
    %v4379 = vmax.f32 %v4223, 0.0
    %v4380 = vmax.f32 %v4264, 0.0
    %v4381 = vmax.f32 %v4266, 0.0
    %v4382 = vmax.f32 %v4307, 0.0
    %v4383 = vmax.f32 %v4309, 0.0
    %v4384 = vmax.f32 %v4350, 0.0
    %v4385 = vmax.f32 %v4352, 0.0
    %v4386 = vpack.c.bf16 %v4370, %v4354
    %v4387 = vpack.c.bf16 %v4371, %v4355
    %v4388 = vpack.c.bf16 %v4372, %v4356
    %v4389 = vpack.c.bf16 %v4373, %v4357
    %v4390 = vpack.c.bf16 %v4374, %v4358
    %v4391 = vpack.c.bf16 %v4375, %v4359
    %v4392 = vpack.c.bf16 %v4376, %v4360
    %v4393 = vpack.c.bf16 %v4377, %v4361
    %v4394 = vpack.c.bf16 %v4378, %v4362
    %v4395 = vpack.c.bf16 %v4379, %v4363
    %v4396 = vpack.c.bf16 %v4380, %v4364
    %v4397 = vpack.c.bf16 %v4381, %v4365
    %v4398 = vpack.c.bf16 %v4382, %v4366
    %v4399 = vpack.c.bf16 %v4383, %v4367
    %v4400 = vpack.c.bf16 %v4384, %v4368
    %v4401 = vpack.c.bf16 %v4385, %v4369
    %v4402 = vld [vmem:[#allocation3] sm:$0xff]
    %v4403 = vld [vmem:[#allocation3 + $0x8] sm:$0xff]
    %v4404 = vld [vmem:[#allocation3 + $0x10] sm:$0xff]
    %v4405 = vld [vmem:[#allocation3 + $0x18] sm:$0xff]
    %v4406 = vld [vmem:[#allocation3 + $0x20] sm:$0xff]
    %v4407 = vld [vmem:[#allocation3 + $0x28] sm:$0xff]
    %v4408 = vld [vmem:[#allocation3 + $0x30] sm:$0xff]
    %v4409 = vld [vmem:[#allocation3 + $0x38] sm:$0xff]
    %v4410 = vld [vmem:[#allocation3 + $0x40] sm:$0xff]
    %v4411 = vld [vmem:[#allocation3 + $0x48] sm:$0xff]
    %v4412 = vld [vmem:[#allocation3 + $0x50] sm:$0xff]
    %v4413 = vld [vmem:[#allocation3 + $0x58] sm:$0xff]
    %v4414 = vld [vmem:[#allocation3 + $0x60] sm:$0xff]
    %v4415 = vld [vmem:[#allocation3 + $0x68] sm:$0xff]
    %v4416 = vld [vmem:[#allocation3 + $0x70] sm:$0xff]
    %v4417 = vld [vmem:[#allocation3 + $0x78] sm:$0xff]
    %v4418 = vld [vmem:[#allocation3 + $0x80] sm:$0xff]
    %v4419 = vld [vmem:[#allocation3 + $0x88] sm:$0xff]
    %v4420 = vld [vmem:[#allocation3 + $0x90] sm:$0xff]
    %v4421 = vld [vmem:[#allocation3 + $0x98] sm:$0xff]
    %v4422 = vld [vmem:[#allocation3 + $0xa0] sm:$0xff]
    %v4423 = vld [vmem:[#allocation3 + $0xa8] sm:$0xff]
    %v4424 = vld [vmem:[#allocation3 + $0xb0] sm:$0xff]
    %v4425 = vld [vmem:[#allocation3 + $0xb8] sm:$0xff]
    %v4426 = vld [vmem:[#allocation3 + $0xc0] sm:$0xff]
    %v4427 = vld [vmem:[#allocation3 + $0xc8] sm:$0xff]
    %v4428 = vld [vmem:[#allocation3 + $0xd0] sm:$0xff]
    %v4429 = vld [vmem:[#allocation3 + $0xd8] sm:$0xff]
    %v4430 = vld [vmem:[#allocation3 + $0xe0] sm:$0xff]
    %v4431 = vld [vmem:[#allocation3 + $0xe8] sm:$0xff]
    %v4432 = vld [vmem:[#allocation3 + $0xf0] sm:$0xff]
    %v4433 = vld [vmem:[#allocation3 + $0xf8] sm:$0xff]
    %v4434 = vld [vmem:[#allocation3 + $0x100] sm:$0xff]
    %v4435 = vld [vmem:[#allocation3 + $0x108] sm:$0xff]
    %v4436 = vld [vmem:[#allocation3 + $0x110] sm:$0xff]
    %v4437 = vld [vmem:[#allocation3 + $0x118] sm:$0xff]
    %v4438 = vld [vmem:[#allocation3 + $0x120] sm:$0xff]
    %v4439 = vld [vmem:[#allocation3 + $0x128] sm:$0xff]
    %v4440 = vld [vmem:[#allocation3 + $0x130] sm:$0xff]
    %v4441 = vld [vmem:[#allocation3 + $0x138] sm:$0xff]
    %v4442 = vld [vmem:[#allocation3 + $0x140] sm:$0xff]
    %v4443 = vld [vmem:[#allocation3 + $0x148] sm:$0xff]
    %v4444 = vld [vmem:[#allocation3 + $0x150] sm:$0xff]
    %v4445 = vld [vmem:[#allocation3 + $0x158] sm:$0xff]
    %v4446 = vld [vmem:[#allocation3 + $0x160] sm:$0xff]
    %v4447 = vld [vmem:[#allocation3 + $0x168] sm:$0xff]
    %v4448 = vld [vmem:[#allocation3 + $0x170] sm:$0xff]
    %v4449 = vld [vmem:[#allocation3 + $0x178] sm:$0xff]
    %v4450 = vld [vmem:[#allocation3 + $0x180] sm:$0xff]
    %v4451 = vld [vmem:[#allocation3 + $0x188] sm:$0xff]
    %v4452 = vld [vmem:[#allocation3 + $0x190] sm:$0xff]
    %v4453 = vld [vmem:[#allocation3 + $0x198] sm:$0xff]
    %v4454 = vld [vmem:[#allocation3 + $0x1a0] sm:$0xff]
    %v4455 = vld [vmem:[#allocation3 + $0x1a8] sm:$0xff]
    %v4456 = vld [vmem:[#allocation3 + $0x1b0] sm:$0xff]
    %v4457 = vld [vmem:[#allocation3 + $0x1b8] sm:$0xff]
    %v4458 = vld [vmem:[#allocation3 + $0x1c0] sm:$0xff]
    %v4459 = vld [vmem:[#allocation3 + $0x1c8] sm:$0xff]
    %v4460 = vld [vmem:[#allocation3 + $0x1d0] sm:$0xff]
    %v4461 = vld [vmem:[#allocation3 + $0x1d8] sm:$0xff]
    %v4462 = vld [vmem:[#allocation3 + $0x1e0] sm:$0xff]
    %v4463 = vld [vmem:[#allocation3 + $0x1e8] sm:$0xff]
    %v4464 = vld [vmem:[#allocation3 + $0x1f0] sm:$0xff]
    %v4465 = vld [vmem:[#allocation3 + $0x1f8] sm:$0xff]
    %v4466 = vld [vmem:[#allocation3 + $0x200] sm:$0xff]
    %v4467 = vld [vmem:[#allocation3 + $0x208] sm:$0xff]
    %v4468 = vld [vmem:[#allocation3 + $0x210] sm:$0xff]
    %v4469 = vld [vmem:[#allocation3 + $0x218] sm:$0xff]
    %v4470 = vld [vmem:[#allocation3 + $0x220] sm:$0xff]
    %v4471 = vld [vmem:[#allocation3 + $0x228] sm:$0xff]
    %v4472 = vld [vmem:[#allocation3 + $0x230] sm:$0xff]
    %v4473 = vld [vmem:[#allocation3 + $0x238] sm:$0xff]
    %v4474 = vld [vmem:[#allocation3 + $0x240] sm:$0xff]
    %v4475 = vld [vmem:[#allocation3 + $0x248] sm:$0xff]
    %v4476 = vld [vmem:[#allocation3 + $0x250] sm:$0xff]
    %v4477 = vld [vmem:[#allocation3 + $0x258] sm:$0xff]
    %v4478 = vld [vmem:[#allocation3 + $0x260] sm:$0xff]
    %v4479 = vld [vmem:[#allocation3 + $0x268] sm:$0xff]
    %v4480 = vld [vmem:[#allocation3 + $0x270] sm:$0xff]
    %v4481 = vld [vmem:[#allocation3 + $0x278] sm:$0xff]
    %v4482 = vld [vmem:[#allocation3 + $0x280] sm:$0xff]
    %v4483 = vld [vmem:[#allocation3 + $0x288] sm:$0xff]
    %v4484 = vld [vmem:[#allocation3 + $0x290] sm:$0xff]
    %v4485 = vld [vmem:[#allocation3 + $0x298] sm:$0xff]
    %v4486 = vld [vmem:[#allocation3 + $0x2a0] sm:$0xff]
    %v4487 = vld [vmem:[#allocation3 + $0x2a8] sm:$0xff]
    %v4488 = vld [vmem:[#allocation3 + $0x2b0] sm:$0xff]
    %v4489 = vld [vmem:[#allocation3 + $0x2b8] sm:$0xff]
    %v4490 = vld [vmem:[#allocation3 + $0x2c0] sm:$0xff]
    %v4491 = vld [vmem:[#allocation3 + $0x2c8] sm:$0xff]
    %v4492 = vld [vmem:[#allocation3 + $0x2d0] sm:$0xff]
    %v4493 = vld [vmem:[#allocation3 + $0x2d8] sm:$0xff]
    %v4494 = vld [vmem:[#allocation3 + $0x2e0] sm:$0xff]
    %v4495 = vld [vmem:[#allocation3 + $0x2e8] sm:$0xff]
    %v4496 = vld [vmem:[#allocation3 + $0x2f0] sm:$0xff]
    %v4497 = vld [vmem:[#allocation3 + $0x2f8] sm:$0xff]
    %v4498 = vld [vmem:[#allocation3 + $0x300] sm:$0xff]
    %v4499 = vld [vmem:[#allocation3 + $0x308] sm:$0xff]
    %v4500 = vld [vmem:[#allocation3 + $0x310] sm:$0xff]
    %v4501 = vld [vmem:[#allocation3 + $0x318] sm:$0xff]
    %v4502 = vld [vmem:[#allocation3 + $0x320] sm:$0xff]
    %v4503 = vld [vmem:[#allocation3 + $0x328] sm:$0xff]
    %v4504 = vld [vmem:[#allocation3 + $0x330] sm:$0xff]
    %v4505 = vld [vmem:[#allocation3 + $0x338] sm:$0xff]
    %v4506 = vld [vmem:[#allocation3 + $0x340] sm:$0xff]
    %v4507 = vld [vmem:[#allocation3 + $0x348] sm:$0xff]
    %v4508 = vld [vmem:[#allocation3 + $0x350] sm:$0xff]
    %v4509 = vld [vmem:[#allocation3 + $0x358] sm:$0xff]
    %v4510 = vld [vmem:[#allocation3 + $0x360] sm:$0xff]
    %v4511 = vld [vmem:[#allocation3 + $0x368] sm:$0xff]
    %v4512 = vld [vmem:[#allocation3 + $0x370] sm:$0xff]
    %v4513 = vld [vmem:[#allocation3 + $0x378] sm:$0xff]
    %v4514 = vld [vmem:[#allocation3 + $0x380] sm:$0xff]
    %v4515 = vld [vmem:[#allocation3 + $0x388] sm:$0xff]
    %v4516 = vld [vmem:[#allocation3 + $0x390] sm:$0xff]
    %v4517 = vld [vmem:[#allocation3 + $0x398] sm:$0xff]
    %v4518 = vld [vmem:[#allocation3 + $0x3a0] sm:$0xff]
    %v4519 = vld [vmem:[#allocation3 + $0x3a8] sm:$0xff]
    %v4520 = vld [vmem:[#allocation3 + $0x3b0] sm:$0xff]
    %v4521 = vld [vmem:[#allocation3 + $0x3b8] sm:$0xff]
    %v4522 = vld [vmem:[#allocation3 + $0x3c0] sm:$0xff]
    %v4523 = vld [vmem:[#allocation3 + $0x3c8] sm:$0xff]
    %v4524 = vld [vmem:[#allocation3 + $0x3d0] sm:$0xff]
    %v4525 = vld [vmem:[#allocation3 + $0x3d8] sm:$0xff]
    %v4526 = vld [vmem:[#allocation3 + $0x3e0] sm:$0xff]
    %v4527 = vld [vmem:[#allocation3 + $0x3e8] sm:$0xff]
    %v4528 = vld [vmem:[#allocation3 + $0x3f0] sm:$0xff]
    %v4529 = vld [vmem:[#allocation3 + $0x3f8] sm:$0xff]
    %v4530 = vld [vmem:[#allocation3 + $0x400] sm:$0xff]
    %v4531 = vld [vmem:[#allocation3 + $0x408] sm:$0xff]
    %v4532 = vld [vmem:[#allocation3 + $0x410] sm:$0xff]
    %v4533 = vld [vmem:[#allocation3 + $0x418] sm:$0xff]
    %v4534 = vld [vmem:[#allocation3 + $0x420] sm:$0xff]
    %v4535 = vld [vmem:[#allocation3 + $0x428] sm:$0xff]
    %v4536 = vld [vmem:[#allocation3 + $0x430] sm:$0xff]
    %v4537 = vld [vmem:[#allocation3 + $0x438] sm:$0xff]
    %v4538 = vld [vmem:[#allocation3 + $0x440] sm:$0xff]
    %v4539 = vld [vmem:[#allocation3 + $0x448] sm:$0xff]
    %v4540 = vld [vmem:[#allocation3 + $0x450] sm:$0xff]
    %v4541 = vld [vmem:[#allocation3 + $0x458] sm:$0xff]
    %v4542 = vld [vmem:[#allocation3 + $0x460] sm:$0xff]
    %v4543 = vld [vmem:[#allocation3 + $0x468] sm:$0xff]
    %v4544 = vld [vmem:[#allocation3 + $0x470] sm:$0xff]
    %v4545 = vld [vmem:[#allocation3 + $0x478] sm:$0xff]
    %v4546 = vld [vmem:[#allocation3 + $0x480] sm:$0xff]
    %v4547 = vld [vmem:[#allocation3 + $0x488] sm:$0xff]
    %v4548 = vld [vmem:[#allocation3 + $0x490] sm:$0xff]
    %v4549 = vld [vmem:[#allocation3 + $0x498] sm:$0xff]
    %v4550 = vld [vmem:[#allocation3 + $0x4a0] sm:$0xff]
    %v4551 = vld [vmem:[#allocation3 + $0x4a8] sm:$0xff]
    %v4552 = vld [vmem:[#allocation3 + $0x4b0] sm:$0xff]
    %v4553 = vld [vmem:[#allocation3 + $0x4b8] sm:$0xff]
    %v4554 = vld [vmem:[#allocation3 + $0x4c0] sm:$0xff]
    %v4555 = vld [vmem:[#allocation3 + $0x4c8] sm:$0xff]
    %v4556 = vld [vmem:[#allocation3 + $0x4d0] sm:$0xff]
    %v4557 = vld [vmem:[#allocation3 + $0x4d8] sm:$0xff]
    %v4558 = vld [vmem:[#allocation3 + $0x4e0] sm:$0xff]
    %v4559 = vld [vmem:[#allocation3 + $0x4e8] sm:$0xff]
    %v4560 = vld [vmem:[#allocation3 + $0x4f0] sm:$0xff]
    %v4561 = vld [vmem:[#allocation3 + $0x4f8] sm:$0xff]
    %v4562 = vld [vmem:[#allocation3 + $0x500] sm:$0xff]
    %v4563 = vld [vmem:[#allocation3 + $0x508] sm:$0xff]
    %v4564 = vld [vmem:[#allocation3 + $0x510] sm:$0xff]
    %v4565 = vld [vmem:[#allocation3 + $0x518] sm:$0xff]
    %v4566 = vld [vmem:[#allocation3 + $0x520] sm:$0xff]
    %v4567 = vld [vmem:[#allocation3 + $0x528] sm:$0xff]
    %v4568 = vld [vmem:[#allocation3 + $0x530] sm:$0xff]
    %v4569 = vld [vmem:[#allocation3 + $0x538] sm:$0xff]
    %v4570 = vld [vmem:[#allocation3 + $0x540] sm:$0xff]
    %v4571 = vld [vmem:[#allocation3 + $0x548] sm:$0xff]
    %v4572 = vld [vmem:[#allocation3 + $0x550] sm:$0xff]
    %v4573 = vld [vmem:[#allocation3 + $0x558] sm:$0xff]
    %v4574 = vld [vmem:[#allocation3 + $0x560] sm:$0xff]
    %v4575 = vld [vmem:[#allocation3 + $0x568] sm:$0xff]
    %v4576 = vld [vmem:[#allocation3 + $0x570] sm:$0xff]
    %v4577 = vld [vmem:[#allocation3 + $0x578] sm:$0xff]
    %v4578 = vld [vmem:[#allocation3 + $0x580] sm:$0xff]
    %v4579 = vld [vmem:[#allocation3 + $0x588] sm:$0xff]
    %v4580 = vld [vmem:[#allocation3 + $0x590] sm:$0xff]
    %v4581 = vld [vmem:[#allocation3 + $0x598] sm:$0xff]
    %v4582 = vld [vmem:[#allocation3 + $0x5a0] sm:$0xff]
    %v4583 = vld [vmem:[#allocation3 + $0x5a8] sm:$0xff]
    %v4584 = vld [vmem:[#allocation3 + $0x5b0] sm:$0xff]
    %v4585 = vld [vmem:[#allocation3 + $0x5b8] sm:$0xff]
    %v4586 = vld [vmem:[#allocation3 + $0x5c0] sm:$0xff]
    %v4587 = vld [vmem:[#allocation3 + $0x5c8] sm:$0xff]
    %v4588 = vld [vmem:[#allocation3 + $0x5d0] sm:$0xff]
    %v4589 = vld [vmem:[#allocation3 + $0x5d8] sm:$0xff]
    %v4590 = vld [vmem:[#allocation3 + $0x5e0] sm:$0xff]
    %v4591 = vld [vmem:[#allocation3 + $0x5e8] sm:$0xff]
    %v4592 = vld [vmem:[#allocation3 + $0x5f0] sm:$0xff]
    %v4593 = vld [vmem:[#allocation3 + $0x5f8] sm:$0xff]
    %v4594 = vld [vmem:[#allocation3 + $0x600] sm:$0xff]
    %v4595 = vld [vmem:[#allocation3 + $0x608] sm:$0xff]
    %v4596 = vld [vmem:[#allocation3 + $0x610] sm:$0xff]
    %v4597 = vld [vmem:[#allocation3 + $0x618] sm:$0xff]
    %v4598 = vld [vmem:[#allocation3 + $0x620] sm:$0xff]
    %v4599 = vld [vmem:[#allocation3 + $0x628] sm:$0xff]
    %v4600 = vld [vmem:[#allocation3 + $0x630] sm:$0xff]
    %v4601 = vld [vmem:[#allocation3 + $0x638] sm:$0xff]
    %v4602 = vld [vmem:[#allocation3 + $0x640] sm:$0xff]
    %v4603 = vld [vmem:[#allocation3 + $0x648] sm:$0xff]
    %v4604 = vld [vmem:[#allocation3 + $0x650] sm:$0xff]
    %v4605 = vld [vmem:[#allocation3 + $0x658] sm:$0xff]
    %v4606 = vld [vmem:[#allocation3 + $0x660] sm:$0xff]
    %v4607 = vld [vmem:[#allocation3 + $0x668] sm:$0xff]
    %v4608 = vld [vmem:[#allocation3 + $0x670] sm:$0xff]
    %v4609 = vld [vmem:[#allocation3 + $0x678] sm:$0xff]
    %v4610 = vld [vmem:[#allocation3 + $0x680] sm:$0xff]
    %v4611 = vld [vmem:[#allocation3 + $0x688] sm:$0xff]
    %v4612 = vld [vmem:[#allocation3 + $0x690] sm:$0xff]
    %v4613 = vld [vmem:[#allocation3 + $0x698] sm:$0xff]
    %v4614 = vld [vmem:[#allocation3 + $0x6a0] sm:$0xff]
    %v4615 = vld [vmem:[#allocation3 + $0x6a8] sm:$0xff]
    %v4616 = vld [vmem:[#allocation3 + $0x6b0] sm:$0xff]
    %v4617 = vld [vmem:[#allocation3 + $0x6b8] sm:$0xff]
    %v4618 = vld [vmem:[#allocation3 + $0x6c0] sm:$0xff]
    %v4619 = vld [vmem:[#allocation3 + $0x6c8] sm:$0xff]
    %v4620 = vld [vmem:[#allocation3 + $0x6d0] sm:$0xff]
    %v4621 = vld [vmem:[#allocation3 + $0x6d8] sm:$0xff]
    %v4622 = vld [vmem:[#allocation3 + $0x6e0] sm:$0xff]
    %v4623 = vld [vmem:[#allocation3 + $0x6e8] sm:$0xff]
    %v4624 = vld [vmem:[#allocation3 + $0x6f0] sm:$0xff]
    %v4625 = vld [vmem:[#allocation3 + $0x6f8] sm:$0xff]
    %v4626 = vld [vmem:[#allocation3 + $0x700] sm:$0xff]
    %v4627 = vld [vmem:[#allocation3 + $0x708] sm:$0xff]
    %v4628 = vld [vmem:[#allocation3 + $0x710] sm:$0xff]
    %v4629 = vld [vmem:[#allocation3 + $0x718] sm:$0xff]
    %v4630 = vld [vmem:[#allocation3 + $0x720] sm:$0xff]
    %v4631 = vld [vmem:[#allocation3 + $0x728] sm:$0xff]
    %v4632 = vld [vmem:[#allocation3 + $0x730] sm:$0xff]
    %v4633 = vld [vmem:[#allocation3 + $0x738] sm:$0xff]
    %v4634 = vld [vmem:[#allocation3 + $0x740] sm:$0xff]
    %v4635 = vld [vmem:[#allocation3 + $0x748] sm:$0xff]
    %v4636 = vld [vmem:[#allocation3 + $0x750] sm:$0xff]
    %v4637 = vld [vmem:[#allocation3 + $0x758] sm:$0xff]
    %v4638 = vld [vmem:[#allocation3 + $0x760] sm:$0xff]
    %v4639 = vld [vmem:[#allocation3 + $0x768] sm:$0xff]
    %v4640 = vld [vmem:[#allocation3 + $0x770] sm:$0xff]
    %v4641 = vld [vmem:[#allocation3 + $0x778] sm:$0xff]
    %v4642 = vld [vmem:[#allocation3 + $0x780] sm:$0xff]
    %v4643 = vld [vmem:[#allocation3 + $0x788] sm:$0xff]
    %v4644 = vld [vmem:[#allocation3 + $0x790] sm:$0xff]
    %v4645 = vld [vmem:[#allocation3 + $0x798] sm:$0xff]
    %v4646 = vld [vmem:[#allocation3 + $0x7a0] sm:$0xff]
    %v4647 = vld [vmem:[#allocation3 + $0x7a8] sm:$0xff]
    %v4648 = vld [vmem:[#allocation3 + $0x7b0] sm:$0xff]
    %v4649 = vld [vmem:[#allocation3 + $0x7b8] sm:$0xff]
    %v4650 = vld [vmem:[#allocation3 + $0x7c0] sm:$0xff]
    %v4651 = vld [vmem:[#allocation3 + $0x7c8] sm:$0xff]
    %v4652 = vld [vmem:[#allocation3 + $0x7d0] sm:$0xff]
    %v4653 = vld [vmem:[#allocation3 + $0x7d8] sm:$0xff]
    %v4654 = vld [vmem:[#allocation3 + $0x7e0] sm:$0xff]
    %v4655 = vld [vmem:[#allocation3 + $0x7e8] sm:$0xff]
    %v4656 = vld [vmem:[#allocation3 + $0x7f0] sm:$0xff]
    %v4657 = vld [vmem:[#allocation3 + $0x7f8] sm:$0xff]
    %s4658 = scalar_lea.vmem %s1, 129
    %v4659 = vld [vmem:[%s4658] ss:$8 sm:$0x3]
    %v4661 = vlaneseq
    %v4662 = vshrl.u32 %v4661, 7
    %v4663 = vsub.s32 0, %v4662
    %v4664 = vrot.slane %v4659, %v4663
    %v4665 = vlaneseq
    %v4666 = vshrl.u32 %v4665, 7
    %v4667 = vsub.s32 1, %v4666
    %v4668 = vrot.slane %v4659, %v4667
    %v4927 = vunpack.c.l.b16 %v4402
    %v4928 = vunpack.c.h.b16 %v4402
    %v4929 = vunpack.c.l.b16 %v4403
    %v4930 = vunpack.c.h.b16 %v4403
    %v4931 = vunpack.c.l.b16 %v4404
    %v4932 = vunpack.c.h.b16 %v4404
    %v4933 = vunpack.c.l.b16 %v4405
    %v4934 = vunpack.c.h.b16 %v4405
    %v4935 = vunpack.c.l.b16 %v4406
    %v4936 = vunpack.c.h.b16 %v4406
    %v4937 = vunpack.c.l.b16 %v4407
    %v4938 = vunpack.c.h.b16 %v4407
    %v4939 = vunpack.c.l.b16 %v4408
    %v4940 = vunpack.c.h.b16 %v4408
    %v4941 = vunpack.c.l.b16 %v4409
    %v4942 = vunpack.c.h.b16 %v4409
    %v4943 = vunpack.c.l.b16 %v4410
    %v4944 = vunpack.c.h.b16 %v4410
    %v4945 = vunpack.c.l.b16 %v4411
    %v4946 = vunpack.c.h.b16 %v4411
    %v4947 = vunpack.c.l.b16 %v4412
    %v4948 = vunpack.c.h.b16 %v4412
    %v4949 = vunpack.c.l.b16 %v4413
    %v4950 = vunpack.c.h.b16 %v4413
    %v4951 = vunpack.c.l.b16 %v4414
    %v4952 = vunpack.c.h.b16 %v4414
    %v4953 = vunpack.c.l.b16 %v4415
    %v4954 = vunpack.c.h.b16 %v4415
    %v4955 = vunpack.c.l.b16 %v4416
    %v4956 = vunpack.c.h.b16 %v4416
    %v4957 = vunpack.c.l.b16 %v4417
    %v4958 = vunpack.c.h.b16 %v4417
    %v4959 = vunpack.c.l.b16 %v4418
    %v4960 = vunpack.c.h.b16 %v4418
    %v4961 = vunpack.c.l.b16 %v4419
    %v4962 = vunpack.c.h.b16 %v4419
    %v4963 = vunpack.c.l.b16 %v4420
    %v4964 = vunpack.c.h.b16 %v4420
    %v4965 = vunpack.c.l.b16 %v4421
    %v4966 = vunpack.c.h.b16 %v4421
    %v4967 = vunpack.c.l.b16 %v4422
    %v4968 = vunpack.c.h.b16 %v4422
    %v4969 = vunpack.c.l.b16 %v4423
    %v4970 = vunpack.c.h.b16 %v4423
    %v4971 = vunpack.c.l.b16 %v4424
    %v4972 = vunpack.c.h.b16 %v4424
    %v4973 = vunpack.c.l.b16 %v4425
    %v4974 = vunpack.c.h.b16 %v4425
    %v4975 = vunpack.c.l.b16 %v4426
    %v4976 = vunpack.c.h.b16 %v4426
    %v4977 = vunpack.c.l.b16 %v4427
    %v4978 = vunpack.c.h.b16 %v4427
    %v4979 = vunpack.c.l.b16 %v4428
    %v4980 = vunpack.c.h.b16 %v4428
    %v4981 = vunpack.c.l.b16 %v4429
    %v4982 = vunpack.c.h.b16 %v4429
    %v4983 = vunpack.c.l.b16 %v4430
    %v4984 = vunpack.c.h.b16 %v4430
    %v4985 = vunpack.c.l.b16 %v4431
    %v4986 = vunpack.c.h.b16 %v4431
    %v4987 = vunpack.c.l.b16 %v4432
    %v4988 = vunpack.c.h.b16 %v4432
    %v4989 = vunpack.c.l.b16 %v4433
    %v4990 = vunpack.c.h.b16 %v4433
    %v4991 = vunpack.c.l.b16 %v4434
    %v4992 = vunpack.c.h.b16 %v4434
    %v4993 = vunpack.c.l.b16 %v4435
    %v4994 = vunpack.c.h.b16 %v4435
    %v4995 = vunpack.c.l.b16 %v4436
    %v4996 = vunpack.c.h.b16 %v4436
    %v4997 = vunpack.c.l.b16 %v4437
    %v4998 = vunpack.c.h.b16 %v4437
    %v4999 = vunpack.c.l.b16 %v4438
    %v5000 = vunpack.c.h.b16 %v4438
    %v5001 = vunpack.c.l.b16 %v4439
    %v5002 = vunpack.c.h.b16 %v4439
    %v5003 = vunpack.c.l.b16 %v4440
    %v5004 = vunpack.c.h.b16 %v4440
    %v5005 = vunpack.c.l.b16 %v4441
    %v5006 = vunpack.c.h.b16 %v4441
    %v5007 = vunpack.c.l.b16 %v4442
    %v5008 = vunpack.c.h.b16 %v4442
    %v5009 = vunpack.c.l.b16 %v4443
    %v5010 = vunpack.c.h.b16 %v4443
    %v5011 = vunpack.c.l.b16 %v4444
    %v5012 = vunpack.c.h.b16 %v4444
    %v5013 = vunpack.c.l.b16 %v4445
    %v5014 = vunpack.c.h.b16 %v4445
    %v5015 = vunpack.c.l.b16 %v4446
    %v5016 = vunpack.c.h.b16 %v4446
    %v5017 = vunpack.c.l.b16 %v4447
    %v5018 = vunpack.c.h.b16 %v4447
    %v5019 = vunpack.c.l.b16 %v4448
    %v5020 = vunpack.c.h.b16 %v4448
    %v5021 = vunpack.c.l.b16 %v4449
    %v5022 = vunpack.c.h.b16 %v4449
    %v5023 = vunpack.c.l.b16 %v4450
    %v5024 = vunpack.c.h.b16 %v4450
    %v5025 = vunpack.c.l.b16 %v4451
    %v5026 = vunpack.c.h.b16 %v4451
    %v5027 = vunpack.c.l.b16 %v4452
    %v5028 = vunpack.c.h.b16 %v4452
    %v5029 = vunpack.c.l.b16 %v4453
    %v5030 = vunpack.c.h.b16 %v4453
    %v5031 = vunpack.c.l.b16 %v4454
    %v5032 = vunpack.c.h.b16 %v4454
    %v5033 = vunpack.c.l.b16 %v4455
    %v5034 = vunpack.c.h.b16 %v4455
    %v5035 = vunpack.c.l.b16 %v4456
    %v5036 = vunpack.c.h.b16 %v4456
    %v5037 = vunpack.c.l.b16 %v4457
    %v5038 = vunpack.c.h.b16 %v4457
    %v5039 = vunpack.c.l.b16 %v4458
    %v5040 = vunpack.c.h.b16 %v4458
    %v5041 = vunpack.c.l.b16 %v4459
    %v5042 = vunpack.c.h.b16 %v4459
    %v5043 = vunpack.c.l.b16 %v4460
    %v5044 = vunpack.c.h.b16 %v4460
    %v5045 = vunpack.c.l.b16 %v4461
    %v5046 = vunpack.c.h.b16 %v4461
    %v5047 = vunpack.c.l.b16 %v4462
    %v5048 = vunpack.c.h.b16 %v4462
    %v5049 = vunpack.c.l.b16 %v4463
    %v5050 = vunpack.c.h.b16 %v4463
    %v5051 = vunpack.c.l.b16 %v4464
    %v5052 = vunpack.c.h.b16 %v4464
    %v5053 = vunpack.c.l.b16 %v4465
    %v5054 = vunpack.c.h.b16 %v4465
    %v5055 = vunpack.c.l.b16 %v4466
    %v5056 = vunpack.c.h.b16 %v4466
    %v5057 = vunpack.c.l.b16 %v4467
    %v5058 = vunpack.c.h.b16 %v4467
    %v5059 = vunpack.c.l.b16 %v4468
    %v5060 = vunpack.c.h.b16 %v4468
    %v5061 = vunpack.c.l.b16 %v4469
    %v5062 = vunpack.c.h.b16 %v4469
    %v5063 = vunpack.c.l.b16 %v4470
    %v5064 = vunpack.c.h.b16 %v4470
    %v5065 = vunpack.c.l.b16 %v4471
    %v5066 = vunpack.c.h.b16 %v4471
    %v5067 = vunpack.c.l.b16 %v4472
    %v5068 = vunpack.c.h.b16 %v4472
    %v5069 = vunpack.c.l.b16 %v4473
    %v5070 = vunpack.c.h.b16 %v4473
    %v5071 = vunpack.c.l.b16 %v4474
    %v5072 = vunpack.c.h.b16 %v4474
    %v5073 = vunpack.c.l.b16 %v4475
    %v5074 = vunpack.c.h.b16 %v4475
    %v5075 = vunpack.c.l.b16 %v4476
    %v5076 = vunpack.c.h.b16 %v4476
    %v5077 = vunpack.c.l.b16 %v4477
    %v5078 = vunpack.c.h.b16 %v4477
    %v5079 = vunpack.c.l.b16 %v4478
    %v5080 = vunpack.c.h.b16 %v4478
    %v5081 = vunpack.c.l.b16 %v4479
    %v5082 = vunpack.c.h.b16 %v4479
    %v5083 = vunpack.c.l.b16 %v4480
    %v5084 = vunpack.c.h.b16 %v4480
    %v5085 = vunpack.c.l.b16 %v4481
    %v5086 = vunpack.c.h.b16 %v4481
    %v5087 = vunpack.c.l.b16 %v4482
    %v5088 = vunpack.c.h.b16 %v4482
    %v5089 = vunpack.c.l.b16 %v4483
    %v5090 = vunpack.c.h.b16 %v4483
    %v5091 = vunpack.c.l.b16 %v4484
    %v5092 = vunpack.c.h.b16 %v4484
    %v5093 = vunpack.c.l.b16 %v4485
    %v5094 = vunpack.c.h.b16 %v4485
    %v5095 = vunpack.c.l.b16 %v4486
    %v5096 = vunpack.c.h.b16 %v4486
    %v5097 = vunpack.c.l.b16 %v4487
    %v5098 = vunpack.c.h.b16 %v4487
    %v5099 = vunpack.c.l.b16 %v4488
    %v5100 = vunpack.c.h.b16 %v4488
    %v5101 = vunpack.c.l.b16 %v4489
    %v5102 = vunpack.c.h.b16 %v4489
    %v5103 = vunpack.c.l.b16 %v4490
    %v5104 = vunpack.c.h.b16 %v4490
    %v5105 = vunpack.c.l.b16 %v4491
    %v5106 = vunpack.c.h.b16 %v4491
    %v5107 = vunpack.c.l.b16 %v4492
    %v5108 = vunpack.c.h.b16 %v4492
    %v5109 = vunpack.c.l.b16 %v4493
    %v5110 = vunpack.c.h.b16 %v4493
    %v5111 = vunpack.c.l.b16 %v4494
    %v5112 = vunpack.c.h.b16 %v4494
    %v5113 = vunpack.c.l.b16 %v4495
    %v5114 = vunpack.c.h.b16 %v4495
    %v5115 = vunpack.c.l.b16 %v4496
    %v5116 = vunpack.c.h.b16 %v4496
    %v5117 = vunpack.c.l.b16 %v4497
    %v5118 = vunpack.c.h.b16 %v4497
    %v5119 = vunpack.c.l.b16 %v4498
    %v5120 = vunpack.c.h.b16 %v4498
    %v5121 = vunpack.c.l.b16 %v4499
    %v5122 = vunpack.c.h.b16 %v4499
    %v5123 = vunpack.c.l.b16 %v4500
    %v5124 = vunpack.c.h.b16 %v4500
    %v5125 = vunpack.c.l.b16 %v4501
    %v5126 = vunpack.c.h.b16 %v4501
    %v5127 = vunpack.c.l.b16 %v4502
    %v5128 = vunpack.c.h.b16 %v4502
    %v5129 = vunpack.c.l.b16 %v4503
    %v5130 = vunpack.c.h.b16 %v4503
    %v5131 = vunpack.c.l.b16 %v4504
    %v5132 = vunpack.c.h.b16 %v4504
    %v5133 = vunpack.c.l.b16 %v4505
    %v5134 = vunpack.c.h.b16 %v4505
    %v5135 = vunpack.c.l.b16 %v4506
    %v5136 = vunpack.c.h.b16 %v4506
    %v5137 = vunpack.c.l.b16 %v4507
    %v5138 = vunpack.c.h.b16 %v4507
    %v5139 = vunpack.c.l.b16 %v4508
    %v5140 = vunpack.c.h.b16 %v4508
    %v5141 = vunpack.c.l.b16 %v4509
    %v5142 = vunpack.c.h.b16 %v4509
    %v5143 = vunpack.c.l.b16 %v4510
    %v5144 = vunpack.c.h.b16 %v4510
    %v5145 = vunpack.c.l.b16 %v4511
    %v5146 = vunpack.c.h.b16 %v4511
    %v5147 = vunpack.c.l.b16 %v4512
    %v5148 = vunpack.c.h.b16 %v4512
    %v5149 = vunpack.c.l.b16 %v4513
    %v5150 = vunpack.c.h.b16 %v4513
    %v5151 = vunpack.c.l.b16 %v4514
    %v5152 = vunpack.c.h.b16 %v4514
    %v5153 = vunpack.c.l.b16 %v4515
    %v5154 = vunpack.c.h.b16 %v4515
    %v5155 = vunpack.c.l.b16 %v4516
    %v5156 = vunpack.c.h.b16 %v4516
    %v5157 = vunpack.c.l.b16 %v4517
    %v5158 = vunpack.c.h.b16 %v4517
    %v5159 = vunpack.c.l.b16 %v4518
    %v5160 = vunpack.c.h.b16 %v4518
    %v5161 = vunpack.c.l.b16 %v4519
    %v5162 = vunpack.c.h.b16 %v4519
    %v5163 = vunpack.c.l.b16 %v4520
    %v5164 = vunpack.c.h.b16 %v4520
    %v5165 = vunpack.c.l.b16 %v4521
    %v5166 = vunpack.c.h.b16 %v4521
    %v5167 = vunpack.c.l.b16 %v4522
    %v5168 = vunpack.c.h.b16 %v4522
    %v5169 = vunpack.c.l.b16 %v4523
    %v5170 = vunpack.c.h.b16 %v4523
    %v5171 = vunpack.c.l.b16 %v4524
    %v5172 = vunpack.c.h.b16 %v4524
    %v5173 = vunpack.c.l.b16 %v4525
    %v5174 = vunpack.c.h.b16 %v4525
    %v5175 = vunpack.c.l.b16 %v4526
    %v5176 = vunpack.c.h.b16 %v4526
    %v5177 = vunpack.c.l.b16 %v4527
    %v5178 = vunpack.c.h.b16 %v4527
    %v5179 = vunpack.c.l.b16 %v4528
    %v5180 = vunpack.c.h.b16 %v4528
    %v5181 = vunpack.c.l.b16 %v4529
    %v5182 = vunpack.c.h.b16 %v4529
    %v5183 = vunpack.c.l.b16 %v4530
    %v5184 = vunpack.c.h.b16 %v4530
    %v5185 = vunpack.c.l.b16 %v4531
    %v5186 = vunpack.c.h.b16 %v4531
    %v5187 = vunpack.c.l.b16 %v4532
    %v5188 = vunpack.c.h.b16 %v4532
    %v5189 = vunpack.c.l.b16 %v4533
    %v5190 = vunpack.c.h.b16 %v4533
    %v5191 = vunpack.c.l.b16 %v4534
    %v5192 = vunpack.c.h.b16 %v4534
    %v5193 = vunpack.c.l.b16 %v4535
    %v5194 = vunpack.c.h.b16 %v4535
    %v5195 = vunpack.c.l.b16 %v4536
    %v5196 = vunpack.c.h.b16 %v4536
    %v5197 = vunpack.c.l.b16 %v4537
    %v5198 = vunpack.c.h.b16 %v4537
    %v5199 = vunpack.c.l.b16 %v4538
    %v5200 = vunpack.c.h.b16 %v4538
    %v5201 = vunpack.c.l.b16 %v4539
    %v5202 = vunpack.c.h.b16 %v4539
    %v5203 = vunpack.c.l.b16 %v4540
    %v5204 = vunpack.c.h.b16 %v4540
    %v5205 = vunpack.c.l.b16 %v4541
    %v5206 = vunpack.c.h.b16 %v4541
    %v5207 = vunpack.c.l.b16 %v4542
    %v5208 = vunpack.c.h.b16 %v4542
    %v5209 = vunpack.c.l.b16 %v4543
    %v5210 = vunpack.c.h.b16 %v4543
    %v5211 = vunpack.c.l.b16 %v4544
    %v5212 = vunpack.c.h.b16 %v4544
    %v5213 = vunpack.c.l.b16 %v4545
    %v5214 = vunpack.c.h.b16 %v4545
    %v5215 = vunpack.c.l.b16 %v4546
    %v5216 = vunpack.c.h.b16 %v4546
    %v5217 = vunpack.c.l.b16 %v4547
    %v5218 = vunpack.c.h.b16 %v4547
    %v5219 = vunpack.c.l.b16 %v4548
    %v5220 = vunpack.c.h.b16 %v4548
    %v5221 = vunpack.c.l.b16 %v4549
    %v5222 = vunpack.c.h.b16 %v4549
    %v5223 = vunpack.c.l.b16 %v4550
    %v5224 = vunpack.c.h.b16 %v4550
    %v5225 = vunpack.c.l.b16 %v4551
    %v5226 = vunpack.c.h.b16 %v4551
    %v5227 = vunpack.c.l.b16 %v4552
    %v5228 = vunpack.c.h.b16 %v4552
    %v5229 = vunpack.c.l.b16 %v4553
    %v5230 = vunpack.c.h.b16 %v4553
    %v5231 = vunpack.c.l.b16 %v4554
    %v5232 = vunpack.c.h.b16 %v4554
    %v5233 = vunpack.c.l.b16 %v4555
    %v5234 = vunpack.c.h.b16 %v4555
    %v5235 = vunpack.c.l.b16 %v4556
    %v5236 = vunpack.c.h.b16 %v4556
    %v5237 = vunpack.c.l.b16 %v4557
    %v5238 = vunpack.c.h.b16 %v4557
    %v5239 = vunpack.c.l.b16 %v4558
    %v5240 = vunpack.c.h.b16 %v4558
    %v5241 = vunpack.c.l.b16 %v4559
    %v5242 = vunpack.c.h.b16 %v4559
    %v5243 = vunpack.c.l.b16 %v4560
    %v5244 = vunpack.c.h.b16 %v4560
    %v5245 = vunpack.c.l.b16 %v4561
    %v5246 = vunpack.c.h.b16 %v4561
    %v5247 = vunpack.c.l.b16 %v4562
    %v5248 = vunpack.c.h.b16 %v4562
    %v5249 = vunpack.c.l.b16 %v4563
    %v5250 = vunpack.c.h.b16 %v4563
    %v5251 = vunpack.c.l.b16 %v4564
    %v5252 = vunpack.c.h.b16 %v4564
    %v5253 = vunpack.c.l.b16 %v4565
    %v5254 = vunpack.c.h.b16 %v4565
    %v5255 = vunpack.c.l.b16 %v4566
    %v5256 = vunpack.c.h.b16 %v4566
    %v5257 = vunpack.c.l.b16 %v4567
    %v5258 = vunpack.c.h.b16 %v4567
    %v5259 = vunpack.c.l.b16 %v4568
    %v5260 = vunpack.c.h.b16 %v4568
    %v5261 = vunpack.c.l.b16 %v4569
    %v5262 = vunpack.c.h.b16 %v4569
    %v5263 = vunpack.c.l.b16 %v4570
    %v5264 = vunpack.c.h.b16 %v4570
    %v5265 = vunpack.c.l.b16 %v4571
    %v5266 = vunpack.c.h.b16 %v4571
    %v5267 = vunpack.c.l.b16 %v4572
    %v5268 = vunpack.c.h.b16 %v4572
    %v5269 = vunpack.c.l.b16 %v4573
    %v5270 = vunpack.c.h.b16 %v4573
    %v5271 = vunpack.c.l.b16 %v4574
    %v5272 = vunpack.c.h.b16 %v4574
    %v5273 = vunpack.c.l.b16 %v4575
    %v5274 = vunpack.c.h.b16 %v4575
    %v5275 = vunpack.c.l.b16 %v4576
    %v5276 = vunpack.c.h.b16 %v4576
    %v5277 = vunpack.c.l.b16 %v4577
    %v5278 = vunpack.c.h.b16 %v4577
    %v5279 = vunpack.c.l.b16 %v4578
    %v5280 = vunpack.c.h.b16 %v4578
    %v5281 = vunpack.c.l.b16 %v4579
    %v5282 = vunpack.c.h.b16 %v4579
    %v5283 = vunpack.c.l.b16 %v4580
    %v5284 = vunpack.c.h.b16 %v4580
    %v5285 = vunpack.c.l.b16 %v4581
    %v5286 = vunpack.c.h.b16 %v4581
    %v5287 = vunpack.c.l.b16 %v4582
    %v5288 = vunpack.c.h.b16 %v4582
    %v5289 = vunpack.c.l.b16 %v4583
    %v5290 = vunpack.c.h.b16 %v4583
    %v5291 = vunpack.c.l.b16 %v4584
    %v5292 = vunpack.c.h.b16 %v4584
    %v5293 = vunpack.c.l.b16 %v4585
    %v5294 = vunpack.c.h.b16 %v4585
    %v5295 = vunpack.c.l.b16 %v4586
    %v5296 = vunpack.c.h.b16 %v4586
    %v5297 = vunpack.c.l.b16 %v4587
    %v5298 = vunpack.c.h.b16 %v4587
    %v5299 = vunpack.c.l.b16 %v4588
    %v5300 = vunpack.c.h.b16 %v4588
    %v5301 = vunpack.c.l.b16 %v4589
    %v5302 = vunpack.c.h.b16 %v4589
    %v5303 = vunpack.c.l.b16 %v4590
    %v5304 = vunpack.c.h.b16 %v4590
    %v5305 = vunpack.c.l.b16 %v4591
    %v5306 = vunpack.c.h.b16 %v4591
    %v5307 = vunpack.c.l.b16 %v4592
    %v5308 = vunpack.c.h.b16 %v4592
    %v5309 = vunpack.c.l.b16 %v4593
    %v5310 = vunpack.c.h.b16 %v4593
    %v5311 = vunpack.c.l.b16 %v4594
    %v5312 = vunpack.c.h.b16 %v4594
    %v5313 = vunpack.c.l.b16 %v4595
    %v5314 = vunpack.c.h.b16 %v4595
    %v5315 = vunpack.c.l.b16 %v4596
    %v5316 = vunpack.c.h.b16 %v4596
    %v5317 = vunpack.c.l.b16 %v4597
    %v5318 = vunpack.c.h.b16 %v4597
    %v5319 = vunpack.c.l.b16 %v4598
    %v5320 = vunpack.c.h.b16 %v4598
    %v5321 = vunpack.c.l.b16 %v4599
    %v5322 = vunpack.c.h.b16 %v4599
    %v5323 = vunpack.c.l.b16 %v4600
    %v5324 = vunpack.c.h.b16 %v4600
    %v5325 = vunpack.c.l.b16 %v4601
    %v5326 = vunpack.c.h.b16 %v4601
    %v5327 = vunpack.c.l.b16 %v4602
    %v5328 = vunpack.c.h.b16 %v4602
    %v5329 = vunpack.c.l.b16 %v4603
    %v5330 = vunpack.c.h.b16 %v4603
    %v5331 = vunpack.c.l.b16 %v4604
    %v5332 = vunpack.c.h.b16 %v4604
    %v5333 = vunpack.c.l.b16 %v4605
    %v5334 = vunpack.c.h.b16 %v4605
    %v5335 = vunpack.c.l.b16 %v4606
    %v5336 = vunpack.c.h.b16 %v4606
    %v5337 = vunpack.c.l.b16 %v4607
    %v5338 = vunpack.c.h.b16 %v4607
    %v5339 = vunpack.c.l.b16 %v4608
    %v5340 = vunpack.c.h.b16 %v4608
    %v5341 = vunpack.c.l.b16 %v4609
    %v5342 = vunpack.c.h.b16 %v4609
    %v5343 = vunpack.c.l.b16 %v4610
    %v5344 = vunpack.c.h.b16 %v4610
    %v5345 = vunpack.c.l.b16 %v4611
    %v5346 = vunpack.c.h.b16 %v4611
    %v5347 = vunpack.c.l.b16 %v4612
    %v5348 = vunpack.c.h.b16 %v4612
    %v5349 = vunpack.c.l.b16 %v4613
    %v5350 = vunpack.c.h.b16 %v4613
    %v5351 = vunpack.c.l.b16 %v4614
    %v5352 = vunpack.c.h.b16 %v4614
    %v5353 = vunpack.c.l.b16 %v4615
    %v5354 = vunpack.c.h.b16 %v4615
    %v5355 = vunpack.c.l.b16 %v4616
    %v5356 = vunpack.c.h.b16 %v4616
    %v5357 = vunpack.c.l.b16 %v4617
    %v5358 = vunpack.c.h.b16 %v4617
    %v5359 = vunpack.c.l.b16 %v4618
    %v5360 = vunpack.c.h.b16 %v4618
    %v5361 = vunpack.c.l.b16 %v4619
    %v5362 = vunpack.c.h.b16 %v4619
    %v5363 = vunpack.c.l.b16 %v4620
    %v5364 = vunpack.c.h.b16 %v4620
    %v5365 = vunpack.c.l.b16 %v4621
    %v5366 = vunpack.c.h.b16 %v4621
    %v5367 = vunpack.c.l.b16 %v4622
    %v5368 = vunpack.c.h.b16 %v4622
    %v5369 = vunpack.c.l.b16 %v4623
    %v5370 = vunpack.c.h.b16 %v4623
    %v5371 = vunpack.c.l.b16 %v4624
    %v5372 = vunpack.c.h.b16 %v4624
    %v5373 = vunpack.c.l.b16 %v4625
    %v5374 = vunpack.c.h.b16 %v4625
    %v5375 = vunpack.c.l.b16 %v4626
    %v5376 = vunpack.c.h.b16 %v4626
    %v5377 = vunpack.c.l.b16 %v4627
    %v5378 = vunpack.c.h.b16 %v4627
    %v5379 = vunpack.c.l.b16 %v4628
    %v5380 = vunpack.c.h.b16 %v4628
    %v5381 = vunpack.c.l.b16 %v4629
    %v5382 = vunpack.c.h.b16 %v4629
    %v5383 = vunpack.c.l.b16 %v4630
    %v5384 = vunpack.c.h.b16 %v4630
    %v5385 = vunpack.c.l.b16 %v4631
    %v5386 = vunpack.c.h.b16 %v4631
    %v5387 = vunpack.c.l.b16 %v4632
    %v5388 = vunpack.c.h.b16 %v4632
    %v5389 = vunpack.c.l.b16 %v4633
    %v5390 = vunpack.c.h.b16 %v4633
    %v5391 = vunpack.c.l.b16 %v4634
    %v5392 = vunpack.c.h.b16 %v4634
    %v5393 = vunpack.c.l.b16 %v4635
    %v5394 = vunpack.c.h.b16 %v4635
    %v5395 = vunpack.c.l.b16 %v4636
    %v5396 = vunpack.c.h.b16 %v4636
    %v5397 = vunpack.c.l.b16 %v4637
    %v5398 = vunpack.c.h.b16 %v4637
    %v5399 = vunpack.c.l.b16 %v4638
    %v5400 = vunpack.c.h.b16 %v4638
    %v5401 = vunpack.c.l.b16 %v4639
    %v5402 = vunpack.c.h.b16 %v4639
    %v5403 = vunpack.c.l.b16 %v4640
    %v5404 = vunpack.c.h.b16 %v4640
    %v5405 = vunpack.c.l.b16 %v4641
    %v5406 = vunpack.c.h.b16 %v4641
    %v5407 = vunpack.c.l.b16 %v4642
    %v5408 = vunpack.c.h.b16 %v4642
    %v5409 = vunpack.c.l.b16 %v4643
    %v5410 = vunpack.c.h.b16 %v4643
    %v5411 = vunpack.c.l.b16 %v4644
    %v5412 = vunpack.c.h.b16 %v4644
    %v5413 = vunpack.c.l.b16 %v4645
    %v5414 = vunpack.c.h.b16 %v4645
    %v5415 = vunpack.c.l.b16 %v4646
    %v5416 = vunpack.c.h.b16 %v4646
    %v5417 = vunpack.c.l.b16 %v4647
    %v5418 = vunpack.c.h.b16 %v4647
    %v5419 = vunpack.c.l.b16 %v4648
    %v5420 = vunpack.c.h.b16 %v4648
    %v5421 = vunpack.c.l.b16 %v4649
    %v5422 = vunpack.c.h.b16 %v4649
    %v5423 = vunpack.c.l.b16 %v4650
    %v5424 = vunpack.c.h.b16 %v4650
    %v5425 = vunpack.c.l.b16 %v4651
    %v5426 = vunpack.c.h.b16 %v4651
    %v5427 = vunpack.c.l.b16 %v4652
    %v5428 = vunpack.c.h.b16 %v4652
    %v5429 = vunpack.c.l.b16 %v4653
    %v5430 = vunpack.c.h.b16 %v4653
    %v5431 = vunpack.c.l.b16 %v4654
    %v5432 = vunpack.c.h.b16 %v4654
    %v5433 = vunpack.c.l.b16 %v4655
    %v5434 = vunpack.c.h.b16 %v4655
    %v5435 = vunpack.c.l.b16 %v4656
    %v5436 = vunpack.c.h.b16 %v4656
    %v5437 = vunpack.c.l.b16 %v4657
    %v5438 = vunpack.c.h.b16 %v4657
    %v5439 = vpack.c.b16 %v4929, %v4927
    %v5440 = vpack.c.b16 %v4930, %v4928
    %v5441 = vpack.c.b16 %v4933, %v4931
    %v5442 = vpack.c.b16 %v4934, %v4932
    %v5443 = vpack.c.b16 %v4937, %v4935
    %v5444 = vpack.c.b16 %v4938, %v4936
    %v5445 = vpack.c.b16 %v4941, %v4939
    %v5446 = vpack.c.b16 %v4942, %v4940
    %v5447 = vpack.c.b16 %v4945, %v4943
    %v5448 = vpack.c.b16 %v4946, %v4944
    %v5449 = vpack.c.b16 %v4949, %v4947
    %v5450 = vpack.c.b16 %v4950, %v4948
    %v5451 = vpack.c.b16 %v4953, %v4951
    %v5452 = vpack.c.b16 %v4954, %v4952
    %v5453 = vpack.c.b16 %v4957, %v4955
    %v5454 = vpack.c.b16 %v4958, %v4956
    %v5455 = vpack.c.b16 %v4961, %v4959
    %v5456 = vpack.c.b16 %v4962, %v4960
    %v5457 = vpack.c.b16 %v4965, %v4963
    %v5458 = vpack.c.b16 %v4966, %v4964
    %v5459 = vpack.c.b16 %v4969, %v4967
    %v5460 = vpack.c.b16 %v4970, %v4968
    %v5461 = vpack.c.b16 %v4973, %v4971
    %v5462 = vpack.c.b16 %v4974, %v4972
    %v5463 = vpack.c.b16 %v4977, %v4975
    %v5464 = vpack.c.b16 %v4978, %v4976
    %v5465 = vpack.c.b16 %v4981, %v4979
    %v5466 = vpack.c.b16 %v4982, %v4980
    %v5467 = vpack.c.b16 %v4985, %v4983
    %v5468 = vpack.c.b16 %v4986, %v4984
    %v5469 = vpack.c.b16 %v4989, %v4987
    %v5470 = vpack.c.b16 %v4990, %v4988
    %v5471 = vpack.c.b16 %v4993, %v4991
    %v5472 = vpack.c.b16 %v4994, %v4992
    %v5473 = vpack.c.b16 %v4997, %v4995
    %v5474 = vpack.c.b16 %v4998, %v4996
    %v5475 = vpack.c.b16 %v5001, %v4999
    %v5476 = vpack.c.b16 %v5002, %v5000
    %v5477 = vpack.c.b16 %v5005, %v5003
    %v5478 = vpack.c.b16 %v5006, %v5004
    %v5479 = vpack.c.b16 %v5009, %v5007
    %v5480 = vpack.c.b16 %v5010, %v5008
    %v5481 = vpack.c.b16 %v5013, %v5011
    %v5482 = vpack.c.b16 %v5014, %v5012
    %v5483 = vpack.c.b16 %v5017, %v5015
    %v5484 = vpack.c.b16 %v5018, %v5016
    %v5485 = vpack.c.b16 %v5021, %v5019
    %v5486 = vpack.c.b16 %v5022, %v5020
    %v5487 = vpack.c.b16 %v5025, %v5023
    %v5488 = vpack.c.b16 %v5026, %v5024
    %v5489 = vpack.c.b16 %v5029, %v5027
    %v5490 = vpack.c.b16 %v5030, %v5028
    %v5491 = vpack.c.b16 %v5033, %v5031
    %v5492 = vpack.c.b16 %v5034, %v5032
    %v5493 = vpack.c.b16 %v5037, %v5035
    %v5494 = vpack.c.b16 %v5038, %v5036
    %v5495 = vpack.c.b16 %v5041, %v5039
    %v5496 = vpack.c.b16 %v5042, %v5040
    %v5497 = vpack.c.b16 %v5045, %v5043
    %v5498 = vpack.c.b16 %v5046, %v5044
    %v5499 = vpack.c.b16 %v5049, %v5047
    %v5500 = vpack.c.b16 %v5050, %v5048
    %v5501 = vpack.c.b16 %v5053, %v5051
    %v5502 = vpack.c.b16 %v5054, %v5052
    %v5503 = vpack.c.b16 %v5057, %v5055
    %v5504 = vpack.c.b16 %v5058, %v5056
    %v5505 = vpack.c.b16 %v5061, %v5059
    %v5506 = vpack.c.b16 %v5062, %v5060
    %v5507 = vpack.c.b16 %v5065, %v5063
    %v5508 = vpack.c.b16 %v5066, %v5064
    %v5509 = vpack.c.b16 %v5069, %v5067
    %v5510 = vpack.c.b16 %v5070, %v5068
    %v5511 = vpack.c.b16 %v5073, %v5071
    %v5512 = vpack.c.b16 %v5074, %v5072
    %v5513 = vpack.c.b16 %v5077, %v5075
    %v5514 = vpack.c.b16 %v5078, %v5076
    %v5515 = vpack.c.b16 %v5081, %v5079
    %v5516 = vpack.c.b16 %v5082, %v5080
    %v5517 = vpack.c.b16 %v5085, %v5083
    %v5518 = vpack.c.b16 %v5086, %v5084
    %v5519 = vpack.c.b16 %v5089, %v5087
    %v5520 = vpack.c.b16 %v5090, %v5088
    %v5521 = vpack.c.b16 %v5093, %v5091
    %v5522 = vpack.c.b16 %v5094, %v5092
    %v5523 = vpack.c.b16 %v5097, %v5095
    %v5524 = vpack.c.b16 %v5098, %v5096
    %v5525 = vpack.c.b16 %v5101, %v5099
    %v5526 = vpack.c.b16 %v5102, %v5100
    %v5527 = vpack.c.b16 %v5105, %v5103
    %v5528 = vpack.c.b16 %v5106, %v5104
    %v5529 = vpack.c.b16 %v5109, %v5107
    %v5530 = vpack.c.b16 %v5110, %v5108
    %v5531 = vpack.c.b16 %v5113, %v5111
    %v5532 = vpack.c.b16 %v5114, %v5112
    %v5533 = vpack.c.b16 %v5117, %v5115
    %v5534 = vpack.c.b16 %v5118, %v5116
    %v5535 = vpack.c.b16 %v5121, %v5119
    %v5536 = vpack.c.b16 %v5122, %v5120
    %v5537 = vpack.c.b16 %v5125, %v5123
    %v5538 = vpack.c.b16 %v5126, %v5124
    %v5539 = vpack.c.b16 %v5129, %v5127
    %v5540 = vpack.c.b16 %v5130, %v5128
    %v5541 = vpack.c.b16 %v5133, %v5131
    %v5542 = vpack.c.b16 %v5134, %v5132
    %v5543 = vpack.c.b16 %v5137, %v5135
    %v5544 = vpack.c.b16 %v5138, %v5136
    %v5545 = vpack.c.b16 %v5141, %v5139
    %v5546 = vpack.c.b16 %v5142, %v5140
    %v5547 = vpack.c.b16 %v5145, %v5143
    %v5548 = vpack.c.b16 %v5146, %v5144
    %v5549 = vpack.c.b16 %v5149, %v5147
    %v5550 = vpack.c.b16 %v5150, %v5148
    %v5551 = vpack.c.b16 %v5153, %v5151
    %v5552 = vpack.c.b16 %v5154, %v5152
    %v5553 = vpack.c.b16 %v5157, %v5155
    %v5554 = vpack.c.b16 %v5158, %v5156
    %v5555 = vpack.c.b16 %v5161, %v5159
    %v5556 = vpack.c.b16 %v5162, %v5160
    %v5557 = vpack.c.b16 %v5165, %v5163
    %v5558 = vpack.c.b16 %v5166, %v5164
    %v5559 = vpack.c.b16 %v5169, %v5167
    %v5560 = vpack.c.b16 %v5170, %v5168
    %v5561 = vpack.c.b16 %v5173, %v5171
    %v5562 = vpack.c.b16 %v5174, %v5172
    %v5563 = vpack.c.b16 %v5177, %v5175
    %v5564 = vpack.c.b16 %v5178, %v5176
    %v5565 = vpack.c.b16 %v5181, %v5179
    %v5566 = vpack.c.b16 %v5182, %v5180
    %v5567 = vpack.c.b16 %v5185, %v5183
    %v5568 = vpack.c.b16 %v5186, %v5184
    %v5569 = vpack.c.b16 %v5189, %v5187
    %v5570 = vpack.c.b16 %v5190, %v5188
    %v5571 = vpack.c.b16 %v5193, %v5191
    %v5572 = vpack.c.b16 %v5194, %v5192
    %v5573 = vpack.c.b16 %v5197, %v5195
    %v5574 = vpack.c.b16 %v5198, %v5196
    %v5575 = vpack.c.b16 %v5201, %v5199
    %v5576 = vpack.c.b16 %v5202, %v5200
    %v5577 = vpack.c.b16 %v5205, %v5203
    %v5578 = vpack.c.b16 %v5206, %v5204
    %v5579 = vpack.c.b16 %v5209, %v5207
    %v5580 = vpack.c.b16 %v5210, %v5208
    %v5581 = vpack.c.b16 %v5213, %v5211
    %v5582 = vpack.c.b16 %v5214, %v5212
    %v5583 = vpack.c.b16 %v5217, %v5215
    %v5584 = vpack.c.b16 %v5218, %v5216
    %v5585 = vpack.c.b16 %v5221, %v5219
    %v5586 = vpack.c.b16 %v5222, %v5220
    %v5587 = vpack.c.b16 %v5225, %v5223
    %v5588 = vpack.c.b16 %v5226, %v5224
    %v5589 = vpack.c.b16 %v5229, %v5227
    %v5590 = vpack.c.b16 %v5230, %v5228
    %v5591 = vpack.c.b16 %v5233, %v5231
    %v5592 = vpack.c.b16 %v5234, %v5232
    %v5593 = vpack.c.b16 %v5237, %v5235
    %v5594 = vpack.c.b16 %v5238, %v5236
    %v5595 = vpack.c.b16 %v5241, %v5239
    %v5596 = vpack.c.b16 %v5242, %v5240
    %v5597 = vpack.c.b16 %v5245, %v5243
    %v5598 = vpack.c.b16 %v5246, %v5244
    %v5599 = vpack.c.b16 %v5249, %v5247
    %v5600 = vpack.c.b16 %v5250, %v5248
    %v5601 = vpack.c.b16 %v5253, %v5251
    %v5602 = vpack.c.b16 %v5254, %v5252
    %v5603 = vpack.c.b16 %v5257, %v5255
    %v5604 = vpack.c.b16 %v5258, %v5256
    %v5605 = vpack.c.b16 %v5261, %v5259
    %v5606 = vpack.c.b16 %v5262, %v5260
    %v5607 = vpack.c.b16 %v5265, %v5263
    %v5608 = vpack.c.b16 %v5266, %v5264
    %v5609 = vpack.c.b16 %v5269, %v5267
    %v5610 = vpack.c.b16 %v5270, %v5268
    %v5611 = vpack.c.b16 %v5273, %v5271
    %v5612 = vpack.c.b16 %v5274, %v5272
    %v5613 = vpack.c.b16 %v5277, %v5275
    %v5614 = vpack.c.b16 %v5278, %v5276
    %v5615 = vpack.c.b16 %v5281, %v5279
    %v5616 = vpack.c.b16 %v5282, %v5280
    %v5617 = vpack.c.b16 %v5285, %v5283
    %v5618 = vpack.c.b16 %v5286, %v5284
    %v5619 = vpack.c.b16 %v5289, %v5287
    %v5620 = vpack.c.b16 %v5290, %v5288
    %v5621 = vpack.c.b16 %v5293, %v5291
    %v5622 = vpack.c.b16 %v5294, %v5292
    %v5623 = vpack.c.b16 %v5297, %v5295
    %v5624 = vpack.c.b16 %v5298, %v5296
    %v5625 = vpack.c.b16 %v5301, %v5299
    %v5626 = vpack.c.b16 %v5302, %v5300
    %v5627 = vpack.c.b16 %v5305, %v5303
    %v5628 = vpack.c.b16 %v5306, %v5304
    %v5629 = vpack.c.b16 %v5309, %v5307
    %v5630 = vpack.c.b16 %v5310, %v5308
    %v5631 = vpack.c.b16 %v5313, %v5311
    %v5632 = vpack.c.b16 %v5314, %v5312
    %v5633 = vpack.c.b16 %v5317, %v5315
    %v5634 = vpack.c.b16 %v5318, %v5316
    %v5635 = vpack.c.b16 %v5321, %v5319
    %v5636 = vpack.c.b16 %v5322, %v5320
    %v5637 = vpack.c.b16 %v5325, %v5323
    %v5638 = vpack.c.b16 %v5326, %v5324
    %v5639 = vpack.c.b16 %v5329, %v5327
    %v5640 = vpack.c.b16 %v5330, %v5328
    %v5641 = vpack.c.b16 %v5333, %v5331
    %v5642 = vpack.c.b16 %v5334, %v5332
    %v5643 = vpack.c.b16 %v5337, %v5335
    %v5644 = vpack.c.b16 %v5338, %v5336
    %v5645 = vpack.c.b16 %v5341, %v5339
    %v5646 = vpack.c.b16 %v5342, %v5340
    %v5647 = vpack.c.b16 %v5345, %v5343
    %v5648 = vpack.c.b16 %v5346, %v5344
    %v5649 = vpack.c.b16 %v5349, %v5347
    %v5650 = vpack.c.b16 %v5350, %v5348
    %v5651 = vpack.c.b16 %v5353, %v5351
    %v5652 = vpack.c.b16 %v5354, %v5352
    %v5653 = vpack.c.b16 %v5357, %v5355
    %v5654 = vpack.c.b16 %v5358, %v5356
    %v5655 = vpack.c.b16 %v5361, %v5359
    %v5656 = vpack.c.b16 %v5362, %v5360
    %v5657 = vpack.c.b16 %v5365, %v5363
    %v5658 = vpack.c.b16 %v5366, %v5364
    %v5659 = vpack.c.b16 %v5369, %v5367
    %v5660 = vpack.c.b16 %v5370, %v5368
    %v5661 = vpack.c.b16 %v5373, %v5371
    %v5662 = vpack.c.b16 %v5374, %v5372
    %v5663 = vpack.c.b16 %v5377, %v5375
    %v5664 = vpack.c.b16 %v5378, %v5376
    %v5665 = vpack.c.b16 %v5381, %v5379
    %v5666 = vpack.c.b16 %v5382, %v5380
    %v5667 = vpack.c.b16 %v5385, %v5383
    %v5668 = vpack.c.b16 %v5386, %v5384
    %v5669 = vpack.c.b16 %v5389, %v5387
    %v5670 = vpack.c.b16 %v5390, %v5388
    %v5671 = vpack.c.b16 %v5393, %v5391
    %v5672 = vpack.c.b16 %v5394, %v5392
    %v5673 = vpack.c.b16 %v5397, %v5395
    %v5674 = vpack.c.b16 %v5398, %v5396
    %v5675 = vpack.c.b16 %v5401, %v5399
    %v5676 = vpack.c.b16 %v5402, %v5400
    %v5677 = vpack.c.b16 %v5405, %v5403
    %v5678 = vpack.c.b16 %v5406, %v5404
    %v5679 = vpack.c.b16 %v5409, %v5407
    %v5680 = vpack.c.b16 %v5410, %v5408
    %v5681 = vpack.c.b16 %v5413, %v5411
    %v5682 = vpack.c.b16 %v5414, %v5412
    %v5683 = vpack.c.b16 %v5417, %v5415
    %v5684 = vpack.c.b16 %v5418, %v5416
    %v5685 = vpack.c.b16 %v5421, %v5419
    %v5686 = vpack.c.b16 %v5422, %v5420
    %v5687 = vpack.c.b16 %v5425, %v5423
    %v5688 = vpack.c.b16 %v5426, %v5424
    %v5689 = vpack.c.b16 %v5429, %v5427
    %v5690 = vpack.c.b16 %v5430, %v5428
    %v5691 = vpack.c.b16 %v5433, %v5431
    %v5692 = vpack.c.b16 %v5434, %v5432
    %v5693 = vpack.c.b16 %v5437, %v5435
    %v5694 = vpack.c.b16 %v5438, %v5436
    %5951 = vmatprep.subr.bf16.mxu0 %v5454
    %5952 = vmatpush1.bf16.msra.mxu0 %v5453
    %5953 = vmatprep.subr.bf16.mxu0 %v5452
    %5954 = vmatpush1.bf16.msra.mxu0 %v5451
    %5955 = vmatprep.subr.bf16.mxu0 %v5450
    %5956 = vmatpush1.bf16.msra.mxu0 %v5449
    %5957 = vmatprep.subr.bf16.mxu0 %v5448
    %5958 = vmatpush1.bf16.msra.mxu0 %v5447
    %5959 = vmatprep.subr.bf16.mxu0 %v5446
    %5960 = vmatpush1.bf16.msra.mxu0 %v5445
    %5961 = vmatprep.subr.bf16.mxu0 %v5444
    %5962 = vmatpush1.bf16.msra.mxu0 %v5443
    %5963 = vmatprep.subr.bf16.mxu0 %v5442
    %5964 = vmatpush1.bf16.msra.mxu0 %v5441
    %5965 = vmatprep.subr.bf16.mxu0 %v5440
    %5966 = vmatpush1.bf16.msra.mxu0 %v5439
    %5967 = vmatprep.subr.bf16.mxu0 %v5470
    %5968 = vmatpush2.bf16.msra.mxu0 %v5469
    %5969 = vmatprep.subr.bf16.mxu0 %v5468
    %5970 = vmatpush2.bf16.msra.mxu0 %v5467
    %5971 = vmatprep.subr.bf16.mxu0 %v5466
    %5972 = vmatpush2.bf16.msra.mxu0 %v5465
    %5973 = vmatprep.subr.bf16.mxu0 %v5464
    %5974 = vmatpush2.bf16.msra.mxu0 %v5463
    %5975 = vmatprep.subr.bf16.mxu0 %v5462
    %5976 = vmatpush2.bf16.msra.mxu0 %v5461
    %5977 = vmatprep.subr.bf16.mxu0 %v5460
    %5978 = vmatpush2.bf16.msra.mxu0 %v5459
    %5979 = vmatprep.subr.bf16.mxu0 %v5458
    %5980 = vmatpush2.bf16.msra.mxu0 %v5457
    %5981 = vmatprep.subr.bf16.mxu0 %v5456
    %5982 = vmatpush2.bf16.msra.mxu0 %v5455
    %5983 = vmatprep.mubr.bf16.mxu0 %v4387
    %5984 = vmatmul.mubr.bf16.gmra.mxu0 %v4386
    %v5985 = vpop.f32.mrf.mxu0
    %v5986 = vadd.f32 %v4664, %v5985
    %v5987 = vpop.f32.mrf.mxu0
    %v5988 = vadd.f32 %v4668, %v5987
    %v5989 = vpop.f32.mrf.mxu0
    %v5990 = vadd.f32 %v4664, %v5989
    %v5991 = vpop.f32.mrf.mxu0
    %v5992 = vadd.f32 %v4668, %v5991
    %5993 = vdwg.mxu0
    %5994 = vmatprep.subr.bf16.mxu0 %v5486
    %5995 = vmatpush1.bf16.msra.mxu0 %v5485
    %5996 = vmatprep.subr.bf16.mxu0 %v5484
    %5997 = vmatpush1.bf16.msra.mxu0 %v5483
    %5998 = vmatprep.subr.bf16.mxu0 %v5482
    %5999 = vmatpush1.bf16.msra.mxu0 %v5481
    %6000 = vmatprep.subr.bf16.mxu0 %v5480
    %6001 = vmatpush1.bf16.msra.mxu0 %v5479
    %6002 = vmatprep.subr.bf16.mxu0 %v5478
    %6003 = vmatpush1.bf16.msra.mxu0 %v5477
    %6004 = vmatprep.subr.bf16.mxu0 %v5476
    %6005 = vmatpush1.bf16.msra.mxu0 %v5475
    %6006 = vmatprep.subr.bf16.mxu0 %v5474
    %6007 = vmatpush1.bf16.msra.mxu0 %v5473
    %6008 = vmatprep.subr.bf16.mxu0 %v5472
    %6009 = vmatpush1.bf16.msra.mxu0 %v5471
    %6010 = vmatprep.subr.bf16.mxu0 %v5502
    %6011 = vmatpush2.bf16.msra.mxu0 %v5501
    %6012 = vmatprep.subr.bf16.mxu0 %v5500
    %6013 = vmatpush2.bf16.msra.mxu0 %v5499
    %6014 = vmatprep.subr.bf16.mxu0 %v5498
    %6015 = vmatpush2.bf16.msra.mxu0 %v5497
    %6016 = vmatprep.subr.bf16.mxu0 %v5496
    %6017 = vmatpush2.bf16.msra.mxu0 %v5495
    %6018 = vmatprep.subr.bf16.mxu0 %v5494
    %6019 = vmatpush2.bf16.msra.mxu0 %v5493
    %6020 = vmatprep.subr.bf16.mxu0 %v5492
    %6021 = vmatpush2.bf16.msra.mxu0 %v5491
    %6022 = vmatprep.subr.bf16.mxu0 %v5490
    %6023 = vmatpush2.bf16.msra.mxu0 %v5489
    %6024 = vmatprep.subr.bf16.mxu0 %v5488
    %6025 = vmatpush2.bf16.msra.mxu0 %v5487
    %6026 = vmatprep.mubr.bf16.mxu0 %v4389
    %6027 = vmatmul.mubr.bf16.gmra.mxu0 %v4388
    %v6028 = vpop.f32.mrf.mxu0
    %v6029 = vadd.f32 %v5986, %v6028
    %v6030 = vpop.f32.mrf.mxu0
    %v6031 = vadd.f32 %v5988, %v6030
    %v6032 = vpop.f32.mrf.mxu0
    %v6033 = vadd.f32 %v5990, %v6032
    %v6034 = vpop.f32.mrf.mxu0
    %v6035 = vadd.f32 %v5992, %v6034
    %6036 = vdwg.mxu0
    %6037 = vmatprep.subr.bf16.mxu0 %v5518
    %6038 = vmatpush1.bf16.msra.mxu0 %v5517
    %6039 = vmatprep.subr.bf16.mxu0 %v5516
    %6040 = vmatpush1.bf16.msra.mxu0 %v5515
    %6041 = vmatprep.subr.bf16.mxu0 %v5514
    %6042 = vmatpush1.bf16.msra.mxu0 %v5513
    %6043 = vmatprep.subr.bf16.mxu0 %v5512
    %6044 = vmatpush1.bf16.msra.mxu0 %v5511
    %6045 = vmatprep.subr.bf16.mxu0 %v5510
    %6046 = vmatpush1.bf16.msra.mxu0 %v5509
    %6047 = vmatprep.subr.bf16.mxu0 %v5508
    %6048 = vmatpush1.bf16.msra.mxu0 %v5507
    %6049 = vmatprep.subr.bf16.mxu0 %v5506
    %6050 = vmatpush1.bf16.msra.mxu0 %v5505
    %6051 = vmatprep.subr.bf16.mxu0 %v5504
    %6052 = vmatpush1.bf16.msra.mxu0 %v5503
    %6053 = vmatprep.subr.bf16.mxu0 %v5534
    %6054 = vmatpush2.bf16.msra.mxu0 %v5533
    %6055 = vmatprep.subr.bf16.mxu0 %v5532
    %6056 = vmatpush2.bf16.msra.mxu0 %v5531
    %6057 = vmatprep.subr.bf16.mxu0 %v5530
    %6058 = vmatpush2.bf16.msra.mxu0 %v5529
    %6059 = vmatprep.subr.bf16.mxu0 %v5528
    %6060 = vmatpush2.bf16.msra.mxu0 %v5527
    %6061 = vmatprep.subr.bf16.mxu0 %v5526
    %6062 = vmatpush2.bf16.msra.mxu0 %v5525
    %6063 = vmatprep.subr.bf16.mxu0 %v5524
    %6064 = vmatpush2.bf16.msra.mxu0 %v5523
    %6065 = vmatprep.subr.bf16.mxu0 %v5522
    %6066 = vmatpush2.bf16.msra.mxu0 %v5521
    %6067 = vmatprep.subr.bf16.mxu0 %v5520
    %6068 = vmatpush2.bf16.msra.mxu0 %v5519
    %6069 = vmatprep.mubr.bf16.mxu0 %v4391
    %6070 = vmatmul.mubr.bf16.gmra.mxu0 %v4390
    %v6071 = vpop.f32.mrf.mxu0
    %v6072 = vadd.f32 %v6029, %v6071
    %v6073 = vpop.f32.mrf.mxu0
    %v6074 = vadd.f32 %v6031, %v6073
    %v6075 = vpop.f32.mrf.mxu0
    %v6076 = vadd.f32 %v6033, %v6075
    %v6077 = vpop.f32.mrf.mxu0
    %v6078 = vadd.f32 %v6035, %v6077
    %6079 = vdwg.mxu0
    %6080 = vmatprep.subr.bf16.mxu0 %v5550
    %6081 = vmatpush1.bf16.msra.mxu0 %v5549
    %6082 = vmatprep.subr.bf16.mxu0 %v5548
    %6083 = vmatpush1.bf16.msra.mxu0 %v5547
    %6084 = vmatprep.subr.bf16.mxu0 %v5546
    %6085 = vmatpush1.bf16.msra.mxu0 %v5545
    %6086 = vmatprep.subr.bf16.mxu0 %v5544
    %6087 = vmatpush1.bf16.msra.mxu0 %v5543
    %6088 = vmatprep.subr.bf16.mxu0 %v5542
    %6089 = vmatpush1.bf16.msra.mxu0 %v5541
    %6090 = vmatprep.subr.bf16.mxu0 %v5540
    %6091 = vmatpush1.bf16.msra.mxu0 %v5539
    %6092 = vmatprep.subr.bf16.mxu0 %v5538
    %6093 = vmatpush1.bf16.msra.mxu0 %v5537
    %6094 = vmatprep.subr.bf16.mxu0 %v5536
    %6095 = vmatpush1.bf16.msra.mxu0 %v5535
    %6096 = vmatprep.subr.bf16.mxu0 %v5566
    %6097 = vmatpush2.bf16.msra.mxu0 %v5565
    %6098 = vmatprep.subr.bf16.mxu0 %v5564
    %6099 = vmatpush2.bf16.msra.mxu0 %v5563
    %6100 = vmatprep.subr.bf16.mxu0 %v5562
    %6101 = vmatpush2.bf16.msra.mxu0 %v5561
    %6102 = vmatprep.subr.bf16.mxu0 %v5560
    %6103 = vmatpush2.bf16.msra.mxu0 %v5559
    %6104 = vmatprep.subr.bf16.mxu0 %v5558
    %6105 = vmatpush2.bf16.msra.mxu0 %v5557
    %6106 = vmatprep.subr.bf16.mxu0 %v5556
    %6107 = vmatpush2.bf16.msra.mxu0 %v5555
    %6108 = vmatprep.subr.bf16.mxu0 %v5554
    %6109 = vmatpush2.bf16.msra.mxu0 %v5553
    %6110 = vmatprep.subr.bf16.mxu0 %v5552
    %6111 = vmatpush2.bf16.msra.mxu0 %v5551
    %6112 = vmatprep.mubr.bf16.mxu0 %v4393
    %6113 = vmatmul.mubr.bf16.gmra.mxu0 %v4392
    %v6114 = vpop.f32.mrf.mxu0
    %v6115 = vadd.f32 %v6072, %v6114
    %v6116 = vpop.f32.mrf.mxu0
    %v6117 = vadd.f32 %v6074, %v6116
    %v6118 = vpop.f32.mrf.mxu0
    %v6119 = vadd.f32 %v6076, %v6118
    %v6120 = vpop.f32.mrf.mxu0
    %v6121 = vadd.f32 %v6078, %v6120
    %6122 = vdwg.mxu0
    %6123 = vmatprep.subr.bf16.mxu0 %v5582
    %6124 = vmatpush1.bf16.msra.mxu0 %v5581
    %6125 = vmatprep.subr.bf16.mxu0 %v5580
    %6126 = vmatpush1.bf16.msra.mxu0 %v5579
    %6127 = vmatprep.subr.bf16.mxu0 %v5578
    %6128 = vmatpush1.bf16.msra.mxu0 %v5577
    %6129 = vmatprep.subr.bf16.mxu0 %v5576
    %6130 = vmatpush1.bf16.msra.mxu0 %v5575
    %6131 = vmatprep.subr.bf16.mxu0 %v5574
    %6132 = vmatpush1.bf16.msra.mxu0 %v5573
    %6133 = vmatprep.subr.bf16.mxu0 %v5572
    %6134 = vmatpush1.bf16.msra.mxu0 %v5571
    %6135 = vmatprep.subr.bf16.mxu0 %v5570
    %6136 = vmatpush1.bf16.msra.mxu0 %v5569
    %6137 = vmatprep.subr.bf16.mxu0 %v5568
    %6138 = vmatpush1.bf16.msra.mxu0 %v5567
    %6139 = vmatprep.subr.bf16.mxu0 %v5598
    %6140 = vmatpush2.bf16.msra.mxu0 %v5597
    %6141 = vmatprep.subr.bf16.mxu0 %v5596
    %6142 = vmatpush2.bf16.msra.mxu0 %v5595
    %6143 = vmatprep.subr.bf16.mxu0 %v5594
    %6144 = vmatpush2.bf16.msra.mxu0 %v5593
    %6145 = vmatprep.subr.bf16.mxu0 %v5592
    %6146 = vmatpush2.bf16.msra.mxu0 %v5591
    %6147 = vmatprep.subr.bf16.mxu0 %v5590
    %6148 = vmatpush2.bf16.msra.mxu0 %v5589
    %6149 = vmatprep.subr.bf16.mxu0 %v5588
    %6150 = vmatpush2.bf16.msra.mxu0 %v5587
    %6151 = vmatprep.subr.bf16.mxu0 %v5586
    %6152 = vmatpush2.bf16.msra.mxu0 %v5585
    %6153 = vmatprep.subr.bf16.mxu0 %v5584
    %6154 = vmatpush2.bf16.msra.mxu0 %v5583
    %6155 = vmatprep.mubr.bf16.mxu0 %v4395
    %6156 = vmatmul.mubr.bf16.gmra.mxu0 %v4394
    %v6157 = vpop.f32.mrf.mxu0
    %v6158 = vadd.f32 %v6115, %v6157
    %v6159 = vpop.f32.mrf.mxu0
    %v6160 = vadd.f32 %v6117, %v6159
    %v6161 = vpop.f32.mrf.mxu0
    %v6162 = vadd.f32 %v6119, %v6161
    %v6163 = vpop.f32.mrf.mxu0
    %v6164 = vadd.f32 %v6121, %v6163
    %6165 = vdwg.mxu0
    %6166 = vmatprep.subr.bf16.mxu0 %v5614
    %6167 = vmatpush1.bf16.msra.mxu0 %v5613
    %6168 = vmatprep.subr.bf16.mxu0 %v5612
    %6169 = vmatpush1.bf16.msra.mxu0 %v5611
    %6170 = vmatprep.subr.bf16.mxu0 %v5610
    %6171 = vmatpush1.bf16.msra.mxu0 %v5609
    %6172 = vmatprep.subr.bf16.mxu0 %v5608
    %6173 = vmatpush1.bf16.msra.mxu0 %v5607
    %6174 = vmatprep.subr.bf16.mxu0 %v5606
    %6175 = vmatpush1.bf16.msra.mxu0 %v5605
    %6176 = vmatprep.subr.bf16.mxu0 %v5604
    %6177 = vmatpush1.bf16.msra.mxu0 %v5603
    %6178 = vmatprep.subr.bf16.mxu0 %v5602
    %6179 = vmatpush1.bf16.msra.mxu0 %v5601
    %6180 = vmatprep.subr.bf16.mxu0 %v5600
    %6181 = vmatpush1.bf16.msra.mxu0 %v5599
    %6182 = vmatprep.subr.bf16.mxu0 %v5630
    %6183 = vmatpush2.bf16.msra.mxu0 %v5629
    %6184 = vmatprep.subr.bf16.mxu0 %v5628
    %6185 = vmatpush2.bf16.msra.mxu0 %v5627
    %6186 = vmatprep.subr.bf16.mxu0 %v5626
    %6187 = vmatpush2.bf16.msra.mxu0 %v5625
    %6188 = vmatprep.subr.bf16.mxu0 %v5624
    %6189 = vmatpush2.bf16.msra.mxu0 %v5623
    %6190 = vmatprep.subr.bf16.mxu0 %v5622
    %6191 = vmatpush2.bf16.msra.mxu0 %v5621
    %6192 = vmatprep.subr.bf16.mxu0 %v5620
    %6193 = vmatpush2.bf16.msra.mxu0 %v5619
    %6194 = vmatprep.subr.bf16.mxu0 %v5618
    %6195 = vmatpush2.bf16.msra.mxu0 %v5617
    %6196 = vmatprep.subr.bf16.mxu0 %v5616
    %6197 = vmatpush2.bf16.msra.mxu0 %v5615
    %6198 = vmatprep.mubr.bf16.mxu0 %v4397
    %6199 = vmatmul.mubr.bf16.gmra.mxu0 %v4396
    %v6200 = vpop.f32.mrf.mxu0
    %v6201 = vadd.f32 %v6158, %v6200
    %v6202 = vpop.f32.mrf.mxu0
    %v6203 = vadd.f32 %v6160, %v6202
    %v6204 = vpop.f32.mrf.mxu0
    %v6205 = vadd.f32 %v6162, %v6204
    %v6206 = vpop.f32.mrf.mxu0
    %v6207 = vadd.f32 %v6164, %v6206
    %6208 = vdwg.mxu0
    %6209 = vmatprep.subr.bf16.mxu0 %v5646
    %6210 = vmatpush1.bf16.msra.mxu0 %v5645
    %6211 = vmatprep.subr.bf16.mxu0 %v5644
    %6212 = vmatpush1.bf16.msra.mxu0 %v5643
    %6213 = vmatprep.subr.bf16.mxu0 %v5642
    %6214 = vmatpush1.bf16.msra.mxu0 %v5641
    %6215 = vmatprep.subr.bf16.mxu0 %v5640
    %6216 = vmatpush1.bf16.msra.mxu0 %v5639
    %6217 = vmatprep.subr.bf16.mxu0 %v5638
    %6218 = vmatpush1.bf16.msra.mxu0 %v5637
    %6219 = vmatprep.subr.bf16.mxu0 %v5636
    %6220 = vmatpush1.bf16.msra.mxu0 %v5635
    %6221 = vmatprep.subr.bf16.mxu0 %v5634
    %6222 = vmatpush1.bf16.msra.mxu0 %v5633
    %6223 = vmatprep.subr.bf16.mxu0 %v5632
    %6224 = vmatpush1.bf16.msra.mxu0 %v5631
    %6225 = vmatprep.subr.bf16.mxu0 %v5662
    %6226 = vmatpush2.bf16.msra.mxu0 %v5661
    %6227 = vmatprep.subr.bf16.mxu0 %v5660
    %6228 = vmatpush2.bf16.msra.mxu0 %v5659
    %6229 = vmatprep.subr.bf16.mxu0 %v5658
    %6230 = vmatpush2.bf16.msra.mxu0 %v5657
    %6231 = vmatprep.subr.bf16.mxu0 %v5656
    %6232 = vmatpush2.bf16.msra.mxu0 %v5655
    %6233 = vmatprep.subr.bf16.mxu0 %v5654
    %6234 = vmatpush2.bf16.msra.mxu0 %v5653
    %6235 = vmatprep.subr.bf16.mxu0 %v5652
    %6236 = vmatpush2.bf16.msra.mxu0 %v5651
    %6237 = vmatprep.subr.bf16.mxu0 %v5650
    %6238 = vmatpush2.bf16.msra.mxu0 %v5649
    %6239 = vmatprep.subr.bf16.mxu0 %v5648
    %6240 = vmatpush2.bf16.msra.mxu0 %v5647
    %6241 = vmatprep.mubr.bf16.mxu0 %v4399
    %6242 = vmatmul.mubr.bf16.gmra.mxu0 %v4398
    %v6243 = vpop.f32.mrf.mxu0
    %v6244 = vadd.f32 %v6201, %v6243
    %v6245 = vpop.f32.mrf.mxu0
    %v6246 = vadd.f32 %v6203, %v6245
    %v6247 = vpop.f32.mrf.mxu0
    %v6248 = vadd.f32 %v6205, %v6247
    %v6249 = vpop.f32.mrf.mxu0
    %v6250 = vadd.f32 %v6207, %v6249
    %6251 = vdwg.mxu0
    %6252 = vmatprep.subr.bf16.mxu0 %v5678
    %6253 = vmatpush1.bf16.msra.mxu0 %v5677
    %6254 = vmatprep.subr.bf16.mxu0 %v5676
    %6255 = vmatpush1.bf16.msra.mxu0 %v5675
    %6256 = vmatprep.subr.bf16.mxu0 %v5674
    %6257 = vmatpush1.bf16.msra.mxu0 %v5673
    %6258 = vmatprep.subr.bf16.mxu0 %v5672
    %6259 = vmatpush1.bf16.msra.mxu0 %v5671
    %6260 = vmatprep.subr.bf16.mxu0 %v5670
    %6261 = vmatpush1.bf16.msra.mxu0 %v5669
    %6262 = vmatprep.subr.bf16.mxu0 %v5668
    %6263 = vmatpush1.bf16.msra.mxu0 %v5667
    %6264 = vmatprep.subr.bf16.mxu0 %v5666
    %6265 = vmatpush1.bf16.msra.mxu0 %v5665
    %6266 = vmatprep.subr.bf16.mxu0 %v5664
    %6267 = vmatpush1.bf16.msra.mxu0 %v5663
    %6268 = vmatprep.subr.bf16.mxu0 %v5694
    %6269 = vmatpush2.bf16.msra.mxu0 %v5693
    %6270 = vmatprep.subr.bf16.mxu0 %v5692
    %6271 = vmatpush2.bf16.msra.mxu0 %v5691
    %6272 = vmatprep.subr.bf16.mxu0 %v5690
    %6273 = vmatpush2.bf16.msra.mxu0 %v5689
    %6274 = vmatprep.subr.bf16.mxu0 %v5688
    %6275 = vmatpush2.bf16.msra.mxu0 %v5687
    %6276 = vmatprep.subr.bf16.mxu0 %v5686
    %6277 = vmatpush2.bf16.msra.mxu0 %v5685
    %6278 = vmatprep.subr.bf16.mxu0 %v5684
    %6279 = vmatpush2.bf16.msra.mxu0 %v5683
    %6280 = vmatprep.subr.bf16.mxu0 %v5682
    %6281 = vmatpush2.bf16.msra.mxu0 %v5681
    %6282 = vmatprep.subr.bf16.mxu0 %v5680
    %6283 = vmatpush2.bf16.msra.mxu0 %v5679
    %6284 = vmatprep.mubr.bf16.mxu0 %v4401
    %6285 = vmatmul.mubr.bf16.gmra.mxu0 %v4400
    %v6286 = vpop.f32.mrf.mxu0
    %v6287 = vadd.f32 %v6244, %v6286
    %v6288 = vpop.f32.mrf.mxu0
    %v6289 = vadd.f32 %v6246, %v6288
    %v6290 = vpop.f32.mrf.mxu0
    %v6291 = vadd.f32 %v6248, %v6290
    %v6292 = vpop.f32.mrf.mxu0
    %v6293 = vadd.f32 %v6250, %v6292
    %6294 = vdwg.mxu0
    %v6295 = vadd.f32 %v2751, %v6287
    %v6296 = vadd.f32 %v2752, %v6289
    %v6297 = vadd.f32 %v2753, %v6291
    %v6298 = vadd.f32 %v2754, %v6293
    %s6299 = scalar_lea.vmem %s1, 130
    %v6300 = vld [vmem:[%s6299] ss:$8 sm:$0x3]
    %s6301 = scalar_lea.vmem %s1, 131
    %v6302 = vld [vmem:[%s6301] ss:$8 sm:$0x3]
    %v6303 = vsel %vm1237, %v6296, 0.0
    %v6304 = vadd.f32 %v6295, %v6303
    %6305 = vadd.xlane.f32.xlu0 %v6304
    %v6306 = vpop.xlane.xlu0 %6305
    %v6307 = vsel %vm1237, %v6298, 0.0
    %v6308 = vadd.f32 %v6297, %v6307
    %6309 = vadd.xlane.f32.xlu0 %v6308
    %v6310 = vpop.xlane.xlu0 %6309
    %v6311 = vmul.f32 %v6306, %v2696
    %v6312 = vmul.f32 %v6310, %v2696
    %v6313 = vsub.f32 %v6295, %v6311
    %v6314 = vsub.f32 %v6296, %v6311
    %v6315 = vsub.f32 %v6297, %v6312
    %v6316 = vsub.f32 %v6298, %v6312
    %v6317 = vmul.f32 %v6313, %v6313
    %v6318 = vmul.f32 %v6314, %v6314
    %v6319 = vmul.f32 %v6315, %v6315
    %v6320 = vmul.f32 %v6316, %v6316
    %v6321 = vsel %vm1237, %v6318, 0.0
    %v6322 = vadd.f32 %v6317, %v6321
    %6323 = vadd.xlane.f32.xlu0 %v6322
    %v6324 = vpop.xlane.xlu0 %6323
    %v6325 = vsel %vm1237, %v6320, 0.0
    %v6326 = vadd.f32 %v6319, %v6325
    %6327 = vadd.xlane.f32.xlu0 %v6326
    %v6328 = vpop.xlane.xlu0 %6327
    %v6329 = vmul.f32 %v6324, %v2696
    %v6330 = vmul.f32 %v6328, %v2696
    %v6331 = vadd.f32 %v6329, 1e-05
    %v6332 = vadd.f32 %v6330, 1e-05
    %v6333 = vrsqrt.pop %v6331
    %v6334 = vrsqrt.pop %v6332
    %v6335 = vmul.f32 %v6313, %v6333
    %v6336 = vmul.f32 %v6314, %v6333
    %v6337 = vmul.f32 %v6315, %v6334
    %v6338 = vmul.f32 %v6316, %v6334
    %v6340 = vlaneseq
    %v6341 = vshrl.u32 %v6340, 7
    %v6342 = vsub.s32 0, %v6341
    %v6343 = vrot.slane %v6300, %v6342
    %v6344 = vlaneseq
    %v6345 = vshrl.u32 %v6344, 7
    %v6346 = vsub.s32 1, %v6345
    %v6347 = vrot.slane %v6300, %v6346
    %v6350 = vmul.f32 %v6335, %v6343
    %v6351 = vmul.f32 %v6336, %v6347
    %v6352 = vmul.f32 %v6337, %v6343
    %v6353 = vmul.f32 %v6338, %v6347
    %v6355 = vlaneseq
    %v6356 = vshrl.u32 %v6355, 7
    %v6357 = vsub.s32 0, %v6356
    %v6358 = vrot.slane %v6302, %v6357
    %v6359 = vlaneseq
    %v6360 = vshrl.u32 %v6359, 7
    %v6361 = vsub.s32 1, %v6360
    %v6362 = vrot.slane %v6302, %v6361
    %v6365 = vadd.f32 %v6350, %v6358
    %v6366 = vadd.f32 %v6351, %v6362
    %v6367 = vadd.f32 %v6352, %v6358
    %v6368 = vadd.f32 %v6353, %v6362
    %v6369 = vpack.c.bf16 %v6367, %v6365
    %v6370 = vpack.c.bf16 %v6368, %v6366
    %v6371 = vld [vmem:[%s2 + $0x1e0] sm:$0xf]
    %v6372 = vld [vmem:[%s2 + $0x1e8] sm:$0xf]
    %v6373 = vld [vmem:[%s2 + $0x1f0] sm:$0xf]
    %v6374 = vld [vmem:[%s2 + $0x1f8] sm:$0xf]
    %v6375 = vld [vmem:[%s2 + $0x200] sm:$0xf]
    %v6376 = vld [vmem:[%s2 + $0x208] sm:$0xf]
    %v6377 = vld [vmem:[%s2 + $0x210] sm:$0xf]
    %v6378 = vld [vmem:[%s2 + $0x218] sm:$0xf]
    %v6379 = vld [vmem:[%s2 + $0x220] sm:$0xf]
    %v6380 = vld [vmem:[%s2 + $0x228] sm:$0xf]
    %v6381 = vld [vmem:[%s2 + $0x230] sm:$0xf]
    %v6382 = vld [vmem:[%s2 + $0x238] sm:$0xf]
    %v6383 = vld [vmem:[%s2 + $0x240] sm:$0xf]
    %v6384 = vld [vmem:[%s2 + $0x248] sm:$0xf]
    %v6385 = vld [vmem:[%s2 + $0x250] sm:$0xf]
    %v6386 = vld [vmem:[%s2 + $0x258] sm:$0xf]
    %v6387 = vld [vmem:[%s2 + $0x260] sm:$0xf]
    %v6388 = vld [vmem:[%s2 + $0x268] sm:$0xf]
    %v6389 = vld [vmem:[%s2 + $0x270] sm:$0xf]
    %v6390 = vld [vmem:[%s2 + $0x278] sm:$0xf]
    %v6391 = vld [vmem:[%s2 + $0x280] sm:$0xf]
    %v6392 = vld [vmem:[%s2 + $0x288] sm:$0xf]
    %v6393 = vld [vmem:[%s2 + $0x290] sm:$0xf]
    %v6394 = vld [vmem:[%s2 + $0x298] sm:$0xf]
    %v6395 = vld [vmem:[%s1 + $0x84] ss:$0 sm:$0xff]
    %v6420 = vunpack.c.l.b16 %v6371
    %v6421 = vunpack.c.l.b16 %v6372
    %v6422 = vunpack.c.l.b16 %v6373
    %v6423 = vunpack.c.l.b16 %v6374
    %v6424 = vunpack.c.l.b16 %v6375
    %v6425 = vunpack.c.l.b16 %v6376
    %v6426 = vunpack.c.l.b16 %v6377
    %v6427 = vunpack.c.l.b16 %v6378
    %v6428 = vunpack.c.l.b16 %v6379
    %v6429 = vunpack.c.l.b16 %v6380
    %v6430 = vunpack.c.l.b16 %v6381
    %v6431 = vunpack.c.l.b16 %v6382
    %v6432 = vunpack.c.l.b16 %v6383
    %v6433 = vunpack.c.l.b16 %v6384
    %v6434 = vunpack.c.l.b16 %v6385
    %v6435 = vunpack.c.l.b16 %v6386
    %v6436 = vunpack.c.l.b16 %v6387
    %v6437 = vunpack.c.l.b16 %v6388
    %v6438 = vunpack.c.l.b16 %v6389
    %v6439 = vunpack.c.l.b16 %v6390
    %v6440 = vunpack.c.l.b16 %v6391
    %v6441 = vunpack.c.l.b16 %v6392
    %v6442 = vunpack.c.l.b16 %v6393
    %v6443 = vunpack.c.l.b16 %v6394
    %v6444 = vpack.c.b16 %v6421, %v6420
    %v6445 = vpack.c.b16 %v6423, %v6422
    %v6446 = vpack.c.b16 %v6425, %v6424
    %v6447 = vpack.c.b16 %v6427, %v6426
    %v6448 = vpack.c.b16 %v6429, %v6428
    %v6449 = vpack.c.b16 %v6431, %v6430
    %v6450 = vpack.c.b16 %v6433, %v6432
    %v6451 = vpack.c.b16 %v6435, %v6434
    %v6452 = vpack.c.b16 %v6437, %v6436
    %v6453 = vpack.c.b16 %v6439, %v6438
    %v6454 = vpack.c.b16 %v6441, %v6440
    %v6455 = vpack.c.b16 %v6443, %v6442
    %v6469 = vsel %vm1237, %v6370, 0
    %6471 = vmatprep.subr.bf16.mxu0 0
    %6472 = vmatpush1.bf16.msra.mxu0 %v6451
    %6473 = vmatprep.subr.bf16.mxu0 0
    %6474 = vmatpush1.bf16.msra.mxu0 %v6450
    %6475 = vmatprep.subr.bf16.mxu0 0
    %6476 = vmatpush1.bf16.msra.mxu0 %v6449
    %6477 = vmatprep.subr.bf16.mxu0 0
    %6478 = vmatpush1.bf16.msra.mxu0 %v6448
    %6479 = vmatprep.subr.bf16.mxu0 0
    %6480 = vmatpush1.bf16.msra.mxu0 %v6447
    %6481 = vmatprep.subr.bf16.mxu0 0
    %6482 = vmatpush1.bf16.msra.mxu0 %v6446
    %6483 = vmatprep.subr.bf16.mxu0 0
    %6484 = vmatpush1.bf16.msra.mxu0 %v6445
    %6485 = vmatprep.subr.bf16.mxu0 0
    %6486 = vmatpush1.bf16.msra.mxu0 %v6444
    %6487 = vmatprep.subr.bf16.mxu0 0
    %6488 = vmatpush2.bf16.msra.mxu0 0
    %6489 = vmatprep.subr.bf16.mxu0 0
    %6490 = vmatpush2.bf16.msra.mxu0 0
    %6491 = vmatprep.subr.bf16.mxu0 0
    %6492 = vmatpush2.bf16.msra.mxu0 0
    %6493 = vmatprep.subr.bf16.mxu0 0
    %6494 = vmatpush2.bf16.msra.mxu0 0
    %6495 = vmatprep.subr.bf16.mxu0 0
    %6496 = vmatpush2.bf16.msra.mxu0 %v6455
    %6497 = vmatprep.subr.bf16.mxu0 0
    %6498 = vmatpush2.bf16.msra.mxu0 %v6454
    %6499 = vmatprep.subr.bf16.mxu0 0
    %6500 = vmatpush2.bf16.msra.mxu0 %v6453
    %6501 = vmatprep.subr.bf16.mxu0 0
    %6502 = vmatpush2.bf16.msra.mxu0 %v6452
    %6503 = vmatprep.mubr.bf16.mxu0 %v6469
    %6504 = vmatmul.mubr.bf16.gmra.mxu0 %v6369
    %v6505 = vpop.f32.mrf.mxu0
    %v6506 = vadd.f32 %v6395, %v6505
    %v6507 = vpop.f32.mrf.mxu0
    %v6508 = vpop.f32.mrf.mxu0
    %v6509 = vadd.f32 %v6395, %v6508
    %v6510 = vpop.f32.mrf.mxu0
    %6511 = vdwg.mxu0
    %v6512 = vmax.f32 %v6506, 0.0
    %v6513 = vmax.f32 %v6509, 0.0
    %v6514 = vpack.c.bf16 %v6513, %v6512
    %v6515 = vld [vmem:[%s2 + $0x2a0] sm:$0xf]
    %v6516 = vld [vmem:[%s2 + $0x2a8] sm:$0xf]
    %v6517 = vld [vmem:[%s2 + $0x2b0] sm:$0xf]
    %v6518 = vld [vmem:[%s2 + $0x2b8] sm:$0xf]
    %v6519 = vld [vmem:[%s2 + $0x2c0] sm:$0xf]
    %v6520 = vld [vmem:[%s2 + $0x2c8] sm:$0xf]
    %v6521 = vld [vmem:[%s2 + $0x2d0] sm:$0xf]
    %v6522 = vld [vmem:[%s2 + $0x2d8] sm:$0xf]
    %v6523 = vld [vmem:[%s2 + $0x2e0] sm:$0xf]
    %v6524 = vld [vmem:[%s2 + $0x2e8] sm:$0xf]
    %v6525 = vld [vmem:[%s2 + $0x2f0] sm:$0xf]
    %v6526 = vld [vmem:[%s2 + $0x2f8] sm:$0xf]
    %v6527 = vld [vmem:[%s2 + $0x300] sm:$0xf]
    %v6528 = vld [vmem:[%s2 + $0x308] sm:$0xf]
    %v6529 = vld [vmem:[%s2 + $0x310] sm:$0xf]
    %v6530 = vld [vmem:[%s2 + $0x318] sm:$0xf]
    %v6531 = vld [vmem:[%s1 + $0x85] ss:$0 sm:$0xff]
    %v6548 = vunpack.c.l.b16 %v6515
    %v6549 = vunpack.c.l.b16 %v6516
    %v6550 = vunpack.c.l.b16 %v6517
    %v6551 = vunpack.c.l.b16 %v6518
    %v6552 = vunpack.c.l.b16 %v6519
    %v6553 = vunpack.c.l.b16 %v6520
    %v6554 = vunpack.c.l.b16 %v6521
    %v6555 = vunpack.c.l.b16 %v6522
    %v6556 = vunpack.c.l.b16 %v6523
    %v6557 = vunpack.c.l.b16 %v6524
    %v6558 = vunpack.c.l.b16 %v6525
    %v6559 = vunpack.c.l.b16 %v6526
    %v6560 = vunpack.c.l.b16 %v6527
    %v6561 = vunpack.c.l.b16 %v6528
    %v6562 = vunpack.c.l.b16 %v6529
    %v6563 = vunpack.c.l.b16 %v6530
    %v6564 = vpack.c.b16 %v6549, %v6548
    %v6565 = vpack.c.b16 %v6551, %v6550
    %v6566 = vpack.c.b16 %v6553, %v6552
    %v6567 = vpack.c.b16 %v6555, %v6554
    %v6568 = vpack.c.b16 %v6557, %v6556
    %v6569 = vpack.c.b16 %v6559, %v6558
    %v6570 = vpack.c.b16 %v6561, %v6560
    %v6571 = vpack.c.b16 %v6563, %v6562
    %6580 = vmatprep.subr.bf16.mxu0 0
    %6581 = vmatpush1.bf16.msra.mxu0 %v6571
    %6582 = vmatprep.subr.bf16.mxu0 0
    %6583 = vmatpush1.bf16.msra.mxu0 %v6570
    %6584 = vmatprep.subr.bf16.mxu0 0
    %6585 = vmatpush1.bf16.msra.mxu0 %v6569
    %6586 = vmatprep.subr.bf16.mxu0 0
    %6587 = vmatpush1.bf16.msra.mxu0 %v6568
    %6588 = vmatprep.subr.bf16.mxu0 0
    %6589 = vmatpush1.bf16.msra.mxu0 %v6567
    %6590 = vmatprep.subr.bf16.mxu0 0
    %6591 = vmatpush1.bf16.msra.mxu0 %v6566
    %6592 = vmatprep.subr.bf16.mxu0 0
    %6593 = vmatpush1.bf16.msra.mxu0 %v6565
    %6594 = vmatprep.subr.bf16.mxu0 0
    %6595 = vmatpush1.bf16.msra.mxu0 %v6564
    %6596 = vmatprep.subr.bf16.mxu0 0
    %6597 = vmatpush2.bf16.msra.mxu0 0
    %6598 = vmatprep.subr.bf16.mxu0 0
    %6599 = vmatpush2.bf16.msra.mxu0 0
    %6600 = vmatprep.subr.bf16.mxu0 0
    %6601 = vmatpush2.bf16.msra.mxu0 0
    %6602 = vmatprep.subr.bf16.mxu0 0
    %6603 = vmatpush2.bf16.msra.mxu0 0
    %6604 = vmatprep.subr.bf16.mxu0 0
    %6605 = vmatpush2.bf16.msra.mxu0 0
    %6606 = vmatprep.subr.bf16.mxu0 0
    %6607 = vmatpush2.bf16.msra.mxu0 0
    %6608 = vmatprep.subr.bf16.mxu0 0
    %6609 = vmatpush2.bf16.msra.mxu0 0
    %6610 = vmatprep.subr.bf16.mxu0 0
    %6611 = vmatpush2.bf16.msra.mxu0 0
    %6612 = vmatprep.mubr.bf16.mxu0 0
    %6613 = vmatmul.mubr.bf16.gmra.mxu0 %v6514
    %v6614 = vpop.f32.mrf.mxu0
    %v6615 = vadd.f32 %v6531, %v6614
    %v6616 = vpop.f32.mrf.mxu0
    %v6617 = vpop.f32.mrf.mxu0
    %v6618 = vadd.f32 %v6531, %v6617
    %v6619 = vpop.f32.mrf.mxu0
    %6620 = vdwg.mxu0
    %6621 = vst [vmem:[#allocation5] sm:$0xff] %v6615
    %6622 = vst [vmem:[#allocation5 + $0x8] sm:$0xff] %v6618
    // Predicated region
    $region86: #{misa_forward.1} parent=1 // pred_check
      _
    $region87: #{misa_forward.1} parent=1 // pred_check_branch
      %6624 = sbr.rel (0) target = $region89
    $region88: #{misa_forward.1} parent=1 // pred_region
      %s6626 = ssub.s32 256, 256
      %6627 = vsyncadd [#allocation6], %s6626
      %s6628 = sshll.u32 [#allocation5], 4
      %s6629 = int_to_ptr.vmem [resolvable:$true] %s6628
      %6634 = dma.vmem_to_hbm [thread:$0]  %s6629, 256, %s6, [#allocation6], 128, 128, 8
    $region89: #{misa_forward.1} parent=1 // pred_fallthru
      _
    // Predicated region
    $region90: #{misa_forward.1} parent=1 // pred_check
      _
    $region91: #{misa_forward.1} parent=1 // pred_check_branch
      %6636 = sbr.rel (0) target = $region93
    $region92: #{misa_forward.1} parent=1 // pred_region
      %6637 = dma.done [#allocation6], 256
    $region93: #{misa_forward.1} parent=1 // pred_fallthru
      _
    %6638 = vsyncpa [#allocation6], 1
  %6639 = vsyncmov [#allocation4]
  %s6640 = vpop.sfrf %6639
  %p6641 = scmp.eq.s32.totalorder %s6640, 0
  %p6642 = pneg %p6641
  %6644 = shalt.err (%p6642)
  %s6645 = scalar_lea.sflag [#allocation4], 1
  %6646 = vsyncmov %s6645
  %s6647 = vpop.sfrf %6646
  %p6648 = scmp.eq.s32.totalorder %s6647, 0
  %p6649 = pneg %p6648
  %6651 = shalt.err (%p6649)

</llo_original>
